<compile_context>
chip_gen: v7x
topology: tpu7x:2x2x1
jax: 0.10.0
libtpu: 0.0.40
codegen_flags: <defaults>
</compile_context>

<pallas_src>
import functools

import numpy as np

import jax
import jax.numpy as jnp
from jax.experimental import pallas as pl
from jax.experimental.pallas import tpu as pltpu

VMEM = pl.BlockSpec(memory_space=pltpu.MemorySpace.VMEM)


def _round_up(x, m):
    return (x + m - 1) // m * m


# --------------------------------------------------------------------------
# Kernel A: matmul + bias + ReLU (conv1 via im2col patches)
# --------------------------------------------------------------------------
def _mm_bias_relu_kernel(x_ref, w_ref, b_ref, o_ref):
    acc = jnp.dot(x_ref[...], w_ref[...], preferred_element_type=jnp.float32)
    o_ref[...] = jnp.maximum(acc + b_ref[...], 0.0).astype(o_ref.dtype)


def matmul_bias_relu(x, w, b, out_dtype=jnp.bfloat16):
    m, k = x.shape
    k2, n = w.shape
    assert k == k2, (k, k2)
    # Single block: a multi-step grid at these shapes is pure per-step
    # overhead on 1-TensorCore chips (v5e/v6e).
    # TODO(synk): at production resolutions, grid over M with
    # dimension_semantics=("parallel",) so v7x's two TensorCores share it.
    return pl.pallas_call(
        _mm_bias_relu_kernel,
        out_shape=jax.ShapeDtypeStruct((m, n), out_dtype),
        in_specs=[VMEM, VMEM, VMEM],
        out_specs=VMEM,
    )(x, w, b)


# --------------------------------------------------------------------------
# In-kernel 3x3 stride-1 pad-1 conv on a flattened zero-padded NHWC grid,
# issued as ONE MXU matmul per conv (im2col built in VMEM).
# --------------------------------------------------------------------------
def _conv3x3_relu(loads, w_ref, b_ref, mask, wp, rint):
    """conv3x3(s=1,p=1) + bias + ReLU on flattened padded grids (in VMEM).

    `loads[s](off, n)` returns rows [off, off+n) of the s-th input channel
    group, stored as a canonical padded-flat activation (rows = N*Hp*Wp pixels
    in raster order, zero border, row stride wp).  The 9 shifted taps of all
    channel groups are concatenated along lanes (tap-major, group-minor) to
    match the row order of `w_ref` ((9*sum(cin), cout)), then a single dot
    with K = 9*sum(cin) runs on the MXU.  `mask` re-zeroes border outputs so
    the result can be stored straight back into a padded flat buffer.

    TODO(synk): at production sizes, block `rint` (e.g. 256 rows) via a grid
    so the f32 accumulator stays within a handful of vregs.
    """
    cols = []
    for dy in range(3):
        for dx in range(3):
            off = dy * wp + dx
            for load in loads:
                cols.append(load(off, rint))
    lhs = jnp.concatenate(cols, axis=1)               # (rint, 9*sum(cin)) bf16
    acc = jnp.dot(lhs, w_ref[...], preferred_element_type=jnp.float32)
    return jnp.maximum(acc + b_ref[...], 0.0) * mask


# --------------------------------------------------------------------------
# Fused kernel: trunk layer conv + conv_adjuster + conv_adjuster2 (both
# streams batched) + regression head (3 convs + AvgPool2d(5) + 2 Linears),
# all activations chained through VMEM scratch.
# --------------------------------------------------------------------------
def _fused_net_kernel(x_ref, wl, bl, wa1, ba1, wa2, ba2,
                      wr1, br1, wr2, br2, wr3, br3,
                      mask_b_ref, mask_c_ref,
                      fw1, fb1, fw2, fb2,
                      o_ref,
                      buf1, buf2, buf3, buf4, buf5, bufp,
                      *, wp, rows_per_img, inv_pool):
    pad = wp + 1
    mask_b = mask_b_ref[...]                  # (rint, 1)  batched n2 images
    mask_c = mask_c_ref[...]                  # (rint_c, 1) nimg images
    rint = mask_b.shape[0]
    rint_c = mask_c.shape[0]
    rcat = buf4.shape[0]

    def zero_border(buf):
        # Only the first/last `pad` rows are never overwritten by the masked
        # conv results; zero just those instead of the whole buffer.
        rows, width = buf.shape
        z = jnp.zeros((pad, width), buf.dtype)
        buf[0:pad, :] = z
        buf[rows - pad:rows, :] = z

    # trunk "layer" conv (trunk_c -> fc_in) + ReLU, both streams batched
    zero_border(buf1)
    h = _conv3x3_relu([lambda o, n: x_ref[o:o + n, :]], wl, bl, mask_b, wp, rint)
    buf1[pad:pad + rint, :] = h.astype(buf1.dtype)

    # conv_adjuster (fc_in -> icc) + ReLU  (+ Dropout = identity in eval)
    zero_border(buf2)
    h = _conv3x3_relu([lambda o, n: buf1[o:o + n, :]], wa1, ba1, mask_b, wp, rint)
    buf2[pad:pad + rint, :] = h.astype(buf2.dtype)

    # conv_adjuster2 (icc -> icc) + ReLU
    zero_border(buf3)
    h = _conv3x3_relu([lambda o, n: buf2[o:o + n, :]], wa2, ba2, mask_b, wp, rint)
    buf3[pad:pad + rint, :] = h.astype(buf3.dtype)

    # regression conv1 (2*icc -> icc): torch.cat((x1, x2), dim=1) realized by
    # feeding the two batch halves of buf3 as two channel groups.
    zero_border(buf4)
    h = _conv3x3_relu(
        [lambda o, n: buf3[o:o + n, :],
         lambda o, n: buf3[rcat + o:rcat + o + n, :]],
        wr1, br1, mask_c, wp, rint_c)
    buf4[pad:pad + rint_c, :] = h.astype(buf4.dtype)

    # regression conv2 (icc -> icc)
    zero_border(buf5)
    h = _conv3x3_relu([lambda o, n: buf4[o:o + n, :]], wr2, br2, mask_c, wp, rint_c)
    buf5[pad:pad + rint_c, :] = h.astype(buf5.dtype)

    # regression conv3 (icc -> icc) -> f32 padded buffer consumed by the pool
    zero_border(bufp)
    h = _conv3x3_relu([lambda o, n: buf5[o:o + n, :]], wr3, br3, mask_c, wp, rint_c)
    bufp[pad:pad + rint_c, :] = h

    # AvgPool2d(5) + Flatten as a per-image VPU/XLU reduction: non-interior
    # rows are exactly zero, so summing every row of an image and scaling by
    # 1/(hs*ws) equals the interior average.
    nimg = rcat // rows_per_img
    pooled_rows = []
    for i in range(nimg):
        chunk = bufp[i * rows_per_img:(i + 1) * rows_per_img, :]
        pooled_rows.append(jnp.sum(chunk, axis=0, keepdims=True))
    pooled = jnp.concatenate(pooled_rows, axis=0) * inv_pool     # (nimg, icc) f32

    # Linear + ReLU (+ Dropout = identity), then Linear + ReLU
    h1 = jnp.maximum(
        jnp.dot(pooled.astype(jnp.bfloat16), fw1[...],
                preferred_element_type=jnp.float32) + fb1[...], 0.0)
    out = jnp.maximum(
        jnp.dot(h1.astype(jnp.bfloat16), fw2[...],
                preferred_element_type=jnp.float32) + fb2[...], 0.0)
    o_ref[...] = out.astype(o_ref.dtype)


# --------------------------------------------------------------------------
# XLA glue (tiny at these shapes): im2col for the strided conv1, strided
# maxpool, flat-padding, and compile-time interior masks.
# --------------------------------------------------------------------------
def _im2col_3x3(x, stride, pad):
    """x: (N,H,W,C) NHWC -> patches (N*Ho*Wo, 9*C), plus output geometry."""
    n, h, w, c = x.shape
    xp = jnp.pad(x, ((0, 0), (pad, pad), (pad, pad), (0, 0)))
    hp, wp = h + 2 * pad, w + 2 * pad
    ho = (hp - 3) // stride + 1
    wo = (wp - 3) // stride + 1
    cols = []
    for dy in range(3):
        for dx in range(3):
            cols.append(xp[:, dy:dy + stride * (ho - 1) + 1:stride,
                              dx:dx + stride * (wo - 1) + 1:stride, :])
    patches = jnp.concatenate(cols, axis=-1)          # (N, Ho, Wo, 9*C)
    return patches.reshape(n * ho * wo, 9 * c), (n, ho, wo)


def _maxpool3x3_s2_p1(x):
    """MaxPool2d(3, stride=2, padding=1) in NHWC.

    The input is post-ReLU (>= 0), so zero padding equals -inf padding here
    (the center tap is always a real value)."""
    n, h, w, c = x.shape
    xp = jnp.pad(x, ((0, 0), (1, 1), (1, 1), (0, 0)))
    ho = (h + 2 - 3) // 2 + 1
    wo = (w + 2 - 3) // 2 + 1
    out = None
    for dy in range(3):
        for dx in range(3):
            tap = xp[:, dy:dy + 2 * (ho - 1) + 1:2,
                        dx:dx + 2 * (wo - 1) + 1:2, :]
            out = tap if out is None else jnp.maximum(out, tap)
    return out


def _to_flat_padded(x_nhwc, wp):
    """(N,H,W,C) -> spatial zero-pad (top/left/bottom by 1, right to width wp)
    and flatten to (N*(H+2)*wp, C).  wp >= W+2 (rounded up to multiple of 8)."""
    n, h, w, c = x_nhwc.shape
    xp = jnp.pad(x_nhwc, ((0, 0), (1, 1), (1, wp - w - 1), (0, 0)))
    return xp.reshape(n * (h + 2) * wp, c)


def _interior_mask(nimg, hs, ws, wp):
    """(rint, 1) f32 mask over the interior row-range of the flat padded grid."""
    hp = hs + 2
    full = np.zeros((nimg, hp, wp), np.float32)
    full[:, 1:1 + hs, 1:1 + ws] = 1.0
    flat = full.reshape(-1)
    pad = wp + 1
    return jnp.asarray(flat[pad:flat.size - pad].reshape(-1, 1))


# --------------------------------------------------------------------------
# Parameter construction (deterministic, synthetic), kernel-ready layout:
#   conv weights  -> (9*Cin, Cout) bf16   (tap-major, matches in-kernel taps)
#   biases        -> (1, Cout)     f32
#   fc weights    -> (in, out)     bf16
# --------------------------------------------------------------------------
def make_params(key, cin=3, trunk_c=64, fc_in=32, icc=32):
    ks = list(jax.random.split(key, 18))

    def nrm(k, shape, scale):
        return scale * jax.random.normal(k, shape, dtype=jnp.float32)

    def conv_w(w):                      # (3,3,Cin,Cout) -> (9*Cin, Cout) bf16
        return w.reshape(-1, w.shape[-1]).astype(jnp.bfloat16)

    def bias(b):
        return b.reshape(1, -1).astype(jnp.float32)

    p = {}
    # backbone conv1 (cin -> 64, k3 s2 p3) with BatchNorm (eval stats) folded
    w1 = nrm(ks[0], (3, 3, cin, trunk_c), 0.1)
    b1 = nrm(ks[1], (trunk_c,), 0.05)
    gamma = 1.0 + nrm(ks[2], (trunk_c,), 0.1)
    beta = nrm(ks[3], (trunk_c,), 0.05)
    run_mean = jnp.zeros((trunk_c,), jnp.float32)
    run_var = jnp.ones((trunk_c,), jnp.float32)
    scale = gamma / jnp.sqrt(run_var + 1e-5)
    p['conv1_w'] = conv_w(w1 * scale)
    p['conv1_b'] = bias((b1 - run_mean) * scale + beta)

    # stand-in trunk "layer" conv (64 -> fc_in, k3 s1 p1) + ReLU
    p['layer_w'] = conv_w(nrm(ks[4], (3, 3, trunk_c, fc_in), 0.03))
    p['layer_b'] = bias(nrm(ks[5], (fc_in,), 0.05))

    # conv_adjuster / conv_adjuster2 (shared between both streams)
    p['adj1_w'] = conv_w(nrm(ks[6], (3, 3, fc_in, icc), 0.05))
    p['adj1_b'] = bias(nrm(ks[7], (icc,), 0.05))
    p['adj2_w'] = conv_w(nrm(ks[8], (3, 3, icc, icc), 0.05))
    p['adj2_b'] = bias(nrm(ks[9], (icc,), 0.05))

    # regression_layer convs
    p['reg_c1_w'] = conv_w(nrm(ks[10], (3, 3, 2 * icc, icc), 0.05))
    p['reg_c1_b'] = bias(nrm(ks[11], (icc,), 0.05))
    p['reg_c2_w'] = conv_w(nrm(ks[12], (3, 3, icc, icc), 0.05))
    p['reg_c2_b'] = bias(nrm(ks[13], (icc,), 0.05))
    p['reg_c3_w'] = conv_w(nrm(ks[14], (3, 3, icc, icc), 0.05))
    p['reg_c3_b'] = bias(nrm(ks[15], (icc,), 0.05))

    # regression_layer linears: weight ~ N(0, 0.005), bias = 1 (weight_init)
    p['fc1_w'] = nrm(ks[16], (icc, icc), 0.005).astype(jnp.bfloat16)
    p['fc1_b'] = jnp.ones((1, icc), jnp.float32)
    p['fc2_w'] = nrm(ks[17], (icc, 4), 0.005).astype(jnp.bfloat16)
    p['fc2_b'] = jnp.ones((1, 4), jnp.float32)
    return p


# --------------------------------------------------------------------------
# Forward pass (mirrors New_GoTURN.forward)
# --------------------------------------------------------------------------
def goturn_forward(p, x_nchw, y_nchw):
    icc = p['adj2_b'].shape[-1]
    trunk_c = p['conv1_b'].shape[-1]
    fc_in = p['layer_b'].shape[-1]

    # Batch the two streams through the shared weights; NCHW -> NHWC, bf16.
    xy = jnp.concatenate([x_nchw, y_nchw], axis=0)
    xy = jnp.transpose(xy, (0, 2, 3, 1)).astype(jnp.bfloat16)
    n2 = xy.shape[0]
    assert n2 % 2 == 0
    nimg = n2 // 2

    # --- Pallas kernel A: conv1(k3,s2,p3) + folded BN + ReLU ---------------
    patches, (_, ho, wo) = _im2col_3x3(xy, stride=2, pad=3)
    c1 = matmul_bias_relu(patches, p['conv1_w'], p['conv1_b'])
    c1 = c1.reshape(n2, ho, wo, trunk_c)

    # MaxPool2d(3, s2, p1) -- tiny fused-XLA glue at these shapes.
    pooled = _maxpool3x3_s2_p1(c1)
    _, hs, ws, _ = pooled.shape

    # Flat-padded layout geometry; row stride rounded to a multiple of 8 so
    # dy-shifted tap loads / per-image row groups are sublane-aligned.
    hp = hs + 2
    wp = _round_up(ws + 2, 8)
    rows_per_img = hp * wp
    r = n2 * rows_per_img
    rcat = nimg * rows_per_img
    pad = wp + 1
    rint = r - 2 * pad
    rint_c = rcat - 2 * pad

    flat_in = _to_flat_padded(pooled, wp)          # canonical (r, trunk_c) bf16
    mask_b = _interior_mask(n2, hs, ws, wp)        # (rint, 1)
    mask_c = _interior_mask(nimg, hs, ws, wp)      # (rint_c, 1)

    # --- Fused Pallas kernel: trunk conv + adjusters + regression head -----
    out = pl.pallas_call(
        functools.partial(_fused_net_kernel, wp=wp, rows_per_img=rows_per_img,
                          inv_pool=1.0 / float(hs * ws)),
        out_shape=jax.ShapeDtypeStruct((nimg, 4), jnp.float32),
        in_specs=[VMEM] * 19,
        out_specs=VMEM,
        scratch_shapes=[
            pltpu.VMEM((r, fc_in), jnp.bfloat16),     # layer conv out
            pltpu.VMEM((r, icc), jnp.bfloat16),       # conv_adjuster out
            pltpu.VMEM((r, icc), jnp.bfloat16),       # conv_adjuster2 out
            pltpu.VMEM((rcat, icc), jnp.bfloat16),    # reg conv1 out
            pltpu.VMEM((rcat, icc), jnp.bfloat16),    # reg conv2 out
            pltpu.VMEM((rcat, icc), jnp.float32),     # reg conv3 out (pool src)
        ],
    )(flat_in,
      p['layer_w'], p['layer_b'],
      p['adj1_w'], p['adj1_b'], p['adj2_w'], p['adj2_b'],
      p['reg_c1_w'], p['reg_c1_b'], p['reg_c2_w'], p['reg_c2_b'],
      p['reg_c3_w'], p['reg_c3_b'],
      mask_b, mask_c,
      p['fc1_w'], p['fc1_b'], p['fc2_w'], p['fc2_b'])
    return out                                                       # (N, 4)


# --------------------------------------------------------------------------
if __name__ == "__main__":
    key = jax.random.PRNGKey(0)
    kp, kx, ky = jax.random.split(key, 3)

    # small shapes: batch=2, channels=3, spatial=16x16 (NCHW, as PyTorch)
    x = jax.random.normal(kx, (2, 3, 16, 16), dtype=jnp.float32)
    y = jax.random.normal(ky, (2, 3, 16, 16), dtype=jnp.float32)

    params = make_params(kp, cin=3, trunk_c=64, fc_in=32, icc=32)

    fwd = jax.jit(goturn_forward)
    out = jax.block_until_ready(fwd(params, x, y))

    assert out.shape == (2, 4), out.shape
    assert bool(jnp.all(jnp.isfinite(out)))
    assert bool(jnp.all(out >= 0.0))  # final ReLU (present in the reference)
    print("KERNEL_OK")
</pallas_src>

<mosaic_0001>
module attributes {stable_mosaic.version = 11 : i64} {
  func.func @_mm_bias_relu_kernel(%arg0: memref<400x27xbf16, #tpu.memory_space<vmem>>, %arg1: memref<27x64xbf16, #tpu.memory_space<vmem>>, %arg2: memref<1x64xf32, #tpu.memory_space<vmem>>, %arg3: memref<400x64xbf16, #tpu.memory_space<vmem>>) attributes {dimension_semantics = [], scalar_prefetch = 0 : i64, scratch_operands = 0 : i64, tpu.core_type = #tpu.core_type<tc>} {
    %c0 = arith.constant 0 : index
    %c0_0 = arith.constant 0 : index
    %0 = vector.load %arg0[%c0, %c0_0] : memref<400x27xbf16, #tpu.memory_space<vmem>>, vector<400x27xbf16>
    %c0_1 = arith.constant 0 : index
    %c0_2 = arith.constant 0 : index
    %1 = vector.load %arg1[%c0_1, %c0_2] : memref<27x64xbf16, #tpu.memory_space<vmem>>, vector<27x64xbf16>
    %cst = arith.constant dense<0.000000e+00> : vector<400x64xf32>
    %2 = tpu.matmul %0, %1, %cst {dimension_numbers = #tpu.dot_dimension_numbers<[1], [0], [0], [1], [0, 0, 1, 1], [], []>} : vector<400x27xbf16>, vector<27x64xbf16>, vector<400x64xf32> -> vector<400x64xf32>
    %c0_3 = arith.constant 0 : index
    %c0_4 = arith.constant 0 : index
    %3 = vector.load %arg2[%c0_3, %c0_4] : memref<1x64xf32, #tpu.memory_space<vmem>>, vector<1x64xf32>
    %4 = vector.broadcast %3 : vector<1x64xf32> to vector<400x64xf32>
    %5 = arith.addf %2, %4 : vector<400x64xf32>
    %cst_5 = arith.constant 0.000000e+00 : f32
    %6 = vector.broadcast %cst_5 : f32 to vector<400x64xf32>
    %7 = arith.maximumf %5, %6 : vector<400x64xf32>
    %8 = arith.truncf %7 : vector<400x64xf32> to vector<400x64xbf16>
    %c0_6 = arith.constant 0 : index
    %c0_7 = arith.constant 0 : index
    %9 = vector.load %arg3[%c0_6, %c0_7] : memref<400x64xbf16, #tpu.memory_space<vmem>>, vector<400x64xbf16>
    tpu.vector_store %arg3[%c0_6, %c0_7], %8 {strides = array<i32>} : memref<400x64xbf16, #tpu.memory_space<vmem>>, vector<400x64xbf16>,
    return
  }
}

module attributes {stable_mosaic.version = 11 : i64} {
  func.func @_fused_net_kernel(%arg0: memref<224x64xbf16, #tpu.memory_space<vmem>>, %arg1: memref<576x32xbf16, #tpu.memory_space<vmem>>, %arg2: memref<1x32xf32, #tpu.memory_space<vmem>>, %arg3: memref<288x32xbf16, #tpu.memory_space<vmem>>, %arg4: memref<1x32xf32, #tpu.memory_space<vmem>>, %arg5: memref<288x32xbf16, #tpu.memory_space<vmem>>, %arg6: memref<1x32xf32, #tpu.memory_space<vmem>>, %arg7: memref<576x32xbf16, #tpu.memory_space<vmem>>, %arg8: memref<1x32xf32, #tpu.memory_space<vmem>>, %arg9: memref<288x32xbf16, #tpu.memory_space<vmem>>, %arg10: memref<1x32xf32, #tpu.memory_space<vmem>>, %arg11: memref<288x32xbf16, #tpu.memory_space<vmem>>, %arg12: memref<1x32xf32, #tpu.memory_space<vmem>>, %arg13: memref<206x1xf32, #tpu.memory_space<vmem>>, %arg14: memref<94x1xf32, #tpu.memory_space<vmem>>, %arg15: memref<32x32xbf16, #tpu.memory_space<vmem>>, %arg16: memref<1x32xf32, #tpu.memory_space<vmem>>, %arg17: memref<32x4xbf16, #tpu.memory_space<vmem>>, %arg18: memref<1x4xf32, #tpu.memory_space<vmem>>, %arg19: memref<2x4xf32, #tpu.memory_space<vmem>>, %arg20: memref<224x32xbf16, #tpu.memory_space<vmem>>, %arg21: memref<224x32xbf16, #tpu.memory_space<vmem>>, %arg22: memref<224x32xbf16, #tpu.memory_space<vmem>>, %arg23: memref<112x32xbf16, #tpu.memory_space<vmem>>, %arg24: memref<112x32xbf16, #tpu.memory_space<vmem>>, %arg25: memref<112x32xf32, #tpu.memory_space<vmem>>) attributes {dimension_semantics = [], scalar_prefetch = 0 : i64, scratch_operands = 6 : i64, tpu.core_type = #tpu.core_type<tc>} {
    %c0 = arith.constant 0 : index
    %c0_0 = arith.constant 0 : index
    %0 = vector.load %arg13[%c0, %c0_0] : memref<206x1xf32, #tpu.memory_space<vmem>>, vector<206x1xf32>
    %c0_1 = arith.constant 0 : index
    %c0_2 = arith.constant 0 : index
    %1 = vector.load %arg14[%c0_1, %c0_2] : memref<94x1xf32, #tpu.memory_space<vmem>>, vector<94x1xf32>
    %cst = arith.constant 0.000000e+00 : bf16
    %2 = vector.broadcast %cst : bf16 to vector<9x32xbf16>
    %c0_3 = arith.constant 0 : index
    %c0_4 = arith.constant 0 : index
    %3 = vector.load %arg20[%c0_3, %c0_4] : memref<224x32xbf16, #tpu.memory_space<vmem>>, vector<9x32xbf16>
    tpu.vector_store %arg20[%c0_3, %c0_4], %2 {strides = array<i32>} : memref<224x32xbf16, #tpu.memory_space<vmem>>, vector<9x32xbf16>,
    %c215 = arith.constant 215 : index
    %c0_5 = arith.constant 0 : index
    %4 = vector.load %arg20[%c215, %c0_5] : memref<224x32xbf16, #tpu.memory_space<vmem>>, vector<9x32xbf16>
    tpu.vector_store %arg20[%c215, %c0_5], %2 {strides = array<i32>} : memref<224x32xbf16, #tpu.memory_space<vmem>>, vector<9x32xbf16>,
    %c0_6 = arith.constant 0 : index
    %c0_7 = arith.constant 0 : index
    %5 = vector.load %arg0[%c0_6, %c0_7] : memref<224x64xbf16, #tpu.memory_space<vmem>>, vector<206x64xbf16>
    %c1 = arith.constant 1 : index
    %c0_8 = arith.constant 0 : index
    %6 = vector.load %arg0[%c1, %c0_8] : memref<224x64xbf16, #tpu.memory_space<vmem>>, vector<206x64xbf16>
    %c2 = arith.constant 2 : index
    %c0_9 = arith.constant 0 : index
    %7 = vector.load %arg0[%c2, %c0_9] : memref<224x64xbf16, #tpu.memory_space<vmem>>, vector<206x64xbf16>
    %c8 = arith.constant 8 : index
    %c0_10 = arith.constant 0 : index
    %8 = vector.load %arg0[%c8, %c0_10] : memref<224x64xbf16, #tpu.memory_space<vmem>>, vector<206x64xbf16>
    %c9 = arith.constant 9 : index
    %c0_11 = arith.constant 0 : index
    %9 = vector.load %arg0[%c9, %c0_11] : memref<224x64xbf16, #tpu.memory_space<vmem>>, vector<206x64xbf16>
    %c10 = arith.constant 10 : index
    %c0_12 = arith.constant 0 : index
    %10 = vector.load %arg0[%c10, %c0_12] : memref<224x64xbf16, #tpu.memory_space<vmem>>, vector<206x64xbf16>
    %c16 = arith.constant 16 : index
    %c0_13 = arith.constant 0 : index
    %11 = vector.load %arg0[%c16, %c0_13] : memref<224x64xbf16, #tpu.memory_space<vmem>>, vector<206x64xbf16>
    %c17 = arith.constant 17 : index
    %c0_14 = arith.constant 0 : index
    %12 = vector.load %arg0[%c17, %c0_14] : memref<224x64xbf16, #tpu.memory_space<vmem>>, vector<206x64xbf16>
    %c18 = arith.constant 18 : index
    %c0_15 = arith.constant 0 : index
    %13 = vector.load %arg0[%c18, %c0_15] : memref<224x64xbf16, #tpu.memory_space<vmem>>, vector<206x64xbf16>
    %14 = tpu.concatenate %5, %6, %7, %8, %9, %10, %11, %12, %13 in 1 : vector<206x64xbf16>, vector<206x64xbf16>, vector<206x64xbf16>, vector<206x64xbf16>, vector<206x64xbf16>, vector<206x64xbf16>, vector<206x64xbf16>, vector<206x64xbf16>, vector<206x64xbf16> -> vector<206x576xbf16>
    %c0_16 = arith.constant 0 : index
    %c0_17 = arith.constant 0 : index
    %15 = vector.load %arg1[%c0_16, %c0_17] : memref<576x32xbf16, #tpu.memory_space<vmem>>, vector<576x32xbf16>
    %cst_18 = arith.constant dense<0.000000e+00> : vector<206x32xf32>
    %16 = tpu.matmul %14, %15, %cst_18 {dimension_numbers = #tpu.dot_dimension_numbers<[1], [0], [0], [1], [0, 0, 1, 1], [], []>} : vector<206x576xbf16>, vector<576x32xbf16>, vector<206x32xf32> -> vector<206x32xf32>
    %c0_19 = arith.constant 0 : index
    %c0_20 = arith.constant 0 : index
    %17 = vector.load %arg2[%c0_19, %c0_20] : memref<1x32xf32, #tpu.memory_space<vmem>>, vector<1x32xf32>
    %18 = vector.broadcast %17 : vector<1x32xf32> to vector<206x32xf32>
    %19 = arith.addf %16, %18 : vector<206x32xf32>
    %cst_21 = arith.constant 0.000000e+00 : f32
    %20 = vector.broadcast %cst_21 : f32 to vector<206x32xf32>
    %21 = arith.maximumf %19, %20 : vector<206x32xf32>
    %22 = vector.broadcast %0 : vector<206x1xf32> to vector<206x32xf32>
    %23 = arith.mulf %21, %22 : vector<206x32xf32>
    %24 = arith.truncf %23 : vector<206x32xf32> to vector<206x32xbf16>
    %c9_22 = arith.constant 9 : index
    %c0_23 = arith.constant 0 : index
    %25 = vector.load %arg20[%c9_22, %c0_23] : memref<224x32xbf16, #tpu.memory_space<vmem>>, vector<206x32xbf16>
    tpu.vector_store %arg20[%c9_22, %c0_23], %24 {strides = array<i32>} : memref<224x32xbf16, #tpu.memory_space<vmem>>, vector<206x32xbf16>,
    %cst_24 = arith.constant 0.000000e+00 : bf16
    %26 = vector.broadcast %cst_24 : bf16 to vector<9x32xbf16>
    %c0_25 = arith.constant 0 : index
    %c0_26 = arith.constant 0 : index
    %27 = vector.load %arg21[%c0_25, %c0_26] : memref<224x32xbf16, #tpu.memory_space<vmem>>, vector<9x32xbf16>
    tpu.vector_store %arg21[%c0_25, %c0_26], %26 {strides = array<i32>} : memref<224x32xbf16, #tpu.memory_space<vmem>>, vector<9x32xbf16>,
    %c215_27 = arith.constant 215 : index
    %c0_28 = arith.constant 0 : index
    %28 = vector.load %arg21[%c215_27, %c0_28] : memref<224x32xbf16, #tpu.memory_space<vmem>>, vector<9x32xbf16>
    tpu.vector_store %arg21[%c215_27, %c0_28], %26 {strides = array<i32>} : memref<224x32xbf16, #tpu.memory_space<vmem>>, vector<9x32xbf16>,
    %c0_29 = arith.constant 0 : index
    %c0_30 = arith.constant 0 : index
    %29 = vector.load %arg20[%c0_29, %c0_30] : memref<224x32xbf16, #tpu.memory_space<vmem>>, vector<206x32xbf16>
    %c1_31 = arith.constant 1 : index
    %c0_32 = arith.constant 0 : index
    %30 = vector.load %arg20[%c1_31, %c0_32] : memref<224x32xbf16, #tpu.memory_space<vmem>>, vector<206x32xbf16>
    %c2_33 = arith.constant 2 : index
    %c0_34 = arith.constant 0 : index
    %31 = vector.load %arg20[%c2_33, %c0_34] : memref<224x32xbf16, #tpu.memory_space<vmem>>, vector<206x32xbf16>
    %c8_35 = arith.constant 8 : index
    %c0_36 = arith.constant 0 : index
    %32 = vector.load %arg20[%c8_35, %c0_36] : memref<224x32xbf16, #tpu.memory_space<vmem>>, vector<206x32xbf16>
    %c9_37 = arith.constant 9 : index
    %c0_38 = arith.constant 0 : index
    %33 = vector.load %arg20[%c9_37, %c0_38] : memref<224x32xbf16, #tpu.memory_space<vmem>>, vector<206x32xbf16>
    %c10_39 = arith.constant 10 : index
    %c0_40 = arith.constant 0 : index
    %34 = vector.load %arg20[%c10_39, %c0_40] : memref<224x32xbf16, #tpu.memory_space<vmem>>, vector<206x32xbf16>
    %c16_41 = arith.constant 16 : index
    %c0_42 = arith.constant 0 : index
    %35 = vector.load %arg20[%c16_41, %c0_42] : memref<224x32xbf16, #tpu.memory_space<vmem>>, vector<206x32xbf16>
    %c17_43 = arith.constant 17 : index
    %c0_44 = arith.constant 0 : index
    %36 = vector.load %arg20[%c17_43, %c0_44] : memref<224x32xbf16, #tpu.memory_space<vmem>>, vector<206x32xbf16>
    %c18_45 = arith.constant 18 : index
    %c0_46 = arith.constant 0 : index
    %37 = vector.load %arg20[%c18_45, %c0_46] : memref<224x32xbf16, #tpu.memory_space<vmem>>, vector<206x32xbf16>
    %38 = tpu.concatenate %29, %30, %31, %32, %33, %34, %35, %36, %37 in 1 : vector<206x32xbf16>, vector<206x32xbf16>, vector<206x32xbf16>, vector<206x32xbf16>, vector<206x32xbf16>, vector<206x32xbf16>, vector<206x32xbf16>, vector<206x32xbf16>, vector<206x32xbf16> -> vector<206x288xbf16>
    %c0_47 = arith.constant 0 : index
    %c0_48 = arith.constant 0 : index
    %39 = vector.load %arg3[%c0_47, %c0_48] : memref<288x32xbf16, #tpu.memory_space<vmem>>, vector<288x32xbf16>
    %cst_49 = arith.constant dense<0.000000e+00> : vector<206x32xf32>
    %40 = tpu.matmul %38, %39, %cst_49 {dimension_numbers = #tpu.dot_dimension_numbers<[1], [0], [0], [1], [0, 0, 1, 1], [], []>} : vector<206x288xbf16>, vector<288x32xbf16>, vector<206x32xf32> -> vector<206x32xf32>
    %c0_50 = arith.constant 0 : index
    %c0_51 = arith.constant 0 : index
    %41 = vector.load %arg4[%c0_50, %c0_51] : memref<1x32xf32, #tpu.memory_space<vmem>>, vector<1x32xf32>
    %42 = vector.broadcast %41 : vector<1x32xf32> to vector<206x32xf32>
    %43 = arith.addf %40, %42 : vector<206x32xf32>
    %cst_52 = arith.constant 0.000000e+00 : f32
    %44 = vector.broadcast %cst_52 : f32 to vector<206x32xf32>
    %45 = arith.maximumf %43, %44 : vector<206x32xf32>
    %46 = vector.broadcast %0 : vector<206x1xf32> to vector<206x32xf32>
    %47 = arith.mulf %45, %46 : vector<206x32xf32>
    %48 = arith.truncf %47 : vector<206x32xf32> to vector<206x32xbf16>
    %c9_53 = arith.constant 9 : index
    %c0_54 = arith.constant 0 : index
    %49 = vector.load %arg21[%c9_53, %c0_54] : memref<224x32xbf16, #tpu.memory_space<vmem>>, vector<206x32xbf16>
    tpu.vector_store %arg21[%c9_53, %c0_54], %48 {strides = array<i32>} : memref<224x32xbf16, #tpu.memory_space<vmem>>, vector<206x32xbf16>,
    %cst_55 = arith.constant 0.000000e+00 : bf16
    %50 = vector.broadcast %cst_55 : bf16 to vector<9x32xbf16>
    %c0_56 = arith.constant 0 : index
    %c0_57 = arith.constant 0 : index
    %51 = vector.load %arg22[%c0_56, %c0_57] : memref<224x32xbf16, #tpu.memory_space<vmem>>, vector<9x32xbf16>
    tpu.vector_store %arg22[%c0_56, %c0_57], %50 {strides = array<i32>} : memref<224x32xbf16, #tpu.memory_space<vmem>>, vector<9x32xbf16>,
    %c215_58 = arith.constant 215 : index
    %c0_59 = arith.constant 0 : index
    %52 = vector.load %arg22[%c215_58, %c0_59] : memref<224x32xbf16, #tpu.memory_space<vmem>>, vector<9x32xbf16>
    tpu.vector_store %arg22[%c215_58, %c0_59], %50 {strides = array<i32>} : memref<224x32xbf16, #tpu.memory_space<vmem>>, vector<9x32xbf16>,
    %c0_60 = arith.constant 0 : index
    %c0_61 = arith.constant 0 : index
    %53 = vector.load %arg21[%c0_60, %c0_61] : memref<224x32xbf16, #tpu.memory_space<vmem>>, vector<206x32xbf16>
    %c1_62 = arith.constant 1 : index
    %c0_63 = arith.constant 0 : index
    %54 = vector.load %arg21[%c1_62, %c0_63] : memref<224x32xbf16, #tpu.memory_space<vmem>>, vector<206x32xbf16>
    %c2_64 = arith.constant 2 : index
    %c0_65 = arith.constant 0 : index
    %55 = vector.load %arg21[%c2_64, %c0_65] : memref<224x32xbf16, #tpu.memory_space<vmem>>, vector<206x32xbf16>
    %c8_66 = arith.constant 8 : index
    %c0_67 = arith.constant 0 : index
    %56 = vector.load %arg21[%c8_66, %c0_67] : memref<224x32xbf16, #tpu.memory_space<vmem>>, vector<206x32xbf16>
    %c9_68 = arith.constant 9 : index
    %c0_69 = arith.constant 0 : index
    %57 = vector.load %arg21[%c9_68, %c0_69] : memref<224x32xbf16, #tpu.memory_space<vmem>>, vector<206x32xbf16>
    %c10_70 = arith.constant 10 : index
    %c0_71 = arith.constant 0 : index
    %58 = vector.load %arg21[%c10_70, %c0_71] : memref<224x32xbf16, #tpu.memory_space<vmem>>, vector<206x32xbf16>
    %c16_72 = arith.constant 16 : index
    %c0_73 = arith.constant 0 : index
    %59 = vector.load %arg21[%c16_72, %c0_73] : memref<224x32xbf16, #tpu.memory_space<vmem>>, vector<206x32xbf16>
    %c17_74 = arith.constant 17 : index
    %c0_75 = arith.constant 0 : index
    %60 = vector.load %arg21[%c17_74, %c0_75] : memref<224x32xbf16, #tpu.memory_space<vmem>>, vector<206x32xbf16>
    %c18_76 = arith.constant 18 : index
    %c0_77 = arith.constant 0 : index
    %61 = vector.load %arg21[%c18_76, %c0_77] : memref<224x32xbf16, #tpu.memory_space<vmem>>, vector<206x32xbf16>
    %62 = tpu.concatenate %53, %54, %55, %56, %57, %58, %59, %60, %61 in 1 : vector<206x32xbf16>, vector<206x32xbf16>, vector<206x32xbf16>, vector<206x32xbf16>, vector<206x32xbf16>, vector<206x32xbf16>, vector<206x32xbf16>, vector<206x32xbf16>, vector<206x32xbf16> -> vector<206x288xbf16>
    %c0_78 = arith.constant 0 : index
    %c0_79 = arith.constant 0 : index
    %63 = vector.load %arg5[%c0_78, %c0_79] : memref<288x32xbf16, #tpu.memory_space<vmem>>, vector<288x32xbf16>
    %cst_80 = arith.constant dense<0.000000e+00> : vector<206x32xf32>
    %64 = tpu.matmul %62, %63, %cst_80 {dimension_numbers = #tpu.dot_dimension_numbers<[1], [0], [0], [1], [0, 0, 1, 1], [], []>} : vector<206x288xbf16>, vector<288x32xbf16>, vector<206x32xf32> -> vector<206x32xf32>
    %c0_81 = arith.constant 0 : index
    %c0_82 = arith.constant 0 : index
    %65 = vector.load %arg6[%c0_81, %c0_82] : memref<1x32xf32, #tpu.memory_space<vmem>>, vector<1x32xf32>
    %66 = vector.broadcast %65 : vector<1x32xf32> to vector<206x32xf32>
    %67 = arith.addf %64, %66 : vector<206x32xf32>
    %cst_83 = arith.constant 0.000000e+00 : f32
    %68 = vector.broadcast %cst_83 : f32 to vector<206x32xf32>
    %69 = arith.maximumf %67, %68 : vector<206x32xf32>
    %70 = vector.broadcast %0 : vector<206x1xf32> to vector<206x32xf32>
    %71 = arith.mulf %69, %70 : vector<206x32xf32>
    %72 = arith.truncf %71 : vector<206x32xf32> to vector<206x32xbf16>
    %c9_84 = arith.constant 9 : index
    %c0_85 = arith.constant 0 : index
    %73 = vector.load %arg22[%c9_84, %c0_85] : memref<224x32xbf16, #tpu.memory_space<vmem>>, vector<206x32xbf16>
    tpu.vector_store %arg22[%c9_84, %c0_85], %72 {strides = array<i32>} : memref<224x32xbf16, #tpu.memory_space<vmem>>, vector<206x32xbf16>,
    %cst_86 = arith.constant 0.000000e+00 : bf16
    %74 = vector.broadcast %cst_86 : bf16 to vector<9x32xbf16>
    %c0_87 = arith.constant 0 : index
    %c0_88 = arith.constant 0 : index
    %75 = vector.load %arg23[%c0_87, %c0_88] : memref<112x32xbf16, #tpu.memory_space<vmem>>, vector<9x32xbf16>
    tpu.vector_store %arg23[%c0_87, %c0_88], %74 {strides = array<i32>} : memref<112x32xbf16, #tpu.memory_space<vmem>>, vector<9x32xbf16>,
    %c103 = arith.constant 103 : index
    %c0_89 = arith.constant 0 : index
    %76 = vector.load %arg23[%c103, %c0_89] : memref<112x32xbf16, #tpu.memory_space<vmem>>, vector<9x32xbf16>
    tpu.vector_store %arg23[%c103, %c0_89], %74 {strides = array<i32>} : memref<112x32xbf16, #tpu.memory_space<vmem>>, vector<9x32xbf16>,
    %c0_90 = arith.constant 0 : index
    %c0_91 = arith.constant 0 : index
    %77 = vector.load %arg22[%c0_90, %c0_91] : memref<224x32xbf16, #tpu.memory_space<vmem>>, vector<94x32xbf16>
    %c112 = arith.constant 112 : index
    %c0_92 = arith.constant 0 : index
    %78 = vector.load %arg22[%c112, %c0_92] : memref<224x32xbf16, #tpu.memory_space<vmem>>, vector<94x32xbf16>
    %c1_93 = arith.constant 1 : index
    %c0_94 = arith.constant 0 : index
    %79 = vector.load %arg22[%c1_93, %c0_94] : memref<224x32xbf16, #tpu.memory_space<vmem>>, vector<94x32xbf16>
    %c113 = arith.constant 113 : index
    %c0_95 = arith.constant 0 : index
    %80 = vector.load %arg22[%c113, %c0_95] : memref<224x32xbf16, #tpu.memory_space<vmem>>, vector<94x32xbf16>
    %c2_96 = arith.constant 2 : index
    %c0_97 = arith.constant 0 : index
    %81 = vector.load %arg22[%c2_96, %c0_97] : memref<224x32xbf16, #tpu.memory_space<vmem>>, vector<94x32xbf16>
    %c114 = arith.constant 114 : index
    %c0_98 = arith.constant 0 : index
    %82 = vector.load %arg22[%c114, %c0_98] : memref<224x32xbf16, #tpu.memory_space<vmem>>, vector<94x32xbf16>
    %c8_99 = arith.constant 8 : index
    %c0_100 = arith.constant 0 : index
    %83 = vector.load %arg22[%c8_99, %c0_100] : memref<224x32xbf16, #tpu.memory_space<vmem>>, vector<94x32xbf16>
    %c120 = arith.constant 120 : index
    %c0_101 = arith.constant 0 : index
    %84 = vector.load %arg22[%c120, %c0_101] : memref<224x32xbf16, #tpu.memory_space<vmem>>, vector<94x32xbf16>
    %c9_102 = arith.constant 9 : index
    %c0_103 = arith.constant 0 : index
    %85 = vector.load %arg22[%c9_102, %c0_103] : memref<224x32xbf16, #tpu.memory_space<vmem>>, vector<94x32xbf16>
    %c121 = arith.constant 121 : index
    %c0_104 = arith.constant 0 : index
    %86 = vector.load %arg22[%c121, %c0_104] : memref<224x32xbf16, #tpu.memory_space<vmem>>, vector<94x32xbf16>
    %c10_105 = arith.constant 10 : index
    %c0_106 = arith.constant 0 : index
    %87 = vector.load %arg22[%c10_105, %c0_106] : memref<224x32xbf16, #tpu.memory_space<vmem>>, vector<94x32xbf16>
    %c122 = arith.constant 122 : index
    %c0_107 = arith.constant 0 : index
    %88 = vector.load %arg22[%c122, %c0_107] : memref<224x32xbf16, #tpu.memory_space<vmem>>, vector<94x32xbf16>
    %c16_108 = arith.constant 16 : index
    %c0_109 = arith.constant 0 : index
    %89 = vector.load %arg22[%c16_108, %c0_109] : memref<224x32xbf16, #tpu.memory_space<vmem>>, vector<94x32xbf16>
    %c128 = arith.constant 128 : index
    %c0_110 = arith.constant 0 : index
    %90 = vector.load %arg22[%c128, %c0_110] : memref<224x32xbf16, #tpu.memory_space<vmem>>, vector<94x32xbf16>
    %c17_111 = arith.constant 17 : index
    %c0_112 = arith.constant 0 : index
    %91 = vector.load %arg22[%c17_111, %c0_112] : memref<224x32xbf16, #tpu.memory_space<vmem>>, vector<94x32xbf16>
    %c129 = arith.constant 129 : index
    %c0_113 = arith.constant 0 : index
    %92 = vector.load %arg22[%c129, %c0_113] : memref<224x32xbf16, #tpu.memory_space<vmem>>, vector<94x32xbf16>
    %c18_114 = arith.constant 18 : index
    %c0_115 = arith.constant 0 : index
    %93 = vector.load %arg22[%c18_114, %c0_115] : memref<224x32xbf16, #tpu.memory_space<vmem>>, vector<94x32xbf16>
    %c130 = arith.constant 130 : index
    %c0_116 = arith.constant 0 : index
    %94 = vector.load %arg22[%c130, %c0_116] : memref<224x32xbf16, #tpu.memory_space<vmem>>, vector<94x32xbf16>
    %95 = tpu.concatenate %77, %78, %79, %80, %81, %82, %83, %84, %85, %86, %87, %88, %89, %90, %91, %92 in 1 : vector<94x32xbf16>, vector<94x32xbf16>, vector<94x32xbf16>, vector<94x32xbf16>, vector<94x32xbf16>, vector<94x32xbf16>, vector<94x32xbf16>, vector<94x32xbf16>, vector<94x32xbf16>, vector<94x32xbf16>, vector<94x32xbf16>, vector<94x32xbf16>, vector<94x32xbf16>, vector<94x32xbf16>, vector<94x32xbf16>, vector<94x32xbf16> -> vector<94x512xbf16>
    %96 = tpu.concatenate %93, %94 in 1 : vector<94x32xbf16>, vector<94x32xbf16> -> vector<94x64xbf16>
    %97 = tpu.concatenate %95, %96 in 1 : vector<94x512xbf16>, vector<94x64xbf16> -> vector<94x576xbf16>
    %c0_117 = arith.constant 0 : index
    %c0_118 = arith.constant 0 : index
    %98 = vector.load %arg7[%c0_117, %c0_118] : memref<576x32xbf16, #tpu.memory_space<vmem>>, vector<576x32xbf16>
    %cst_119 = arith.constant dense<0.000000e+00> : vector<94x32xf32>
    %99 = tpu.matmul %97, %98, %cst_119 {dimension_numbers = #tpu.dot_dimension_numbers<[1], [0], [0], [1], [0, 0, 1, 1], [], []>} : vector<94x576xbf16>, vector<576x32xbf16>, vector<94x32xf32> -> vector<94x32xf32>
    %c0_120 = arith.constant 0 : index
    %c0_121 = arith.constant 0 : index
    %100 = vector.load %arg8[%c0_120, %c0_121] : memref<1x32xf32, #tpu.memory_space<vmem>>, vector<1x32xf32>
    %101 = vector.broadcast %100 : vector<1x32xf32> to vector<94x32xf32>
    %102 = arith.addf %99, %101 : vector<94x32xf32>
    %cst_122 = arith.constant 0.000000e+00 : f32
    %103 = vector.broadcast %cst_122 : f32 to vector<94x32xf32>
    %104 = arith.maximumf %102, %103 : vector<94x32xf32>
    %105 = vector.broadcast %1 : vector<94x1xf32> to vector<94x32xf32>
    %106 = arith.mulf %104, %105 : vector<94x32xf32>
    %107 = arith.truncf %106 : vector<94x32xf32> to vector<94x32xbf16>
    %c9_123 = arith.constant 9 : index
    %c0_124 = arith.constant 0 : index
    %108 = vector.load %arg23[%c9_123, %c0_124] : memref<112x32xbf16, #tpu.memory_space<vmem>>, vector<94x32xbf16>
    tpu.vector_store %arg23[%c9_123, %c0_124], %107 {strides = array<i32>} : memref<112x32xbf16, #tpu.memory_space<vmem>>, vector<94x32xbf16>,
    %cst_125 = arith.constant 0.000000e+00 : bf16
    %109 = vector.broadcast %cst_125 : bf16 to vector<9x32xbf16>
    %c0_126 = arith.constant 0 : index
    %c0_127 = arith.constant 0 : index
    %110 = vector.load %arg24[%c0_126, %c0_127] : memref<112x32xbf16, #tpu.memory_space<vmem>>, vector<9x32xbf16>
    tpu.vector_store %arg24[%c0_126, %c0_127], %109 {strides = array<i32>} : memref<112x32xbf16, #tpu.memory_space<vmem>>, vector<9x32xbf16>,
    %c103_128 = arith.constant 103 : index
    %c0_129 = arith.constant 0 : index
    %111 = vector.load %arg24[%c103_128, %c0_129] : memref<112x32xbf16, #tpu.memory_space<vmem>>, vector<9x32xbf16>
    tpu.vector_store %arg24[%c103_128, %c0_129], %109 {strides = array<i32>} : memref<112x32xbf16, #tpu.memory_space<vmem>>, vector<9x32xbf16>,
    %c0_130 = arith.constant 0 : index
    %c0_131 = arith.constant 0 : index
    %112 = vector.load %arg23[%c0_130, %c0_131] : memref<112x32xbf16, #tpu.memory_space<vmem>>, vector<94x32xbf16>
    %c1_132 = arith.constant 1 : index
    %c0_133 = arith.constant 0 : index
    %113 = vector.load %arg23[%c1_132, %c0_133] : memref<112x32xbf16, #tpu.memory_space<vmem>>, vector<94x32xbf16>
    %c2_134 = arith.constant 2 : index
    %c0_135 = arith.constant 0 : index
    %114 = vector.load %arg23[%c2_134, %c0_135] : memref<112x32xbf16, #tpu.memory_space<vmem>>, vector<94x32xbf16>
    %c8_136 = arith.constant 8 : index
    %c0_137 = arith.constant 0 : index
    %115 = vector.load %arg23[%c8_136, %c0_137] : memref<112x32xbf16, #tpu.memory_space<vmem>>, vector<94x32xbf16>
    %c9_138 = arith.constant 9 : index
    %c0_139 = arith.constant 0 : index
    %116 = vector.load %arg23[%c9_138, %c0_139] : memref<112x32xbf16, #tpu.memory_space<vmem>>, vector<94x32xbf16>
    %c10_140 = arith.constant 10 : index
    %c0_141 = arith.constant 0 : index
    %117 = vector.load %arg23[%c10_140, %c0_141] : memref<112x32xbf16, #tpu.memory_space<vmem>>, vector<94x32xbf16>
    %c16_142 = arith.constant 16 : index
    %c0_143 = arith.constant 0 : index
    %118 = vector.load %arg23[%c16_142, %c0_143] : memref<112x32xbf16, #tpu.memory_space<vmem>>, vector<94x32xbf16>
    %c17_144 = arith.constant 17 : index
    %c0_145 = arith.constant 0 : index
    %119 = vector.load %arg23[%c17_144, %c0_145] : memref<112x32xbf16, #tpu.memory_space<vmem>>, vector<94x32xbf16>
    %c18_146 = arith.constant 18 : index
    %c0_147 = arith.constant 0 : index
    %120 = vector.load %arg23[%c18_146, %c0_147] : memref<112x32xbf16, #tpu.memory_space<vmem>>, vector<94x32xbf16>
    %121 = tpu.concatenate %112, %113, %114, %115, %116, %117, %118, %119, %120 in 1 : vector<94x32xbf16>, vector<94x32xbf16>, vector<94x32xbf16>, vector<94x32xbf16>, vector<94x32xbf16>, vector<94x32xbf16>, vector<94x32xbf16>, vector<94x32xbf16>, vector<94x32xbf16> -> vector<94x288xbf16>
    %c0_148 = arith.constant 0 : index
    %c0_149 = arith.constant 0 : index
    %122 = vector.load %arg9[%c0_148, %c0_149] : memref<288x32xbf16, #tpu.memory_space<vmem>>, vector<288x32xbf16>
    %cst_150 = arith.constant dense<0.000000e+00> : vector<94x32xf32>
    %123 = tpu.matmul %121, %122, %cst_150 {dimension_numbers = #tpu.dot_dimension_numbers<[1], [0], [0], [1], [0, 0, 1, 1], [], []>} : vector<94x288xbf16>, vector<288x32xbf16>, vector<94x32xf32> -> vector<94x32xf32>
    %c0_151 = arith.constant 0 : index
    %c0_152 = arith.constant 0 : index
    %124 = vector.load %arg10[%c0_151, %c0_152] : memref<1x32xf32, #tpu.memory_space<vmem>>, vector<1x32xf32>
    %125 = vector.broadcast %124 : vector<1x32xf32> to vector<94x32xf32>
    %126 = arith.addf %123, %125 : vector<94x32xf32>
    %cst_153 = arith.constant 0.000000e+00 : f32
    %127 = vector.broadcast %cst_153 : f32 to vector<94x32xf32>
    %128 = arith.maximumf %126, %127 : vector<94x32xf32>
    %129 = vector.broadcast %1 : vector<94x1xf32> to vector<94x32xf32>
    %130 = arith.mulf %128, %129 : vector<94x32xf32>
    %131 = arith.truncf %130 : vector<94x32xf32> to vector<94x32xbf16>
    %c9_154 = arith.constant 9 : index
    %c0_155 = arith.constant 0 : index
    %132 = vector.load %arg24[%c9_154, %c0_155] : memref<112x32xbf16, #tpu.memory_space<vmem>>, vector<94x32xbf16>
    tpu.vector_store %arg24[%c9_154, %c0_155], %131 {strides = array<i32>} : memref<112x32xbf16, #tpu.memory_space<vmem>>, vector<94x32xbf16>,
    %cst_156 = arith.constant 0.000000e+00 : f32
    %133 = vector.broadcast %cst_156 : f32 to vector<9x32xf32>
    %c0_157 = arith.constant 0 : index
    %c0_158 = arith.constant 0 : index
    %134 = vector.load %arg25[%c0_157, %c0_158] : memref<112x32xf32, #tpu.memory_space<vmem>>, vector<9x32xf32>
    tpu.vector_store %arg25[%c0_157, %c0_158], %133 {strides = array<i32>} : memref<112x32xf32, #tpu.memory_space<vmem>>, vector<9x32xf32>,
    %c103_159 = arith.constant 103 : index
    %c0_160 = arith.constant 0 : index
    %135 = vector.load %arg25[%c103_159, %c0_160] : memref<112x32xf32, #tpu.memory_space<vmem>>, vector<9x32xf32>
    tpu.vector_store %arg25[%c103_159, %c0_160], %133 {strides = array<i32>} : memref<112x32xf32, #tpu.memory_space<vmem>>, vector<9x32xf32>,
    %c0_161 = arith.constant 0 : index
    %c0_162 = arith.constant 0 : index
    %136 = vector.load %arg24[%c0_161, %c0_162] : memref<112x32xbf16, #tpu.memory_space<vmem>>, vector<94x32xbf16>
    %c1_163 = arith.constant 1 : index
    %c0_164 = arith.constant 0 : index
    %137 = vector.load %arg24[%c1_163, %c0_164] : memref<112x32xbf16, #tpu.memory_space<vmem>>, vector<94x32xbf16>
    %c2_165 = arith.constant 2 : index
    %c0_166 = arith.constant 0 : index
    %138 = vector.load %arg24[%c2_165, %c0_166] : memref<112x32xbf16, #tpu.memory_space<vmem>>, vector<94x32xbf16>
    %c8_167 = arith.constant 8 : index
    %c0_168 = arith.constant 0 : index
    %139 = vector.load %arg24[%c8_167, %c0_168] : memref<112x32xbf16, #tpu.memory_space<vmem>>, vector<94x32xbf16>
    %c9_169 = arith.constant 9 : index
    %c0_170 = arith.constant 0 : index
    %140 = vector.load %arg24[%c9_169, %c0_170] : memref<112x32xbf16, #tpu.memory_space<vmem>>, vector<94x32xbf16>
    %c10_171 = arith.constant 10 : index
    %c0_172 = arith.constant 0 : index
    %141 = vector.load %arg24[%c10_171, %c0_172] : memref<112x32xbf16, #tpu.memory_space<vmem>>, vector<94x32xbf16>
    %c16_173 = arith.constant 16 : index
    %c0_174 = arith.constant 0 : index
    %142 = vector.load %arg24[%c16_173, %c0_174] : memref<112x32xbf16, #tpu.memory_space<vmem>>, vector<94x32xbf16>
    %c17_175 = arith.constant 17 : index
    %c0_176 = arith.constant 0 : index
    %143 = vector.load %arg24[%c17_175, %c0_176] : memref<112x32xbf16, #tpu.memory_space<vmem>>, vector<94x32xbf16>
    %c18_177 = arith.constant 18 : index
    %c0_178 = arith.constant 0 : index
    %144 = vector.load %arg24[%c18_177, %c0_178] : memref<112x32xbf16, #tpu.memory_space<vmem>>, vector<94x32xbf16>
    %145 = tpu.concatenate %136, %137, %138, %139, %140, %141, %142, %143, %144 in 1 : vector<94x32xbf16>, vector<94x32xbf16>, vector<94x32xbf16>, vector<94x32xbf16>, vector<94x32xbf16>, vector<94x32xbf16>, vector<94x32xbf16>, vector<94x32xbf16>, vector<94x32xbf16> -> vector<94x288xbf16>
    %c0_179 = arith.constant 0 : index
    %c0_180 = arith.constant 0 : index
    %146 = vector.load %arg11[%c0_179, %c0_180] : memref<288x32xbf16, #tpu.memory_space<vmem>>, vector<288x32xbf16>
    %cst_181 = arith.constant dense<0.000000e+00> : vector<94x32xf32>
    %147 = tpu.matmul %145, %146, %cst_181 {dimension_numbers = #tpu.dot_dimension_numbers<[1], [0], [0], [1], [0, 0, 1, 1], [], []>} : vector<94x288xbf16>, vector<288x32xbf16>, vector<94x32xf32> -> vector<94x32xf32>
    %c0_182 = arith.constant 0 : index
    %c0_183 = arith.constant 0 : index
    %148 = vector.load %arg12[%c0_182, %c0_183] : memref<1x32xf32, #tpu.memory_space<vmem>>, vector<1x32xf32>
    %149 = vector.broadcast %148 : vector<1x32xf32> to vector<94x32xf32>
    %150 = arith.addf %147, %149 : vector<94x32xf32>
    %cst_184 = arith.constant 0.000000e+00 : f32
    %151 = vector.broadcast %cst_184 : f32 to vector<94x32xf32>
    %152 = arith.maximumf %150, %151 : vector<94x32xf32>
    %153 = vector.broadcast %1 : vector<94x1xf32> to vector<94x32xf32>
    %154 = arith.mulf %152, %153 : vector<94x32xf32>
    %c9_185 = arith.constant 9 : index
    %c0_186 = arith.constant 0 : index
    %155 = vector.load %arg25[%c9_185, %c0_186] : memref<112x32xf32, #tpu.memory_space<vmem>>, vector<94x32xf32>
    tpu.vector_store %arg25[%c9_185, %c0_186], %154 {strides = array<i32>} : memref<112x32xf32, #tpu.memory_space<vmem>>, vector<94x32xf32>,
    %c0_187 = arith.constant 0 : index
    %c0_188 = arith.constant 0 : index
    %156 = vector.load %arg25[%c0_187, %c0_188] : memref<112x32xf32, #tpu.memory_space<vmem>>, vector<56x32xf32>
    %cst_189 = arith.constant dense<0.000000e+00> : vector<32xf32>
    %157 = vector.multi_reduction <add>, %156, %cst_189 [0] : vector<56x32xf32> to vector<32xf32>
    %158 = vector.shape_cast %157 : vector<32xf32> to vector<1x32xf32>
    %c56 = arith.constant 56 : index
    %c0_190 = arith.constant 0 : index
    %159 = vector.load %arg25[%c56, %c0_190] : memref<112x32xf32, #tpu.memory_space<vmem>>, vector<56x32xf32>
    %cst_191 = arith.constant dense<0.000000e+00> : vector<32xf32>
    %160 = vector.multi_reduction <add>, %159, %cst_191 [0] : vector<56x32xf32> to vector<32xf32>
    %161 = vector.shape_cast %160 : vector<32xf32> to vector<1x32xf32>
    %162 = tpu.concatenate %158, %161 in 0 : vector<1x32xf32>, vector<1x32xf32> -> vector<2x32xf32>
    %cst_192 = arith.constant 4.000000e-02 : f32
    %163 = vector.broadcast %cst_192 : f32 to vector<2x32xf32>
    %164 = arith.mulf %162, %163 : vector<2x32xf32>
    %165 = arith.truncf %164 : vector<2x32xf32> to vector<2x32xbf16>
    %c0_193 = arith.constant 0 : index
    %c0_194 = arith.constant 0 : index
    %166 = vector.load %arg15[%c0_193, %c0_194] : memref<32x32xbf16, #tpu.memory_space<vmem>>, vector<32x32xbf16>
    %cst_195 = arith.constant dense<0.000000e+00> : vector<2x32xf32>
    %167 = tpu.matmul %165, %166, %cst_195 {dimension_numbers = #tpu.dot_dimension_numbers<[1], [0], [0], [1], [0, 0, 1, 1], [], []>} : vector<2x32xbf16>, vector<32x32xbf16>, vector<2x32xf32> -> vector<2x32xf32>
    %c0_196 = arith.constant 0 : index
    %c0_197 = arith.constant 0 : index
    %168 = vector.load %arg16[%c0_196, %c0_197] : memref<1x32xf32, #tpu.memory_space<vmem>>, vector<1x32xf32>
    %169 = vector.broadcast %168 : vector<1x32xf32> to vector<2x32xf32>
    %170 = arith.addf %167, %169 : vector<2x32xf32>
    %cst_198 = arith.constant 0.000000e+00 : f32
    %171 = vector.broadcast %cst_198 : f32 to vector<2x32xf32>
    %172 = arith.maximumf %170, %171 : vector<2x32xf32>
    %173 = arith.truncf %172 : vector<2x32xf32> to vector<2x32xbf16>
    %c0_199 = arith.constant 0 : index
    %c0_200 = arith.constant 0 : index
    %174 = vector.load %arg17[%c0_199, %c0_200] : memref<32x4xbf16, #tpu.memory_space<vmem>>, vector<32x4xbf16>
    %cst_201 = arith.constant dense<0.000000e+00> : vector<2x4xf32>
    %175 = tpu.matmul %173, %174, %cst_201 {dimension_numbers = #tpu.dot_dimension_numbers<[1], [0], [0], [1], [0, 0, 1, 1], [], []>} : vector<2x32xbf16>, vector<32x4xbf16>, vector<2x4xf32> -> vector<2x4xf32>
    %c0_202 = arith.constant 0 : index
    %c0_203 = arith.constant 0 : index
    %176 = vector.load %arg18[%c0_202, %c0_203] : memref<1x4xf32, #tpu.memory_space<vmem>>, vector<1x4xf32>
    %177 = vector.broadcast %176 : vector<1x4xf32> to vector<2x4xf32>
    %178 = arith.addf %175, %177 : vector<2x4xf32>
    %cst_204 = arith.constant 0.000000e+00 : f32
    %179 = vector.broadcast %cst_204 : f32 to vector<2x4xf32>
    %180 = arith.maximumf %178, %179 : vector<2x4xf32>
    %c0_205 = arith.constant 0 : index
    %c0_206 = arith.constant 0 : index
    %181 = vector.load %arg19[%c0_205, %c0_206] : memref<2x4xf32, #tpu.memory_space<vmem>>, vector<2x4xf32>
    tpu.vector_store %arg19[%c0_205, %c0_206], %180 {strides = array<i32>} : memref<2x4xf32, #tpu.memory_space<vmem>>, vector<2x4xf32>,
    return
  }
}

</mosaic_0001>

<llo_original>
// kernel: goturn_forward.2
$region0: #{goturn_forward.2}
  #allocation0 [shape = 'u32[]', space=smem, size = 0x4, offset = 0x4, fixed_abs, tag = 'smem constant byte address 0x4 - core index']
  #allocation1 [shape = 'u32[144,128]{1,0:T(1,128)}', space=vmem, size = 0x12000, scoped, tag = 'internal scratch']
  %s0 = inlined_call_operand.vmem [shape: bf16[400,27], index: 0, kind: input, shape index: {}]
  %s1 = inlined_call_operand.vmem [shape: bf16[27,64], index: 1, kind: input, shape index: {}]
  %s2 = inlined_call_operand.vmem [shape: f32[1,64], index: 2, kind: input, shape index: {}]
  %s3 = inlined_call_operand.vmem [shape: bf16[400,64], index: 3, kind: output, shape index: {}]
  %s4 = sld [smem:[#allocation0]]
  $region22: #{goturn_forward.2} parent=0
    _
  %s6 = ssub.s32 1, %s4
  %s7 = scalar_select 0, %s6, %s4
  // Predicated region
  $region2: #{goturn_forward.2} parent=0 // pred_check
    _
  $region3: #{goturn_forward.2} parent=0 // pred_check_branch
    %9 = sbr.rel (0) target = $region5
  $region4: #{goturn_forward.2} parent=0 // pred_region
    _
  $region5: #{goturn_forward.2} parent=0 // pred_fallthru
    _
  // Predicated region
  $region6: #{goturn_forward.2} parent=0 // pred_check
    _
  $region7: #{goturn_forward.2} parent=0 // pred_check_branch
    %11 = sbr.rel (0) target = $region9
  $region8: #{goturn_forward.2} parent=0 // pred_region
    _
  $region9: #{goturn_forward.2} parent=0 // pred_fallthru
    _
  // Predicated region
  $region10: #{goturn_forward.2} parent=0 // pred_check
    _
  $region11: #{goturn_forward.2} parent=0 // pred_check_branch
    %13 = sbr.rel (0) target = $region13
  $region12: #{goturn_forward.2} parent=0 // pred_region
    _
  $region13: #{goturn_forward.2} parent=0 // pred_fallthru
    _
  %v15 = vld [vmem:[%s0] sm:$0xf]
  %v16 = vld [vmem:[%s0 + $0x4] sm:$0xf]
  %v17 = vld [vmem:[%s0 + $0x8] sm:$0xf]
  %v18 = vld [vmem:[%s0 + $0xc] sm:$0xf]
  %v19 = vld [vmem:[%s0 + $0x10] sm:$0xf]
  %v20 = vld [vmem:[%s0 + $0x14] sm:$0xf]
  %v21 = vld [vmem:[%s0 + $0x18] sm:$0xf]
  %v22 = vld [vmem:[%s0 + $0x1c] sm:$0xf]
  %v23 = vld [vmem:[%s0 + $0x20] sm:$0xf]
  %v24 = vld [vmem:[%s0 + $0x24] sm:$0xf]
  %v25 = vld [vmem:[%s0 + $0x28] sm:$0xf]
  %v26 = vld [vmem:[%s0 + $0x2c] sm:$0xf]
  %v27 = vld [vmem:[%s0 + $0x30] sm:$0xf]
  %v28 = vld [vmem:[%s0 + $0x34] sm:$0xf]
  %v29 = vld [vmem:[%s0 + $0x38] sm:$0xf]
  %v30 = vld [vmem:[%s0 + $0x3c] sm:$0xf]
  %v31 = vld [vmem:[%s0 + $0x40] sm:$0xf]
  %v32 = vld [vmem:[%s0 + $0x44] sm:$0xf]
  %v33 = vld [vmem:[%s0 + $0x48] sm:$0xf]
  %v34 = vld [vmem:[%s0 + $0x4c] sm:$0xf]
  %v35 = vld [vmem:[%s0 + $0x50] sm:$0xf]
  %v36 = vld [vmem:[%s0 + $0x54] sm:$0xf]
  %v37 = vld [vmem:[%s0 + $0x58] sm:$0xf]
  %v38 = vld [vmem:[%s0 + $0x5c] sm:$0xf]
  %v39 = vld [vmem:[%s0 + $0x60] sm:$0xf]
  %v40 = vld [vmem:[%s0 + $0x64] sm:$0xf]
  %v41 = vld [vmem:[%s0 + $0x68] sm:$0xf]
  %v42 = vld [vmem:[%s0 + $0x6c] sm:$0xf]
  %v43 = vld [vmem:[%s0 + $0x70] sm:$0xf]
  %v44 = vld [vmem:[%s0 + $0x74] sm:$0xf]
  %v45 = vld [vmem:[%s0 + $0x78] sm:$0xf]
  %v46 = vld [vmem:[%s0 + $0x7c] sm:$0xf]
  %v47 = vld [vmem:[%s0 + $0x80] sm:$0xf]
  %v48 = vld [vmem:[%s0 + $0x84] sm:$0xf]
  %v49 = vld [vmem:[%s0 + $0x88] sm:$0xf]
  %v50 = vld [vmem:[%s0 + $0x8c] sm:$0xf]
  %v51 = vld [vmem:[%s0 + $0x90] sm:$0xf]
  %v52 = vld [vmem:[%s0 + $0x94] sm:$0xf]
  %v53 = vld [vmem:[%s0 + $0x98] sm:$0xf]
  %v54 = vld [vmem:[%s0 + $0x9c] sm:$0xf]
  %v55 = vld [vmem:[%s0 + $0xa0] sm:$0xf]
  %v56 = vld [vmem:[%s0 + $0xa4] sm:$0xf]
  %v57 = vld [vmem:[%s0 + $0xa8] sm:$0xf]
  %v58 = vld [vmem:[%s0 + $0xac] sm:$0xf]
  %v59 = vld [vmem:[%s0 + $0xb0] sm:$0xf]
  %v60 = vld [vmem:[%s0 + $0xb4] sm:$0xf]
  %v61 = vld [vmem:[%s0 + $0xb8] sm:$0xf]
  %v62 = vld [vmem:[%s0 + $0xbc] sm:$0xf]
  %v63 = vld [vmem:[%s0 + $0xc0] sm:$0xf]
  %v64 = vld [vmem:[%s0 + $0xc4] sm:$0xf]
  %v65 = vld [vmem:[%s1] sm:$0xf]
  %v66 = vld [vmem:[%s1 + $0x4] sm:$0xf]
  %v67 = vld [vmem:[%s1 + $0x8] sm:$0xf]
  %v68 = vld [vmem:[%s1 + $0xc] sm:$0x3]
  %v69 = vld [vmem:[%s2] sm:$0x1]
  %v71 = vlaneseq
  %v72 = vshrl.u32 %v71, 7
  %v73 = vsub.s32 0, %v72
  %v74 = vrot.slane %v69, %v73
  %v126 = vunpack.c.l.b16 %v15
  %v127 = vunpack.c.l.b16 %v16
  %v128 = vunpack.c.l.b16 %v17
  %v129 = vunpack.c.l.b16 %v18
  %v130 = vunpack.c.l.b16 %v19
  %v131 = vunpack.c.l.b16 %v20
  %v132 = vunpack.c.l.b16 %v21
  %v133 = vunpack.c.l.b16 %v22
  %v134 = vunpack.c.l.b16 %v23
  %v135 = vunpack.c.l.b16 %v24
  %v136 = vunpack.c.l.b16 %v25
  %v137 = vunpack.c.l.b16 %v26
  %v138 = vunpack.c.l.b16 %v27
  %v139 = vunpack.c.l.b16 %v28
  %v140 = vunpack.c.l.b16 %v29
  %v141 = vunpack.c.l.b16 %v30
  %v142 = vunpack.c.l.b16 %v31
  %v143 = vunpack.c.l.b16 %v32
  %v144 = vunpack.c.l.b16 %v33
  %v145 = vunpack.c.l.b16 %v34
  %v146 = vunpack.c.l.b16 %v35
  %v147 = vunpack.c.l.b16 %v36
  %v148 = vunpack.c.l.b16 %v37
  %v149 = vunpack.c.l.b16 %v38
  %v150 = vunpack.c.l.b16 %v39
  %v151 = vunpack.c.l.b16 %v40
  %v152 = vunpack.c.l.b16 %v41
  %v153 = vunpack.c.l.b16 %v42
  %v154 = vunpack.c.l.b16 %v43
  %v155 = vunpack.c.l.b16 %v44
  %v156 = vunpack.c.l.b16 %v45
  %v157 = vunpack.c.l.b16 %v46
  %v158 = vunpack.c.l.b16 %v47
  %v159 = vunpack.c.l.b16 %v48
  %v160 = vunpack.c.l.b16 %v49
  %v161 = vunpack.c.l.b16 %v50
  %v162 = vunpack.c.l.b16 %v51
  %v163 = vunpack.c.l.b16 %v52
  %v164 = vunpack.c.l.b16 %v53
  %v165 = vunpack.c.l.b16 %v54
  %v166 = vunpack.c.l.b16 %v55
  %v167 = vunpack.c.l.b16 %v56
  %v168 = vunpack.c.l.b16 %v57
  %v169 = vunpack.c.l.b16 %v58
  %v170 = vunpack.c.l.b16 %v59
  %v171 = vunpack.c.l.b16 %v60
  %v172 = vunpack.c.l.b16 %v61
  %v173 = vunpack.c.l.b16 %v62
  %v174 = vunpack.c.l.b16 %v63
  %v175 = vunpack.c.l.b16 %v64
  %v176 = vpack.c.b16 %v127, %v126
  %v177 = vpack.c.b16 %v129, %v128
  %v178 = vpack.c.b16 %v131, %v130
  %v179 = vpack.c.b16 %v133, %v132
  %v180 = vpack.c.b16 %v135, %v134
  %v181 = vpack.c.b16 %v137, %v136
  %v182 = vpack.c.b16 %v139, %v138
  %v183 = vpack.c.b16 %v141, %v140
  %v184 = vpack.c.b16 %v143, %v142
  %v185 = vpack.c.b16 %v145, %v144
  %v186 = vpack.c.b16 %v147, %v146
  %v187 = vpack.c.b16 %v149, %v148
  %v188 = vpack.c.b16 %v151, %v150
  %v189 = vpack.c.b16 %v153, %v152
  %v190 = vpack.c.b16 %v155, %v154
  %v191 = vpack.c.b16 %v157, %v156
  %v192 = vpack.c.b16 %v159, %v158
  %v193 = vpack.c.b16 %v161, %v160
  %v194 = vpack.c.b16 %v163, %v162
  %v195 = vpack.c.b16 %v165, %v164
  %v196 = vpack.c.b16 %v167, %v166
  %v197 = vpack.c.b16 %v169, %v168
  %v198 = vpack.c.b16 %v171, %v170
  %v199 = vpack.c.b16 %v173, %v172
  %v200 = vpack.c.b16 %v175, %v174
  %v205 = vunpack.c.l.b16 %v65
  %v206 = vunpack.c.l.b16 %v66
  %v207 = vunpack.c.l.b16 %v67
  %v208 = vunpack.c.l.b16 %v68
  %v209 = vpack.c.b16 %v206, %v205
  %v210 = vpack.c.b16 %v208, %v207
  %vm212 = vcmask 220160
  %v214 = vsel %vm212, %v176, 0
  %v217 = vsel %vm212, %v177, 0
  %v220 = vsel %vm212, %v178, 0
  %v223 = vsel %vm212, %v179, 0
  %v226 = vsel %vm212, %v180, 0
  %v229 = vsel %vm212, %v181, 0
  %v232 = vsel %vm212, %v182, 0
  %v235 = vsel %vm212, %v183, 0
  %v238 = vsel %vm212, %v184, 0
  %v241 = vsel %vm212, %v185, 0
  %v244 = vsel %vm212, %v186, 0
  %v247 = vsel %vm212, %v187, 0
  %v250 = vsel %vm212, %v188, 0
  %v253 = vsel %vm212, %v189, 0
  %v256 = vsel %vm212, %v190, 0
  %v259 = vsel %vm212, %v191, 0
  %v262 = vsel %vm212, %v192, 0
  %v265 = vsel %vm212, %v193, 0
  %v268 = vsel %vm212, %v194, 0
  %v271 = vsel %vm212, %v195, 0
  %v274 = vsel %vm212, %v196, 0
  %v277 = vsel %vm212, %v197, 0
  %v280 = vsel %vm212, %v198, 0
  %v283 = vsel %vm212, %v199, 0
  %v286 = vsel %vm212, %v200, 0
  %vm288 = vcmask 1044480
  %vm289 = vcmask 1045504
  %v290 = vsel %vm288, 4294967295, 65535
  %v291 = vsel %vm289, %v290, 0
  %v293 = vand.u32 %v210, %v291
  %295 = vmatprep.subr.bf16.mxu0 0
  %296 = vmatpush1.bf16.msra.mxu0 %v209
  %297 = vmatprep.subr.bf16.mxu0 0
  %298 = vmatpush1.bf16.msra.mxu0 %v293
  %299 = vmatprep.subr.bf16.mxu0 0
  %300 = vmatpush1.bf16.msra.mxu0 0
  %301 = vmatprep.subr.bf16.mxu0 0
  %302 = vmatpush1.bf16.msra.mxu0 0
  %303 = vmatprep.subr.bf16.mxu0 0
  %304 = vmatpush1.bf16.msra.mxu0 0
  %305 = vmatprep.subr.bf16.mxu0 0
  %306 = vmatpush1.bf16.msra.mxu0 0
  %307 = vmatprep.subr.bf16.mxu0 0
  %308 = vmatpush1.bf16.msra.mxu0 0
  %309 = vmatprep.subr.bf16.mxu0 0
  %310 = vmatpush1.bf16.msra.mxu0 0
  %311 = vmatprep.subr.bf16.mxu0 0
  %312 = vmatpush1.bf16.msra.mxu0 0
  %313 = vmatprep.subr.bf16.mxu0 0
  %314 = vmatpush1.bf16.msra.mxu0 0
  %315 = vmatprep.subr.bf16.mxu0 0
  %316 = vmatpush1.bf16.msra.mxu0 0
  %317 = vmatprep.subr.bf16.mxu0 0
  %318 = vmatpush1.bf16.msra.mxu0 0
  %319 = vmatprep.subr.bf16.mxu0 0
  %320 = vmatpush1.bf16.msra.mxu0 0
  %321 = vmatprep.subr.bf16.mxu0 0
  %322 = vmatpush1.bf16.msra.mxu0 0
  %323 = vmatprep.subr.bf16.mxu0 0
  %324 = vmatpush1.bf16.msra.mxu0 0
  %325 = vmatprep.subr.bf16.mxu0 0
  %326 = vmatpush1.bf16.msra.mxu0 0
  %327 = vmatprep.mubr.bf16.mxu0 0
  %328 = vmatmul.mubr.bf16.gmra.mrb[0].mxu0 %v214
  %v329 = vpop.f32.mrb[0].mxu0
  %v330 = vadd.f32 %v74, %v329
  %v331 = vpop.f32.mrb[0].mxu0
  %v332 = vpop.f32.mrb[0].mxu0
  %v333 = vadd.f32 %v74, %v332
  %v334 = vpop.f32.mrb[0].mxu0
  %335 = vmatprep.mubr.bf16.mxu0 0
  %336 = vmatmul.mubr.bf16.gmra.mrb[0].mxu0 %v217
  %v337 = vpop.f32.mrb[0].mxu0
  %v338 = vadd.f32 %v74, %v337
  %v339 = vpop.f32.mrb[0].mxu0
  %v340 = vpop.f32.mrb[0].mxu0
  %v341 = vadd.f32 %v74, %v340
  %v342 = vpop.f32.mrb[0].mxu0
  %343 = vmatprep.mubr.bf16.mxu0 0
  %344 = vmatmul.mubr.bf16.gmra.mrb[0].mxu0 %v220
  %v345 = vpop.f32.mrb[0].mxu0
  %v346 = vadd.f32 %v74, %v345
  %v347 = vpop.f32.mrb[0].mxu0
  %v348 = vpop.f32.mrb[0].mxu0
  %v349 = vadd.f32 %v74, %v348
  %v350 = vpop.f32.mrb[0].mxu0
  %351 = vmatprep.mubr.bf16.mxu0 0
  %352 = vmatmul.mubr.bf16.gmra.mrb[0].mxu0 %v223
  %v353 = vpop.f32.mrb[0].mxu0
  %v354 = vadd.f32 %v74, %v353
  %v355 = vpop.f32.mrb[0].mxu0
  %v356 = vpop.f32.mrb[0].mxu0
  %v357 = vadd.f32 %v74, %v356
  %v358 = vpop.f32.mrb[0].mxu0
  %359 = vmatprep.mubr.bf16.mxu0 0
  %360 = vmatmul.mubr.bf16.gmra.mrb[0].mxu0 %v226
  %v361 = vpop.f32.mrb[0].mxu0
  %v362 = vadd.f32 %v74, %v361
  %v363 = vpop.f32.mrb[0].mxu0
  %v364 = vpop.f32.mrb[0].mxu0
  %v365 = vadd.f32 %v74, %v364
  %v366 = vpop.f32.mrb[0].mxu0
  %367 = vmatprep.mubr.bf16.mxu0 0
  %368 = vmatmul.mubr.bf16.gmra.mrb[0].mxu0 %v229
  %v369 = vpop.f32.mrb[0].mxu0
  %v370 = vadd.f32 %v74, %v369
  %v371 = vpop.f32.mrb[0].mxu0
  %v372 = vpop.f32.mrb[0].mxu0
  %v373 = vadd.f32 %v74, %v372
  %v374 = vpop.f32.mrb[0].mxu0
  %375 = vmatprep.mubr.bf16.mxu0 0
  %376 = vmatmul.mubr.bf16.gmra.mrb[0].mxu0 %v232
  %v377 = vpop.f32.mrb[0].mxu0
  %v378 = vadd.f32 %v74, %v377
  %v379 = vpop.f32.mrb[0].mxu0
  %v380 = vpop.f32.mrb[0].mxu0
  %v381 = vadd.f32 %v74, %v380
  %v382 = vpop.f32.mrb[0].mxu0
  %383 = vmatprep.mubr.bf16.mxu0 0
  %384 = vmatmul.mubr.bf16.gmra.mrb[0].mxu0 %v235
  %v385 = vpop.f32.mrb[0].mxu0
  %v386 = vadd.f32 %v74, %v385
  %v387 = vpop.f32.mrb[0].mxu0
  %v388 = vpop.f32.mrb[0].mxu0
  %v389 = vadd.f32 %v74, %v388
  %v390 = vpop.f32.mrb[0].mxu0
  %391 = vmatprep.mubr.bf16.mxu0 0
  %392 = vmatmul.mubr.bf16.gmra.mrb[0].mxu0 %v238
  %v393 = vpop.f32.mrb[0].mxu0
  %v394 = vadd.f32 %v74, %v393
  %v395 = vpop.f32.mrb[0].mxu0
  %v396 = vpop.f32.mrb[0].mxu0
  %v397 = vadd.f32 %v74, %v396
  %v398 = vpop.f32.mrb[0].mxu0
  %399 = vmatprep.mubr.bf16.mxu0 0
  %400 = vmatmul.mubr.bf16.gmra.mrb[0].mxu0 %v241
  %v401 = vpop.f32.mrb[0].mxu0
  %v402 = vadd.f32 %v74, %v401
  %v403 = vpop.f32.mrb[0].mxu0
  %v404 = vpop.f32.mrb[0].mxu0
  %v405 = vadd.f32 %v74, %v404
  %v406 = vpop.f32.mrb[0].mxu0
  %407 = vmatprep.mubr.bf16.mxu0 0
  %408 = vmatmul.mubr.bf16.gmra.mrb[0].mxu0 %v244
  %v409 = vpop.f32.mrb[0].mxu0
  %v410 = vadd.f32 %v74, %v409
  %v411 = vpop.f32.mrb[0].mxu0
  %v412 = vpop.f32.mrb[0].mxu0
  %v413 = vadd.f32 %v74, %v412
  %v414 = vpop.f32.mrb[0].mxu0
  %415 = vmatprep.mubr.bf16.mxu0 0
  %416 = vmatmul.mubr.bf16.gmra.mrb[0].mxu0 %v247
  %v417 = vpop.f32.mrb[0].mxu0
  %v418 = vadd.f32 %v74, %v417
  %v419 = vpop.f32.mrb[0].mxu0
  %v420 = vpop.f32.mrb[0].mxu0
  %v421 = vadd.f32 %v74, %v420
  %v422 = vpop.f32.mrb[0].mxu0
  %423 = vmatprep.mubr.bf16.mxu0 0
  %424 = vmatmul.mubr.bf16.gmra.mrb[0].mxu0 %v250
  %v425 = vpop.f32.mrb[0].mxu0
  %v426 = vadd.f32 %v74, %v425
  %v427 = vpop.f32.mrb[0].mxu0
  %v428 = vpop.f32.mrb[0].mxu0
  %v429 = vadd.f32 %v74, %v428
  %v430 = vpop.f32.mrb[0].mxu0
  %431 = vmatprep.mubr.bf16.mxu0 0
  %432 = vmatmul.mubr.bf16.gmra.mrb[0].mxu0 %v253
  %v433 = vpop.f32.mrb[0].mxu0
  %v434 = vadd.f32 %v74, %v433
  %v435 = vpop.f32.mrb[0].mxu0
  %v436 = vpop.f32.mrb[0].mxu0
  %v437 = vadd.f32 %v74, %v436
  %v438 = vpop.f32.mrb[0].mxu0
  %439 = vmatprep.mubr.bf16.mxu0 0
  %440 = vmatmul.mubr.bf16.gmra.mrb[0].mxu0 %v256
  %v441 = vpop.f32.mrb[0].mxu0
  %v442 = vadd.f32 %v74, %v441
  %v443 = vpop.f32.mrb[0].mxu0
  %v444 = vpop.f32.mrb[0].mxu0
  %v445 = vadd.f32 %v74, %v444
  %v446 = vpop.f32.mrb[0].mxu0
  %447 = vmatprep.mubr.bf16.mxu0 0
  %448 = vmatmul.mubr.bf16.gmra.mrb[0].mxu0 %v259
  %v449 = vpop.f32.mrb[0].mxu0
  %v450 = vadd.f32 %v74, %v449
  %v451 = vpop.f32.mrb[0].mxu0
  %v452 = vpop.f32.mrb[0].mxu0
  %v453 = vadd.f32 %v74, %v452
  %v454 = vpop.f32.mrb[0].mxu0
  %455 = vmatprep.mubr.bf16.mxu0 0
  %456 = vmatmul.mubr.bf16.gmra.mrb[0].mxu0 %v262
  %v457 = vpop.f32.mrb[0].mxu0
  %v458 = vadd.f32 %v74, %v457
  %v459 = vpop.f32.mrb[0].mxu0
  %v460 = vpop.f32.mrb[0].mxu0
  %v461 = vadd.f32 %v74, %v460
  %v462 = vpop.f32.mrb[0].mxu0
  %463 = vmatprep.mubr.bf16.mxu0 0
  %464 = vmatmul.mubr.bf16.gmra.mrb[0].mxu0 %v265
  %v465 = vpop.f32.mrb[0].mxu0
  %v466 = vadd.f32 %v74, %v465
  %v467 = vpop.f32.mrb[0].mxu0
  %v468 = vpop.f32.mrb[0].mxu0
  %v469 = vadd.f32 %v74, %v468
  %v470 = vpop.f32.mrb[0].mxu0
  %471 = vmatprep.mubr.bf16.mxu0 0
  %472 = vmatmul.mubr.bf16.gmra.mrb[0].mxu0 %v268
  %v473 = vpop.f32.mrb[0].mxu0
  %v474 = vadd.f32 %v74, %v473
  %v475 = vpop.f32.mrb[0].mxu0
  %v476 = vpop.f32.mrb[0].mxu0
  %v477 = vadd.f32 %v74, %v476
  %v478 = vpop.f32.mrb[0].mxu0
  %479 = vmatprep.mubr.bf16.mxu0 0
  %480 = vmatmul.mubr.bf16.gmra.mrb[0].mxu0 %v271
  %v481 = vpop.f32.mrb[0].mxu0
  %v482 = vadd.f32 %v74, %v481
  %v483 = vpop.f32.mrb[0].mxu0
  %v484 = vpop.f32.mrb[0].mxu0
  %v485 = vadd.f32 %v74, %v484
  %v486 = vpop.f32.mrb[0].mxu0
  %487 = vmatprep.mubr.bf16.mxu0 0
  %488 = vmatmul.mubr.bf16.gmra.mrb[0].mxu0 %v274
  %v489 = vpop.f32.mrb[0].mxu0
  %v490 = vadd.f32 %v74, %v489
  %v491 = vpop.f32.mrb[0].mxu0
  %v492 = vpop.f32.mrb[0].mxu0
  %v493 = vadd.f32 %v74, %v492
  %v494 = vpop.f32.mrb[0].mxu0
  %495 = vmatprep.mubr.bf16.mxu0 0
  %496 = vmatmul.mubr.bf16.gmra.mrb[0].mxu0 %v277
  %v497 = vpop.f32.mrb[0].mxu0
  %v498 = vadd.f32 %v74, %v497
  %v499 = vpop.f32.mrb[0].mxu0
  %v500 = vpop.f32.mrb[0].mxu0
  %v501 = vadd.f32 %v74, %v500
  %v502 = vpop.f32.mrb[0].mxu0
  %503 = vmatprep.mubr.bf16.mxu0 0
  %504 = vmatmul.mubr.bf16.gmra.mrb[0].mxu0 %v280
  %v505 = vpop.f32.mrb[0].mxu0
  %v506 = vadd.f32 %v74, %v505
  %v507 = vpop.f32.mrb[0].mxu0
  %v508 = vpop.f32.mrb[0].mxu0
  %v509 = vadd.f32 %v74, %v508
  %v510 = vpop.f32.mrb[0].mxu0
  %511 = vmatprep.mubr.bf16.mxu0 0
  %512 = vmatmul.mubr.bf16.gmra.mrb[0].mxu0 %v283
  %v513 = vpop.f32.mrb[0].mxu0
  %v514 = vadd.f32 %v74, %v513
  %v515 = vpop.f32.mrb[0].mxu0
  %v516 = vpop.f32.mrb[0].mxu0
  %v517 = vadd.f32 %v74, %v516
  %v518 = vpop.f32.mrb[0].mxu0
  %519 = vmatprep.mubr.bf16.mxu0 0
  %520 = vmatmul.mubr.bf16.gmra.mrb[0].mxu0 %v286
  %v521 = vpop.f32.mrb[0].mxu0
  %v522 = vadd.f32 %v74, %v521
  %v523 = vpop.f32.mrb[0].mxu0
  %v524 = vpop.f32.mrb[0].mxu0
  %v525 = vadd.f32 %v74, %v524
  %v526 = vpop.f32.mrb[0].mxu0
  %527 = vdwg.mxu0
  %v528 = vmax.f32 %v330, 0.0
  %v529 = vmax.f32 %v333, 0.0
  %v530 = vmax.f32 %v338, 0.0
  %v531 = vmax.f32 %v341, 0.0
  %v532 = vmax.f32 %v346, 0.0
  %v533 = vmax.f32 %v349, 0.0
  %v534 = vmax.f32 %v354, 0.0
  %v535 = vmax.f32 %v357, 0.0
  %v536 = vmax.f32 %v362, 0.0
  %v537 = vmax.f32 %v365, 0.0
  %v538 = vmax.f32 %v370, 0.0
  %v539 = vmax.f32 %v373, 0.0
  %v540 = vmax.f32 %v378, 0.0
  %v541 = vmax.f32 %v381, 0.0
  %v542 = vmax.f32 %v386, 0.0
  %v543 = vmax.f32 %v389, 0.0
  %v544 = vmax.f32 %v394, 0.0
  %v545 = vmax.f32 %v397, 0.0
  %v546 = vmax.f32 %v402, 0.0
  %v547 = vmax.f32 %v405, 0.0
  %v548 = vmax.f32 %v410, 0.0
  %v549 = vmax.f32 %v413, 0.0
  %v550 = vmax.f32 %v418, 0.0
  %v551 = vmax.f32 %v421, 0.0
  %v552 = vmax.f32 %v426, 0.0
  %v553 = vmax.f32 %v429, 0.0
  %v554 = vmax.f32 %v434, 0.0
  %v555 = vmax.f32 %v437, 0.0
  %v556 = vmax.f32 %v442, 0.0
  %v557 = vmax.f32 %v445, 0.0
  %v558 = vmax.f32 %v450, 0.0
  %v559 = vmax.f32 %v453, 0.0
  %v560 = vmax.f32 %v458, 0.0
  %v561 = vmax.f32 %v461, 0.0
  %v562 = vmax.f32 %v466, 0.0
  %v563 = vmax.f32 %v469, 0.0
  %v564 = vmax.f32 %v474, 0.0
  %v565 = vmax.f32 %v477, 0.0
  %v566 = vmax.f32 %v482, 0.0
  %v567 = vmax.f32 %v485, 0.0
  %v568 = vmax.f32 %v490, 0.0
  %v569 = vmax.f32 %v493, 0.0
  %v570 = vmax.f32 %v498, 0.0
  %v571 = vmax.f32 %v501, 0.0
  %v572 = vmax.f32 %v506, 0.0
  %v573 = vmax.f32 %v509, 0.0
  %v574 = vmax.f32 %v514, 0.0
  %v575 = vmax.f32 %v517, 0.0
  %v576 = vmax.f32 %v522, 0.0
  %v577 = vmax.f32 %v525, 0.0
  %v578 = vpack.c.bf16 %v529, %v528
  %v579 = vpack.c.bf16 %v531, %v530
  %v580 = vpack.c.bf16 %v533, %v532
  %v581 = vpack.c.bf16 %v535, %v534
  %v582 = vpack.c.bf16 %v537, %v536
  %v583 = vpack.c.bf16 %v539, %v538
  %v584 = vpack.c.bf16 %v541, %v540
  %v585 = vpack.c.bf16 %v543, %v542
  %v586 = vpack.c.bf16 %v545, %v544
  %v587 = vpack.c.bf16 %v547, %v546
  %v588 = vpack.c.bf16 %v549, %v548
  %v589 = vpack.c.bf16 %v551, %v550
  %v590 = vpack.c.bf16 %v553, %v552
  %v591 = vpack.c.bf16 %v555, %v554
  %v592 = vpack.c.bf16 %v557, %v556
  %v593 = vpack.c.bf16 %v559, %v558
  %v594 = vpack.c.bf16 %v561, %v560
  %v595 = vpack.c.bf16 %v563, %v562
  %v596 = vpack.c.bf16 %v565, %v564
  %v597 = vpack.c.bf16 %v567, %v566
  %v598 = vpack.c.bf16 %v569, %v568
  %v599 = vpack.c.bf16 %v571, %v570
  %v600 = vpack.c.bf16 %v573, %v572
  %v601 = vpack.c.bf16 %v575, %v574
  %v602 = vpack.c.bf16 %v577, %v576
  %v628 = vunpack.c.l.b16 %v578
  %v629 = vunpack.c.h.b16 %v578
  %v630 = vunpack.c.l.b16 %v579
  %v631 = vunpack.c.h.b16 %v579
  %v632 = vunpack.c.l.b16 %v580
  %v633 = vunpack.c.h.b16 %v580
  %v634 = vunpack.c.l.b16 %v581
  %v635 = vunpack.c.h.b16 %v581
  %v636 = vunpack.c.l.b16 %v582
  %v637 = vunpack.c.h.b16 %v582
  %v638 = vunpack.c.l.b16 %v583
  %v639 = vunpack.c.h.b16 %v583
  %v640 = vunpack.c.l.b16 %v584
  %v641 = vunpack.c.h.b16 %v584
  %v642 = vunpack.c.l.b16 %v585
  %v643 = vunpack.c.h.b16 %v585
  %v644 = vunpack.c.l.b16 %v586
  %v645 = vunpack.c.h.b16 %v586
  %v646 = vunpack.c.l.b16 %v587
  %v647 = vunpack.c.h.b16 %v587
  %v648 = vunpack.c.l.b16 %v588
  %v649 = vunpack.c.h.b16 %v588
  %v650 = vunpack.c.l.b16 %v589
  %v651 = vunpack.c.h.b16 %v589
  %v652 = vunpack.c.l.b16 %v590
  %v653 = vunpack.c.h.b16 %v590
  %v654 = vunpack.c.l.b16 %v591
  %v655 = vunpack.c.h.b16 %v591
  %v656 = vunpack.c.l.b16 %v592
  %v657 = vunpack.c.h.b16 %v592
  %v658 = vunpack.c.l.b16 %v593
  %v659 = vunpack.c.h.b16 %v593
  %v660 = vunpack.c.l.b16 %v594
  %v661 = vunpack.c.h.b16 %v594
  %v662 = vunpack.c.l.b16 %v595
  %v663 = vunpack.c.h.b16 %v595
  %v664 = vunpack.c.l.b16 %v596
  %v665 = vunpack.c.h.b16 %v596
  %v666 = vunpack.c.l.b16 %v597
  %v667 = vunpack.c.h.b16 %v597
  %v668 = vunpack.c.l.b16 %v598
  %v669 = vunpack.c.h.b16 %v598
  %v670 = vunpack.c.l.b16 %v599
  %v671 = vunpack.c.h.b16 %v599
  %v672 = vunpack.c.l.b16 %v600
  %v673 = vunpack.c.h.b16 %v600
  %v674 = vunpack.c.l.b16 %v601
  %v675 = vunpack.c.h.b16 %v601
  %v676 = vunpack.c.l.b16 %v602
  %v677 = vunpack.c.h.b16 %v602
  %v678 = vpack.c.b16 %v628, %v628
  %v679 = vpack.c.b16 %v629, %v629
  %v680 = vpack.c.b16 %v630, %v630
  %v681 = vpack.c.b16 %v631, %v631
  %v682 = vpack.c.b16 %v632, %v632
  %v683 = vpack.c.b16 %v633, %v633
  %v684 = vpack.c.b16 %v634, %v634
  %v685 = vpack.c.b16 %v635, %v635
  %v686 = vpack.c.b16 %v636, %v636
  %v687 = vpack.c.b16 %v637, %v637
  %v688 = vpack.c.b16 %v638, %v638
  %v689 = vpack.c.b16 %v639, %v639
  %v690 = vpack.c.b16 %v640, %v640
  %v691 = vpack.c.b16 %v641, %v641
  %v692 = vpack.c.b16 %v642, %v642
  %v693 = vpack.c.b16 %v643, %v643
  %v694 = vpack.c.b16 %v644, %v644
  %v695 = vpack.c.b16 %v645, %v645
  %v696 = vpack.c.b16 %v646, %v646
  %v697 = vpack.c.b16 %v647, %v647
  %v698 = vpack.c.b16 %v648, %v648
  %v699 = vpack.c.b16 %v649, %v649
  %v700 = vpack.c.b16 %v650, %v650
  %v701 = vpack.c.b16 %v651, %v651
  %v702 = vpack.c.b16 %v652, %v652
  %v703 = vpack.c.b16 %v653, %v653
  %v704 = vpack.c.b16 %v654, %v654
  %v705 = vpack.c.b16 %v655, %v655
  %v706 = vpack.c.b16 %v656, %v656
  %v707 = vpack.c.b16 %v657, %v657
  %v708 = vpack.c.b16 %v658, %v658
  %v709 = vpack.c.b16 %v659, %v659
  %v710 = vpack.c.b16 %v660, %v660
  %v711 = vpack.c.b16 %v661, %v661
  %v712 = vpack.c.b16 %v662, %v662
  %v713 = vpack.c.b16 %v663, %v663
  %v714 = vpack.c.b16 %v664, %v664
  %v715 = vpack.c.b16 %v665, %v665
  %v716 = vpack.c.b16 %v666, %v666
  %v717 = vpack.c.b16 %v667, %v667
  %v718 = vpack.c.b16 %v668, %v668
  %v719 = vpack.c.b16 %v669, %v669
  %v720 = vpack.c.b16 %v670, %v670
  %v721 = vpack.c.b16 %v671, %v671
  %v722 = vpack.c.b16 %v672, %v672
  %v723 = vpack.c.b16 %v673, %v673
  %v724 = vpack.c.b16 %v674, %v674
  %v725 = vpack.c.b16 %v675, %v675
  %v726 = vpack.c.b16 %v676, %v676
  %v727 = vpack.c.b16 %v677, %v677
  %vm778 = vcmask 519168
  %779 = vst.msk [vmem:[%s3] sm:$0xf] %vm778, %v678
  %780 = vst.msk [vmem:[%s3 + $0x4] sm:$0xf] %vm778, %v679
  %781 = vst.msk [vmem:[%s3 + $0x8] sm:$0xf] %vm778, %v680
  %782 = vst.msk [vmem:[%s3 + $0xc] sm:$0xf] %vm778, %v681
  %783 = vst.msk [vmem:[%s3 + $0x10] sm:$0xf] %vm778, %v682
  %784 = vst.msk [vmem:[%s3 + $0x14] sm:$0xf] %vm778, %v683
  %785 = vst.msk [vmem:[%s3 + $0x18] sm:$0xf] %vm778, %v684
  %786 = vst.msk [vmem:[%s3 + $0x1c] sm:$0xf] %vm778, %v685
  %787 = vst.msk [vmem:[%s3 + $0x20] sm:$0xf] %vm778, %v686
  %788 = vst.msk [vmem:[%s3 + $0x24] sm:$0xf] %vm778, %v687
  %789 = vst.msk [vmem:[%s3 + $0x28] sm:$0xf] %vm778, %v688
  %790 = vst.msk [vmem:[%s3 + $0x2c] sm:$0xf] %vm778, %v689
  %791 = vst.msk [vmem:[%s3 + $0x30] sm:$0xf] %vm778, %v690
  %792 = vst.msk [vmem:[%s3 + $0x34] sm:$0xf] %vm778, %v691
  %793 = vst.msk [vmem:[%s3 + $0x38] sm:$0xf] %vm778, %v692
  %794 = vst.msk [vmem:[%s3 + $0x3c] sm:$0xf] %vm778, %v693
  %795 = vst.msk [vmem:[%s3 + $0x40] sm:$0xf] %vm778, %v694
  %796 = vst.msk [vmem:[%s3 + $0x44] sm:$0xf] %vm778, %v695
  %797 = vst.msk [vmem:[%s3 + $0x48] sm:$0xf] %vm778, %v696
  %798 = vst.msk [vmem:[%s3 + $0x4c] sm:$0xf] %vm778, %v697
  %799 = vst.msk [vmem:[%s3 + $0x50] sm:$0xf] %vm778, %v698
  %800 = vst.msk [vmem:[%s3 + $0x54] sm:$0xf] %vm778, %v699
  %801 = vst.msk [vmem:[%s3 + $0x58] sm:$0xf] %vm778, %v700
  %802 = vst.msk [vmem:[%s3 + $0x5c] sm:$0xf] %vm778, %v701
  %803 = vst.msk [vmem:[%s3 + $0x60] sm:$0xf] %vm778, %v702
  %804 = vst.msk [vmem:[%s3 + $0x64] sm:$0xf] %vm778, %v703
  %805 = vst.msk [vmem:[%s3 + $0x68] sm:$0xf] %vm778, %v704
  %806 = vst.msk [vmem:[%s3 + $0x6c] sm:$0xf] %vm778, %v705
  %807 = vst.msk [vmem:[%s3 + $0x70] sm:$0xf] %vm778, %v706
  %808 = vst.msk [vmem:[%s3 + $0x74] sm:$0xf] %vm778, %v707
  %809 = vst.msk [vmem:[%s3 + $0x78] sm:$0xf] %vm778, %v708
  %810 = vst.msk [vmem:[%s3 + $0x7c] sm:$0xf] %vm778, %v709
  %811 = vst.msk [vmem:[%s3 + $0x80] sm:$0xf] %vm778, %v710
  %812 = vst.msk [vmem:[%s3 + $0x84] sm:$0xf] %vm778, %v711
  %813 = vst.msk [vmem:[%s3 + $0x88] sm:$0xf] %vm778, %v712
  %814 = vst.msk [vmem:[%s3 + $0x8c] sm:$0xf] %vm778, %v713
  %815 = vst.msk [vmem:[%s3 + $0x90] sm:$0xf] %vm778, %v714
  %816 = vst.msk [vmem:[%s3 + $0x94] sm:$0xf] %vm778, %v715
  %817 = vst.msk [vmem:[%s3 + $0x98] sm:$0xf] %vm778, %v716
  %818 = vst.msk [vmem:[%s3 + $0x9c] sm:$0xf] %vm778, %v717
  %819 = vst.msk [vmem:[%s3 + $0xa0] sm:$0xf] %vm778, %v718
  %820 = vst.msk [vmem:[%s3 + $0xa4] sm:$0xf] %vm778, %v719
  %821 = vst.msk [vmem:[%s3 + $0xa8] sm:$0xf] %vm778, %v720
  %822 = vst.msk [vmem:[%s3 + $0xac] sm:$0xf] %vm778, %v721
  %823 = vst.msk [vmem:[%s3 + $0xb0] sm:$0xf] %vm778, %v722
  %824 = vst.msk [vmem:[%s3 + $0xb4] sm:$0xf] %vm778, %v723
  %825 = vst.msk [vmem:[%s3 + $0xb8] sm:$0xf] %vm778, %v724
  %826 = vst.msk [vmem:[%s3 + $0xbc] sm:$0xf] %vm778, %v725
  %827 = vst.msk [vmem:[%s3 + $0xc0] sm:$0xf] %vm778, %v726
  %828 = vst.msk [vmem:[%s3 + $0xc4] sm:$0xf] %vm778, %v727
  // Predicated region
  $region14: #{goturn_forward.2} parent=0 // pred_check
    _
  $region15: #{goturn_forward.2} parent=0 // pred_check_branch
    %830 = sbr.rel (0) target = $region17
  $region16: #{goturn_forward.2} parent=0 // pred_region
    _
  $region17: #{goturn_forward.2} parent=0 // pred_fallthru
    _
  // Predicated region
  $region18: #{goturn_forward.2} parent=0 // pred_check
    _
  $region19: #{goturn_forward.2} parent=0 // pred_check_branch
    %832 = sbr.rel (0) target = $region21
  $region20: #{goturn_forward.2} parent=0 // pred_region
    _
  $region21: #{goturn_forward.2} parent=0 // pred_fallthru
    _

// kernel: goturn_forward.3
$region0: #{goturn_forward.3}
  #allocation0 [shape = 'u32[]', space=smem, size = 0x4, offset = 0x4, fixed_abs, tag = 'smem constant byte address 0x4 - core index']
  #allocation1 [shape = 'u32[144,128]{1,0:T(1,128)}', space=vmem, size = 0x12000, scoped, tag = 'internal scratch']
  #allocation2 [shape = 'bf16[224,32]{1,0:T(16,128)(2,1)}', space=vmem, size = 0xe000, scoped, tag = 'scratch operand']
  #allocation3 [shape = 'bf16[224,32]{1,0:T(16,128)(2,1)}', space=vmem, size = 0xe000, scoped, tag = 'scratch operand']
  #allocation4 [shape = 'bf16[224,32]{1,0:T(16,128)(2,1)}', space=vmem, size = 0xe000, scoped, tag = 'scratch operand']
  #allocation5 [shape = 'bf16[112,32]{1,0:T(16,128)(2,1)}', space=vmem, size = 0x7000, scoped, tag = 'scratch operand']
  #allocation6 [shape = 'bf16[112,32]{1,0:T(16,128)(2,1)}', space=vmem, size = 0x7000, scoped, tag = 'scratch operand']
  #allocation7 [shape = 'f32[112,32]{1,0:T(8,128)}', space=vmem, size = 0xe000, scoped, tag = 'scratch operand']
  %s0 = inlined_call_operand.vmem [shape: bf16[224,64], index: 0, kind: input, shape index: {}]
  %s1 = inlined_call_operand.vmem [shape: bf16[576,32], index: 1, kind: input, shape index: {}]
  %s2 = inlined_call_operand.vmem [shape: f32[1,32], index: 2, kind: input, shape index: {}]
  %s3 = inlined_call_operand.vmem [shape: bf16[288,32], index: 3, kind: input, shape index: {}]
  %s4 = inlined_call_operand.vmem [shape: f32[1,32], index: 4, kind: input, shape index: {}]
  %s5 = inlined_call_operand.vmem [shape: bf16[288,32], index: 5, kind: input, shape index: {}]
  %s6 = inlined_call_operand.vmem [shape: f32[1,32], index: 6, kind: input, shape index: {}]
  %s7 = inlined_call_operand.vmem [shape: bf16[576,32], index: 7, kind: input, shape index: {}]
  %s8 = inlined_call_operand.vmem [shape: f32[1,32], index: 8, kind: input, shape index: {}]
  %s9 = inlined_call_operand.vmem [shape: bf16[288,32], index: 9, kind: input, shape index: {}]
  %s10 = inlined_call_operand.vmem [shape: f32[1,32], index: 10, kind: input, shape index: {}]
  %s11 = inlined_call_operand.vmem [shape: bf16[288,32], index: 11, kind: input, shape index: {}]
  %s12 = inlined_call_operand.vmem [shape: f32[1,32], index: 12, kind: input, shape index: {}]
  %s13 = inlined_call_operand.vmem [shape: f32[206,1], index: 13, kind: input, shape index: {}]
  %s14 = inlined_call_operand.vmem [shape: f32[94,1], index: 14, kind: input, shape index: {}]
  %s15 = inlined_call_operand.vmem [shape: bf16[32,32], index: 15, kind: input, shape index: {}]
  %s16 = inlined_call_operand.vmem [shape: f32[1,32], index: 16, kind: input, shape index: {}]
  %s17 = inlined_call_operand.vmem [shape: bf16[32,4], index: 17, kind: input, shape index: {}]
  %s18 = inlined_call_operand.vmem [shape: f32[1,4], index: 18, kind: input, shape index: {}]
  %s19 = inlined_call_operand.hbm [shape: f32[2,4], index: 19, kind: output, shape index: {}]
  %s20 = sld [smem:[#allocation0]]
  $region86: #{goturn_forward.3} parent=0
    _
  %s22 = ssub.s32 1, %s20
  %s23 = scalar_select 0, %s22, %s20
  $region1: #{goturn_forward.3} parent=0
    #allocation8 [shape = 'u8[1024]{0}', space=vmem, size = 0x400, scoped, tag = 'output window, operand 0, single buffered']
    #allocation9 [shape = 's32[1]{0}', space=sflag, size = 0x4, scoped, tag = 'scoped memory for goturn_forward.3']
    %24 = vsyncpa [#allocation9], 0
    // Predicated region
    $region2: #{goturn_forward.3} parent=1 // pred_check
      _
    $region3: #{goturn_forward.3} parent=1 // pred_check_branch
      %26 = sbr.rel (0) target = $region5
    $region4: #{goturn_forward.3} parent=1 // pred_region
      _
    $region5: #{goturn_forward.3} parent=1 // pred_fallthru
      _
    // Predicated region
    $region6: #{goturn_forward.3} parent=1 // pred_check
      _
    $region7: #{goturn_forward.3} parent=1 // pred_check_branch
      %28 = sbr.rel (0) target = $region9
    $region8: #{goturn_forward.3} parent=1 // pred_region
      _
    $region9: #{goturn_forward.3} parent=1 // pred_fallthru
      _
    // Predicated region
    $region10: #{goturn_forward.3} parent=1 // pred_check
      _
    $region11: #{goturn_forward.3} parent=1 // pred_check_branch
      %30 = sbr.rel (0) target = $region13
    $region12: #{goturn_forward.3} parent=1 // pred_region
      _
    $region13: #{goturn_forward.3} parent=1 // pred_fallthru
      _
    // Predicated region
    $region14: #{goturn_forward.3} parent=1 // pred_check
      _
    $region15: #{goturn_forward.3} parent=1 // pred_check_branch
      %32 = sbr.rel (0) target = $region17
    $region16: #{goturn_forward.3} parent=1 // pred_region
      _
    $region17: #{goturn_forward.3} parent=1 // pred_fallthru
      _
    // Predicated region
    $region18: #{goturn_forward.3} parent=1 // pred_check
      _
    $region19: #{goturn_forward.3} parent=1 // pred_check_branch
      %34 = sbr.rel (0) target = $region21
    $region20: #{goturn_forward.3} parent=1 // pred_region
      _
    $region21: #{goturn_forward.3} parent=1 // pred_fallthru
      _
    // Predicated region
    $region22: #{goturn_forward.3} parent=1 // pred_check
      _
    $region23: #{goturn_forward.3} parent=1 // pred_check_branch
      %36 = sbr.rel (0) target = $region25
    $region24: #{goturn_forward.3} parent=1 // pred_region
      _
    $region25: #{goturn_forward.3} parent=1 // pred_fallthru
      _
    // Predicated region
    $region26: #{goturn_forward.3} parent=1 // pred_check
      _
    $region27: #{goturn_forward.3} parent=1 // pred_check_branch
      %38 = sbr.rel (0) target = $region29
    $region28: #{goturn_forward.3} parent=1 // pred_region
      _
    $region29: #{goturn_forward.3} parent=1 // pred_fallthru
      _
    // Predicated region
    $region30: #{goturn_forward.3} parent=1 // pred_check
      _
    $region31: #{goturn_forward.3} parent=1 // pred_check_branch
      %40 = sbr.rel (0) target = $region33
    $region32: #{goturn_forward.3} parent=1 // pred_region
      _
    $region33: #{goturn_forward.3} parent=1 // pred_fallthru
      _
    // Predicated region
    $region34: #{goturn_forward.3} parent=1 // pred_check
      _
    $region35: #{goturn_forward.3} parent=1 // pred_check_branch
      %42 = sbr.rel (0) target = $region37
    $region36: #{goturn_forward.3} parent=1 // pred_region
      _
    $region37: #{goturn_forward.3} parent=1 // pred_fallthru
      _
    // Predicated region
    $region38: #{goturn_forward.3} parent=1 // pred_check
      _
    $region39: #{goturn_forward.3} parent=1 // pred_check_branch
      %44 = sbr.rel (0) target = $region41
    $region40: #{goturn_forward.3} parent=1 // pred_region
      _
    $region41: #{goturn_forward.3} parent=1 // pred_fallthru
      _
    // Predicated region
    $region42: #{goturn_forward.3} parent=1 // pred_check
      _
    $region43: #{goturn_forward.3} parent=1 // pred_check_branch
      %46 = sbr.rel (0) target = $region45
    $region44: #{goturn_forward.3} parent=1 // pred_region
      _
    $region45: #{goturn_forward.3} parent=1 // pred_fallthru
      _
    // Predicated region
    $region46: #{goturn_forward.3} parent=1 // pred_check
      _
    $region47: #{goturn_forward.3} parent=1 // pred_check_branch
      %48 = sbr.rel (0) target = $region49
    $region48: #{goturn_forward.3} parent=1 // pred_region
      _
    $region49: #{goturn_forward.3} parent=1 // pred_fallthru
      _
    // Predicated region
    $region50: #{goturn_forward.3} parent=1 // pred_check
      _
    $region51: #{goturn_forward.3} parent=1 // pred_check_branch
      %50 = sbr.rel (0) target = $region53
    $region52: #{goturn_forward.3} parent=1 // pred_region
      _
    $region53: #{goturn_forward.3} parent=1 // pred_fallthru
      _
    // Predicated region
    $region54: #{goturn_forward.3} parent=1 // pred_check
      _
    $region55: #{goturn_forward.3} parent=1 // pred_check_branch
      %52 = sbr.rel (0) target = $region57
    $region56: #{goturn_forward.3} parent=1 // pred_region
      _
    $region57: #{goturn_forward.3} parent=1 // pred_fallthru
      _
    // Predicated region
    $region58: #{goturn_forward.3} parent=1 // pred_check
      _
    $region59: #{goturn_forward.3} parent=1 // pred_check_branch
      %54 = sbr.rel (0) target = $region61
    $region60: #{goturn_forward.3} parent=1 // pred_region
      _
    $region61: #{goturn_forward.3} parent=1 // pred_fallthru
      _
    // Predicated region
    $region62: #{goturn_forward.3} parent=1 // pred_check
      _
    $region63: #{goturn_forward.3} parent=1 // pred_check_branch
      %56 = sbr.rel (0) target = $region65
    $region64: #{goturn_forward.3} parent=1 // pred_region
      _
    $region65: #{goturn_forward.3} parent=1 // pred_fallthru
      _
    // Predicated region
    $region66: #{goturn_forward.3} parent=1 // pred_check
      _
    $region67: #{goturn_forward.3} parent=1 // pred_check_branch
      %58 = sbr.rel (0) target = $region69
    $region68: #{goturn_forward.3} parent=1 // pred_region
      _
    $region69: #{goturn_forward.3} parent=1 // pred_fallthru
      _
    // Predicated region
    $region70: #{goturn_forward.3} parent=1 // pred_check
      _
    $region71: #{goturn_forward.3} parent=1 // pred_check_branch
      %60 = sbr.rel (0) target = $region73
    $region72: #{goturn_forward.3} parent=1 // pred_region
      _
    $region73: #{goturn_forward.3} parent=1 // pred_fallthru
      _
    // Predicated region
    $region74: #{goturn_forward.3} parent=1 // pred_check
      _
    $region75: #{goturn_forward.3} parent=1 // pred_check_branch
      %62 = sbr.rel (0) target = $region77
    $region76: #{goturn_forward.3} parent=1 // pred_region
      _
    $region77: #{goturn_forward.3} parent=1 // pred_fallthru
      _
    %v64 = vld [vmem:[%s13] sm:$0xff]
    %v65 = vld [vmem:[%s13 + $0x8] sm:$0xff]
    %v66 = vld [vmem:[%s13 + $0x10] sm:$0xff]
    %v67 = vld [vmem:[%s13 + $0x18] sm:$0xff]
    %v68 = vld [vmem:[%s13 + $0x20] sm:$0xff]
    %v69 = vld [vmem:[%s13 + $0x28] sm:$0xff]
    %v70 = vld [vmem:[%s13 + $0x30] sm:$0xff]
    %v71 = vld [vmem:[%s13 + $0x38] sm:$0xff]
    %v72 = vld [vmem:[%s13 + $0x40] sm:$0xff]
    %v73 = vld [vmem:[%s13 + $0x48] sm:$0xff]
    %v74 = vld [vmem:[%s13 + $0x50] sm:$0xff]
    %v75 = vld [vmem:[%s13 + $0x58] sm:$0xff]
    %v76 = vld [vmem:[%s13 + $0x60] sm:$0xff]
    %v77 = vld [vmem:[%s13 + $0x68] sm:$0xff]
    %v78 = vld [vmem:[%s13 + $0x70] sm:$0xff]
    %v79 = vld [vmem:[%s13 + $0x78] sm:$0xff]
    %v80 = vld [vmem:[%s13 + $0x80] sm:$0xff]
    %v81 = vld [vmem:[%s13 + $0x88] sm:$0xff]
    %v82 = vld [vmem:[%s13 + $0x90] sm:$0xff]
    %v83 = vld [vmem:[%s13 + $0x98] sm:$0xff]
    %v84 = vld [vmem:[%s13 + $0xa0] sm:$0xff]
    %v85 = vld [vmem:[%s13 + $0xa8] sm:$0xff]
    %v86 = vld [vmem:[%s13 + $0xb0] sm:$0xff]
    %v87 = vld [vmem:[%s13 + $0xb8] sm:$0xff]
    %v88 = vld [vmem:[%s13 + $0xc0] sm:$0xff]
    %v89 = vld [vmem:[%s13 + $0xc8] sm:$0x3f]
    %v90 = vld [vmem:[%s14] sm:$0xff]
    %v91 = vld [vmem:[%s14 + $0x8] sm:$0xff]
    %v92 = vld [vmem:[%s14 + $0x10] sm:$0xff]
    %v93 = vld [vmem:[%s14 + $0x18] sm:$0xff]
    %v94 = vld [vmem:[%s14 + $0x20] sm:$0xff]
    %v95 = vld [vmem:[%s14 + $0x28] sm:$0xff]
    %v96 = vld [vmem:[%s14 + $0x30] sm:$0xff]
    %v97 = vld [vmem:[%s14 + $0x38] sm:$0xff]
    %v98 = vld [vmem:[%s14 + $0x40] sm:$0xff]
    %v99 = vld [vmem:[%s14 + $0x48] sm:$0xff]
    %v100 = vld [vmem:[%s14 + $0x50] sm:$0xff]
    %v101 = vld [vmem:[%s14 + $0x58] sm:$0x3f]
    %vm102 = vcmask 258048
    %vm103 = vsmask.f32 4352
    %vm104 = vmand %vm102, %vm103
    %v105 = vld [vmem:[#allocation2] sm:$0x1f]
    %v106 = vsel %vm104, 0, %v105
    %107 = vst [vmem:[#allocation2] sm:$0x1f] %v106
    %vm108 = vcmask 261123
    %vm109 = vsmask.f32 7950
    %vm110 = vmand %vm108, %vm109
    %v111 = vld [vmem:[#allocation2 + $0x68] sm:$0xf8]
    %v112 = vsel %vm110, 0, %v111
    %113 = vst [vmem:[#allocation2 + $0x68] sm:$0xf8] %v112
    %v114 = vld [vmem:[%s0] sm:$0xf]
    %v115 = vld [vmem:[%s0 + $0x4] sm:$0xf]
    %v116 = vld [vmem:[%s0 + $0x8] sm:$0xf]
    %v117 = vld [vmem:[%s0 + $0xc] sm:$0xf]
    %v118 = vld [vmem:[%s0 + $0x10] sm:$0xf]
    %v119 = vld [vmem:[%s0 + $0x14] sm:$0xf]
    %v120 = vld [vmem:[%s0 + $0x18] sm:$0xf]
    %v121 = vld [vmem:[%s0 + $0x1c] sm:$0xf]
    %v122 = vld [vmem:[%s0 + $0x20] sm:$0xf]
    %v123 = vld [vmem:[%s0 + $0x24] sm:$0xf]
    %v124 = vld [vmem:[%s0 + $0x28] sm:$0xf]
    %v125 = vld [vmem:[%s0 + $0x2c] sm:$0xf]
    %v126 = vld [vmem:[%s0 + $0x30] sm:$0xf]
    %v127 = vld [vmem:[%s0 + $0x34] sm:$0xf]
    %v128 = vld [vmem:[%s0 + $0x38] sm:$0xf]
    %v129 = vld [vmem:[%s0 + $0x3c] sm:$0xf]
    %v130 = vld [vmem:[%s0 + $0x40] sm:$0xf]
    %v131 = vld [vmem:[%s0 + $0x44] sm:$0xf]
    %v132 = vld [vmem:[%s0 + $0x48] sm:$0xf]
    %v133 = vld [vmem:[%s0 + $0x4c] sm:$0xf]
    %v134 = vld [vmem:[%s0 + $0x50] sm:$0xf]
    %v135 = vld [vmem:[%s0 + $0x54] sm:$0xf]
    %v136 = vld [vmem:[%s0 + $0x58] sm:$0xf]
    %v137 = vld [vmem:[%s0 + $0x5c] sm:$0xf]
    %v138 = vld [vmem:[%s0 + $0x60] sm:$0xf]
    %v139 = vld [vmem:[%s0 + $0x64] sm:$0x7]
    %v140 = vld [vmem:[%s0 + $0x64] sm:$0xf]
    %v141 = vld [vmem:[%s0] sm:$0xe]
    %v142 = vld [vmem:[%s0 + $0x68] sm:$0x7]
    %v143 = vld [vmem:[%s0 + $0x68] sm:$0xf]
    %v144 = vld [vmem:[%s0 + $0x4] sm:$0xe]
    %v145 = vld [vmem:[%s0 + $0x6c] sm:$0x7]
    %v146 = vld [vmem:[%s0 + $0x6c] sm:$0xf]
    %v147 = vld [vmem:[%s0 + $0x8] sm:$0xe]
    %v174 = vunpack.c.l.b16 %v114
    %v175 = vunpack.c.l.b16 %v115
    %v176 = vunpack.c.l.b16 %v116
    %v177 = vunpack.c.l.b16 %v117
    %v178 = vunpack.c.l.b16 %v118
    %v179 = vunpack.c.l.b16 %v119
    %v180 = vunpack.c.l.b16 %v120
    %v181 = vunpack.c.l.b16 %v121
    %v182 = vunpack.c.l.b16 %v122
    %v183 = vunpack.c.l.b16 %v123
    %v184 = vunpack.c.l.b16 %v124
    %v185 = vunpack.c.l.b16 %v125
    %v186 = vunpack.c.l.b16 %v126
    %v187 = vunpack.c.l.b16 %v127
    %v188 = vunpack.c.l.b16 %v128
    %v189 = vunpack.c.l.b16 %v129
    %v190 = vunpack.c.l.b16 %v130
    %v191 = vunpack.c.l.b16 %v131
    %v192 = vunpack.c.l.b16 %v132
    %v193 = vunpack.c.l.b16 %v133
    %v194 = vunpack.c.l.b16 %v134
    %v195 = vunpack.c.l.b16 %v135
    %v196 = vunpack.c.l.b16 %v136
    %v197 = vunpack.c.l.b16 %v137
    %v198 = vunpack.c.l.b16 %v138
    %v199 = vunpack.c.l.b16 %v139
    %v200 = vpack.c.b16 %v175, %v174
    %v201 = vpack.c.b16 %v177, %v176
    %v202 = vpack.c.b16 %v179, %v178
    %v203 = vpack.c.b16 %v181, %v180
    %v204 = vpack.c.b16 %v183, %v182
    %v205 = vpack.c.b16 %v185, %v184
    %v206 = vpack.c.b16 %v187, %v186
    %v207 = vpack.c.b16 %v189, %v188
    %v208 = vpack.c.b16 %v191, %v190
    %v209 = vpack.c.b16 %v193, %v192
    %v210 = vpack.c.b16 %v195, %v194
    %v211 = vpack.c.b16 %v197, %v196
    %v212 = vpack.c.b16 %v199, %v198
    %v214 = vunpack.c.l.b16 %v140
    %v215 = vpack.c.b16 %v214, %v198
    %vm216 = vsmask.f32 7424
    %v218 = vshrl.u32 %v200, 16
    %v220 = vshll.u32 %v200, 16
    %v222 = vrot.slane %v220, 1
    %v223 = vor.u32 %v218, %v222
    %v225 = vshll.u32 %v201, 16
    %v227 = vrot.slane %v225, 1
    %v228 = vsel %vm216, %v223, %v227
    %v229 = vshrl.u32 %v201, 16
    %v231 = vor.u32 %v229, %v227
    %v233 = vshll.u32 %v202, 16
    %v235 = vrot.slane %v233, 1
    %v236 = vsel %vm216, %v231, %v235
    %v237 = vshrl.u32 %v202, 16
    %v239 = vor.u32 %v237, %v235
    %v241 = vshll.u32 %v203, 16
    %v243 = vrot.slane %v241, 1
    %v244 = vsel %vm216, %v239, %v243
    %v245 = vshrl.u32 %v203, 16
    %v247 = vor.u32 %v245, %v243
    %v249 = vshll.u32 %v204, 16
    %v251 = vrot.slane %v249, 1
    %v252 = vsel %vm216, %v247, %v251
    %v253 = vshrl.u32 %v204, 16
    %v255 = vor.u32 %v253, %v251
    %v257 = vshll.u32 %v205, 16
    %v259 = vrot.slane %v257, 1
    %v260 = vsel %vm216, %v255, %v259
    %v261 = vshrl.u32 %v205, 16
    %v263 = vor.u32 %v261, %v259
    %v265 = vshll.u32 %v206, 16
    %v267 = vrot.slane %v265, 1
    %v268 = vsel %vm216, %v263, %v267
    %v269 = vshrl.u32 %v206, 16
    %v271 = vor.u32 %v269, %v267
    %v273 = vshll.u32 %v207, 16
    %v275 = vrot.slane %v273, 1
    %v276 = vsel %vm216, %v271, %v275
    %v277 = vshrl.u32 %v207, 16
    %v279 = vor.u32 %v277, %v275
    %v281 = vshll.u32 %v208, 16
    %v283 = vrot.slane %v281, 1
    %v284 = vsel %vm216, %v279, %v283
    %v285 = vshrl.u32 %v208, 16
    %v287 = vor.u32 %v285, %v283
    %v289 = vshll.u32 %v209, 16
    %v291 = vrot.slane %v289, 1
    %v292 = vsel %vm216, %v287, %v291
    %v293 = vshrl.u32 %v209, 16
    %v295 = vor.u32 %v293, %v291
    %v297 = vshll.u32 %v210, 16
    %v299 = vrot.slane %v297, 1
    %v300 = vsel %vm216, %v295, %v299
    %v301 = vshrl.u32 %v210, 16
    %v303 = vor.u32 %v301, %v299
    %v305 = vshll.u32 %v211, 16
    %v307 = vrot.slane %v305, 1
    %v308 = vsel %vm216, %v303, %v307
    %v309 = vshrl.u32 %v211, 16
    %v311 = vor.u32 %v309, %v307
    %v313 = vshll.u32 %v215, 16
    %v315 = vrot.slane %v313, 1
    %v316 = vsel %vm216, %v311, %v315
    %v317 = vshrl.u32 %v215, 16
    %v319 = vor.u32 %v317, %v315
    %320 = vrot.lane.b32.xlu0 %v228, 64
    %v321 = vpop.permute.xlu0 %320
    %322 = vrot.lane.b32.xlu0 %v236, 64
    %v323 = vpop.permute.xlu0 %322
    %324 = vrot.lane.b32.xlu0 %v244, 64
    %v325 = vpop.permute.xlu0 %324
    %326 = vrot.lane.b32.xlu0 %v252, 64
    %v327 = vpop.permute.xlu0 %326
    %328 = vrot.lane.b32.xlu0 %v260, 64
    %v329 = vpop.permute.xlu0 %328
    %330 = vrot.lane.b32.xlu0 %v268, 64
    %v331 = vpop.permute.xlu0 %330
    %332 = vrot.lane.b32.xlu0 %v276, 64
    %v333 = vpop.permute.xlu0 %332
    %334 = vrot.lane.b32.xlu0 %v284, 64
    %v335 = vpop.permute.xlu0 %334
    %336 = vrot.lane.b32.xlu0 %v292, 64
    %v337 = vpop.permute.xlu0 %336
    %338 = vrot.lane.b32.xlu0 %v300, 64
    %v339 = vpop.permute.xlu0 %338
    %340 = vrot.lane.b32.xlu0 %v308, 64
    %v341 = vpop.permute.xlu0 %340
    %342 = vrot.lane.b32.xlu0 %v316, 64
    %v343 = vpop.permute.xlu0 %342
    %344 = vrot.lane.b32.xlu0 %v319, 64
    %v345 = vpop.permute.xlu0 %344
    %v347 = vunpack.c.l.b16 %v141
    %v348 = vpack.c.b16 %v175, %v347
    %vm349 = vcmask 1046528
    %v350 = vrot.slane %v348, 1
    %v351 = vrot.slane %v201, 1
    %v352 = vsel %vm349, %v350, %v351
    %v353 = vrot.slane %v202, 1
    %v354 = vsel %vm349, %v351, %v353
    %v355 = vrot.slane %v203, 1
    %v356 = vsel %vm349, %v353, %v355
    %v357 = vrot.slane %v204, 1
    %v358 = vsel %vm349, %v355, %v357
    %v359 = vrot.slane %v205, 1
    %v360 = vsel %vm349, %v357, %v359
    %v361 = vrot.slane %v206, 1
    %v362 = vsel %vm349, %v359, %v361
    %v363 = vrot.slane %v207, 1
    %v364 = vsel %vm349, %v361, %v363
    %v365 = vrot.slane %v208, 1
    %v366 = vsel %vm349, %v363, %v365
    %v367 = vrot.slane %v209, 1
    %v368 = vsel %vm349, %v365, %v367
    %v369 = vrot.slane %v210, 1
    %v370 = vsel %vm349, %v367, %v369
    %v371 = vrot.slane %v211, 1
    %v372 = vsel %vm349, %v369, %v371
    %v373 = vrot.slane %v215, 1
    %v374 = vsel %vm349, %v371, %v373
    %v376 = vunpack.c.l.b16 %v142
    %v377 = vpack.c.b16 %v176, %v175
    %v378 = vpack.c.b16 %v178, %v177
    %v379 = vpack.c.b16 %v180, %v179
    %v380 = vpack.c.b16 %v182, %v181
    %v381 = vpack.c.b16 %v184, %v183
    %v382 = vpack.c.b16 %v186, %v185
    %v383 = vpack.c.b16 %v188, %v187
    %v384 = vpack.c.b16 %v190, %v189
    %v385 = vpack.c.b16 %v192, %v191
    %v386 = vpack.c.b16 %v194, %v193
    %v387 = vpack.c.b16 %v196, %v195
    %v388 = vpack.c.b16 %v198, %v197
    %v389 = vpack.c.b16 %v376, %v214
    %390 = vrot.lane.b32.xlu0 %v377, 64
    %v391 = vpop.permute.xlu0 %390
    %392 = vrot.lane.b32.xlu0 %v378, 64
    %v393 = vpop.permute.xlu0 %392
    %394 = vrot.lane.b32.xlu0 %v379, 64
    %v395 = vpop.permute.xlu0 %394
    %396 = vrot.lane.b32.xlu0 %v380, 64
    %v397 = vpop.permute.xlu0 %396
    %398 = vrot.lane.b32.xlu0 %v381, 64
    %v399 = vpop.permute.xlu0 %398
    %400 = vrot.lane.b32.xlu0 %v382, 64
    %v401 = vpop.permute.xlu0 %400
    %402 = vrot.lane.b32.xlu0 %v383, 64
    %v403 = vpop.permute.xlu0 %402
    %404 = vrot.lane.b32.xlu0 %v384, 64
    %v405 = vpop.permute.xlu0 %404
    %406 = vrot.lane.b32.xlu0 %v385, 64
    %v407 = vpop.permute.xlu0 %406
    %408 = vrot.lane.b32.xlu0 %v386, 64
    %v409 = vpop.permute.xlu0 %408
    %410 = vrot.lane.b32.xlu0 %v387, 64
    %v411 = vpop.permute.xlu0 %410
    %412 = vrot.lane.b32.xlu0 %v388, 64
    %v413 = vpop.permute.xlu0 %412
    %414 = vrot.lane.b32.xlu0 %v389, 64
    %v415 = vpop.permute.xlu0 %414
    %v417 = vunpack.c.l.b16 %v143
    %v418 = vpack.c.b16 %v417, %v214
    %v420 = vshrl.u32 %v377, 16
    %v422 = vshll.u32 %v377, 16
    %v424 = vrot.slane %v422, 1
    %v425 = vor.u32 %v420, %v424
    %v427 = vshll.u32 %v378, 16
    %v429 = vrot.slane %v427, 1
    %v430 = vsel %vm216, %v425, %v429
    %v431 = vshrl.u32 %v378, 16
    %v433 = vor.u32 %v431, %v429
    %v435 = vshll.u32 %v379, 16
    %v437 = vrot.slane %v435, 1
    %v438 = vsel %vm216, %v433, %v437
    %v439 = vshrl.u32 %v379, 16
    %v441 = vor.u32 %v439, %v437
    %v443 = vshll.u32 %v380, 16
    %v445 = vrot.slane %v443, 1
    %v446 = vsel %vm216, %v441, %v445
    %v447 = vshrl.u32 %v380, 16
    %v449 = vor.u32 %v447, %v445
    %v451 = vshll.u32 %v381, 16
    %v453 = vrot.slane %v451, 1
    %v454 = vsel %vm216, %v449, %v453
    %v455 = vshrl.u32 %v381, 16
    %v457 = vor.u32 %v455, %v453
    %v459 = vshll.u32 %v382, 16
    %v461 = vrot.slane %v459, 1
    %v462 = vsel %vm216, %v457, %v461
    %v463 = vshrl.u32 %v382, 16
    %v465 = vor.u32 %v463, %v461
    %v467 = vshll.u32 %v383, 16
    %v469 = vrot.slane %v467, 1
    %v470 = vsel %vm216, %v465, %v469
    %v471 = vshrl.u32 %v383, 16
    %v473 = vor.u32 %v471, %v469
    %v475 = vshll.u32 %v384, 16
    %v477 = vrot.slane %v475, 1
    %v478 = vsel %vm216, %v473, %v477
    %v479 = vshrl.u32 %v384, 16
    %v481 = vor.u32 %v479, %v477
    %v483 = vshll.u32 %v385, 16
    %v485 = vrot.slane %v483, 1
    %v486 = vsel %vm216, %v481, %v485
    %v487 = vshrl.u32 %v385, 16
    %v489 = vor.u32 %v487, %v485
    %v491 = vshll.u32 %v386, 16
    %v493 = vrot.slane %v491, 1
    %v494 = vsel %vm216, %v489, %v493
    %v495 = vshrl.u32 %v386, 16
    %v497 = vor.u32 %v495, %v493
    %v499 = vshll.u32 %v387, 16
    %v501 = vrot.slane %v499, 1
    %v502 = vsel %vm216, %v497, %v501
    %v503 = vshrl.u32 %v387, 16
    %v505 = vor.u32 %v503, %v501
    %v507 = vshll.u32 %v388, 16
    %v509 = vrot.slane %v507, 1
    %v510 = vsel %vm216, %v505, %v509
    %v511 = vshrl.u32 %v388, 16
    %v513 = vor.u32 %v511, %v509
    %v515 = vshll.u32 %v418, 16
    %v517 = vrot.slane %v515, 1
    %v518 = vsel %vm216, %v513, %v517
    %v519 = vshrl.u32 %v418, 16
    %v521 = vor.u32 %v519, %v517
    %v523 = vunpack.c.l.b16 %v144
    %v524 = vpack.c.b16 %v176, %v523
    %v525 = vrot.slane %v524, 1
    %v526 = vrot.slane %v378, 1
    %v527 = vsel %vm349, %v525, %v526
    %v528 = vrot.slane %v379, 1
    %v529 = vsel %vm349, %v526, %v528
    %v530 = vrot.slane %v380, 1
    %v531 = vsel %vm349, %v528, %v530
    %v532 = vrot.slane %v381, 1
    %v533 = vsel %vm349, %v530, %v532
    %v534 = vrot.slane %v382, 1
    %v535 = vsel %vm349, %v532, %v534
    %v536 = vrot.slane %v383, 1
    %v537 = vsel %vm349, %v534, %v536
    %v538 = vrot.slane %v384, 1
    %v539 = vsel %vm349, %v536, %v538
    %v540 = vrot.slane %v385, 1
    %v541 = vsel %vm349, %v538, %v540
    %v542 = vrot.slane %v386, 1
    %v543 = vsel %vm349, %v540, %v542
    %v544 = vrot.slane %v387, 1
    %v545 = vsel %vm349, %v542, %v544
    %v546 = vrot.slane %v388, 1
    %v547 = vsel %vm349, %v544, %v546
    %v548 = vrot.slane %v418, 1
    %v549 = vsel %vm349, %v546, %v548
    %550 = vrot.lane.b32.xlu0 %v527, 64
    %v551 = vpop.permute.xlu0 %550
    %552 = vrot.lane.b32.xlu0 %v529, 64
    %v553 = vpop.permute.xlu0 %552
    %554 = vrot.lane.b32.xlu0 %v531, 64
    %v555 = vpop.permute.xlu0 %554
    %556 = vrot.lane.b32.xlu0 %v533, 64
    %v557 = vpop.permute.xlu0 %556
    %558 = vrot.lane.b32.xlu0 %v535, 64
    %v559 = vpop.permute.xlu0 %558
    %560 = vrot.lane.b32.xlu0 %v537, 64
    %v561 = vpop.permute.xlu0 %560
    %562 = vrot.lane.b32.xlu0 %v539, 64
    %v563 = vpop.permute.xlu0 %562
    %564 = vrot.lane.b32.xlu0 %v541, 64
    %v565 = vpop.permute.xlu0 %564
    %566 = vrot.lane.b32.xlu0 %v543, 64
    %v567 = vpop.permute.xlu0 %566
    %568 = vrot.lane.b32.xlu0 %v545, 64
    %v569 = vpop.permute.xlu0 %568
    %570 = vrot.lane.b32.xlu0 %v547, 64
    %v571 = vpop.permute.xlu0 %570
    %572 = vrot.lane.b32.xlu0 %v549, 64
    %v573 = vpop.permute.xlu0 %572
    %574 = vrot.lane.b32.xlu0 %v548, 64
    %v575 = vpop.permute.xlu0 %574
    %v577 = vunpack.c.l.b16 %v145
    %v578 = vpack.c.b16 %v577, %v417
    %v580 = vunpack.c.l.b16 %v146
    %v581 = vpack.c.b16 %v580, %v417
    %v583 = vshll.u32 %v581, 16
    %v585 = vrot.slane %v583, 1
    %v586 = vsel %vm216, %v319, %v585
    %v587 = vshrl.u32 %v581, 16
    %v589 = vor.u32 %v587, %v585
    %590 = vrot.lane.b32.xlu0 %v586, 64
    %v591 = vpop.permute.xlu0 %590
    %592 = vrot.lane.b32.xlu0 %v589, 64
    %v593 = vpop.permute.xlu0 %592
    %v595 = vunpack.c.l.b16 %v147
    %v596 = vpack.c.b16 %v177, %v595
    %v597 = vrot.slane %v596, 1
    %v598 = vsel %vm349, %v597, %v353
    %v599 = vrot.slane %v581, 1
    %v600 = vsel %vm349, %v373, %v599
    %vm601 = vcmask 523264
    %v603 = vsel %vm601, %v200, %v321
    %v606 = vsel %vm601, %v201, %v323
    %v609 = vsel %vm601, %v202, %v325
    %v612 = vsel %vm601, %v203, %v327
    %v615 = vsel %vm601, %v204, %v329
    %v618 = vsel %vm601, %v205, %v331
    %v621 = vsel %vm601, %v206, %v333
    %v624 = vsel %vm601, %v207, %v335
    %v627 = vsel %vm601, %v208, %v337
    %v630 = vsel %vm601, %v209, %v339
    %v633 = vsel %vm601, %v210, %v341
    %v636 = vsel %vm601, %v211, %v343
    %v640 = vsel %vm601, %v212, %v345
    %v644 = vsel %vm601, %v352, %v391
    %v648 = vsel %vm601, %v354, %v393
    %v652 = vsel %vm601, %v356, %v395
    %v656 = vsel %vm601, %v358, %v397
    %v660 = vsel %vm601, %v360, %v399
    %v664 = vsel %vm601, %v362, %v401
    %v668 = vsel %vm601, %v364, %v403
    %v672 = vsel %vm601, %v366, %v405
    %v676 = vsel %vm601, %v368, %v407
    %v680 = vsel %vm601, %v370, %v409
    %v684 = vsel %vm601, %v372, %v411
    %v688 = vsel %vm601, %v374, %v413
    %v692 = vsel %vm601, %v373, %v415
    %v696 = vsel %vm601, %v430, %v551
    %v700 = vsel %vm601, %v438, %v553
    %v704 = vsel %vm601, %v446, %v555
    %v708 = vsel %vm601, %v454, %v557
    %v712 = vsel %vm601, %v462, %v559
    %v716 = vsel %vm601, %v470, %v561
    %v720 = vsel %vm601, %v478, %v563
    %v724 = vsel %vm601, %v486, %v565
    %v728 = vsel %vm601, %v494, %v567
    %v732 = vsel %vm601, %v502, %v569
    %v736 = vsel %vm601, %v510, %v571
    %v740 = vsel %vm601, %v518, %v573
    %v744 = vsel %vm601, %v521, %v575
    %v747 = vsel %vm601, %v215, %v591
    %v751 = vsel %vm601, %v578, %v593
    %v753 = vld [vmem:[%s1] sm:$0xf]
    %v754 = vld [vmem:[%s1 + $0x4] sm:$0xf]
    %v755 = vld [vmem:[%s1 + $0x8] sm:$0xf]
    %v756 = vld [vmem:[%s1 + $0xc] sm:$0xf]
    %v757 = vld [vmem:[%s1 + $0x10] sm:$0xf]
    %v758 = vld [vmem:[%s1 + $0x14] sm:$0xf]
    %v759 = vld [vmem:[%s1 + $0x18] sm:$0xf]
    %v760 = vld [vmem:[%s1 + $0x1c] sm:$0xf]
    %v761 = vld [vmem:[%s1 + $0x20] sm:$0xf]
    %v762 = vld [vmem:[%s1 + $0x24] sm:$0xf]
    %v763 = vld [vmem:[%s1 + $0x28] sm:$0xf]
    %v764 = vld [vmem:[%s1 + $0x2c] sm:$0xf]
    %v765 = vld [vmem:[%s1 + $0x30] sm:$0xf]
    %v766 = vld [vmem:[%s1 + $0x34] sm:$0xf]
    %v767 = vld [vmem:[%s1 + $0x38] sm:$0xf]
    %v768 = vld [vmem:[%s1 + $0x3c] sm:$0xf]
    %v769 = vld [vmem:[%s1 + $0x40] sm:$0xf]
    %v770 = vld [vmem:[%s1 + $0x44] sm:$0xf]
    %v771 = vld [vmem:[%s1 + $0x48] sm:$0xf]
    %v772 = vld [vmem:[%s1 + $0x4c] sm:$0xf]
    %v773 = vld [vmem:[%s1 + $0x50] sm:$0xf]
    %v774 = vld [vmem:[%s1 + $0x54] sm:$0xf]
    %v775 = vld [vmem:[%s1 + $0x58] sm:$0xf]
    %v776 = vld [vmem:[%s1 + $0x5c] sm:$0xf]
    %v777 = vld [vmem:[%s1 + $0x60] sm:$0xf]
    %v778 = vld [vmem:[%s1 + $0x64] sm:$0xf]
    %v779 = vld [vmem:[%s1 + $0x68] sm:$0xf]
    %v780 = vld [vmem:[%s1 + $0x6c] sm:$0xf]
    %v781 = vld [vmem:[%s1 + $0x70] sm:$0xf]
    %v782 = vld [vmem:[%s1 + $0x74] sm:$0xf]
    %v783 = vld [vmem:[%s1 + $0x78] sm:$0xf]
    %v784 = vld [vmem:[%s1 + $0x7c] sm:$0xf]
    %v785 = vld [vmem:[%s1 + $0x80] sm:$0xf]
    %v786 = vld [vmem:[%s1 + $0x84] sm:$0xf]
    %v787 = vld [vmem:[%s1 + $0x88] sm:$0xf]
    %v788 = vld [vmem:[%s1 + $0x8c] sm:$0xf]
    %v789 = vld [vmem:[%s1 + $0x90] sm:$0xf]
    %v790 = vld [vmem:[%s1 + $0x94] sm:$0xf]
    %v791 = vld [vmem:[%s1 + $0x98] sm:$0xf]
    %v792 = vld [vmem:[%s1 + $0x9c] sm:$0xf]
    %v793 = vld [vmem:[%s1 + $0xa0] sm:$0xf]
    %v794 = vld [vmem:[%s1 + $0xa4] sm:$0xf]
    %v795 = vld [vmem:[%s1 + $0xa8] sm:$0xf]
    %v796 = vld [vmem:[%s1 + $0xac] sm:$0xf]
    %v797 = vld [vmem:[%s1 + $0xb0] sm:$0xf]
    %v798 = vld [vmem:[%s1 + $0xb4] sm:$0xf]
    %v799 = vld [vmem:[%s1 + $0xb8] sm:$0xf]
    %v800 = vld [vmem:[%s1 + $0xbc] sm:$0xf]
    %v801 = vld [vmem:[%s1 + $0xc0] sm:$0xf]
    %v802 = vld [vmem:[%s1 + $0xc4] sm:$0xf]
    %v803 = vld [vmem:[%s1 + $0xc8] sm:$0xf]
    %v804 = vld [vmem:[%s1 + $0xcc] sm:$0xf]
    %v805 = vld [vmem:[%s1 + $0xd0] sm:$0xf]
    %v806 = vld [vmem:[%s1 + $0xd4] sm:$0xf]
    %v807 = vld [vmem:[%s1 + $0xd8] sm:$0xf]
    %v808 = vld [vmem:[%s1 + $0xdc] sm:$0xf]
    %v809 = vld [vmem:[%s1 + $0xe0] sm:$0xf]
    %v810 = vld [vmem:[%s1 + $0xe4] sm:$0xf]
    %v811 = vld [vmem:[%s1 + $0xe8] sm:$0xf]
    %v812 = vld [vmem:[%s1 + $0xec] sm:$0xf]
    %v813 = vld [vmem:[%s1 + $0xf0] sm:$0xf]
    %v814 = vld [vmem:[%s1 + $0xf4] sm:$0xf]
    %v815 = vld [vmem:[%s1 + $0xf8] sm:$0xf]
    %v816 = vld [vmem:[%s1 + $0xfc] sm:$0xf]
    %v817 = vld [vmem:[%s1 + $0x100] sm:$0xf]
    %v818 = vld [vmem:[%s1 + $0x104] sm:$0xf]
    %v819 = vld [vmem:[%s1 + $0x108] sm:$0xf]
    %v820 = vld [vmem:[%s1 + $0x10c] sm:$0xf]
    %v821 = vld [vmem:[%s1 + $0x110] sm:$0xf]
    %v822 = vld [vmem:[%s1 + $0x114] sm:$0xf]
    %v823 = vld [vmem:[%s1 + $0x118] sm:$0xf]
    %v824 = vld [vmem:[%s1 + $0x11c] sm:$0xf]
    %v825 = vld [vmem:[%s2] sm:$0x1]
    %v827 = vlaneseq
    %v828 = vshrl.u32 %v827, 7
    %v829 = vsub.s32 0, %v828
    %v830 = vrot.slane %v825, %v829
    %v904 = vunpack.c.l.b16 %v753
    %v905 = vunpack.c.l.b16 %v754
    %v906 = vunpack.c.l.b16 %v755
    %v907 = vunpack.c.l.b16 %v756
    %v908 = vunpack.c.l.b16 %v757
    %v909 = vunpack.c.l.b16 %v758
    %v910 = vunpack.c.l.b16 %v759
    %v911 = vunpack.c.l.b16 %v760
    %v912 = vunpack.c.l.b16 %v761
    %v913 = vunpack.c.l.b16 %v762
    %v914 = vunpack.c.l.b16 %v763
    %v915 = vunpack.c.l.b16 %v764
    %v916 = vunpack.c.l.b16 %v765
    %v917 = vunpack.c.l.b16 %v766
    %v918 = vunpack.c.l.b16 %v767
    %v919 = vunpack.c.l.b16 %v768
    %v920 = vunpack.c.l.b16 %v769
    %v921 = vunpack.c.l.b16 %v770
    %v922 = vunpack.c.l.b16 %v771
    %v923 = vunpack.c.l.b16 %v772
    %v924 = vunpack.c.l.b16 %v773
    %v925 = vunpack.c.l.b16 %v774
    %v926 = vunpack.c.l.b16 %v775
    %v927 = vunpack.c.l.b16 %v776
    %v928 = vunpack.c.l.b16 %v777
    %v929 = vunpack.c.l.b16 %v778
    %v930 = vunpack.c.l.b16 %v779
    %v931 = vunpack.c.l.b16 %v780
    %v932 = vunpack.c.l.b16 %v781
    %v933 = vunpack.c.l.b16 %v782
    %v934 = vunpack.c.l.b16 %v783
    %v935 = vunpack.c.l.b16 %v784
    %v936 = vunpack.c.l.b16 %v785
    %v937 = vunpack.c.l.b16 %v786
    %v938 = vunpack.c.l.b16 %v787
    %v939 = vunpack.c.l.b16 %v788
    %v940 = vunpack.c.l.b16 %v789
    %v941 = vunpack.c.l.b16 %v790
    %v942 = vunpack.c.l.b16 %v791
    %v943 = vunpack.c.l.b16 %v792
    %v944 = vunpack.c.l.b16 %v793
    %v945 = vunpack.c.l.b16 %v794
    %v946 = vunpack.c.l.b16 %v795
    %v947 = vunpack.c.l.b16 %v796
    %v948 = vunpack.c.l.b16 %v797
    %v949 = vunpack.c.l.b16 %v798
    %v950 = vunpack.c.l.b16 %v799
    %v951 = vunpack.c.l.b16 %v800
    %v952 = vunpack.c.l.b16 %v801
    %v953 = vunpack.c.l.b16 %v802
    %v954 = vunpack.c.l.b16 %v803
    %v955 = vunpack.c.l.b16 %v804
    %v956 = vunpack.c.l.b16 %v805
    %v957 = vunpack.c.l.b16 %v806
    %v958 = vunpack.c.l.b16 %v807
    %v959 = vunpack.c.l.b16 %v808
    %v960 = vunpack.c.l.b16 %v809
    %v961 = vunpack.c.l.b16 %v810
    %v962 = vunpack.c.l.b16 %v811
    %v963 = vunpack.c.l.b16 %v812
    %v964 = vunpack.c.l.b16 %v813
    %v965 = vunpack.c.l.b16 %v814
    %v966 = vunpack.c.l.b16 %v815
    %v967 = vunpack.c.l.b16 %v816
    %v968 = vunpack.c.l.b16 %v817
    %v969 = vunpack.c.l.b16 %v818
    %v970 = vunpack.c.l.b16 %v819
    %v971 = vunpack.c.l.b16 %v820
    %v972 = vunpack.c.l.b16 %v821
    %v973 = vunpack.c.l.b16 %v822
    %v974 = vunpack.c.l.b16 %v823
    %v975 = vunpack.c.l.b16 %v824
    %v976 = vpack.c.b16 %v905, %v904
    %v977 = vpack.c.b16 %v907, %v906
    %v978 = vpack.c.b16 %v909, %v908
    %v979 = vpack.c.b16 %v911, %v910
    %v980 = vpack.c.b16 %v913, %v912
    %v981 = vpack.c.b16 %v915, %v914
    %v982 = vpack.c.b16 %v917, %v916
    %v983 = vpack.c.b16 %v919, %v918
    %v984 = vpack.c.b16 %v921, %v920
    %v985 = vpack.c.b16 %v923, %v922
    %v986 = vpack.c.b16 %v925, %v924
    %v987 = vpack.c.b16 %v927, %v926
    %v988 = vpack.c.b16 %v929, %v928
    %v989 = vpack.c.b16 %v931, %v930
    %v990 = vpack.c.b16 %v933, %v932
    %v991 = vpack.c.b16 %v935, %v934
    %v992 = vpack.c.b16 %v937, %v936
    %v993 = vpack.c.b16 %v939, %v938
    %v994 = vpack.c.b16 %v941, %v940
    %v995 = vpack.c.b16 %v943, %v942
    %v996 = vpack.c.b16 %v945, %v944
    %v997 = vpack.c.b16 %v947, %v946
    %v998 = vpack.c.b16 %v949, %v948
    %v999 = vpack.c.b16 %v951, %v950
    %v1000 = vpack.c.b16 %v953, %v952
    %v1001 = vpack.c.b16 %v955, %v954
    %v1002 = vpack.c.b16 %v957, %v956
    %v1003 = vpack.c.b16 %v959, %v958
    %v1004 = vpack.c.b16 %v961, %v960
    %v1005 = vpack.c.b16 %v963, %v962
    %v1006 = vpack.c.b16 %v965, %v964
    %v1007 = vpack.c.b16 %v967, %v966
    %v1008 = vpack.c.b16 %v969, %v968
    %v1009 = vpack.c.b16 %v971, %v970
    %v1010 = vpack.c.b16 %v973, %v972
    %v1011 = vpack.c.b16 %v975, %v974
    %v1049 = vsel %vm601, %v598, 0
    %v1051 = vsel %vm601, %v356, 0
    %v1053 = vsel %vm601, %v358, 0
    %v1055 = vsel %vm601, %v360, 0
    %v1057 = vsel %vm601, %v362, 0
    %v1059 = vsel %vm601, %v364, 0
    %v1061 = vsel %vm601, %v366, 0
    %v1063 = vsel %vm601, %v368, 0
    %v1065 = vsel %vm601, %v370, 0
    %v1067 = vsel %vm601, %v372, 0
    %v1069 = vsel %vm601, %v374, 0
    %v1072 = vsel %vm601, %v600, 0
    %v1075 = vsel %vm601, %v599, 0
    %1077 = vmatprep.subr.bf16.mxu0 0
    %1078 = vmatpush1.bf16.msra.mxu0 %v976
    %1079 = vmatprep.subr.bf16.mxu0 0
    %1080 = vmatpush1.bf16.msra.mxu0 %v977
    %1081 = vmatprep.subr.bf16.mxu0 0
    %1082 = vmatpush1.bf16.msra.mxu0 %v978
    %1083 = vmatprep.subr.bf16.mxu0 0
    %1084 = vmatpush1.bf16.msra.mxu0 %v979
    %1085 = vmatprep.subr.bf16.mxu0 0
    %1086 = vmatpush1.bf16.msra.mxu0 %v980
    %1087 = vmatprep.subr.bf16.mxu0 0
    %1088 = vmatpush1.bf16.msra.mxu0 %v981
    %1089 = vmatprep.subr.bf16.mxu0 0
    %1090 = vmatpush1.bf16.msra.mxu0 %v982
    %1091 = vmatprep.subr.bf16.mxu0 0
    %1092 = vmatpush1.bf16.msra.mxu0 %v983
    %1093 = vmatprep.subr.bf16.mxu0 0
    %1094 = vmatpush1.bf16.msra.mxu0 %v984
    %1095 = vmatprep.subr.bf16.mxu0 0
    %1096 = vmatpush1.bf16.msra.mxu0 %v985
    %1097 = vmatprep.subr.bf16.mxu0 0
    %1098 = vmatpush1.bf16.msra.mxu0 %v986
    %1099 = vmatprep.subr.bf16.mxu0 0
    %1100 = vmatpush1.bf16.msra.mxu0 %v987
    %1101 = vmatprep.subr.bf16.mxu0 0
    %1102 = vmatpush1.bf16.msra.mxu0 %v988
    %1103 = vmatprep.subr.bf16.mxu0 0
    %1104 = vmatpush1.bf16.msra.mxu0 %v989
    %1105 = vmatprep.subr.bf16.mxu0 0
    %1106 = vmatpush1.bf16.msra.mxu0 %v990
    %1107 = vmatprep.subr.bf16.mxu0 0
    %1108 = vmatpush1.bf16.msra.mxu0 %v991
    %1109 = vmatprep.mubr.bf16.mxu0 %v644
    %1110 = vmatmul.mubr.bf16.gmra.mrb[0].mxu0 %v603
    %v1111 = vpop.f32.mrb[0].mxu0
    %v1112 = vadd.f32 %v830, %v1111
    %v1113 = vpop.f32.mrb[0].mxu0
    %v1114 = vpop.f32.mrb[0].mxu0
    %v1115 = vadd.f32 %v830, %v1114
    %v1116 = vpop.f32.mrb[0].mxu0
    %1117 = vmatprep.mubr.bf16.mxu0 %v648
    %1118 = vmatmul.mubr.bf16.gmra.mrb[0].mxu0 %v606
    %v1119 = vpop.f32.mrb[0].mxu0
    %v1120 = vadd.f32 %v830, %v1119
    %v1121 = vpop.f32.mrb[0].mxu0
    %v1122 = vpop.f32.mrb[0].mxu0
    %v1123 = vadd.f32 %v830, %v1122
    %v1124 = vpop.f32.mrb[0].mxu0
    %1125 = vmatprep.mubr.bf16.mxu0 %v652
    %1126 = vmatmul.mubr.bf16.gmra.mrb[0].mxu0 %v609
    %v1127 = vpop.f32.mrb[0].mxu0
    %v1128 = vadd.f32 %v830, %v1127
    %v1129 = vpop.f32.mrb[0].mxu0
    %v1130 = vpop.f32.mrb[0].mxu0
    %v1131 = vadd.f32 %v830, %v1130
    %v1132 = vpop.f32.mrb[0].mxu0
    %1133 = vmatprep.mubr.bf16.mxu0 %v656
    %1134 = vmatmul.mubr.bf16.gmra.mrb[0].mxu0 %v612
    %v1135 = vpop.f32.mrb[0].mxu0
    %v1136 = vadd.f32 %v830, %v1135
    %v1137 = vpop.f32.mrb[0].mxu0
    %v1138 = vpop.f32.mrb[0].mxu0
    %v1139 = vadd.f32 %v830, %v1138
    %v1140 = vpop.f32.mrb[0].mxu0
    %1141 = vmatprep.mubr.bf16.mxu0 %v660
    %1142 = vmatmul.mubr.bf16.gmra.mrb[0].mxu0 %v615
    %v1143 = vpop.f32.mrb[0].mxu0
    %v1144 = vadd.f32 %v830, %v1143
    %v1145 = vpop.f32.mrb[0].mxu0
    %v1146 = vpop.f32.mrb[0].mxu0
    %v1147 = vadd.f32 %v830, %v1146
    %v1148 = vpop.f32.mrb[0].mxu0
    %1149 = vmatprep.mubr.bf16.mxu0 %v664
    %1150 = vmatmul.mubr.bf16.gmra.mrb[0].mxu0 %v618
    %v1151 = vpop.f32.mrb[0].mxu0
    %v1152 = vadd.f32 %v830, %v1151
    %v1153 = vpop.f32.mrb[0].mxu0
    %v1154 = vpop.f32.mrb[0].mxu0
    %v1155 = vadd.f32 %v830, %v1154
    %v1156 = vpop.f32.mrb[0].mxu0
    %1157 = vmatprep.mubr.bf16.mxu0 %v668
    %1158 = vmatmul.mubr.bf16.gmra.mrb[0].mxu0 %v621
    %v1159 = vpop.f32.mrb[0].mxu0
    %v1160 = vadd.f32 %v830, %v1159
    %v1161 = vpop.f32.mrb[0].mxu0
    %v1162 = vpop.f32.mrb[0].mxu0
    %v1163 = vadd.f32 %v830, %v1162
    %v1164 = vpop.f32.mrb[0].mxu0
    %1165 = vmatprep.mubr.bf16.mxu0 %v672
    %1166 = vmatmul.mubr.bf16.gmra.mrb[0].mxu0 %v624
    %v1167 = vpop.f32.mrb[0].mxu0
    %v1168 = vadd.f32 %v830, %v1167
    %v1169 = vpop.f32.mrb[0].mxu0
    %v1170 = vpop.f32.mrb[0].mxu0
    %v1171 = vadd.f32 %v830, %v1170
    %v1172 = vpop.f32.mrb[0].mxu0
    %1173 = vmatprep.mubr.bf16.mxu0 %v676
    %1174 = vmatmul.mubr.bf16.gmra.mrb[0].mxu0 %v627
    %v1175 = vpop.f32.mrb[0].mxu0
    %v1176 = vadd.f32 %v830, %v1175
    %v1177 = vpop.f32.mrb[0].mxu0
    %v1178 = vpop.f32.mrb[0].mxu0
    %v1179 = vadd.f32 %v830, %v1178
    %v1180 = vpop.f32.mrb[0].mxu0
    %1181 = vmatprep.mubr.bf16.mxu0 %v680
    %1182 = vmatmul.mubr.bf16.gmra.mrb[0].mxu0 %v630
    %v1183 = vpop.f32.mrb[0].mxu0
    %v1184 = vadd.f32 %v830, %v1183
    %v1185 = vpop.f32.mrb[0].mxu0
    %v1186 = vpop.f32.mrb[0].mxu0
    %v1187 = vadd.f32 %v830, %v1186
    %v1188 = vpop.f32.mrb[0].mxu0
    %1189 = vmatprep.mubr.bf16.mxu0 %v684
    %1190 = vmatmul.mubr.bf16.gmra.mrb[0].mxu0 %v633
    %v1191 = vpop.f32.mrb[0].mxu0
    %v1192 = vadd.f32 %v830, %v1191
    %v1193 = vpop.f32.mrb[0].mxu0
    %v1194 = vpop.f32.mrb[0].mxu0
    %v1195 = vadd.f32 %v830, %v1194
    %v1196 = vpop.f32.mrb[0].mxu0
    %1197 = vmatprep.mubr.bf16.mxu0 %v688
    %1198 = vmatmul.mubr.bf16.gmra.mrb[0].mxu0 %v636
    %v1199 = vpop.f32.mrb[0].mxu0
    %v1200 = vadd.f32 %v830, %v1199
    %v1201 = vpop.f32.mrb[0].mxu0
    %v1202 = vpop.f32.mrb[0].mxu0
    %v1203 = vadd.f32 %v830, %v1202
    %v1204 = vpop.f32.mrb[0].mxu0
    %1205 = vmatprep.mubr.bf16.mxu0 %v692
    %1206 = vmatmul.mubr.bf16.gmra.mrb[0].mxu0 %v640
    %v1207 = vpop.f32.mrb[0].mxu0
    %v1208 = vadd.f32 %v830, %v1207
    %v1209 = vpop.f32.mrb[0].mxu0
    %v1210 = vpop.f32.mrb[0].mxu0
    %v1211 = vadd.f32 %v830, %v1210
    %v1212 = vpop.f32.mrb[0].mxu0
    %1213 = vdwg.mxu0
    %1214 = vmatprep.subr.bf16.mxu0 0
    %1215 = vmatpush1.bf16.msra.mxu0 %v992
    %1216 = vmatprep.subr.bf16.mxu0 0
    %1217 = vmatpush1.bf16.msra.mxu0 %v993
    %1218 = vmatprep.subr.bf16.mxu0 0
    %1219 = vmatpush1.bf16.msra.mxu0 %v994
    %1220 = vmatprep.subr.bf16.mxu0 0
    %1221 = vmatpush1.bf16.msra.mxu0 %v995
    %1222 = vmatprep.subr.bf16.mxu0 0
    %1223 = vmatpush1.bf16.msra.mxu0 %v996
    %1224 = vmatprep.subr.bf16.mxu0 0
    %1225 = vmatpush1.bf16.msra.mxu0 %v997
    %1226 = vmatprep.subr.bf16.mxu0 0
    %1227 = vmatpush1.bf16.msra.mxu0 %v998
    %1228 = vmatprep.subr.bf16.mxu0 0
    %1229 = vmatpush1.bf16.msra.mxu0 %v999
    %1230 = vmatprep.subr.bf16.mxu0 0
    %1231 = vmatpush1.bf16.msra.mxu0 %v1000
    %1232 = vmatprep.subr.bf16.mxu0 0
    %1233 = vmatpush1.bf16.msra.mxu0 %v1001
    %1234 = vmatprep.subr.bf16.mxu0 0
    %1235 = vmatpush1.bf16.msra.mxu0 %v1002
    %1236 = vmatprep.subr.bf16.mxu0 0
    %1237 = vmatpush1.bf16.msra.mxu0 %v1003
    %1238 = vmatprep.subr.bf16.mxu0 0
    %1239 = vmatpush1.bf16.msra.mxu0 %v1004
    %1240 = vmatprep.subr.bf16.mxu0 0
    %1241 = vmatpush1.bf16.msra.mxu0 %v1005
    %1242 = vmatprep.subr.bf16.mxu0 0
    %1243 = vmatpush1.bf16.msra.mxu0 %v1006
    %1244 = vmatprep.subr.bf16.mxu0 0
    %1245 = vmatpush1.bf16.msra.mxu0 %v1007
    %1246 = vmatprep.mubr.bf16.mxu0 %v606
    %1247 = vmatmul.mubr.bf16.gmra.mrb[0].mxu0 %v696
    %v1248 = vpop.f32.mrb[0].mxu0
    %v1249 = vadd.f32 %v1112, %v1248
    %v1250 = vpop.f32.mrb[0].mxu0
    %v1251 = vpop.f32.mrb[0].mxu0
    %v1252 = vadd.f32 %v1115, %v1251
    %v1253 = vpop.f32.mrb[0].mxu0
    %1254 = vmatprep.mubr.bf16.mxu0 %v609
    %1255 = vmatmul.mubr.bf16.gmra.mrb[0].mxu0 %v700
    %v1256 = vpop.f32.mrb[0].mxu0
    %v1257 = vadd.f32 %v1120, %v1256
    %v1258 = vpop.f32.mrb[0].mxu0
    %v1259 = vpop.f32.mrb[0].mxu0
    %v1260 = vadd.f32 %v1123, %v1259
    %v1261 = vpop.f32.mrb[0].mxu0
    %1262 = vmatprep.mubr.bf16.mxu0 %v612
    %1263 = vmatmul.mubr.bf16.gmra.mrb[0].mxu0 %v704
    %v1264 = vpop.f32.mrb[0].mxu0
    %v1265 = vadd.f32 %v1128, %v1264
    %v1266 = vpop.f32.mrb[0].mxu0
    %v1267 = vpop.f32.mrb[0].mxu0
    %v1268 = vadd.f32 %v1131, %v1267
    %v1269 = vpop.f32.mrb[0].mxu0
    %1270 = vmatprep.mubr.bf16.mxu0 %v615
    %1271 = vmatmul.mubr.bf16.gmra.mrb[0].mxu0 %v708
    %v1272 = vpop.f32.mrb[0].mxu0
    %v1273 = vadd.f32 %v1136, %v1272
    %v1274 = vpop.f32.mrb[0].mxu0
    %v1275 = vpop.f32.mrb[0].mxu0
    %v1276 = vadd.f32 %v1139, %v1275
    %v1277 = vpop.f32.mrb[0].mxu0
    %1278 = vmatprep.mubr.bf16.mxu0 %v618
    %1279 = vmatmul.mubr.bf16.gmra.mrb[0].mxu0 %v712
    %v1280 = vpop.f32.mrb[0].mxu0
    %v1281 = vadd.f32 %v1144, %v1280
    %v1282 = vpop.f32.mrb[0].mxu0
    %v1283 = vpop.f32.mrb[0].mxu0
    %v1284 = vadd.f32 %v1147, %v1283
    %v1285 = vpop.f32.mrb[0].mxu0
    %1286 = vmatprep.mubr.bf16.mxu0 %v621
    %1287 = vmatmul.mubr.bf16.gmra.mrb[0].mxu0 %v716
    %v1288 = vpop.f32.mrb[0].mxu0
    %v1289 = vadd.f32 %v1152, %v1288
    %v1290 = vpop.f32.mrb[0].mxu0
    %v1291 = vpop.f32.mrb[0].mxu0
    %v1292 = vadd.f32 %v1155, %v1291
    %v1293 = vpop.f32.mrb[0].mxu0
    %1294 = vmatprep.mubr.bf16.mxu0 %v624
    %1295 = vmatmul.mubr.bf16.gmra.mrb[0].mxu0 %v720
    %v1296 = vpop.f32.mrb[0].mxu0
    %v1297 = vadd.f32 %v1160, %v1296
    %v1298 = vpop.f32.mrb[0].mxu0
    %v1299 = vpop.f32.mrb[0].mxu0
    %v1300 = vadd.f32 %v1163, %v1299
    %v1301 = vpop.f32.mrb[0].mxu0
    %1302 = vmatprep.mubr.bf16.mxu0 %v627
    %1303 = vmatmul.mubr.bf16.gmra.mrb[0].mxu0 %v724
    %v1304 = vpop.f32.mrb[0].mxu0
    %v1305 = vadd.f32 %v1168, %v1304
    %v1306 = vpop.f32.mrb[0].mxu0
    %v1307 = vpop.f32.mrb[0].mxu0
    %v1308 = vadd.f32 %v1171, %v1307
    %v1309 = vpop.f32.mrb[0].mxu0
    %1310 = vmatprep.mubr.bf16.mxu0 %v630
    %1311 = vmatmul.mubr.bf16.gmra.mrb[0].mxu0 %v728
    %v1312 = vpop.f32.mrb[0].mxu0
    %v1313 = vadd.f32 %v1176, %v1312
    %v1314 = vpop.f32.mrb[0].mxu0
    %v1315 = vpop.f32.mrb[0].mxu0
    %v1316 = vadd.f32 %v1179, %v1315
    %v1317 = vpop.f32.mrb[0].mxu0
    %1318 = vmatprep.mubr.bf16.mxu0 %v633
    %1319 = vmatmul.mubr.bf16.gmra.mrb[0].mxu0 %v732
    %v1320 = vpop.f32.mrb[0].mxu0
    %v1321 = vadd.f32 %v1184, %v1320
    %v1322 = vpop.f32.mrb[0].mxu0
    %v1323 = vpop.f32.mrb[0].mxu0
    %v1324 = vadd.f32 %v1187, %v1323
    %v1325 = vpop.f32.mrb[0].mxu0
    %1326 = vmatprep.mubr.bf16.mxu0 %v636
    %1327 = vmatmul.mubr.bf16.gmra.mrb[0].mxu0 %v736
    %v1328 = vpop.f32.mrb[0].mxu0
    %v1329 = vadd.f32 %v1192, %v1328
    %v1330 = vpop.f32.mrb[0].mxu0
    %v1331 = vpop.f32.mrb[0].mxu0
    %v1332 = vadd.f32 %v1195, %v1331
    %v1333 = vpop.f32.mrb[0].mxu0
    %1334 = vmatprep.mubr.bf16.mxu0 %v747
    %1335 = vmatmul.mubr.bf16.gmra.mrb[0].mxu0 %v740
    %v1336 = vpop.f32.mrb[0].mxu0
    %v1337 = vadd.f32 %v1200, %v1336
    %v1338 = vpop.f32.mrb[0].mxu0
    %v1339 = vpop.f32.mrb[0].mxu0
    %v1340 = vadd.f32 %v1203, %v1339
    %v1341 = vpop.f32.mrb[0].mxu0
    %1342 = vmatprep.mubr.bf16.mxu0 %v751
    %1343 = vmatmul.mubr.bf16.gmra.mrb[0].mxu0 %v744
    %v1344 = vpop.f32.mrb[0].mxu0
    %v1345 = vadd.f32 %v1208, %v1344
    %v1346 = vpop.f32.mrb[0].mxu0
    %v1347 = vpop.f32.mrb[0].mxu0
    %v1348 = vadd.f32 %v1211, %v1347
    %v1349 = vpop.f32.mrb[0].mxu0
    %1350 = vdwg.mxu0
    %1351 = vmatprep.subr.bf16.mxu0 0
    %1352 = vmatpush1.bf16.msra.mxu0 %v1008
    %1353 = vmatprep.subr.bf16.mxu0 0
    %1354 = vmatpush1.bf16.msra.mxu0 %v1009
    %1355 = vmatprep.subr.bf16.mxu0 0
    %1356 = vmatpush1.bf16.msra.mxu0 %v1010
    %1357 = vmatprep.subr.bf16.mxu0 0
    %1358 = vmatpush1.bf16.msra.mxu0 %v1011
    %1359 = vmatprep.subr.bf16.mxu0 0
    %1360 = vmatpush1.bf16.msra.mxu0 0
    %1361 = vmatprep.subr.bf16.mxu0 0
    %1362 = vmatpush1.bf16.msra.mxu0 0
    %1363 = vmatprep.subr.bf16.mxu0 0
    %1364 = vmatpush1.bf16.msra.mxu0 0
    %1365 = vmatprep.subr.bf16.mxu0 0
    %1366 = vmatpush1.bf16.msra.mxu0 0
    %1367 = vmatprep.subr.bf16.mxu0 0
    %1368 = vmatpush1.bf16.msra.mxu0 0
    %1369 = vmatprep.subr.bf16.mxu0 0
    %1370 = vmatpush1.bf16.msra.mxu0 0
    %1371 = vmatprep.subr.bf16.mxu0 0
    %1372 = vmatpush1.bf16.msra.mxu0 0
    %1373 = vmatprep.subr.bf16.mxu0 0
    %1374 = vmatpush1.bf16.msra.mxu0 0
    %1375 = vmatprep.subr.bf16.mxu0 0
    %1376 = vmatpush1.bf16.msra.mxu0 0
    %1377 = vmatprep.subr.bf16.mxu0 0
    %1378 = vmatpush1.bf16.msra.mxu0 0
    %1379 = vmatprep.subr.bf16.mxu0 0
    %1380 = vmatpush1.bf16.msra.mxu0 0
    %1381 = vmatprep.subr.bf16.mxu0 0
    %1382 = vmatpush1.bf16.msra.mxu0 0
    %1383 = vmatprep.mubr.bf16.mxu0 0
    %1384 = vmatmul.mubr.bf16.gmra.mrb[0].mxu0 %v1049
    %v1385 = vpop.f32.mrb[0].mxu0
    %v1386 = vadd.f32 %v1249, %v1385
    %v1387 = vpop.f32.mrb[0].mxu0
    %v1388 = vpop.f32.mrb[0].mxu0
    %v1389 = vadd.f32 %v1252, %v1388
    %v1390 = vpop.f32.mrb[0].mxu0
    %1391 = vmatprep.mubr.bf16.mxu0 0
    %1392 = vmatmul.mubr.bf16.gmra.mrb[0].mxu0 %v1051
    %v1393 = vpop.f32.mrb[0].mxu0
    %v1394 = vadd.f32 %v1257, %v1393
    %v1395 = vpop.f32.mrb[0].mxu0
    %v1396 = vpop.f32.mrb[0].mxu0
    %v1397 = vadd.f32 %v1260, %v1396
    %v1398 = vpop.f32.mrb[0].mxu0
    %1399 = vmatprep.mubr.bf16.mxu0 0
    %1400 = vmatmul.mubr.bf16.gmra.mrb[0].mxu0 %v1053
    %v1401 = vpop.f32.mrb[0].mxu0
    %v1402 = vadd.f32 %v1265, %v1401
    %v1403 = vpop.f32.mrb[0].mxu0
    %v1404 = vpop.f32.mrb[0].mxu0
    %v1405 = vadd.f32 %v1268, %v1404
    %v1406 = vpop.f32.mrb[0].mxu0
    %1407 = vmatprep.mubr.bf16.mxu0 0
    %1408 = vmatmul.mubr.bf16.gmra.mrb[0].mxu0 %v1055
    %v1409 = vpop.f32.mrb[0].mxu0
    %v1410 = vadd.f32 %v1273, %v1409
    %v1411 = vpop.f32.mrb[0].mxu0
    %v1412 = vpop.f32.mrb[0].mxu0
    %v1413 = vadd.f32 %v1276, %v1412
    %v1414 = vpop.f32.mrb[0].mxu0
    %1415 = vmatprep.mubr.bf16.mxu0 0
    %1416 = vmatmul.mubr.bf16.gmra.mrb[0].mxu0 %v1057
    %v1417 = vpop.f32.mrb[0].mxu0
    %v1418 = vadd.f32 %v1281, %v1417
    %v1419 = vpop.f32.mrb[0].mxu0
    %v1420 = vpop.f32.mrb[0].mxu0
    %v1421 = vadd.f32 %v1284, %v1420
    %v1422 = vpop.f32.mrb[0].mxu0
    %1423 = vmatprep.mubr.bf16.mxu0 0
    %1424 = vmatmul.mubr.bf16.gmra.mrb[0].mxu0 %v1059
    %v1425 = vpop.f32.mrb[0].mxu0
    %v1426 = vadd.f32 %v1289, %v1425
    %v1427 = vpop.f32.mrb[0].mxu0
    %v1428 = vpop.f32.mrb[0].mxu0
    %v1429 = vadd.f32 %v1292, %v1428
    %v1430 = vpop.f32.mrb[0].mxu0
    %1431 = vmatprep.mubr.bf16.mxu0 0
    %1432 = vmatmul.mubr.bf16.gmra.mrb[0].mxu0 %v1061
    %v1433 = vpop.f32.mrb[0].mxu0
    %v1434 = vadd.f32 %v1297, %v1433
    %v1435 = vpop.f32.mrb[0].mxu0
    %v1436 = vpop.f32.mrb[0].mxu0
    %v1437 = vadd.f32 %v1300, %v1436
    %v1438 = vpop.f32.mrb[0].mxu0
    %1439 = vmatprep.mubr.bf16.mxu0 0
    %1440 = vmatmul.mubr.bf16.gmra.mrb[0].mxu0 %v1063
    %v1441 = vpop.f32.mrb[0].mxu0
    %v1442 = vadd.f32 %v1305, %v1441
    %v1443 = vpop.f32.mrb[0].mxu0
    %v1444 = vpop.f32.mrb[0].mxu0
    %v1445 = vadd.f32 %v1308, %v1444
    %v1446 = vpop.f32.mrb[0].mxu0
    %1447 = vmatprep.mubr.bf16.mxu0 0
    %1448 = vmatmul.mubr.bf16.gmra.mrb[0].mxu0 %v1065
    %v1449 = vpop.f32.mrb[0].mxu0
    %v1450 = vadd.f32 %v1313, %v1449
    %v1451 = vpop.f32.mrb[0].mxu0
    %v1452 = vpop.f32.mrb[0].mxu0
    %v1453 = vadd.f32 %v1316, %v1452
    %v1454 = vpop.f32.mrb[0].mxu0
    %1455 = vmatprep.mubr.bf16.mxu0 0
    %1456 = vmatmul.mubr.bf16.gmra.mrb[0].mxu0 %v1067
    %v1457 = vpop.f32.mrb[0].mxu0
    %v1458 = vadd.f32 %v1321, %v1457
    %v1459 = vpop.f32.mrb[0].mxu0
    %v1460 = vpop.f32.mrb[0].mxu0
    %v1461 = vadd.f32 %v1324, %v1460
    %v1462 = vpop.f32.mrb[0].mxu0
    %1463 = vmatprep.mubr.bf16.mxu0 0
    %1464 = vmatmul.mubr.bf16.gmra.mrb[0].mxu0 %v1069
    %v1465 = vpop.f32.mrb[0].mxu0
    %v1466 = vadd.f32 %v1329, %v1465
    %v1467 = vpop.f32.mrb[0].mxu0
    %v1468 = vpop.f32.mrb[0].mxu0
    %v1469 = vadd.f32 %v1332, %v1468
    %v1470 = vpop.f32.mrb[0].mxu0
    %1471 = vmatprep.mubr.bf16.mxu0 0
    %1472 = vmatmul.mubr.bf16.gmra.mrb[0].mxu0 %v1072
    %v1473 = vpop.f32.mrb[0].mxu0
    %v1474 = vadd.f32 %v1337, %v1473
    %v1475 = vpop.f32.mrb[0].mxu0
    %v1476 = vpop.f32.mrb[0].mxu0
    %v1477 = vadd.f32 %v1340, %v1476
    %v1478 = vpop.f32.mrb[0].mxu0
    %1479 = vmatprep.mubr.bf16.mxu0 0
    %1480 = vmatmul.mubr.bf16.gmra.mrb[0].mxu0 %v1075
    %v1481 = vpop.f32.mrb[0].mxu0
    %v1482 = vadd.f32 %v1345, %v1481
    %v1483 = vpop.f32.mrb[0].mxu0
    %v1484 = vpop.f32.mrb[0].mxu0
    %v1485 = vadd.f32 %v1348, %v1484
    %v1486 = vpop.f32.mrb[0].mxu0
    %1487 = vdwg.mxu0
    %v1488 = vmax.f32 %v1386, 0.0
    %v1489 = vmax.f32 %v1389, 0.0
    %v1490 = vmax.f32 %v1394, 0.0
    %v1491 = vmax.f32 %v1397, 0.0
    %v1492 = vmax.f32 %v1402, 0.0
    %v1493 = vmax.f32 %v1405, 0.0
    %v1494 = vmax.f32 %v1410, 0.0
    %v1495 = vmax.f32 %v1413, 0.0
    %v1496 = vmax.f32 %v1418, 0.0
    %v1497 = vmax.f32 %v1421, 0.0
    %v1498 = vmax.f32 %v1426, 0.0
    %v1499 = vmax.f32 %v1429, 0.0
    %v1500 = vmax.f32 %v1434, 0.0
    %v1501 = vmax.f32 %v1437, 0.0
    %v1502 = vmax.f32 %v1442, 0.0
    %v1503 = vmax.f32 %v1445, 0.0
    %v1504 = vmax.f32 %v1450, 0.0
    %v1505 = vmax.f32 %v1453, 0.0
    %v1506 = vmax.f32 %v1458, 0.0
    %v1507 = vmax.f32 %v1461, 0.0
    %v1508 = vmax.f32 %v1466, 0.0
    %v1509 = vmax.f32 %v1469, 0.0
    %v1510 = vmax.f32 %v1474, 0.0
    %v1511 = vmax.f32 %v1477, 0.0
    %v1512 = vmax.f32 %v1482, 0.0
    %v1513 = vmax.f32 %v1485, 0.0
    %1515 = vset.pattern.permute.xlu0 0
    %1516 = vperm.xlu0 %1515, %v64
    %v1517 = vpop.permute.xlu0 %1516
    %1520 = vset.pattern.permute.xlu0 0
    %1521 = vperm.xlu0 %1520, %v65
    %v1522 = vpop.permute.xlu0 %1521
    %1525 = vset.pattern.permute.xlu0 0
    %1526 = vperm.xlu0 %1525, %v66
    %v1527 = vpop.permute.xlu0 %1526
    %1530 = vset.pattern.permute.xlu0 0
    %1531 = vperm.xlu0 %1530, %v67
    %v1532 = vpop.permute.xlu0 %1531
    %1535 = vset.pattern.permute.xlu0 0
    %1536 = vperm.xlu0 %1535, %v68
    %v1537 = vpop.permute.xlu0 %1536
    %1540 = vset.pattern.permute.xlu0 0
    %1541 = vperm.xlu0 %1540, %v69
    %v1542 = vpop.permute.xlu0 %1541
    %1545 = vset.pattern.permute.xlu0 0
    %1546 = vperm.xlu0 %1545, %v70
    %v1547 = vpop.permute.xlu0 %1546
    %1550 = vset.pattern.permute.xlu0 0
    %1551 = vperm.xlu0 %1550, %v71
    %v1552 = vpop.permute.xlu0 %1551
    %1555 = vset.pattern.permute.xlu0 0
    %1556 = vperm.xlu0 %1555, %v72
    %v1557 = vpop.permute.xlu0 %1556
    %1560 = vset.pattern.permute.xlu0 0
    %1561 = vperm.xlu0 %1560, %v73
    %v1562 = vpop.permute.xlu0 %1561
    %1565 = vset.pattern.permute.xlu0 0
    %1566 = vperm.xlu0 %1565, %v74
    %v1567 = vpop.permute.xlu0 %1566
    %1570 = vset.pattern.permute.xlu0 0
    %1571 = vperm.xlu0 %1570, %v75
    %v1572 = vpop.permute.xlu0 %1571
    %1575 = vset.pattern.permute.xlu0 0
    %1576 = vperm.xlu0 %1575, %v76
    %v1577 = vpop.permute.xlu0 %1576
    %1580 = vset.pattern.permute.xlu0 0
    %1581 = vperm.xlu0 %1580, %v77
    %v1582 = vpop.permute.xlu0 %1581
    %1585 = vset.pattern.permute.xlu0 0
    %1586 = vperm.xlu0 %1585, %v78
    %v1587 = vpop.permute.xlu0 %1586
    %1590 = vset.pattern.permute.xlu0 0
    %1591 = vperm.xlu0 %1590, %v79
    %v1592 = vpop.permute.xlu0 %1591
    %1595 = vset.pattern.permute.xlu0 0
    %1596 = vperm.xlu0 %1595, %v80
    %v1597 = vpop.permute.xlu0 %1596
    %1600 = vset.pattern.permute.xlu0 0
    %1601 = vperm.xlu0 %1600, %v81
    %v1602 = vpop.permute.xlu0 %1601
    %1605 = vset.pattern.permute.xlu0 0
    %1606 = vperm.xlu0 %1605, %v82
    %v1607 = vpop.permute.xlu0 %1606
    %1610 = vset.pattern.permute.xlu0 0
    %1611 = vperm.xlu0 %1610, %v83
    %v1612 = vpop.permute.xlu0 %1611
    %1615 = vset.pattern.permute.xlu0 0
    %1616 = vperm.xlu0 %1615, %v84
    %v1617 = vpop.permute.xlu0 %1616
    %1620 = vset.pattern.permute.xlu0 0
    %1621 = vperm.xlu0 %1620, %v85
    %v1622 = vpop.permute.xlu0 %1621
    %1625 = vset.pattern.permute.xlu0 0
    %1626 = vperm.xlu0 %1625, %v86
    %v1627 = vpop.permute.xlu0 %1626
    %1630 = vset.pattern.permute.xlu0 0
    %1631 = vperm.xlu0 %1630, %v87
    %v1632 = vpop.permute.xlu0 %1631
    %1635 = vset.pattern.permute.xlu0 0
    %1636 = vperm.xlu0 %1635, %v88
    %v1637 = vpop.permute.xlu0 %1636
    %1640 = vset.pattern.permute.xlu0 0
    %1641 = vperm.xlu0 %1640, %v89
    %v1642 = vpop.permute.xlu0 %1641
    %v1644 = vmul.f32 %v1488, %v1517
    %v1645 = vmul.f32 %v1489, %v1522
    %v1646 = vmul.f32 %v1490, %v1527
    %v1647 = vmul.f32 %v1491, %v1532
    %v1648 = vmul.f32 %v1492, %v1537
    %v1649 = vmul.f32 %v1493, %v1542
    %v1650 = vmul.f32 %v1494, %v1547
    %v1651 = vmul.f32 %v1495, %v1552
    %v1652 = vmul.f32 %v1496, %v1557
    %v1653 = vmul.f32 %v1497, %v1562
    %v1654 = vmul.f32 %v1498, %v1567
    %v1655 = vmul.f32 %v1499, %v1572
    %v1656 = vmul.f32 %v1500, %v1577
    %v1657 = vmul.f32 %v1501, %v1582
    %v1658 = vmul.f32 %v1502, %v1587
    %v1659 = vmul.f32 %v1503, %v1592
    %v1660 = vmul.f32 %v1504, %v1597
    %v1661 = vmul.f32 %v1505, %v1602
    %v1662 = vmul.f32 %v1506, %v1607
    %v1663 = vmul.f32 %v1507, %v1612
    %v1664 = vmul.f32 %v1508, %v1617
    %v1665 = vmul.f32 %v1509, %v1622
    %v1666 = vmul.f32 %v1510, %v1627
    %v1667 = vmul.f32 %v1511, %v1632
    %v1668 = vmul.f32 %v1512, %v1637
    %v1669 = vmul.f32 %v1513, %v1642
    %v1670 = vpack.c.bf16 %v1645, %v1644
    %v1671 = vpack.c.bf16 %v1647, %v1646
    %v1672 = vpack.c.bf16 %v1649, %v1648
    %v1673 = vpack.c.bf16 %v1651, %v1650
    %v1674 = vpack.c.bf16 %v1653, %v1652
    %v1675 = vpack.c.bf16 %v1655, %v1654
    %v1676 = vpack.c.bf16 %v1657, %v1656
    %v1677 = vpack.c.bf16 %v1659, %v1658
    %v1678 = vpack.c.bf16 %v1661, %v1660
    %v1679 = vpack.c.bf16 %v1663, %v1662
    %v1680 = vpack.c.bf16 %v1665, %v1664
    %v1681 = vpack.c.bf16 %v1667, %v1666
    %v1682 = vpack.c.bf16 %v1669, %v1668
    %v1684 = vshrl.u32 %v1670, 16
    %v1686 = vrot.slane %v1684, 3
    %v1687 = vshll.u32 %v1670, 16
    %v1689 = vrot.slane %v1687, 4
    %v1690 = vor.u32 %v1686, %v1689
    %v1692 = vshrl.u32 %v1671, 16
    %v1694 = vrot.slane %v1692, 3
    %v1695 = vshll.u32 %v1671, 16
    %v1697 = vrot.slane %v1695, 4
    %v1698 = vor.u32 %v1694, %v1697
    %v1699 = vsel %vm103, %v1690, %v1698
    %v1701 = vshrl.u32 %v1672, 16
    %v1703 = vrot.slane %v1701, 3
    %v1704 = vshll.u32 %v1672, 16
    %v1706 = vrot.slane %v1704, 4
    %v1707 = vor.u32 %v1703, %v1706
    %v1708 = vsel %vm103, %v1698, %v1707
    %v1710 = vshrl.u32 %v1673, 16
    %v1712 = vrot.slane %v1710, 3
    %v1713 = vshll.u32 %v1673, 16
    %v1715 = vrot.slane %v1713, 4
    %v1716 = vor.u32 %v1712, %v1715
    %v1717 = vsel %vm103, %v1707, %v1716
    %v1719 = vshrl.u32 %v1674, 16
    %v1721 = vrot.slane %v1719, 3
    %v1722 = vshll.u32 %v1674, 16
    %v1724 = vrot.slane %v1722, 4
    %v1725 = vor.u32 %v1721, %v1724
    %v1726 = vsel %vm103, %v1716, %v1725
    %v1728 = vshrl.u32 %v1675, 16
    %v1730 = vrot.slane %v1728, 3
    %v1731 = vshll.u32 %v1675, 16
    %v1733 = vrot.slane %v1731, 4
    %v1734 = vor.u32 %v1730, %v1733
    %v1735 = vsel %vm103, %v1725, %v1734
    %v1737 = vshrl.u32 %v1676, 16
    %v1739 = vrot.slane %v1737, 3
    %v1740 = vshll.u32 %v1676, 16
    %v1742 = vrot.slane %v1740, 4
    %v1743 = vor.u32 %v1739, %v1742
    %v1744 = vsel %vm103, %v1734, %v1743
    %v1746 = vshrl.u32 %v1677, 16
    %v1748 = vrot.slane %v1746, 3
    %v1749 = vshll.u32 %v1677, 16
    %v1751 = vrot.slane %v1749, 4
    %v1752 = vor.u32 %v1748, %v1751
    %v1753 = vsel %vm103, %v1743, %v1752
    %v1755 = vshrl.u32 %v1678, 16
    %v1757 = vrot.slane %v1755, 3
    %v1758 = vshll.u32 %v1678, 16
    %v1760 = vrot.slane %v1758, 4
    %v1761 = vor.u32 %v1757, %v1760
    %v1762 = vsel %vm103, %v1752, %v1761
    %v1764 = vshrl.u32 %v1679, 16
    %v1766 = vrot.slane %v1764, 3
    %v1767 = vshll.u32 %v1679, 16
    %v1769 = vrot.slane %v1767, 4
    %v1770 = vor.u32 %v1766, %v1769
    %v1771 = vsel %vm103, %v1761, %v1770
    %v1773 = vshrl.u32 %v1680, 16
    %v1775 = vrot.slane %v1773, 3
    %v1776 = vshll.u32 %v1680, 16
    %v1778 = vrot.slane %v1776, 4
    %v1779 = vor.u32 %v1775, %v1778
    %v1780 = vsel %vm103, %v1770, %v1779
    %v1782 = vshrl.u32 %v1681, 16
    %v1784 = vrot.slane %v1782, 3
    %v1785 = vshll.u32 %v1681, 16
    %v1787 = vrot.slane %v1785, 4
    %v1788 = vor.u32 %v1784, %v1787
    %v1789 = vsel %vm103, %v1779, %v1788
    %v1791 = vshrl.u32 %v1682, 16
    %v1793 = vrot.slane %v1791, 3
    %v1794 = vshll.u32 %v1682, 16
    %v1796 = vrot.slane %v1794, 4
    %v1797 = vor.u32 %v1793, %v1796
    %v1798 = vsel %vm103, %v1788, %v1797
    %vm1813 = vcmask 261124
    %vm1814 = vsmask.f32 7954
    %vm1815 = vmand %vm1813, %vm1814
    %v1816 = vld [vmem:[#allocation2] sm:$0xf0]
    %v1817 = vsel %vm1815, %v1690, %v1816
    %1818 = vst [vmem:[#allocation2] sm:$0xf0] %v1817
    %vm1819 = vcmask 261120
    %1820 = vst.msk [vmem:[#allocation2 + $0x8] sm:$0xff] %vm1819, %v1699
    %1821 = vst.msk [vmem:[#allocation2 + $0x10] sm:$0xff] %vm1819, %v1708
    %1822 = vst.msk [vmem:[#allocation2 + $0x18] sm:$0xff] %vm1819, %v1717
    %1823 = vst.msk [vmem:[#allocation2 + $0x20] sm:$0xff] %vm1819, %v1726
    %1824 = vst.msk [vmem:[#allocation2 + $0x28] sm:$0xff] %vm1819, %v1735
    %1825 = vst.msk [vmem:[#allocation2 + $0x30] sm:$0xff] %vm1819, %v1744
    %1826 = vst.msk [vmem:[#allocation2 + $0x38] sm:$0xff] %vm1819, %v1753
    %1827 = vst.msk [vmem:[#allocation2 + $0x40] sm:$0xff] %vm1819, %v1762
    %1828 = vst.msk [vmem:[#allocation2 + $0x48] sm:$0xff] %vm1819, %v1771
    %1829 = vst.msk [vmem:[#allocation2 + $0x50] sm:$0xff] %vm1819, %v1780
    %1830 = vst.msk [vmem:[#allocation2 + $0x58] sm:$0xff] %vm1819, %v1789
    %1831 = vst.msk [vmem:[#allocation2 + $0x60] sm:$0xff] %vm1819, %v1798
    %vm1832 = vcmask 257024
    %vm1833 = vsmask.f32 3328
    %vm1834 = vmand %vm1832, %vm1833
    %v1835 = vld [vmem:[#allocation2 + $0x68] sm:$0xf]
    %v1836 = vsel %vm1834, %v1797, %v1835
    %1837 = vst [vmem:[#allocation2 + $0x68] sm:$0xf] %v1836
    %v1838 = vld [vmem:[#allocation3] sm:$0x1f]
    %v1839 = vsel %vm104, 0, %v1838
    %1840 = vst [vmem:[#allocation3] sm:$0x1f] %v1839
    %v1841 = vld [vmem:[#allocation3 + $0x68] sm:$0xf8]
    %v1842 = vsel %vm110, 0, %v1841
    %1843 = vst [vmem:[#allocation3 + $0x68] sm:$0xf8] %v1842
    %v1844 = vld [vmem:[#allocation2] sm:$0xff]
    %v1845 = vld [vmem:[#allocation2 + $0x8] sm:$0xff]
    %v1846 = vld [vmem:[#allocation2 + $0x10] sm:$0xff]
    %v1847 = vld [vmem:[#allocation2 + $0x18] sm:$0xff]
    %v1848 = vld [vmem:[#allocation2 + $0x20] sm:$0xff]
    %v1849 = vld [vmem:[#allocation2 + $0x28] sm:$0xff]
    %v1850 = vld [vmem:[#allocation2 + $0x30] sm:$0xff]
    %v1851 = vld [vmem:[#allocation2 + $0x38] sm:$0xff]
    %v1852 = vld [vmem:[#allocation2 + $0x40] sm:$0xff]
    %v1853 = vld [vmem:[#allocation2 + $0x48] sm:$0xff]
    %v1854 = vld [vmem:[#allocation2 + $0x50] sm:$0xff]
    %v1855 = vld [vmem:[#allocation2 + $0x58] sm:$0xff]
    %v1856 = vld [vmem:[#allocation2 + $0x60] sm:$0x7f]
    %v1857 = vld [vmem:[#allocation2 + $0x60] sm:$0xff]
    %v1858 = vld [vmem:[#allocation2] sm:$0xfe]
    %v1859 = vld [vmem:[#allocation2] sm:$0xf0]
    %v1860 = vld [vmem:[#allocation2 + $0x68] sm:$0x7]
    %v1861 = vld [vmem:[#allocation2 + $0x68] sm:$0xf]
    %v1862 = vld [vmem:[#allocation2] sm:$0xe0]
    %v1863 = vld [vmem:[#allocation2 + $0x68] sm:$0x7f]
    %v1864 = vld [vmem:[#allocation2 + $0x68] sm:$0xff]
    %v1865 = vld [vmem:[#allocation2 + $0x8] sm:$0xfe]
    %v1867 = vshrl.u32 %v1844, 16
    %v1869 = vshll.u32 %v1844, 16
    %v1871 = vrot.slane %v1869, 1
    %v1872 = vor.u32 %v1867, %v1871
    %v1874 = vshll.u32 %v1845, 16
    %v1876 = vrot.slane %v1874, 1
    %v1877 = vsel %vm216, %v1872, %v1876
    %v1878 = vshrl.u32 %v1845, 16
    %v1880 = vor.u32 %v1878, %v1876
    %v1882 = vshll.u32 %v1846, 16
    %v1884 = vrot.slane %v1882, 1
    %v1885 = vsel %vm216, %v1880, %v1884
    %v1886 = vshrl.u32 %v1846, 16
    %v1888 = vor.u32 %v1886, %v1884
    %v1890 = vshll.u32 %v1847, 16
    %v1892 = vrot.slane %v1890, 1
    %v1893 = vsel %vm216, %v1888, %v1892
    %v1894 = vshrl.u32 %v1847, 16
    %v1896 = vor.u32 %v1894, %v1892
    %v1898 = vshll.u32 %v1848, 16
    %v1900 = vrot.slane %v1898, 1
    %v1901 = vsel %vm216, %v1896, %v1900
    %v1902 = vshrl.u32 %v1848, 16
    %v1904 = vor.u32 %v1902, %v1900
    %v1906 = vshll.u32 %v1849, 16
    %v1908 = vrot.slane %v1906, 1
    %v1909 = vsel %vm216, %v1904, %v1908
    %v1910 = vshrl.u32 %v1849, 16
    %v1912 = vor.u32 %v1910, %v1908
    %v1914 = vshll.u32 %v1850, 16
    %v1916 = vrot.slane %v1914, 1
    %v1917 = vsel %vm216, %v1912, %v1916
    %v1918 = vshrl.u32 %v1850, 16
    %v1920 = vor.u32 %v1918, %v1916
    %v1922 = vshll.u32 %v1851, 16
    %v1924 = vrot.slane %v1922, 1
    %v1925 = vsel %vm216, %v1920, %v1924
    %v1926 = vshrl.u32 %v1851, 16
    %v1928 = vor.u32 %v1926, %v1924
    %v1930 = vshll.u32 %v1852, 16
    %v1932 = vrot.slane %v1930, 1
    %v1933 = vsel %vm216, %v1928, %v1932
    %v1934 = vshrl.u32 %v1852, 16
    %v1936 = vor.u32 %v1934, %v1932
    %v1938 = vshll.u32 %v1853, 16
    %v1940 = vrot.slane %v1938, 1
    %v1941 = vsel %vm216, %v1936, %v1940
    %v1942 = vshrl.u32 %v1853, 16
    %v1944 = vor.u32 %v1942, %v1940
    %v1946 = vshll.u32 %v1854, 16
    %v1948 = vrot.slane %v1946, 1
    %v1949 = vsel %vm216, %v1944, %v1948
    %v1950 = vshrl.u32 %v1854, 16
    %v1952 = vor.u32 %v1950, %v1948
    %v1954 = vshll.u32 %v1855, 16
    %v1956 = vrot.slane %v1954, 1
    %v1957 = vsel %vm216, %v1952, %v1956
    %v1958 = vshrl.u32 %v1855, 16
    %v1960 = vor.u32 %v1958, %v1956
    %v1962 = vshll.u32 %v1857, 16
    %v1964 = vrot.slane %v1962, 1
    %v1965 = vsel %vm216, %v1960, %v1964
    %v1966 = vshrl.u32 %v1857, 16
    %v1968 = vor.u32 %v1966, %v1964
    %1969 = vrot.lane.b32.xlu0 %v1877, 32
    %v1970 = vpop.permute.xlu0 %1969
    %1971 = vrot.lane.b32.xlu0 %v1885, 32
    %v1972 = vpop.permute.xlu0 %1971
    %1973 = vrot.lane.b32.xlu0 %v1893, 32
    %v1974 = vpop.permute.xlu0 %1973
    %1975 = vrot.lane.b32.xlu0 %v1901, 32
    %v1976 = vpop.permute.xlu0 %1975
    %1977 = vrot.lane.b32.xlu0 %v1909, 32
    %v1978 = vpop.permute.xlu0 %1977
    %1979 = vrot.lane.b32.xlu0 %v1917, 32
    %v1980 = vpop.permute.xlu0 %1979
    %1981 = vrot.lane.b32.xlu0 %v1925, 32
    %v1982 = vpop.permute.xlu0 %1981
    %1983 = vrot.lane.b32.xlu0 %v1933, 32
    %v1984 = vpop.permute.xlu0 %1983
    %1985 = vrot.lane.b32.xlu0 %v1941, 32
    %v1986 = vpop.permute.xlu0 %1985
    %1987 = vrot.lane.b32.xlu0 %v1949, 32
    %v1988 = vpop.permute.xlu0 %1987
    %1989 = vrot.lane.b32.xlu0 %v1957, 32
    %v1990 = vpop.permute.xlu0 %1989
    %1991 = vrot.lane.b32.xlu0 %v1965, 32
    %v1992 = vpop.permute.xlu0 %1991
    %1993 = vrot.lane.b32.xlu0 %v1968, 32
    %v1994 = vpop.permute.xlu0 %1993
    %v2008 = vrot.slane %v1858, 1
    %v2009 = vrot.slane %v1845, 1
    %v2010 = vsel %vm349, %v2008, %v2009
    %v2011 = vrot.slane %v1846, 1
    %v2012 = vsel %vm349, %v2009, %v2011
    %v2013 = vrot.slane %v1847, 1
    %v2014 = vsel %vm349, %v2011, %v2013
    %v2015 = vrot.slane %v1848, 1
    %v2016 = vsel %vm349, %v2013, %v2015
    %v2017 = vrot.slane %v1849, 1
    %v2018 = vsel %vm349, %v2015, %v2017
    %v2019 = vrot.slane %v1850, 1
    %v2020 = vsel %vm349, %v2017, %v2019
    %v2021 = vrot.slane %v1851, 1
    %v2022 = vsel %vm349, %v2019, %v2021
    %v2023 = vrot.slane %v1852, 1
    %v2024 = vsel %vm349, %v2021, %v2023
    %v2025 = vrot.slane %v1853, 1
    %v2026 = vsel %vm349, %v2023, %v2025
    %v2027 = vrot.slane %v1854, 1
    %v2028 = vsel %vm349, %v2025, %v2027
    %v2029 = vrot.slane %v1855, 1
    %v2030 = vsel %vm349, %v2027, %v2029
    %v2031 = vrot.slane %v1857, 1
    %v2032 = vsel %vm349, %v2029, %v2031
    %2033 = vrot.lane.b32.xlu0 %v2010, 64
    %v2034 = vpop.permute.xlu0 %2033
    %2035 = vrot.lane.b32.xlu0 %v2012, 64
    %v2036 = vpop.permute.xlu0 %2035
    %2037 = vrot.lane.b32.xlu0 %v2014, 64
    %v2038 = vpop.permute.xlu0 %2037
    %2039 = vrot.lane.b32.xlu0 %v2016, 64
    %v2040 = vpop.permute.xlu0 %2039
    %2041 = vrot.lane.b32.xlu0 %v2018, 64
    %v2042 = vpop.permute.xlu0 %2041
    %2043 = vrot.lane.b32.xlu0 %v2020, 64
    %v2044 = vpop.permute.xlu0 %2043
    %2045 = vrot.lane.b32.xlu0 %v2022, 64
    %v2046 = vpop.permute.xlu0 %2045
    %2047 = vrot.lane.b32.xlu0 %v2024, 64
    %v2048 = vpop.permute.xlu0 %2047
    %2049 = vrot.lane.b32.xlu0 %v2026, 64
    %v2050 = vpop.permute.xlu0 %2049
    %2051 = vrot.lane.b32.xlu0 %v2028, 64
    %v2052 = vpop.permute.xlu0 %2051
    %2053 = vrot.lane.b32.xlu0 %v2030, 64
    %v2054 = vpop.permute.xlu0 %2053
    %2055 = vrot.lane.b32.xlu0 %v2032, 64
    %v2056 = vpop.permute.xlu0 %2055
    %2057 = vrot.lane.b32.xlu0 %v2031, 64
    %v2058 = vpop.permute.xlu0 %2057
    %vm2061 = vcmask 1043456
    %v2062 = vrot.slane %v1859, 4
    %v2063 = vrot.slane %v1845, 4
    %v2064 = vsel %vm2061, %v2062, %v2063
    %v2065 = vrot.slane %v1846, 4
    %v2066 = vsel %vm2061, %v2063, %v2065
    %v2067 = vrot.slane %v1847, 4
    %v2068 = vsel %vm2061, %v2065, %v2067
    %v2069 = vrot.slane %v1848, 4
    %v2070 = vsel %vm2061, %v2067, %v2069
    %v2071 = vrot.slane %v1849, 4
    %v2072 = vsel %vm2061, %v2069, %v2071
    %v2073 = vrot.slane %v1850, 4
    %v2074 = vsel %vm2061, %v2071, %v2073
    %v2075 = vrot.slane %v1851, 4
    %v2076 = vsel %vm2061, %v2073, %v2075
    %v2077 = vrot.slane %v1852, 4
    %v2078 = vsel %vm2061, %v2075, %v2077
    %v2079 = vrot.slane %v1853, 4
    %v2080 = vsel %vm2061, %v2077, %v2079
    %v2081 = vrot.slane %v1854, 4
    %v2082 = vsel %vm2061, %v2079, %v2081
    %v2083 = vrot.slane %v1855, 4
    %v2084 = vsel %vm2061, %v2081, %v2083
    %v2085 = vrot.slane %v1857, 4
    %v2086 = vsel %vm2061, %v2083, %v2085
    %v2087 = vrot.slane %v1860, 4
    %v2088 = vsel %vm2061, %v2085, %v2087
    %2089 = vrot.lane.b32.xlu0 %v2064, 96
    %v2090 = vpop.permute.xlu0 %2089
    %2091 = vrot.lane.b32.xlu0 %v2066, 96
    %v2092 = vpop.permute.xlu0 %2091
    %2093 = vrot.lane.b32.xlu0 %v2068, 96
    %v2094 = vpop.permute.xlu0 %2093
    %2095 = vrot.lane.b32.xlu0 %v2070, 96
    %v2096 = vpop.permute.xlu0 %2095
    %2097 = vrot.lane.b32.xlu0 %v2072, 96
    %v2098 = vpop.permute.xlu0 %2097
    %2099 = vrot.lane.b32.xlu0 %v2074, 96
    %v2100 = vpop.permute.xlu0 %2099
    %2101 = vrot.lane.b32.xlu0 %v2076, 96
    %v2102 = vpop.permute.xlu0 %2101
    %2103 = vrot.lane.b32.xlu0 %v2078, 96
    %v2104 = vpop.permute.xlu0 %2103
    %2105 = vrot.lane.b32.xlu0 %v2080, 96
    %v2106 = vpop.permute.xlu0 %2105
    %2107 = vrot.lane.b32.xlu0 %v2082, 96
    %v2108 = vpop.permute.xlu0 %2107
    %2109 = vrot.lane.b32.xlu0 %v2084, 96
    %v2110 = vpop.permute.xlu0 %2109
    %2111 = vrot.lane.b32.xlu0 %v2086, 96
    %v2112 = vpop.permute.xlu0 %2111
    %2113 = vrot.lane.b32.xlu0 %v2088, 96
    %v2114 = vpop.permute.xlu0 %2113
    %v2116 = vshrl.u32 %v1859, 16
    %v2118 = vrot.slane %v2116, 4
    %v2119 = vshll.u32 %v1859, 16
    %v2121 = vrot.slane %v2119, 5
    %v2122 = vor.u32 %v2118, %v2121
    %v2123 = vrot.slane %v1878, 4
    %v2124 = vrot.slane %v1874, 5
    %v2125 = vor.u32 %v2123, %v2124
    %v2126 = vsel %vm1833, %v2122, %v2125
    %v2127 = vrot.slane %v1886, 4
    %v2128 = vrot.slane %v1882, 5
    %v2129 = vor.u32 %v2127, %v2128
    %v2130 = vsel %vm1833, %v2125, %v2129
    %v2131 = vrot.slane %v1894, 4
    %v2132 = vrot.slane %v1890, 5
    %v2133 = vor.u32 %v2131, %v2132
    %v2134 = vsel %vm1833, %v2129, %v2133
    %v2135 = vrot.slane %v1902, 4
    %v2136 = vrot.slane %v1898, 5
    %v2137 = vor.u32 %v2135, %v2136
    %v2138 = vsel %vm1833, %v2133, %v2137
    %v2139 = vrot.slane %v1910, 4
    %v2140 = vrot.slane %v1906, 5
    %v2141 = vor.u32 %v2139, %v2140
    %v2142 = vsel %vm1833, %v2137, %v2141
    %v2143 = vrot.slane %v1918, 4
    %v2144 = vrot.slane %v1914, 5
    %v2145 = vor.u32 %v2143, %v2144
    %v2146 = vsel %vm1833, %v2141, %v2145
    %v2147 = vrot.slane %v1926, 4
    %v2148 = vrot.slane %v1922, 5
    %v2149 = vor.u32 %v2147, %v2148
    %v2150 = vsel %vm1833, %v2145, %v2149
    %v2151 = vrot.slane %v1934, 4
    %v2152 = vrot.slane %v1930, 5
    %v2153 = vor.u32 %v2151, %v2152
    %v2154 = vsel %vm1833, %v2149, %v2153
    %v2155 = vrot.slane %v1942, 4
    %v2156 = vrot.slane %v1938, 5
    %v2157 = vor.u32 %v2155, %v2156
    %v2158 = vsel %vm1833, %v2153, %v2157
    %v2159 = vrot.slane %v1950, 4
    %v2160 = vrot.slane %v1946, 5
    %v2161 = vor.u32 %v2159, %v2160
    %v2162 = vsel %vm1833, %v2157, %v2161
    %v2163 = vrot.slane %v1958, 4
    %v2164 = vrot.slane %v1954, 5
    %v2165 = vor.u32 %v2163, %v2164
    %v2166 = vsel %vm1833, %v2161, %v2165
    %v2167 = vrot.slane %v1966, 4
    %v2168 = vrot.slane %v1962, 5
    %v2169 = vor.u32 %v2167, %v2168
    %v2170 = vsel %vm1833, %v2165, %v2169
    %v2172 = vshrl.u32 %v1861, 16
    %v2174 = vrot.slane %v2172, 4
    %v2175 = vshll.u32 %v1861, 16
    %v2177 = vrot.slane %v2175, 5
    %v2178 = vor.u32 %v2174, %v2177
    %v2179 = vsel %vm1833, %v2169, %v2178
    %vm2182 = vcmask 1042432
    %v2183 = vrot.slane %v1862, 5
    %v2184 = vrot.slane %v1845, 5
    %v2185 = vsel %vm2182, %v2183, %v2184
    %v2186 = vrot.slane %v1846, 5
    %v2187 = vsel %vm2182, %v2184, %v2186
    %v2188 = vrot.slane %v1847, 5
    %v2189 = vsel %vm2182, %v2186, %v2188
    %v2190 = vrot.slane %v1848, 5
    %v2191 = vsel %vm2182, %v2188, %v2190
    %v2192 = vrot.slane %v1849, 5
    %v2193 = vsel %vm2182, %v2190, %v2192
    %v2194 = vrot.slane %v1850, 5
    %v2195 = vsel %vm2182, %v2192, %v2194
    %v2196 = vrot.slane %v1851, 5
    %v2197 = vsel %vm2182, %v2194, %v2196
    %v2198 = vrot.slane %v1852, 5
    %v2199 = vsel %vm2182, %v2196, %v2198
    %v2200 = vrot.slane %v1853, 5
    %v2201 = vsel %vm2182, %v2198, %v2200
    %v2202 = vrot.slane %v1854, 5
    %v2203 = vsel %vm2182, %v2200, %v2202
    %v2204 = vrot.slane %v1855, 5
    %v2205 = vsel %vm2182, %v2202, %v2204
    %v2206 = vrot.slane %v1857, 5
    %v2207 = vsel %vm2182, %v2204, %v2206
    %v2208 = vrot.slane %v1861, 5
    %v2209 = vsel %vm2182, %v2206, %v2208
    %2210 = vrot.lane.b32.xlu0 %v2185, 32
    %v2211 = vpop.permute.xlu0 %2210
    %2212 = vrot.lane.b32.xlu0 %v2187, 32
    %v2213 = vpop.permute.xlu0 %2212
    %2214 = vrot.lane.b32.xlu0 %v2189, 32
    %v2215 = vpop.permute.xlu0 %2214
    %2216 = vrot.lane.b32.xlu0 %v2191, 32
    %v2217 = vpop.permute.xlu0 %2216
    %2218 = vrot.lane.b32.xlu0 %v2193, 32
    %v2219 = vpop.permute.xlu0 %2218
    %2220 = vrot.lane.b32.xlu0 %v2195, 32
    %v2221 = vpop.permute.xlu0 %2220
    %2222 = vrot.lane.b32.xlu0 %v2197, 32
    %v2223 = vpop.permute.xlu0 %2222
    %2224 = vrot.lane.b32.xlu0 %v2199, 32
    %v2225 = vpop.permute.xlu0 %2224
    %2226 = vrot.lane.b32.xlu0 %v2201, 32
    %v2227 = vpop.permute.xlu0 %2226
    %2228 = vrot.lane.b32.xlu0 %v2203, 32
    %v2229 = vpop.permute.xlu0 %2228
    %2230 = vrot.lane.b32.xlu0 %v2205, 32
    %v2231 = vpop.permute.xlu0 %2230
    %2232 = vrot.lane.b32.xlu0 %v2207, 32
    %v2233 = vpop.permute.xlu0 %2232
    %2234 = vrot.lane.b32.xlu0 %v2209, 32
    %v2235 = vpop.permute.xlu0 %2234
    %2237 = vrot.lane.b32.xlu0 %v1845, 64
    %v2238 = vpop.permute.xlu0 %2237
    %2239 = vrot.lane.b32.xlu0 %v1846, 64
    %v2240 = vpop.permute.xlu0 %2239
    %2241 = vrot.lane.b32.xlu0 %v1847, 64
    %v2242 = vpop.permute.xlu0 %2241
    %2243 = vrot.lane.b32.xlu0 %v1848, 64
    %v2244 = vpop.permute.xlu0 %2243
    %2245 = vrot.lane.b32.xlu0 %v1849, 64
    %v2246 = vpop.permute.xlu0 %2245
    %2247 = vrot.lane.b32.xlu0 %v1850, 64
    %v2248 = vpop.permute.xlu0 %2247
    %2249 = vrot.lane.b32.xlu0 %v1851, 64
    %v2250 = vpop.permute.xlu0 %2249
    %2251 = vrot.lane.b32.xlu0 %v1852, 64
    %v2252 = vpop.permute.xlu0 %2251
    %2253 = vrot.lane.b32.xlu0 %v1853, 64
    %v2254 = vpop.permute.xlu0 %2253
    %2255 = vrot.lane.b32.xlu0 %v1854, 64
    %v2256 = vpop.permute.xlu0 %2255
    %2257 = vrot.lane.b32.xlu0 %v1855, 64
    %v2258 = vpop.permute.xlu0 %2257
    %2259 = vrot.lane.b32.xlu0 %v1857, 64
    %v2260 = vpop.permute.xlu0 %2259
    %2261 = vrot.lane.b32.xlu0 %v1863, 64
    %v2262 = vpop.permute.xlu0 %2261
    %v2264 = vshll.u32 %v1864, 16
    %v2266 = vrot.slane %v2264, 1
    %v2267 = vsel %vm216, %v1968, %v2266
    %v2268 = vshrl.u32 %v1864, 16
    %v2270 = vor.u32 %v2268, %v2266
    %2271 = vrot.lane.b32.xlu0 %v1885, 96
    %v2272 = vpop.permute.xlu0 %2271
    %2273 = vrot.lane.b32.xlu0 %v1893, 96
    %v2274 = vpop.permute.xlu0 %2273
    %2275 = vrot.lane.b32.xlu0 %v1901, 96
    %v2276 = vpop.permute.xlu0 %2275
    %2277 = vrot.lane.b32.xlu0 %v1909, 96
    %v2278 = vpop.permute.xlu0 %2277
    %2279 = vrot.lane.b32.xlu0 %v1917, 96
    %v2280 = vpop.permute.xlu0 %2279
    %2281 = vrot.lane.b32.xlu0 %v1925, 96
    %v2282 = vpop.permute.xlu0 %2281
    %2283 = vrot.lane.b32.xlu0 %v1933, 96
    %v2284 = vpop.permute.xlu0 %2283
    %2285 = vrot.lane.b32.xlu0 %v1941, 96
    %v2286 = vpop.permute.xlu0 %2285
    %2287 = vrot.lane.b32.xlu0 %v1949, 96
    %v2288 = vpop.permute.xlu0 %2287
    %2289 = vrot.lane.b32.xlu0 %v1957, 96
    %v2290 = vpop.permute.xlu0 %2289
    %2291 = vrot.lane.b32.xlu0 %v1965, 96
    %v2292 = vpop.permute.xlu0 %2291
    %2293 = vrot.lane.b32.xlu0 %v2267, 96
    %v2294 = vpop.permute.xlu0 %2293
    %2295 = vrot.lane.b32.xlu0 %v2270, 96
    %v2296 = vpop.permute.xlu0 %2295
    %v2299 = vrot.slane %v1865, 1
    %v2300 = vsel %vm349, %v2299, %v2011
    %v2301 = vrot.slane %v1864, 1
    %v2302 = vsel %vm349, %v2031, %v2301
    %v2304 = vsel %vm1819, %v1844, %v1970
    %v2306 = vsel %vm1819, %v1845, %v1972
    %v2308 = vsel %vm1819, %v1846, %v1974
    %v2310 = vsel %vm1819, %v1847, %v1976
    %v2312 = vsel %vm1819, %v1848, %v1978
    %v2314 = vsel %vm1819, %v1849, %v1980
    %v2316 = vsel %vm1819, %v1850, %v1982
    %v2318 = vsel %vm1819, %v1851, %v1984
    %v2320 = vsel %vm1819, %v1852, %v1986
    %v2322 = vsel %vm1819, %v1853, %v1988
    %v2324 = vsel %vm1819, %v1854, %v1990
    %v2326 = vsel %vm1819, %v1855, %v1992
    %v2329 = vsel %vm1819, %v1856, %v1994
    %v2331 = vsel %vm601, %v2304, %v2034
    %v2333 = vsel %vm601, %v2306, %v2036
    %v2335 = vsel %vm601, %v2308, %v2038
    %v2337 = vsel %vm601, %v2310, %v2040
    %v2339 = vsel %vm601, %v2312, %v2042
    %v2341 = vsel %vm601, %v2314, %v2044
    %v2343 = vsel %vm601, %v2316, %v2046
    %v2345 = vsel %vm601, %v2318, %v2048
    %v2347 = vsel %vm601, %v2320, %v2050
    %v2349 = vsel %vm601, %v2322, %v2052
    %v2351 = vsel %vm601, %v2324, %v2054
    %v2353 = vsel %vm601, %v2326, %v2056
    %v2355 = vsel %vm601, %v2329, %v2058
    %vm2356 = vcmask 785408
    %v2358 = vsel %vm2356, %v2331, %v2090
    %v2361 = vsel %vm2356, %v2333, %v2092
    %v2364 = vsel %vm2356, %v2335, %v2094
    %v2367 = vsel %vm2356, %v2337, %v2096
    %v2370 = vsel %vm2356, %v2339, %v2098
    %v2373 = vsel %vm2356, %v2341, %v2100
    %v2376 = vsel %vm2356, %v2343, %v2102
    %v2379 = vsel %vm2356, %v2345, %v2104
    %v2382 = vsel %vm2356, %v2347, %v2106
    %v2385 = vsel %vm2356, %v2349, %v2108
    %v2388 = vsel %vm2356, %v2351, %v2110
    %v2391 = vsel %vm2356, %v2353, %v2112
    %v2394 = vsel %vm2356, %v2355, %v2114
    %v2398 = vsel %vm1819, %v2126, %v2211
    %v2401 = vsel %vm1819, %v2130, %v2213
    %v2404 = vsel %vm1819, %v2134, %v2215
    %v2407 = vsel %vm1819, %v2138, %v2217
    %v2410 = vsel %vm1819, %v2142, %v2219
    %v2413 = vsel %vm1819, %v2146, %v2221
    %v2416 = vsel %vm1819, %v2150, %v2223
    %v2419 = vsel %vm1819, %v2154, %v2225
    %v2422 = vsel %vm1819, %v2158, %v2227
    %v2425 = vsel %vm1819, %v2162, %v2229
    %v2428 = vsel %vm1819, %v2166, %v2231
    %v2431 = vsel %vm1819, %v2170, %v2233
    %v2434 = vsel %vm1819, %v2179, %v2235
    %v2436 = vsel %vm601, %v2398, %v2238
    %v2438 = vsel %vm601, %v2401, %v2240
    %v2440 = vsel %vm601, %v2404, %v2242
    %v2442 = vsel %vm601, %v2407, %v2244
    %v2444 = vsel %vm601, %v2410, %v2246
    %v2446 = vsel %vm601, %v2413, %v2248
    %v2448 = vsel %vm601, %v2416, %v2250
    %v2450 = vsel %vm601, %v2419, %v2252
    %v2452 = vsel %vm601, %v2422, %v2254
    %v2454 = vsel %vm601, %v2425, %v2256
    %v2456 = vsel %vm601, %v2428, %v2258
    %v2458 = vsel %vm601, %v2431, %v2260
    %v2460 = vsel %vm601, %v2434, %v2262
    %v2462 = vsel %vm2356, %v2436, %v2272
    %v2465 = vsel %vm2356, %v2438, %v2274
    %v2468 = vsel %vm2356, %v2440, %v2276
    %v2471 = vsel %vm2356, %v2442, %v2278
    %v2474 = vsel %vm2356, %v2444, %v2280
    %v2477 = vsel %vm2356, %v2446, %v2282
    %v2480 = vsel %vm2356, %v2448, %v2284
    %v2483 = vsel %vm2356, %v2450, %v2286
    %v2486 = vsel %vm2356, %v2452, %v2288
    %v2489 = vsel %vm2356, %v2454, %v2290
    %v2492 = vsel %vm2356, %v2456, %v2292
    %v2495 = vsel %vm2356, %v2458, %v2294
    %v2498 = vsel %vm2356, %v2460, %v2296
    %v2500 = vld [vmem:[%s3] sm:$0xf]
    %v2501 = vld [vmem:[%s3 + $0x4] sm:$0xf]
    %v2502 = vld [vmem:[%s3 + $0x8] sm:$0xf]
    %v2503 = vld [vmem:[%s3 + $0xc] sm:$0xf]
    %v2504 = vld [vmem:[%s3 + $0x10] sm:$0xf]
    %v2505 = vld [vmem:[%s3 + $0x14] sm:$0xf]
    %v2506 = vld [vmem:[%s3 + $0x18] sm:$0xf]
    %v2507 = vld [vmem:[%s3 + $0x1c] sm:$0xf]
    %v2508 = vld [vmem:[%s3 + $0x20] sm:$0xf]
    %v2509 = vld [vmem:[%s3 + $0x24] sm:$0xf]
    %v2510 = vld [vmem:[%s3 + $0x28] sm:$0xf]
    %v2511 = vld [vmem:[%s3 + $0x2c] sm:$0xf]
    %v2512 = vld [vmem:[%s3 + $0x30] sm:$0xf]
    %v2513 = vld [vmem:[%s3 + $0x34] sm:$0xf]
    %v2514 = vld [vmem:[%s3 + $0x38] sm:$0xf]
    %v2515 = vld [vmem:[%s3 + $0x3c] sm:$0xf]
    %v2516 = vld [vmem:[%s3 + $0x40] sm:$0xf]
    %v2517 = vld [vmem:[%s3 + $0x44] sm:$0xf]
    %v2518 = vld [vmem:[%s3 + $0x48] sm:$0xf]
    %v2519 = vld [vmem:[%s3 + $0x4c] sm:$0xf]
    %v2520 = vld [vmem:[%s3 + $0x50] sm:$0xf]
    %v2521 = vld [vmem:[%s3 + $0x54] sm:$0xf]
    %v2522 = vld [vmem:[%s3 + $0x58] sm:$0xf]
    %v2523 = vld [vmem:[%s3 + $0x5c] sm:$0xf]
    %v2524 = vld [vmem:[%s3 + $0x60] sm:$0xf]
    %v2525 = vld [vmem:[%s3 + $0x64] sm:$0xf]
    %v2526 = vld [vmem:[%s3 + $0x68] sm:$0xf]
    %v2527 = vld [vmem:[%s3 + $0x6c] sm:$0xf]
    %v2528 = vld [vmem:[%s3 + $0x70] sm:$0xf]
    %v2529 = vld [vmem:[%s3 + $0x74] sm:$0xf]
    %v2530 = vld [vmem:[%s3 + $0x78] sm:$0xf]
    %v2531 = vld [vmem:[%s3 + $0x7c] sm:$0xf]
    %v2532 = vld [vmem:[%s3 + $0x80] sm:$0xf]
    %v2533 = vld [vmem:[%s3 + $0x84] sm:$0xf]
    %v2534 = vld [vmem:[%s3 + $0x88] sm:$0xf]
    %v2535 = vld [vmem:[%s3 + $0x8c] sm:$0xf]
    %v2536 = vld [vmem:[%s4] sm:$0x1]
    %v2538 = vlaneseq
    %v2539 = vshrl.u32 %v2538, 7
    %v2540 = vsub.s32 0, %v2539
    %v2541 = vrot.slane %v2536, %v2540
    %v2579 = vunpack.c.l.b16 %v2500
    %v2580 = vunpack.c.l.b16 %v2501
    %v2581 = vunpack.c.l.b16 %v2502
    %v2582 = vunpack.c.l.b16 %v2503
    %v2583 = vunpack.c.l.b16 %v2504
    %v2584 = vunpack.c.l.b16 %v2505
    %v2585 = vunpack.c.l.b16 %v2506
    %v2586 = vunpack.c.l.b16 %v2507
    %v2587 = vunpack.c.l.b16 %v2508
    %v2588 = vunpack.c.l.b16 %v2509
    %v2589 = vunpack.c.l.b16 %v2510
    %v2590 = vunpack.c.l.b16 %v2511
    %v2591 = vunpack.c.l.b16 %v2512
    %v2592 = vunpack.c.l.b16 %v2513
    %v2593 = vunpack.c.l.b16 %v2514
    %v2594 = vunpack.c.l.b16 %v2515
    %v2595 = vunpack.c.l.b16 %v2516
    %v2596 = vunpack.c.l.b16 %v2517
    %v2597 = vunpack.c.l.b16 %v2518
    %v2598 = vunpack.c.l.b16 %v2519
    %v2599 = vunpack.c.l.b16 %v2520
    %v2600 = vunpack.c.l.b16 %v2521
    %v2601 = vunpack.c.l.b16 %v2522
    %v2602 = vunpack.c.l.b16 %v2523
    %v2603 = vunpack.c.l.b16 %v2524
    %v2604 = vunpack.c.l.b16 %v2525
    %v2605 = vunpack.c.l.b16 %v2526
    %v2606 = vunpack.c.l.b16 %v2527
    %v2607 = vunpack.c.l.b16 %v2528
    %v2608 = vunpack.c.l.b16 %v2529
    %v2609 = vunpack.c.l.b16 %v2530
    %v2610 = vunpack.c.l.b16 %v2531
    %v2611 = vunpack.c.l.b16 %v2532
    %v2612 = vunpack.c.l.b16 %v2533
    %v2613 = vunpack.c.l.b16 %v2534
    %v2614 = vunpack.c.l.b16 %v2535
    %v2615 = vpack.c.b16 %v2580, %v2579
    %v2616 = vpack.c.b16 %v2582, %v2581
    %v2617 = vpack.c.b16 %v2584, %v2583
    %v2618 = vpack.c.b16 %v2586, %v2585
    %v2619 = vpack.c.b16 %v2588, %v2587
    %v2620 = vpack.c.b16 %v2590, %v2589
    %v2621 = vpack.c.b16 %v2592, %v2591
    %v2622 = vpack.c.b16 %v2594, %v2593
    %v2623 = vpack.c.b16 %v2596, %v2595
    %v2624 = vpack.c.b16 %v2598, %v2597
    %v2625 = vpack.c.b16 %v2600, %v2599
    %v2626 = vpack.c.b16 %v2602, %v2601
    %v2627 = vpack.c.b16 %v2604, %v2603
    %v2628 = vpack.c.b16 %v2606, %v2605
    %v2629 = vpack.c.b16 %v2608, %v2607
    %v2630 = vpack.c.b16 %v2610, %v2609
    %v2631 = vpack.c.b16 %v2612, %v2611
    %v2632 = vpack.c.b16 %v2614, %v2613
    %v2652 = vsel %vm1819, %v2300, 0
    %v2655 = vsel %vm1819, %v2014, 0
    %v2658 = vsel %vm1819, %v2016, 0
    %v2661 = vsel %vm1819, %v2018, 0
    %v2664 = vsel %vm1819, %v2020, 0
    %v2667 = vsel %vm1819, %v2022, 0
    %v2670 = vsel %vm1819, %v2024, 0
    %v2673 = vsel %vm1819, %v2026, 0
    %v2676 = vsel %vm1819, %v2028, 0
    %v2679 = vsel %vm1819, %v2030, 0
    %v2682 = vsel %vm1819, %v2032, 0
    %v2685 = vsel %vm1819, %v2302, 0
    %v2688 = vsel %vm1819, %v2301, 0
    %2690 = vmatprep.subr.bf16.mxu0 0
    %2691 = vmatpush1.bf16.msra.mxu0 %v2615
    %2692 = vmatprep.subr.bf16.mxu0 0
    %2693 = vmatpush1.bf16.msra.mxu0 %v2616
    %2694 = vmatprep.subr.bf16.mxu0 0
    %2695 = vmatpush1.bf16.msra.mxu0 %v2617
    %2696 = vmatprep.subr.bf16.mxu0 0
    %2697 = vmatpush1.bf16.msra.mxu0 %v2618
    %2698 = vmatprep.subr.bf16.mxu0 0
    %2699 = vmatpush1.bf16.msra.mxu0 %v2619
    %2700 = vmatprep.subr.bf16.mxu0 0
    %2701 = vmatpush1.bf16.msra.mxu0 %v2620
    %2702 = vmatprep.subr.bf16.mxu0 0
    %2703 = vmatpush1.bf16.msra.mxu0 %v2621
    %2704 = vmatprep.subr.bf16.mxu0 0
    %2705 = vmatpush1.bf16.msra.mxu0 %v2622
    %2706 = vmatprep.subr.bf16.mxu0 0
    %2707 = vmatpush1.bf16.msra.mxu0 %v2623
    %2708 = vmatprep.subr.bf16.mxu0 0
    %2709 = vmatpush1.bf16.msra.mxu0 %v2624
    %2710 = vmatprep.subr.bf16.mxu0 0
    %2711 = vmatpush1.bf16.msra.mxu0 %v2625
    %2712 = vmatprep.subr.bf16.mxu0 0
    %2713 = vmatpush1.bf16.msra.mxu0 %v2626
    %2714 = vmatprep.subr.bf16.mxu0 0
    %2715 = vmatpush1.bf16.msra.mxu0 %v2627
    %2716 = vmatprep.subr.bf16.mxu0 0
    %2717 = vmatpush1.bf16.msra.mxu0 %v2628
    %2718 = vmatprep.subr.bf16.mxu0 0
    %2719 = vmatpush1.bf16.msra.mxu0 %v2629
    %2720 = vmatprep.subr.bf16.mxu0 0
    %2721 = vmatpush1.bf16.msra.mxu0 %v2630
    %2722 = vmatprep.mubr.bf16.mxu0 %v2462
    %2723 = vmatmul.mubr.bf16.gmra.mrb[0].mxu0 %v2358
    %v2724 = vpop.f32.mrb[0].mxu0
    %v2725 = vadd.f32 %v2541, %v2724
    %v2726 = vpop.f32.mrb[0].mxu0
    %v2727 = vpop.f32.mrb[0].mxu0
    %v2728 = vadd.f32 %v2541, %v2727
    %v2729 = vpop.f32.mrb[0].mxu0
    %2730 = vmatprep.mubr.bf16.mxu0 %v2465
    %2731 = vmatmul.mubr.bf16.gmra.mrb[0].mxu0 %v2361
    %v2732 = vpop.f32.mrb[0].mxu0
    %v2733 = vadd.f32 %v2541, %v2732
    %v2734 = vpop.f32.mrb[0].mxu0
    %v2735 = vpop.f32.mrb[0].mxu0
    %v2736 = vadd.f32 %v2541, %v2735
    %v2737 = vpop.f32.mrb[0].mxu0
    %2738 = vmatprep.mubr.bf16.mxu0 %v2468
    %2739 = vmatmul.mubr.bf16.gmra.mrb[0].mxu0 %v2364
    %v2740 = vpop.f32.mrb[0].mxu0
    %v2741 = vadd.f32 %v2541, %v2740
    %v2742 = vpop.f32.mrb[0].mxu0
    %v2743 = vpop.f32.mrb[0].mxu0
    %v2744 = vadd.f32 %v2541, %v2743
    %v2745 = vpop.f32.mrb[0].mxu0
    %2746 = vmatprep.mubr.bf16.mxu0 %v2471
    %2747 = vmatmul.mubr.bf16.gmra.mrb[0].mxu0 %v2367
    %v2748 = vpop.f32.mrb[0].mxu0
    %v2749 = vadd.f32 %v2541, %v2748
    %v2750 = vpop.f32.mrb[0].mxu0
    %v2751 = vpop.f32.mrb[0].mxu0
    %v2752 = vadd.f32 %v2541, %v2751
    %v2753 = vpop.f32.mrb[0].mxu0
    %2754 = vmatprep.mubr.bf16.mxu0 %v2474
    %2755 = vmatmul.mubr.bf16.gmra.mrb[0].mxu0 %v2370
    %v2756 = vpop.f32.mrb[0].mxu0
    %v2757 = vadd.f32 %v2541, %v2756
    %v2758 = vpop.f32.mrb[0].mxu0
    %v2759 = vpop.f32.mrb[0].mxu0
    %v2760 = vadd.f32 %v2541, %v2759
    %v2761 = vpop.f32.mrb[0].mxu0
    %2762 = vmatprep.mubr.bf16.mxu0 %v2477
    %2763 = vmatmul.mubr.bf16.gmra.mrb[0].mxu0 %v2373
    %v2764 = vpop.f32.mrb[0].mxu0
    %v2765 = vadd.f32 %v2541, %v2764
    %v2766 = vpop.f32.mrb[0].mxu0
    %v2767 = vpop.f32.mrb[0].mxu0
    %v2768 = vadd.f32 %v2541, %v2767
    %v2769 = vpop.f32.mrb[0].mxu0
    %2770 = vmatprep.mubr.bf16.mxu0 %v2480
    %2771 = vmatmul.mubr.bf16.gmra.mrb[0].mxu0 %v2376
    %v2772 = vpop.f32.mrb[0].mxu0
    %v2773 = vadd.f32 %v2541, %v2772
    %v2774 = vpop.f32.mrb[0].mxu0
    %v2775 = vpop.f32.mrb[0].mxu0
    %v2776 = vadd.f32 %v2541, %v2775
    %v2777 = vpop.f32.mrb[0].mxu0
    %2778 = vmatprep.mubr.bf16.mxu0 %v2483
    %2779 = vmatmul.mubr.bf16.gmra.mrb[0].mxu0 %v2379
    %v2780 = vpop.f32.mrb[0].mxu0
    %v2781 = vadd.f32 %v2541, %v2780
    %v2782 = vpop.f32.mrb[0].mxu0
    %v2783 = vpop.f32.mrb[0].mxu0
    %v2784 = vadd.f32 %v2541, %v2783
    %v2785 = vpop.f32.mrb[0].mxu0
    %2786 = vmatprep.mubr.bf16.mxu0 %v2486
    %2787 = vmatmul.mubr.bf16.gmra.mrb[0].mxu0 %v2382
    %v2788 = vpop.f32.mrb[0].mxu0
    %v2789 = vadd.f32 %v2541, %v2788
    %v2790 = vpop.f32.mrb[0].mxu0
    %v2791 = vpop.f32.mrb[0].mxu0
    %v2792 = vadd.f32 %v2541, %v2791
    %v2793 = vpop.f32.mrb[0].mxu0
    %2794 = vmatprep.mubr.bf16.mxu0 %v2489
    %2795 = vmatmul.mubr.bf16.gmra.mrb[0].mxu0 %v2385
    %v2796 = vpop.f32.mrb[0].mxu0
    %v2797 = vadd.f32 %v2541, %v2796
    %v2798 = vpop.f32.mrb[0].mxu0
    %v2799 = vpop.f32.mrb[0].mxu0
    %v2800 = vadd.f32 %v2541, %v2799
    %v2801 = vpop.f32.mrb[0].mxu0
    %2802 = vmatprep.mubr.bf16.mxu0 %v2492
    %2803 = vmatmul.mubr.bf16.gmra.mrb[0].mxu0 %v2388
    %v2804 = vpop.f32.mrb[0].mxu0
    %v2805 = vadd.f32 %v2541, %v2804
    %v2806 = vpop.f32.mrb[0].mxu0
    %v2807 = vpop.f32.mrb[0].mxu0
    %v2808 = vadd.f32 %v2541, %v2807
    %v2809 = vpop.f32.mrb[0].mxu0
    %2810 = vmatprep.mubr.bf16.mxu0 %v2495
    %2811 = vmatmul.mubr.bf16.gmra.mrb[0].mxu0 %v2391
    %v2812 = vpop.f32.mrb[0].mxu0
    %v2813 = vadd.f32 %v2541, %v2812
    %v2814 = vpop.f32.mrb[0].mxu0
    %v2815 = vpop.f32.mrb[0].mxu0
    %v2816 = vadd.f32 %v2541, %v2815
    %v2817 = vpop.f32.mrb[0].mxu0
    %2818 = vmatprep.mubr.bf16.mxu0 %v2498
    %2819 = vmatmul.mubr.bf16.gmra.mrb[0].mxu0 %v2394
    %v2820 = vpop.f32.mrb[0].mxu0
    %v2821 = vadd.f32 %v2541, %v2820
    %v2822 = vpop.f32.mrb[0].mxu0
    %v2823 = vpop.f32.mrb[0].mxu0
    %v2824 = vadd.f32 %v2541, %v2823
    %v2825 = vpop.f32.mrb[0].mxu0
    %2826 = vdwg.mxu0
    %2827 = vmatprep.subr.bf16.mxu0 0
    %2828 = vmatpush1.bf16.msra.mxu0 %v2631
    %2829 = vmatprep.subr.bf16.mxu0 0
    %2830 = vmatpush1.bf16.msra.mxu0 %v2632
    %2831 = vmatprep.subr.bf16.mxu0 0
    %2832 = vmatpush1.bf16.msra.mxu0 0
    %2833 = vmatprep.subr.bf16.mxu0 0
    %2834 = vmatpush1.bf16.msra.mxu0 0
    %2835 = vmatprep.subr.bf16.mxu0 0
    %2836 = vmatpush1.bf16.msra.mxu0 0
    %2837 = vmatprep.subr.bf16.mxu0 0
    %2838 = vmatpush1.bf16.msra.mxu0 0
    %2839 = vmatprep.subr.bf16.mxu0 0
    %2840 = vmatpush1.bf16.msra.mxu0 0
    %2841 = vmatprep.subr.bf16.mxu0 0
    %2842 = vmatpush1.bf16.msra.mxu0 0
    %2843 = vmatprep.subr.bf16.mxu0 0
    %2844 = vmatpush1.bf16.msra.mxu0 0
    %2845 = vmatprep.subr.bf16.mxu0 0
    %2846 = vmatpush1.bf16.msra.mxu0 0
    %2847 = vmatprep.subr.bf16.mxu0 0
    %2848 = vmatpush1.bf16.msra.mxu0 0
    %2849 = vmatprep.subr.bf16.mxu0 0
    %2850 = vmatpush1.bf16.msra.mxu0 0
    %2851 = vmatprep.subr.bf16.mxu0 0
    %2852 = vmatpush1.bf16.msra.mxu0 0
    %2853 = vmatprep.subr.bf16.mxu0 0
    %2854 = vmatpush1.bf16.msra.mxu0 0
    %2855 = vmatprep.subr.bf16.mxu0 0
    %2856 = vmatpush1.bf16.msra.mxu0 0
    %2857 = vmatprep.subr.bf16.mxu0 0
    %2858 = vmatpush1.bf16.msra.mxu0 0
    %2859 = vmatprep.mubr.bf16.mxu0 0
    %2860 = vmatmul.mubr.bf16.gmra.mrb[0].mxu0 %v2652
    %v2861 = vpop.f32.mrb[0].mxu0
    %v2862 = vadd.f32 %v2725, %v2861
    %v2863 = vpop.f32.mrb[0].mxu0
    %v2864 = vpop.f32.mrb[0].mxu0
    %v2865 = vadd.f32 %v2728, %v2864
    %v2866 = vpop.f32.mrb[0].mxu0
    %2867 = vmatprep.mubr.bf16.mxu0 0
    %2868 = vmatmul.mubr.bf16.gmra.mrb[0].mxu0 %v2655
    %v2869 = vpop.f32.mrb[0].mxu0
    %v2870 = vadd.f32 %v2733, %v2869
    %v2871 = vpop.f32.mrb[0].mxu0
    %v2872 = vpop.f32.mrb[0].mxu0
    %v2873 = vadd.f32 %v2736, %v2872
    %v2874 = vpop.f32.mrb[0].mxu0
    %2875 = vmatprep.mubr.bf16.mxu0 0
    %2876 = vmatmul.mubr.bf16.gmra.mrb[0].mxu0 %v2658
    %v2877 = vpop.f32.mrb[0].mxu0
    %v2878 = vadd.f32 %v2741, %v2877
    %v2879 = vpop.f32.mrb[0].mxu0
    %v2880 = vpop.f32.mrb[0].mxu0
    %v2881 = vadd.f32 %v2744, %v2880
    %v2882 = vpop.f32.mrb[0].mxu0
    %2883 = vmatprep.mubr.bf16.mxu0 0
    %2884 = vmatmul.mubr.bf16.gmra.mrb[0].mxu0 %v2661
    %v2885 = vpop.f32.mrb[0].mxu0
    %v2886 = vadd.f32 %v2749, %v2885
    %v2887 = vpop.f32.mrb[0].mxu0
    %v2888 = vpop.f32.mrb[0].mxu0
    %v2889 = vadd.f32 %v2752, %v2888
    %v2890 = vpop.f32.mrb[0].mxu0
    %2891 = vmatprep.mubr.bf16.mxu0 0
    %2892 = vmatmul.mubr.bf16.gmra.mrb[0].mxu0 %v2664
    %v2893 = vpop.f32.mrb[0].mxu0
    %v2894 = vadd.f32 %v2757, %v2893
    %v2895 = vpop.f32.mrb[0].mxu0
    %v2896 = vpop.f32.mrb[0].mxu0
    %v2897 = vadd.f32 %v2760, %v2896
    %v2898 = vpop.f32.mrb[0].mxu0
    %2899 = vmatprep.mubr.bf16.mxu0 0
    %2900 = vmatmul.mubr.bf16.gmra.mrb[0].mxu0 %v2667
    %v2901 = vpop.f32.mrb[0].mxu0
    %v2902 = vadd.f32 %v2765, %v2901
    %v2903 = vpop.f32.mrb[0].mxu0
    %v2904 = vpop.f32.mrb[0].mxu0
    %v2905 = vadd.f32 %v2768, %v2904
    %v2906 = vpop.f32.mrb[0].mxu0
    %2907 = vmatprep.mubr.bf16.mxu0 0
    %2908 = vmatmul.mubr.bf16.gmra.mrb[0].mxu0 %v2670
    %v2909 = vpop.f32.mrb[0].mxu0
    %v2910 = vadd.f32 %v2773, %v2909
    %v2911 = vpop.f32.mrb[0].mxu0
    %v2912 = vpop.f32.mrb[0].mxu0
    %v2913 = vadd.f32 %v2776, %v2912
    %v2914 = vpop.f32.mrb[0].mxu0
    %2915 = vmatprep.mubr.bf16.mxu0 0
    %2916 = vmatmul.mubr.bf16.gmra.mrb[0].mxu0 %v2673
    %v2917 = vpop.f32.mrb[0].mxu0
    %v2918 = vadd.f32 %v2781, %v2917
    %v2919 = vpop.f32.mrb[0].mxu0
    %v2920 = vpop.f32.mrb[0].mxu0
    %v2921 = vadd.f32 %v2784, %v2920
    %v2922 = vpop.f32.mrb[0].mxu0
    %2923 = vmatprep.mubr.bf16.mxu0 0
    %2924 = vmatmul.mubr.bf16.gmra.mrb[0].mxu0 %v2676
    %v2925 = vpop.f32.mrb[0].mxu0
    %v2926 = vadd.f32 %v2789, %v2925
    %v2927 = vpop.f32.mrb[0].mxu0
    %v2928 = vpop.f32.mrb[0].mxu0
    %v2929 = vadd.f32 %v2792, %v2928
    %v2930 = vpop.f32.mrb[0].mxu0
    %2931 = vmatprep.mubr.bf16.mxu0 0
    %2932 = vmatmul.mubr.bf16.gmra.mrb[0].mxu0 %v2679
    %v2933 = vpop.f32.mrb[0].mxu0
    %v2934 = vadd.f32 %v2797, %v2933
    %v2935 = vpop.f32.mrb[0].mxu0
    %v2936 = vpop.f32.mrb[0].mxu0
    %v2937 = vadd.f32 %v2800, %v2936
    %v2938 = vpop.f32.mrb[0].mxu0
    %2939 = vmatprep.mubr.bf16.mxu0 0
    %2940 = vmatmul.mubr.bf16.gmra.mrb[0].mxu0 %v2682
    %v2941 = vpop.f32.mrb[0].mxu0
    %v2942 = vadd.f32 %v2805, %v2941
    %v2943 = vpop.f32.mrb[0].mxu0
    %v2944 = vpop.f32.mrb[0].mxu0
    %v2945 = vadd.f32 %v2808, %v2944
    %v2946 = vpop.f32.mrb[0].mxu0
    %2947 = vmatprep.mubr.bf16.mxu0 0
    %2948 = vmatmul.mubr.bf16.gmra.mrb[0].mxu0 %v2685
    %v2949 = vpop.f32.mrb[0].mxu0
    %v2950 = vadd.f32 %v2813, %v2949
    %v2951 = vpop.f32.mrb[0].mxu0
    %v2952 = vpop.f32.mrb[0].mxu0
    %v2953 = vadd.f32 %v2816, %v2952
    %v2954 = vpop.f32.mrb[0].mxu0
    %2955 = vmatprep.mubr.bf16.mxu0 0
    %2956 = vmatmul.mubr.bf16.gmra.mrb[0].mxu0 %v2688
    %v2957 = vpop.f32.mrb[0].mxu0
    %v2958 = vadd.f32 %v2821, %v2957
    %v2959 = vpop.f32.mrb[0].mxu0
    %v2960 = vpop.f32.mrb[0].mxu0
    %v2961 = vadd.f32 %v2824, %v2960
    %v2962 = vpop.f32.mrb[0].mxu0
    %2963 = vdwg.mxu0
    %v2964 = vmax.f32 %v2862, 0.0
    %v2965 = vmax.f32 %v2865, 0.0
    %v2966 = vmax.f32 %v2870, 0.0
    %v2967 = vmax.f32 %v2873, 0.0
    %v2968 = vmax.f32 %v2878, 0.0
    %v2969 = vmax.f32 %v2881, 0.0
    %v2970 = vmax.f32 %v2886, 0.0
    %v2971 = vmax.f32 %v2889, 0.0
    %v2972 = vmax.f32 %v2894, 0.0
    %v2973 = vmax.f32 %v2897, 0.0
    %v2974 = vmax.f32 %v2902, 0.0
    %v2975 = vmax.f32 %v2905, 0.0
    %v2976 = vmax.f32 %v2910, 0.0
    %v2977 = vmax.f32 %v2913, 0.0
    %v2978 = vmax.f32 %v2918, 0.0
    %v2979 = vmax.f32 %v2921, 0.0
    %v2980 = vmax.f32 %v2926, 0.0
    %v2981 = vmax.f32 %v2929, 0.0
    %v2982 = vmax.f32 %v2934, 0.0
    %v2983 = vmax.f32 %v2937, 0.0
    %v2984 = vmax.f32 %v2942, 0.0
    %v2985 = vmax.f32 %v2945, 0.0
    %v2986 = vmax.f32 %v2950, 0.0
    %v2987 = vmax.f32 %v2953, 0.0
    %v2988 = vmax.f32 %v2958, 0.0
    %v2989 = vmax.f32 %v2961, 0.0
    %v2990 = vmul.f32 %v2964, %v1517
    %v2991 = vmul.f32 %v2965, %v1522
    %v2992 = vmul.f32 %v2966, %v1527
    %v2993 = vmul.f32 %v2967, %v1532
    %v2994 = vmul.f32 %v2968, %v1537
    %v2995 = vmul.f32 %v2969, %v1542
    %v2996 = vmul.f32 %v2970, %v1547
    %v2997 = vmul.f32 %v2971, %v1552
    %v2998 = vmul.f32 %v2972, %v1557
    %v2999 = vmul.f32 %v2973, %v1562
    %v3000 = vmul.f32 %v2974, %v1567
    %v3001 = vmul.f32 %v2975, %v1572
    %v3002 = vmul.f32 %v2976, %v1577
    %v3003 = vmul.f32 %v2977, %v1582
    %v3004 = vmul.f32 %v2978, %v1587
    %v3005 = vmul.f32 %v2979, %v1592
    %v3006 = vmul.f32 %v2980, %v1597
    %v3007 = vmul.f32 %v2981, %v1602
    %v3008 = vmul.f32 %v2982, %v1607
    %v3009 = vmul.f32 %v2983, %v1612
    %v3010 = vmul.f32 %v2984, %v1617
    %v3011 = vmul.f32 %v2985, %v1622
    %v3012 = vmul.f32 %v2986, %v1627
    %v3013 = vmul.f32 %v2987, %v1632
    %v3014 = vmul.f32 %v2988, %v1637
    %v3015 = vmul.f32 %v2989, %v1642
    %v3016 = vpack.c.bf16 %v2991, %v2990
    %v3017 = vpack.c.bf16 %v2993, %v2992
    %v3018 = vpack.c.bf16 %v2995, %v2994
    %v3019 = vpack.c.bf16 %v2997, %v2996
    %v3020 = vpack.c.bf16 %v2999, %v2998
    %v3021 = vpack.c.bf16 %v3001, %v3000
    %v3022 = vpack.c.bf16 %v3003, %v3002
    %v3023 = vpack.c.bf16 %v3005, %v3004
    %v3024 = vpack.c.bf16 %v3007, %v3006
    %v3025 = vpack.c.bf16 %v3009, %v3008
    %v3026 = vpack.c.bf16 %v3011, %v3010
    %v3027 = vpack.c.bf16 %v3013, %v3012
    %v3028 = vpack.c.bf16 %v3015, %v3014
    %v3030 = vshrl.u32 %v3016, 16
    %v3032 = vrot.slane %v3030, 3
    %v3033 = vshll.u32 %v3016, 16
    %v3035 = vrot.slane %v3033, 4
    %v3036 = vor.u32 %v3032, %v3035
    %v3038 = vshrl.u32 %v3017, 16
    %v3040 = vrot.slane %v3038, 3
    %v3041 = vshll.u32 %v3017, 16
    %v3043 = vrot.slane %v3041, 4
    %v3044 = vor.u32 %v3040, %v3043
    %v3045 = vsel %vm103, %v3036, %v3044
    %v3047 = vshrl.u32 %v3018, 16
    %v3049 = vrot.slane %v3047, 3
    %v3050 = vshll.u32 %v3018, 16
    %v3052 = vrot.slane %v3050, 4
    %v3053 = vor.u32 %v3049, %v3052
    %v3054 = vsel %vm103, %v3044, %v3053
    %v3056 = vshrl.u32 %v3019, 16
    %v3058 = vrot.slane %v3056, 3
    %v3059 = vshll.u32 %v3019, 16
    %v3061 = vrot.slane %v3059, 4
    %v3062 = vor.u32 %v3058, %v3061
    %v3063 = vsel %vm103, %v3053, %v3062
    %v3065 = vshrl.u32 %v3020, 16
    %v3067 = vrot.slane %v3065, 3
    %v3068 = vshll.u32 %v3020, 16
    %v3070 = vrot.slane %v3068, 4
    %v3071 = vor.u32 %v3067, %v3070
    %v3072 = vsel %vm103, %v3062, %v3071
    %v3074 = vshrl.u32 %v3021, 16
    %v3076 = vrot.slane %v3074, 3
    %v3077 = vshll.u32 %v3021, 16
    %v3079 = vrot.slane %v3077, 4
    %v3080 = vor.u32 %v3076, %v3079
    %v3081 = vsel %vm103, %v3071, %v3080
    %v3083 = vshrl.u32 %v3022, 16
    %v3085 = vrot.slane %v3083, 3
    %v3086 = vshll.u32 %v3022, 16
    %v3088 = vrot.slane %v3086, 4
    %v3089 = vor.u32 %v3085, %v3088
    %v3090 = vsel %vm103, %v3080, %v3089
    %v3092 = vshrl.u32 %v3023, 16
    %v3094 = vrot.slane %v3092, 3
    %v3095 = vshll.u32 %v3023, 16
    %v3097 = vrot.slane %v3095, 4
    %v3098 = vor.u32 %v3094, %v3097
    %v3099 = vsel %vm103, %v3089, %v3098
    %v3101 = vshrl.u32 %v3024, 16
    %v3103 = vrot.slane %v3101, 3
    %v3104 = vshll.u32 %v3024, 16
    %v3106 = vrot.slane %v3104, 4
    %v3107 = vor.u32 %v3103, %v3106
    %v3108 = vsel %vm103, %v3098, %v3107
    %v3110 = vshrl.u32 %v3025, 16
    %v3112 = vrot.slane %v3110, 3
    %v3113 = vshll.u32 %v3025, 16
    %v3115 = vrot.slane %v3113, 4
    %v3116 = vor.u32 %v3112, %v3115
    %v3117 = vsel %vm103, %v3107, %v3116
    %v3119 = vshrl.u32 %v3026, 16
    %v3121 = vrot.slane %v3119, 3
    %v3122 = vshll.u32 %v3026, 16
    %v3124 = vrot.slane %v3122, 4
    %v3125 = vor.u32 %v3121, %v3124
    %v3126 = vsel %vm103, %v3116, %v3125
    %v3128 = vshrl.u32 %v3027, 16
    %v3130 = vrot.slane %v3128, 3
    %v3131 = vshll.u32 %v3027, 16
    %v3133 = vrot.slane %v3131, 4
    %v3134 = vor.u32 %v3130, %v3133
    %v3135 = vsel %vm103, %v3125, %v3134
    %v3137 = vshrl.u32 %v3028, 16
    %v3139 = vrot.slane %v3137, 3
    %v3140 = vshll.u32 %v3028, 16
    %v3142 = vrot.slane %v3140, 4
    %v3143 = vor.u32 %v3139, %v3142
    %v3144 = vsel %vm103, %v3134, %v3143
    %v3159 = vld [vmem:[#allocation3] sm:$0xf0]
    %v3160 = vsel %vm1815, %v3036, %v3159
    %3161 = vst [vmem:[#allocation3] sm:$0xf0] %v3160
    %3162 = vst.msk [vmem:[#allocation3 + $0x8] sm:$0xff] %vm1819, %v3045
    %3163 = vst.msk [vmem:[#allocation3 + $0x10] sm:$0xff] %vm1819, %v3054
    %3164 = vst.msk [vmem:[#allocation3 + $0x18] sm:$0xff] %vm1819, %v3063
    %3165 = vst.msk [vmem:[#allocation3 + $0x20] sm:$0xff] %vm1819, %v3072
    %3166 = vst.msk [vmem:[#allocation3 + $0x28] sm:$0xff] %vm1819, %v3081
    %3167 = vst.msk [vmem:[#allocation3 + $0x30] sm:$0xff] %vm1819, %v3090
    %3168 = vst.msk [vmem:[#allocation3 + $0x38] sm:$0xff] %vm1819, %v3099
    %3169 = vst.msk [vmem:[#allocation3 + $0x40] sm:$0xff] %vm1819, %v3108
    %3170 = vst.msk [vmem:[#allocation3 + $0x48] sm:$0xff] %vm1819, %v3117
    %3171 = vst.msk [vmem:[#allocation3 + $0x50] sm:$0xff] %vm1819, %v3126
    %3172 = vst.msk [vmem:[#allocation3 + $0x58] sm:$0xff] %vm1819, %v3135
    %3173 = vst.msk [vmem:[#allocation3 + $0x60] sm:$0xff] %vm1819, %v3144
    %v3174 = vld [vmem:[#allocation3 + $0x68] sm:$0xf]
    %v3175 = vsel %vm1834, %v3143, %v3174
    %3176 = vst [vmem:[#allocation3 + $0x68] sm:$0xf] %v3175
    %v3177 = vld [vmem:[#allocation4] sm:$0x1f]
    %v3178 = vsel %vm104, 0, %v3177
    %3179 = vst [vmem:[#allocation4] sm:$0x1f] %v3178
    %v3180 = vld [vmem:[#allocation4 + $0x68] sm:$0xf8]
    %v3181 = vsel %vm110, 0, %v3180
    %3182 = vst [vmem:[#allocation4 + $0x68] sm:$0xf8] %v3181
    %v3183 = vld [vmem:[#allocation3] sm:$0xff]
    %v3184 = vld [vmem:[#allocation3 + $0x8] sm:$0xff]
    %v3185 = vld [vmem:[#allocation3 + $0x10] sm:$0xff]
    %v3186 = vld [vmem:[#allocation3 + $0x18] sm:$0xff]
    %v3187 = vld [vmem:[#allocation3 + $0x20] sm:$0xff]
    %v3188 = vld [vmem:[#allocation3 + $0x28] sm:$0xff]
    %v3189 = vld [vmem:[#allocation3 + $0x30] sm:$0xff]
    %v3190 = vld [vmem:[#allocation3 + $0x38] sm:$0xff]
    %v3191 = vld [vmem:[#allocation3 + $0x40] sm:$0xff]
    %v3192 = vld [vmem:[#allocation3 + $0x48] sm:$0xff]
    %v3193 = vld [vmem:[#allocation3 + $0x50] sm:$0xff]
    %v3194 = vld [vmem:[#allocation3 + $0x58] sm:$0xff]
    %v3195 = vld [vmem:[#allocation3 + $0x60] sm:$0x7f]
    %v3196 = vld [vmem:[#allocation3 + $0x60] sm:$0xff]
    %v3197 = vld [vmem:[#allocation3] sm:$0xfe]
    %v3198 = vld [vmem:[#allocation3] sm:$0xf0]
    %v3199 = vld [vmem:[#allocation3 + $0x68] sm:$0x7]
    %v3200 = vld [vmem:[#allocation3 + $0x68] sm:$0xf]
    %v3201 = vld [vmem:[#allocation3] sm:$0xe0]
    %v3202 = vld [vmem:[#allocation3 + $0x68] sm:$0x7f]
    %v3203 = vld [vmem:[#allocation3 + $0x68] sm:$0xff]
    %v3204 = vld [vmem:[#allocation3 + $0x8] sm:$0xfe]
    %v3206 = vshrl.u32 %v3183, 16
    %v3208 = vshll.u32 %v3183, 16
    %v3210 = vrot.slane %v3208, 1
    %v3211 = vor.u32 %v3206, %v3210
    %v3213 = vshll.u32 %v3184, 16
    %v3215 = vrot.slane %v3213, 1
    %v3216 = vsel %vm216, %v3211, %v3215
    %v3217 = vshrl.u32 %v3184, 16
    %v3219 = vor.u32 %v3217, %v3215
    %v3221 = vshll.u32 %v3185, 16
    %v3223 = vrot.slane %v3221, 1
    %v3224 = vsel %vm216, %v3219, %v3223
    %v3225 = vshrl.u32 %v3185, 16
    %v3227 = vor.u32 %v3225, %v3223
    %v3229 = vshll.u32 %v3186, 16
    %v3231 = vrot.slane %v3229, 1
    %v3232 = vsel %vm216, %v3227, %v3231
    %v3233 = vshrl.u32 %v3186, 16
    %v3235 = vor.u32 %v3233, %v3231
    %v3237 = vshll.u32 %v3187, 16
    %v3239 = vrot.slane %v3237, 1
    %v3240 = vsel %vm216, %v3235, %v3239
    %v3241 = vshrl.u32 %v3187, 16
    %v3243 = vor.u32 %v3241, %v3239
    %v3245 = vshll.u32 %v3188, 16
    %v3247 = vrot.slane %v3245, 1
    %v3248 = vsel %vm216, %v3243, %v3247
    %v3249 = vshrl.u32 %v3188, 16
    %v3251 = vor.u32 %v3249, %v3247
    %v3253 = vshll.u32 %v3189, 16
    %v3255 = vrot.slane %v3253, 1
    %v3256 = vsel %vm216, %v3251, %v3255
    %v3257 = vshrl.u32 %v3189, 16
    %v3259 = vor.u32 %v3257, %v3255
    %v3261 = vshll.u32 %v3190, 16
    %v3263 = vrot.slane %v3261, 1
    %v3264 = vsel %vm216, %v3259, %v3263
    %v3265 = vshrl.u32 %v3190, 16
    %v3267 = vor.u32 %v3265, %v3263
    %v3269 = vshll.u32 %v3191, 16
    %v3271 = vrot.slane %v3269, 1
    %v3272 = vsel %vm216, %v3267, %v3271
    %v3273 = vshrl.u32 %v3191, 16
    %v3275 = vor.u32 %v3273, %v3271
    %v3277 = vshll.u32 %v3192, 16
    %v3279 = vrot.slane %v3277, 1
    %v3280 = vsel %vm216, %v3275, %v3279
    %v3281 = vshrl.u32 %v3192, 16
    %v3283 = vor.u32 %v3281, %v3279
    %v3285 = vshll.u32 %v3193, 16
    %v3287 = vrot.slane %v3285, 1
    %v3288 = vsel %vm216, %v3283, %v3287
    %v3289 = vshrl.u32 %v3193, 16
    %v3291 = vor.u32 %v3289, %v3287
    %v3293 = vshll.u32 %v3194, 16
    %v3295 = vrot.slane %v3293, 1
    %v3296 = vsel %vm216, %v3291, %v3295
    %v3297 = vshrl.u32 %v3194, 16
    %v3299 = vor.u32 %v3297, %v3295
    %v3301 = vshll.u32 %v3196, 16
    %v3303 = vrot.slane %v3301, 1
    %v3304 = vsel %vm216, %v3299, %v3303
    %v3305 = vshrl.u32 %v3196, 16
    %v3307 = vor.u32 %v3305, %v3303
    %3308 = vrot.lane.b32.xlu0 %v3216, 32
    %v3309 = vpop.permute.xlu0 %3308
    %3310 = vrot.lane.b32.xlu0 %v3224, 32
    %v3311 = vpop.permute.xlu0 %3310
    %3312 = vrot.lane.b32.xlu0 %v3232, 32
    %v3313 = vpop.permute.xlu0 %3312
    %3314 = vrot.lane.b32.xlu0 %v3240, 32
    %v3315 = vpop.permute.xlu0 %3314
    %3316 = vrot.lane.b32.xlu0 %v3248, 32
    %v3317 = vpop.permute.xlu0 %3316
    %3318 = vrot.lane.b32.xlu0 %v3256, 32
    %v3319 = vpop.permute.xlu0 %3318
    %3320 = vrot.lane.b32.xlu0 %v3264, 32
    %v3321 = vpop.permute.xlu0 %3320
    %3322 = vrot.lane.b32.xlu0 %v3272, 32
    %v3323 = vpop.permute.xlu0 %3322
    %3324 = vrot.lane.b32.xlu0 %v3280, 32
    %v3325 = vpop.permute.xlu0 %3324
    %3326 = vrot.lane.b32.xlu0 %v3288, 32
    %v3327 = vpop.permute.xlu0 %3326
    %3328 = vrot.lane.b32.xlu0 %v3296, 32
    %v3329 = vpop.permute.xlu0 %3328
    %3330 = vrot.lane.b32.xlu0 %v3304, 32
    %v3331 = vpop.permute.xlu0 %3330
    %3332 = vrot.lane.b32.xlu0 %v3307, 32
    %v3333 = vpop.permute.xlu0 %3332
    %v3347 = vrot.slane %v3197, 1
    %v3348 = vrot.slane %v3184, 1
    %v3349 = vsel %vm349, %v3347, %v3348
    %v3350 = vrot.slane %v3185, 1
    %v3351 = vsel %vm349, %v3348, %v3350
    %v3352 = vrot.slane %v3186, 1
    %v3353 = vsel %vm349, %v3350, %v3352
    %v3354 = vrot.slane %v3187, 1
    %v3355 = vsel %vm349, %v3352, %v3354
    %v3356 = vrot.slane %v3188, 1
    %v3357 = vsel %vm349, %v3354, %v3356
    %v3358 = vrot.slane %v3189, 1
    %v3359 = vsel %vm349, %v3356, %v3358
    %v3360 = vrot.slane %v3190, 1
    %v3361 = vsel %vm349, %v3358, %v3360
    %v3362 = vrot.slane %v3191, 1
    %v3363 = vsel %vm349, %v3360, %v3362
    %v3364 = vrot.slane %v3192, 1
    %v3365 = vsel %vm349, %v3362, %v3364
    %v3366 = vrot.slane %v3193, 1
    %v3367 = vsel %vm349, %v3364, %v3366
    %v3368 = vrot.slane %v3194, 1
    %v3369 = vsel %vm349, %v3366, %v3368
    %v3370 = vrot.slane %v3196, 1
    %v3371 = vsel %vm349, %v3368, %v3370
    %3372 = vrot.lane.b32.xlu0 %v3349, 64
    %v3373 = vpop.permute.xlu0 %3372
    %3374 = vrot.lane.b32.xlu0 %v3351, 64
    %v3375 = vpop.permute.xlu0 %3374
    %3376 = vrot.lane.b32.xlu0 %v3353, 64
    %v3377 = vpop.permute.xlu0 %3376
    %3378 = vrot.lane.b32.xlu0 %v3355, 64
    %v3379 = vpop.permute.xlu0 %3378
    %3380 = vrot.lane.b32.xlu0 %v3357, 64
    %v3381 = vpop.permute.xlu0 %3380
    %3382 = vrot.lane.b32.xlu0 %v3359, 64
    %v3383 = vpop.permute.xlu0 %3382
    %3384 = vrot.lane.b32.xlu0 %v3361, 64
    %v3385 = vpop.permute.xlu0 %3384
    %3386 = vrot.lane.b32.xlu0 %v3363, 64
    %v3387 = vpop.permute.xlu0 %3386
    %3388 = vrot.lane.b32.xlu0 %v3365, 64
    %v3389 = vpop.permute.xlu0 %3388
    %3390 = vrot.lane.b32.xlu0 %v3367, 64
    %v3391 = vpop.permute.xlu0 %3390
    %3392 = vrot.lane.b32.xlu0 %v3369, 64
    %v3393 = vpop.permute.xlu0 %3392
    %3394 = vrot.lane.b32.xlu0 %v3371, 64
    %v3395 = vpop.permute.xlu0 %3394
    %3396 = vrot.lane.b32.xlu0 %v3370, 64
    %v3397 = vpop.permute.xlu0 %3396
    %v3400 = vrot.slane %v3198, 4
    %v3401 = vrot.slane %v3184, 4
    %v3402 = vsel %vm2061, %v3400, %v3401
    %v3403 = vrot.slane %v3185, 4
    %v3404 = vsel %vm2061, %v3401, %v3403
    %v3405 = vrot.slane %v3186, 4
    %v3406 = vsel %vm2061, %v3403, %v3405
    %v3407 = vrot.slane %v3187, 4
    %v3408 = vsel %vm2061, %v3405, %v3407
    %v3409 = vrot.slane %v3188, 4
    %v3410 = vsel %vm2061, %v3407, %v3409
    %v3411 = vrot.slane %v3189, 4
    %v3412 = vsel %vm2061, %v3409, %v3411
    %v3413 = vrot.slane %v3190, 4
    %v3414 = vsel %vm2061, %v3411, %v3413
    %v3415 = vrot.slane %v3191, 4
    %v3416 = vsel %vm2061, %v3413, %v3415
    %v3417 = vrot.slane %v3192, 4
    %v3418 = vsel %vm2061, %v3415, %v3417
    %v3419 = vrot.slane %v3193, 4
    %v3420 = vsel %vm2061, %v3417, %v3419
    %v3421 = vrot.slane %v3194, 4
    %v3422 = vsel %vm2061, %v3419, %v3421
    %v3423 = vrot.slane %v3196, 4
    %v3424 = vsel %vm2061, %v3421, %v3423
    %v3425 = vrot.slane %v3199, 4
    %v3426 = vsel %vm2061, %v3423, %v3425
    %3427 = vrot.lane.b32.xlu0 %v3402, 96
    %v3428 = vpop.permute.xlu0 %3427
    %3429 = vrot.lane.b32.xlu0 %v3404, 96
    %v3430 = vpop.permute.xlu0 %3429
    %3431 = vrot.lane.b32.xlu0 %v3406, 96
    %v3432 = vpop.permute.xlu0 %3431
    %3433 = vrot.lane.b32.xlu0 %v3408, 96
    %v3434 = vpop.permute.xlu0 %3433
    %3435 = vrot.lane.b32.xlu0 %v3410, 96
    %v3436 = vpop.permute.xlu0 %3435
    %3437 = vrot.lane.b32.xlu0 %v3412, 96
    %v3438 = vpop.permute.xlu0 %3437
    %3439 = vrot.lane.b32.xlu0 %v3414, 96
    %v3440 = vpop.permute.xlu0 %3439
    %3441 = vrot.lane.b32.xlu0 %v3416, 96
    %v3442 = vpop.permute.xlu0 %3441
    %3443 = vrot.lane.b32.xlu0 %v3418, 96
    %v3444 = vpop.permute.xlu0 %3443
    %3445 = vrot.lane.b32.xlu0 %v3420, 96
    %v3446 = vpop.permute.xlu0 %3445
    %3447 = vrot.lane.b32.xlu0 %v3422, 96
    %v3448 = vpop.permute.xlu0 %3447
    %3449 = vrot.lane.b32.xlu0 %v3424, 96
    %v3450 = vpop.permute.xlu0 %3449
    %3451 = vrot.lane.b32.xlu0 %v3426, 96
    %v3452 = vpop.permute.xlu0 %3451
    %v3454 = vshrl.u32 %v3198, 16
    %v3456 = vrot.slane %v3454, 4
    %v3457 = vshll.u32 %v3198, 16
    %v3459 = vrot.slane %v3457, 5
    %v3460 = vor.u32 %v3456, %v3459
    %v3461 = vrot.slane %v3217, 4
    %v3462 = vrot.slane %v3213, 5
    %v3463 = vor.u32 %v3461, %v3462
    %v3464 = vsel %vm1833, %v3460, %v3463
    %v3465 = vrot.slane %v3225, 4
    %v3466 = vrot.slane %v3221, 5
    %v3467 = vor.u32 %v3465, %v3466
    %v3468 = vsel %vm1833, %v3463, %v3467
    %v3469 = vrot.slane %v3233, 4
    %v3470 = vrot.slane %v3229, 5
    %v3471 = vor.u32 %v3469, %v3470
    %v3472 = vsel %vm1833, %v3467, %v3471
    %v3473 = vrot.slane %v3241, 4
    %v3474 = vrot.slane %v3237, 5
    %v3475 = vor.u32 %v3473, %v3474
    %v3476 = vsel %vm1833, %v3471, %v3475
    %v3477 = vrot.slane %v3249, 4
    %v3478 = vrot.slane %v3245, 5
    %v3479 = vor.u32 %v3477, %v3478
    %v3480 = vsel %vm1833, %v3475, %v3479
    %v3481 = vrot.slane %v3257, 4
    %v3482 = vrot.slane %v3253, 5
    %v3483 = vor.u32 %v3481, %v3482
    %v3484 = vsel %vm1833, %v3479, %v3483
    %v3485 = vrot.slane %v3265, 4
    %v3486 = vrot.slane %v3261, 5
    %v3487 = vor.u32 %v3485, %v3486
    %v3488 = vsel %vm1833, %v3483, %v3487
    %v3489 = vrot.slane %v3273, 4
    %v3490 = vrot.slane %v3269, 5
    %v3491 = vor.u32 %v3489, %v3490
    %v3492 = vsel %vm1833, %v3487, %v3491
    %v3493 = vrot.slane %v3281, 4
    %v3494 = vrot.slane %v3277, 5
    %v3495 = vor.u32 %v3493, %v3494
    %v3496 = vsel %vm1833, %v3491, %v3495
    %v3497 = vrot.slane %v3289, 4
    %v3498 = vrot.slane %v3285, 5
    %v3499 = vor.u32 %v3497, %v3498
    %v3500 = vsel %vm1833, %v3495, %v3499
    %v3501 = vrot.slane %v3297, 4
    %v3502 = vrot.slane %v3293, 5
    %v3503 = vor.u32 %v3501, %v3502
    %v3504 = vsel %vm1833, %v3499, %v3503
    %v3505 = vrot.slane %v3305, 4
    %v3506 = vrot.slane %v3301, 5
    %v3507 = vor.u32 %v3505, %v3506
    %v3508 = vsel %vm1833, %v3503, %v3507
    %v3510 = vshrl.u32 %v3200, 16
    %v3512 = vrot.slane %v3510, 4
    %v3513 = vshll.u32 %v3200, 16
    %v3515 = vrot.slane %v3513, 5
    %v3516 = vor.u32 %v3512, %v3515
    %v3517 = vsel %vm1833, %v3507, %v3516
    %v3520 = vrot.slane %v3201, 5
    %v3521 = vrot.slane %v3184, 5
    %v3522 = vsel %vm2182, %v3520, %v3521
    %v3523 = vrot.slane %v3185, 5
    %v3524 = vsel %vm2182, %v3521, %v3523
    %v3525 = vrot.slane %v3186, 5
    %v3526 = vsel %vm2182, %v3523, %v3525
    %v3527 = vrot.slane %v3187, 5
    %v3528 = vsel %vm2182, %v3525, %v3527
    %v3529 = vrot.slane %v3188, 5
    %v3530 = vsel %vm2182, %v3527, %v3529
    %v3531 = vrot.slane %v3189, 5
    %v3532 = vsel %vm2182, %v3529, %v3531
    %v3533 = vrot.slane %v3190, 5
    %v3534 = vsel %vm2182, %v3531, %v3533
    %v3535 = vrot.slane %v3191, 5
    %v3536 = vsel %vm2182, %v3533, %v3535
    %v3537 = vrot.slane %v3192, 5
    %v3538 = vsel %vm2182, %v3535, %v3537
    %v3539 = vrot.slane %v3193, 5
    %v3540 = vsel %vm2182, %v3537, %v3539
    %v3541 = vrot.slane %v3194, 5
    %v3542 = vsel %vm2182, %v3539, %v3541
    %v3543 = vrot.slane %v3196, 5
    %v3544 = vsel %vm2182, %v3541, %v3543
    %v3545 = vrot.slane %v3200, 5
    %v3546 = vsel %vm2182, %v3543, %v3545
    %3547 = vrot.lane.b32.xlu0 %v3522, 32
    %v3548 = vpop.permute.xlu0 %3547
    %3549 = vrot.lane.b32.xlu0 %v3524, 32
    %v3550 = vpop.permute.xlu0 %3549
    %3551 = vrot.lane.b32.xlu0 %v3526, 32
    %v3552 = vpop.permute.xlu0 %3551
    %3553 = vrot.lane.b32.xlu0 %v3528, 32
    %v3554 = vpop.permute.xlu0 %3553
    %3555 = vrot.lane.b32.xlu0 %v3530, 32
    %v3556 = vpop.permute.xlu0 %3555
    %3557 = vrot.lane.b32.xlu0 %v3532, 32
    %v3558 = vpop.permute.xlu0 %3557
    %3559 = vrot.lane.b32.xlu0 %v3534, 32
    %v3560 = vpop.permute.xlu0 %3559
    %3561 = vrot.lane.b32.xlu0 %v3536, 32
    %v3562 = vpop.permute.xlu0 %3561
    %3563 = vrot.lane.b32.xlu0 %v3538, 32
    %v3564 = vpop.permute.xlu0 %3563
    %3565 = vrot.lane.b32.xlu0 %v3540, 32
    %v3566 = vpop.permute.xlu0 %3565
    %3567 = vrot.lane.b32.xlu0 %v3542, 32
    %v3568 = vpop.permute.xlu0 %3567
    %3569 = vrot.lane.b32.xlu0 %v3544, 32
    %v3570 = vpop.permute.xlu0 %3569
    %3571 = vrot.lane.b32.xlu0 %v3546, 32
    %v3572 = vpop.permute.xlu0 %3571
    %3574 = vrot.lane.b32.xlu0 %v3184, 64
    %v3575 = vpop.permute.xlu0 %3574
    %3576 = vrot.lane.b32.xlu0 %v3185, 64
    %v3577 = vpop.permute.xlu0 %3576
    %3578 = vrot.lane.b32.xlu0 %v3186, 64
    %v3579 = vpop.permute.xlu0 %3578
    %3580 = vrot.lane.b32.xlu0 %v3187, 64
    %v3581 = vpop.permute.xlu0 %3580
    %3582 = vrot.lane.b32.xlu0 %v3188, 64
    %v3583 = vpop.permute.xlu0 %3582
    %3584 = vrot.lane.b32.xlu0 %v3189, 64
    %v3585 = vpop.permute.xlu0 %3584
    %3586 = vrot.lane.b32.xlu0 %v3190, 64
    %v3587 = vpop.permute.xlu0 %3586
    %3588 = vrot.lane.b32.xlu0 %v3191, 64
    %v3589 = vpop.permute.xlu0 %3588
    %3590 = vrot.lane.b32.xlu0 %v3192, 64
    %v3591 = vpop.permute.xlu0 %3590
    %3592 = vrot.lane.b32.xlu0 %v3193, 64
    %v3593 = vpop.permute.xlu0 %3592
    %3594 = vrot.lane.b32.xlu0 %v3194, 64
    %v3595 = vpop.permute.xlu0 %3594
    %3596 = vrot.lane.b32.xlu0 %v3196, 64
    %v3597 = vpop.permute.xlu0 %3596
    %3598 = vrot.lane.b32.xlu0 %v3202, 64
    %v3599 = vpop.permute.xlu0 %3598
    %v3601 = vshll.u32 %v3203, 16
    %v3603 = vrot.slane %v3601, 1
    %v3604 = vsel %vm216, %v3307, %v3603
    %v3605 = vshrl.u32 %v3203, 16
    %v3607 = vor.u32 %v3605, %v3603
    %3608 = vrot.lane.b32.xlu0 %v3224, 96
    %v3609 = vpop.permute.xlu0 %3608
    %3610 = vrot.lane.b32.xlu0 %v3232, 96
    %v3611 = vpop.permute.xlu0 %3610
    %3612 = vrot.lane.b32.xlu0 %v3240, 96
    %v3613 = vpop.permute.xlu0 %3612
    %3614 = vrot.lane.b32.xlu0 %v3248, 96
    %v3615 = vpop.permute.xlu0 %3614
    %3616 = vrot.lane.b32.xlu0 %v3256, 96
    %v3617 = vpop.permute.xlu0 %3616
    %3618 = vrot.lane.b32.xlu0 %v3264, 96
    %v3619 = vpop.permute.xlu0 %3618
    %3620 = vrot.lane.b32.xlu0 %v3272, 96
    %v3621 = vpop.permute.xlu0 %3620
    %3622 = vrot.lane.b32.xlu0 %v3280, 96
    %v3623 = vpop.permute.xlu0 %3622
    %3624 = vrot.lane.b32.xlu0 %v3288, 96
    %v3625 = vpop.permute.xlu0 %3624
    %3626 = vrot.lane.b32.xlu0 %v3296, 96
    %v3627 = vpop.permute.xlu0 %3626
    %3628 = vrot.lane.b32.xlu0 %v3304, 96
    %v3629 = vpop.permute.xlu0 %3628
    %3630 = vrot.lane.b32.xlu0 %v3604, 96
    %v3631 = vpop.permute.xlu0 %3630
    %3632 = vrot.lane.b32.xlu0 %v3607, 96
    %v3633 = vpop.permute.xlu0 %3632
    %v3636 = vrot.slane %v3204, 1
    %v3637 = vsel %vm349, %v3636, %v3350
    %v3638 = vrot.slane %v3203, 1
    %v3639 = vsel %vm349, %v3370, %v3638
    %v3641 = vsel %vm1819, %v3183, %v3309
    %v3643 = vsel %vm1819, %v3184, %v3311
    %v3645 = vsel %vm1819, %v3185, %v3313
    %v3647 = vsel %vm1819, %v3186, %v3315
    %v3649 = vsel %vm1819, %v3187, %v3317
    %v3651 = vsel %vm1819, %v3188, %v3319
    %v3653 = vsel %vm1819, %v3189, %v3321
    %v3655 = vsel %vm1819, %v3190, %v3323
    %v3657 = vsel %vm1819, %v3191, %v3325
    %v3659 = vsel %vm1819, %v3192, %v3327
    %v3661 = vsel %vm1819, %v3193, %v3329
    %v3663 = vsel %vm1819, %v3194, %v3331
    %v3666 = vsel %vm1819, %v3195, %v3333
    %v3668 = vsel %vm601, %v3641, %v3373
    %v3670 = vsel %vm601, %v3643, %v3375
    %v3672 = vsel %vm601, %v3645, %v3377
    %v3674 = vsel %vm601, %v3647, %v3379
    %v3676 = vsel %vm601, %v3649, %v3381
    %v3678 = vsel %vm601, %v3651, %v3383
    %v3680 = vsel %vm601, %v3653, %v3385
    %v3682 = vsel %vm601, %v3655, %v3387
    %v3684 = vsel %vm601, %v3657, %v3389
    %v3686 = vsel %vm601, %v3659, %v3391
    %v3688 = vsel %vm601, %v3661, %v3393
    %v3690 = vsel %vm601, %v3663, %v3395
    %v3692 = vsel %vm601, %v3666, %v3397
    %v3694 = vsel %vm2356, %v3668, %v3428
    %v3697 = vsel %vm2356, %v3670, %v3430
    %v3700 = vsel %vm2356, %v3672, %v3432
    %v3703 = vsel %vm2356, %v3674, %v3434
    %v3706 = vsel %vm2356, %v3676, %v3436
    %v3709 = vsel %vm2356, %v3678, %v3438
    %v3712 = vsel %vm2356, %v3680, %v3440
    %v3715 = vsel %vm2356, %v3682, %v3442
    %v3718 = vsel %vm2356, %v3684, %v3444
    %v3721 = vsel %vm2356, %v3686, %v3446
    %v3724 = vsel %vm2356, %v3688, %v3448
    %v3727 = vsel %vm2356, %v3690, %v3450
    %v3730 = vsel %vm2356, %v3692, %v3452
    %v3734 = vsel %vm1819, %v3464, %v3548
    %v3737 = vsel %vm1819, %v3468, %v3550
    %v3740 = vsel %vm1819, %v3472, %v3552
    %v3743 = vsel %vm1819, %v3476, %v3554
    %v3746 = vsel %vm1819, %v3480, %v3556
    %v3749 = vsel %vm1819, %v3484, %v3558
    %v3752 = vsel %vm1819, %v3488, %v3560
    %v3755 = vsel %vm1819, %v3492, %v3562
    %v3758 = vsel %vm1819, %v3496, %v3564
    %v3761 = vsel %vm1819, %v3500, %v3566
    %v3764 = vsel %vm1819, %v3504, %v3568
    %v3767 = vsel %vm1819, %v3508, %v3570
    %v3770 = vsel %vm1819, %v3517, %v3572
    %v3772 = vsel %vm601, %v3734, %v3575
    %v3774 = vsel %vm601, %v3737, %v3577
    %v3776 = vsel %vm601, %v3740, %v3579
    %v3778 = vsel %vm601, %v3743, %v3581
    %v3780 = vsel %vm601, %v3746, %v3583
    %v3782 = vsel %vm601, %v3749, %v3585
    %v3784 = vsel %vm601, %v3752, %v3587
    %v3786 = vsel %vm601, %v3755, %v3589
    %v3788 = vsel %vm601, %v3758, %v3591
    %v3790 = vsel %vm601, %v3761, %v3593
    %v3792 = vsel %vm601, %v3764, %v3595
    %v3794 = vsel %vm601, %v3767, %v3597
    %v3796 = vsel %vm601, %v3770, %v3599
    %v3798 = vsel %vm2356, %v3772, %v3609
    %v3801 = vsel %vm2356, %v3774, %v3611
    %v3804 = vsel %vm2356, %v3776, %v3613
    %v3807 = vsel %vm2356, %v3778, %v3615
    %v3810 = vsel %vm2356, %v3780, %v3617
    %v3813 = vsel %vm2356, %v3782, %v3619
    %v3816 = vsel %vm2356, %v3784, %v3621
    %v3819 = vsel %vm2356, %v3786, %v3623
    %v3822 = vsel %vm2356, %v3788, %v3625
    %v3825 = vsel %vm2356, %v3790, %v3627
    %v3828 = vsel %vm2356, %v3792, %v3629
    %v3831 = vsel %vm2356, %v3794, %v3631
    %v3834 = vsel %vm2356, %v3796, %v3633
    %v3836 = vld [vmem:[%s5] sm:$0xf]
    %v3837 = vld [vmem:[%s5 + $0x4] sm:$0xf]
    %v3838 = vld [vmem:[%s5 + $0x8] sm:$0xf]
    %v3839 = vld [vmem:[%s5 + $0xc] sm:$0xf]
    %v3840 = vld [vmem:[%s5 + $0x10] sm:$0xf]
    %v3841 = vld [vmem:[%s5 + $0x14] sm:$0xf]
    %v3842 = vld [vmem:[%s5 + $0x18] sm:$0xf]
    %v3843 = vld [vmem:[%s5 + $0x1c] sm:$0xf]
    %v3844 = vld [vmem:[%s5 + $0x20] sm:$0xf]
    %v3845 = vld [vmem:[%s5 + $0x24] sm:$0xf]
    %v3846 = vld [vmem:[%s5 + $0x28] sm:$0xf]
    %v3847 = vld [vmem:[%s5 + $0x2c] sm:$0xf]
    %v3848 = vld [vmem:[%s5 + $0x30] sm:$0xf]
    %v3849 = vld [vmem:[%s5 + $0x34] sm:$0xf]
    %v3850 = vld [vmem:[%s5 + $0x38] sm:$0xf]
    %v3851 = vld [vmem:[%s5 + $0x3c] sm:$0xf]
    %v3852 = vld [vmem:[%s5 + $0x40] sm:$0xf]
    %v3853 = vld [vmem:[%s5 + $0x44] sm:$0xf]
    %v3854 = vld [vmem:[%s5 + $0x48] sm:$0xf]
    %v3855 = vld [vmem:[%s5 + $0x4c] sm:$0xf]
    %v3856 = vld [vmem:[%s5 + $0x50] sm:$0xf]
    %v3857 = vld [vmem:[%s5 + $0x54] sm:$0xf]
    %v3858 = vld [vmem:[%s5 + $0x58] sm:$0xf]
    %v3859 = vld [vmem:[%s5 + $0x5c] sm:$0xf]
    %v3860 = vld [vmem:[%s5 + $0x60] sm:$0xf]
    %v3861 = vld [vmem:[%s5 + $0x64] sm:$0xf]
    %v3862 = vld [vmem:[%s5 + $0x68] sm:$0xf]
    %v3863 = vld [vmem:[%s5 + $0x6c] sm:$0xf]
    %v3864 = vld [vmem:[%s5 + $0x70] sm:$0xf]
    %v3865 = vld [vmem:[%s5 + $0x74] sm:$0xf]
    %v3866 = vld [vmem:[%s5 + $0x78] sm:$0xf]
    %v3867 = vld [vmem:[%s5 + $0x7c] sm:$0xf]
    %v3868 = vld [vmem:[%s5 + $0x80] sm:$0xf]
    %v3869 = vld [vmem:[%s5 + $0x84] sm:$0xf]
    %v3870 = vld [vmem:[%s5 + $0x88] sm:$0xf]
    %v3871 = vld [vmem:[%s5 + $0x8c] sm:$0xf]
    %v3872 = vld [vmem:[%s6] sm:$0x1]
    %v3874 = vlaneseq
    %v3875 = vshrl.u32 %v3874, 7
    %v3876 = vsub.s32 0, %v3875
    %v3877 = vrot.slane %v3872, %v3876
    %v3915 = vunpack.c.l.b16 %v3836
    %v3916 = vunpack.c.l.b16 %v3837
    %v3917 = vunpack.c.l.b16 %v3838
    %v3918 = vunpack.c.l.b16 %v3839
    %v3919 = vunpack.c.l.b16 %v3840
    %v3920 = vunpack.c.l.b16 %v3841
    %v3921 = vunpack.c.l.b16 %v3842
    %v3922 = vunpack.c.l.b16 %v3843
    %v3923 = vunpack.c.l.b16 %v3844
    %v3924 = vunpack.c.l.b16 %v3845
    %v3925 = vunpack.c.l.b16 %v3846
    %v3926 = vunpack.c.l.b16 %v3847
    %v3927 = vunpack.c.l.b16 %v3848
    %v3928 = vunpack.c.l.b16 %v3849
    %v3929 = vunpack.c.l.b16 %v3850
    %v3930 = vunpack.c.l.b16 %v3851
    %v3931 = vunpack.c.l.b16 %v3852
    %v3932 = vunpack.c.l.b16 %v3853
    %v3933 = vunpack.c.l.b16 %v3854
    %v3934 = vunpack.c.l.b16 %v3855
    %v3935 = vunpack.c.l.b16 %v3856
    %v3936 = vunpack.c.l.b16 %v3857
    %v3937 = vunpack.c.l.b16 %v3858
    %v3938 = vunpack.c.l.b16 %v3859
    %v3939 = vunpack.c.l.b16 %v3860
    %v3940 = vunpack.c.l.b16 %v3861
    %v3941 = vunpack.c.l.b16 %v3862
    %v3942 = vunpack.c.l.b16 %v3863
    %v3943 = vunpack.c.l.b16 %v3864
    %v3944 = vunpack.c.l.b16 %v3865
    %v3945 = vunpack.c.l.b16 %v3866
    %v3946 = vunpack.c.l.b16 %v3867
    %v3947 = vunpack.c.l.b16 %v3868
    %v3948 = vunpack.c.l.b16 %v3869
    %v3949 = vunpack.c.l.b16 %v3870
    %v3950 = vunpack.c.l.b16 %v3871
    %v3951 = vpack.c.b16 %v3916, %v3915
    %v3952 = vpack.c.b16 %v3918, %v3917
    %v3953 = vpack.c.b16 %v3920, %v3919
    %v3954 = vpack.c.b16 %v3922, %v3921
    %v3955 = vpack.c.b16 %v3924, %v3923
    %v3956 = vpack.c.b16 %v3926, %v3925
    %v3957 = vpack.c.b16 %v3928, %v3927
    %v3958 = vpack.c.b16 %v3930, %v3929
    %v3959 = vpack.c.b16 %v3932, %v3931
    %v3960 = vpack.c.b16 %v3934, %v3933
    %v3961 = vpack.c.b16 %v3936, %v3935
    %v3962 = vpack.c.b16 %v3938, %v3937
    %v3963 = vpack.c.b16 %v3940, %v3939
    %v3964 = vpack.c.b16 %v3942, %v3941
    %v3965 = vpack.c.b16 %v3944, %v3943
    %v3966 = vpack.c.b16 %v3946, %v3945
    %v3967 = vpack.c.b16 %v3948, %v3947
    %v3968 = vpack.c.b16 %v3950, %v3949
    %v3988 = vsel %vm1819, %v3637, 0
    %v3991 = vsel %vm1819, %v3353, 0
    %v3994 = vsel %vm1819, %v3355, 0
    %v3997 = vsel %vm1819, %v3357, 0
    %v4000 = vsel %vm1819, %v3359, 0
    %v4003 = vsel %vm1819, %v3361, 0
    %v4006 = vsel %vm1819, %v3363, 0
    %v4009 = vsel %vm1819, %v3365, 0
    %v4012 = vsel %vm1819, %v3367, 0
    %v4015 = vsel %vm1819, %v3369, 0
    %v4018 = vsel %vm1819, %v3371, 0
    %v4021 = vsel %vm1819, %v3639, 0
    %v4024 = vsel %vm1819, %v3638, 0
    %4026 = vmatprep.subr.bf16.mxu0 0
    %4027 = vmatpush1.bf16.msra.mxu0 %v3951
    %4028 = vmatprep.subr.bf16.mxu0 0
    %4029 = vmatpush1.bf16.msra.mxu0 %v3952
    %4030 = vmatprep.subr.bf16.mxu0 0
    %4031 = vmatpush1.bf16.msra.mxu0 %v3953
    %4032 = vmatprep.subr.bf16.mxu0 0
    %4033 = vmatpush1.bf16.msra.mxu0 %v3954
    %4034 = vmatprep.subr.bf16.mxu0 0
    %4035 = vmatpush1.bf16.msra.mxu0 %v3955
    %4036 = vmatprep.subr.bf16.mxu0 0
    %4037 = vmatpush1.bf16.msra.mxu0 %v3956
    %4038 = vmatprep.subr.bf16.mxu0 0
    %4039 = vmatpush1.bf16.msra.mxu0 %v3957
    %4040 = vmatprep.subr.bf16.mxu0 0
    %4041 = vmatpush1.bf16.msra.mxu0 %v3958
    %4042 = vmatprep.subr.bf16.mxu0 0
    %4043 = vmatpush1.bf16.msra.mxu0 %v3959
    %4044 = vmatprep.subr.bf16.mxu0 0
    %4045 = vmatpush1.bf16.msra.mxu0 %v3960
    %4046 = vmatprep.subr.bf16.mxu0 0
    %4047 = vmatpush1.bf16.msra.mxu0 %v3961
    %4048 = vmatprep.subr.bf16.mxu0 0
    %4049 = vmatpush1.bf16.msra.mxu0 %v3962
    %4050 = vmatprep.subr.bf16.mxu0 0
    %4051 = vmatpush1.bf16.msra.mxu0 %v3963
    %4052 = vmatprep.subr.bf16.mxu0 0
    %4053 = vmatpush1.bf16.msra.mxu0 %v3964
    %4054 = vmatprep.subr.bf16.mxu0 0
    %4055 = vmatpush1.bf16.msra.mxu0 %v3965
    %4056 = vmatprep.subr.bf16.mxu0 0
    %4057 = vmatpush1.bf16.msra.mxu0 %v3966
    %4058 = vmatprep.mubr.bf16.mxu0 %v3798
    %4059 = vmatmul.mubr.bf16.gmra.mrb[0].mxu0 %v3694
    %v4060 = vpop.f32.mrb[0].mxu0
    %v4061 = vadd.f32 %v3877, %v4060
    %v4062 = vpop.f32.mrb[0].mxu0
    %v4063 = vpop.f32.mrb[0].mxu0
    %v4064 = vadd.f32 %v3877, %v4063
    %v4065 = vpop.f32.mrb[0].mxu0
    %4066 = vmatprep.mubr.bf16.mxu0 %v3801
    %4067 = vmatmul.mubr.bf16.gmra.mrb[0].mxu0 %v3697
    %v4068 = vpop.f32.mrb[0].mxu0
    %v4069 = vadd.f32 %v3877, %v4068
    %v4070 = vpop.f32.mrb[0].mxu0
    %v4071 = vpop.f32.mrb[0].mxu0
    %v4072 = vadd.f32 %v3877, %v4071
    %v4073 = vpop.f32.mrb[0].mxu0
    %4074 = vmatprep.mubr.bf16.mxu0 %v3804
    %4075 = vmatmul.mubr.bf16.gmra.mrb[0].mxu0 %v3700
    %v4076 = vpop.f32.mrb[0].mxu0
    %v4077 = vadd.f32 %v3877, %v4076
    %v4078 = vpop.f32.mrb[0].mxu0
    %v4079 = vpop.f32.mrb[0].mxu0
    %v4080 = vadd.f32 %v3877, %v4079
    %v4081 = vpop.f32.mrb[0].mxu0
    %4082 = vmatprep.mubr.bf16.mxu0 %v3807
    %4083 = vmatmul.mubr.bf16.gmra.mrb[0].mxu0 %v3703
    %v4084 = vpop.f32.mrb[0].mxu0
    %v4085 = vadd.f32 %v3877, %v4084
    %v4086 = vpop.f32.mrb[0].mxu0
    %v4087 = vpop.f32.mrb[0].mxu0
    %v4088 = vadd.f32 %v3877, %v4087
    %v4089 = vpop.f32.mrb[0].mxu0
    %4090 = vmatprep.mubr.bf16.mxu0 %v3810
    %4091 = vmatmul.mubr.bf16.gmra.mrb[0].mxu0 %v3706
    %v4092 = vpop.f32.mrb[0].mxu0
    %v4093 = vadd.f32 %v3877, %v4092
    %v4094 = vpop.f32.mrb[0].mxu0
    %v4095 = vpop.f32.mrb[0].mxu0
    %v4096 = vadd.f32 %v3877, %v4095
    %v4097 = vpop.f32.mrb[0].mxu0
    %4098 = vmatprep.mubr.bf16.mxu0 %v3813
    %4099 = vmatmul.mubr.bf16.gmra.mrb[0].mxu0 %v3709
    %v4100 = vpop.f32.mrb[0].mxu0
    %v4101 = vadd.f32 %v3877, %v4100
    %v4102 = vpop.f32.mrb[0].mxu0
    %v4103 = vpop.f32.mrb[0].mxu0
    %v4104 = vadd.f32 %v3877, %v4103
    %v4105 = vpop.f32.mrb[0].mxu0
    %4106 = vmatprep.mubr.bf16.mxu0 %v3816
    %4107 = vmatmul.mubr.bf16.gmra.mrb[0].mxu0 %v3712
    %v4108 = vpop.f32.mrb[0].mxu0
    %v4109 = vadd.f32 %v3877, %v4108
    %v4110 = vpop.f32.mrb[0].mxu0
    %v4111 = vpop.f32.mrb[0].mxu0
    %v4112 = vadd.f32 %v3877, %v4111
    %v4113 = vpop.f32.mrb[0].mxu0
    %4114 = vmatprep.mubr.bf16.mxu0 %v3819
    %4115 = vmatmul.mubr.bf16.gmra.mrb[0].mxu0 %v3715
    %v4116 = vpop.f32.mrb[0].mxu0
    %v4117 = vadd.f32 %v3877, %v4116
    %v4118 = vpop.f32.mrb[0].mxu0
    %v4119 = vpop.f32.mrb[0].mxu0
    %v4120 = vadd.f32 %v3877, %v4119
    %v4121 = vpop.f32.mrb[0].mxu0
    %4122 = vmatprep.mubr.bf16.mxu0 %v3822
    %4123 = vmatmul.mubr.bf16.gmra.mrb[0].mxu0 %v3718
    %v4124 = vpop.f32.mrb[0].mxu0
    %v4125 = vadd.f32 %v3877, %v4124
    %v4126 = vpop.f32.mrb[0].mxu0
    %v4127 = vpop.f32.mrb[0].mxu0
    %v4128 = vadd.f32 %v3877, %v4127
    %v4129 = vpop.f32.mrb[0].mxu0
    %4130 = vmatprep.mubr.bf16.mxu0 %v3825
    %4131 = vmatmul.mubr.bf16.gmra.mrb[0].mxu0 %v3721
    %v4132 = vpop.f32.mrb[0].mxu0
    %v4133 = vadd.f32 %v3877, %v4132
    %v4134 = vpop.f32.mrb[0].mxu0
    %v4135 = vpop.f32.mrb[0].mxu0
    %v4136 = vadd.f32 %v3877, %v4135
    %v4137 = vpop.f32.mrb[0].mxu0
    %4138 = vmatprep.mubr.bf16.mxu0 %v3828
    %4139 = vmatmul.mubr.bf16.gmra.mrb[0].mxu0 %v3724
    %v4140 = vpop.f32.mrb[0].mxu0
    %v4141 = vadd.f32 %v3877, %v4140
    %v4142 = vpop.f32.mrb[0].mxu0
    %v4143 = vpop.f32.mrb[0].mxu0
    %v4144 = vadd.f32 %v3877, %v4143
    %v4145 = vpop.f32.mrb[0].mxu0
    %4146 = vmatprep.mubr.bf16.mxu0 %v3831
    %4147 = vmatmul.mubr.bf16.gmra.mrb[0].mxu0 %v3727
    %v4148 = vpop.f32.mrb[0].mxu0
    %v4149 = vadd.f32 %v3877, %v4148
    %v4150 = vpop.f32.mrb[0].mxu0
    %v4151 = vpop.f32.mrb[0].mxu0
    %v4152 = vadd.f32 %v3877, %v4151
    %v4153 = vpop.f32.mrb[0].mxu0
    %4154 = vmatprep.mubr.bf16.mxu0 %v3834
    %4155 = vmatmul.mubr.bf16.gmra.mrb[0].mxu0 %v3730
    %v4156 = vpop.f32.mrb[0].mxu0
    %v4157 = vadd.f32 %v3877, %v4156
    %v4158 = vpop.f32.mrb[0].mxu0
    %v4159 = vpop.f32.mrb[0].mxu0
    %v4160 = vadd.f32 %v3877, %v4159
    %v4161 = vpop.f32.mrb[0].mxu0
    %4162 = vdwg.mxu0
    %4163 = vmatprep.subr.bf16.mxu0 0
    %4164 = vmatpush1.bf16.msra.mxu0 %v3967
    %4165 = vmatprep.subr.bf16.mxu0 0
    %4166 = vmatpush1.bf16.msra.mxu0 %v3968
    %4167 = vmatprep.subr.bf16.mxu0 0
    %4168 = vmatpush1.bf16.msra.mxu0 0
    %4169 = vmatprep.subr.bf16.mxu0 0
    %4170 = vmatpush1.bf16.msra.mxu0 0
    %4171 = vmatprep.subr.bf16.mxu0 0
    %4172 = vmatpush1.bf16.msra.mxu0 0
    %4173 = vmatprep.subr.bf16.mxu0 0
    %4174 = vmatpush1.bf16.msra.mxu0 0
    %4175 = vmatprep.subr.bf16.mxu0 0
    %4176 = vmatpush1.bf16.msra.mxu0 0
    %4177 = vmatprep.subr.bf16.mxu0 0
    %4178 = vmatpush1.bf16.msra.mxu0 0
    %4179 = vmatprep.subr.bf16.mxu0 0
    %4180 = vmatpush1.bf16.msra.mxu0 0
    %4181 = vmatprep.subr.bf16.mxu0 0
    %4182 = vmatpush1.bf16.msra.mxu0 0
    %4183 = vmatprep.subr.bf16.mxu0 0
    %4184 = vmatpush1.bf16.msra.mxu0 0
    %4185 = vmatprep.subr.bf16.mxu0 0
    %4186 = vmatpush1.bf16.msra.mxu0 0
    %4187 = vmatprep.subr.bf16.mxu0 0
    %4188 = vmatpush1.bf16.msra.mxu0 0
    %4189 = vmatprep.subr.bf16.mxu0 0
    %4190 = vmatpush1.bf16.msra.mxu0 0
    %4191 = vmatprep.subr.bf16.mxu0 0
    %4192 = vmatpush1.bf16.msra.mxu0 0
    %4193 = vmatprep.subr.bf16.mxu0 0
    %4194 = vmatpush1.bf16.msra.mxu0 0
    %4195 = vmatprep.mubr.bf16.mxu0 0
    %4196 = vmatmul.mubr.bf16.gmra.mrb[0].mxu0 %v3988
    %v4197 = vpop.f32.mrb[0].mxu0
    %v4198 = vadd.f32 %v4061, %v4197
    %v4199 = vpop.f32.mrb[0].mxu0
    %v4200 = vpop.f32.mrb[0].mxu0
    %v4201 = vadd.f32 %v4064, %v4200
    %v4202 = vpop.f32.mrb[0].mxu0
    %4203 = vmatprep.mubr.bf16.mxu0 0
    %4204 = vmatmul.mubr.bf16.gmra.mrb[0].mxu0 %v3991
    %v4205 = vpop.f32.mrb[0].mxu0
    %v4206 = vadd.f32 %v4069, %v4205
    %v4207 = vpop.f32.mrb[0].mxu0
    %v4208 = vpop.f32.mrb[0].mxu0
    %v4209 = vadd.f32 %v4072, %v4208
    %v4210 = vpop.f32.mrb[0].mxu0
    %4211 = vmatprep.mubr.bf16.mxu0 0
    %4212 = vmatmul.mubr.bf16.gmra.mrb[0].mxu0 %v3994
    %v4213 = vpop.f32.mrb[0].mxu0
    %v4214 = vadd.f32 %v4077, %v4213
    %v4215 = vpop.f32.mrb[0].mxu0
    %v4216 = vpop.f32.mrb[0].mxu0
    %v4217 = vadd.f32 %v4080, %v4216
    %v4218 = vpop.f32.mrb[0].mxu0
    %4219 = vmatprep.mubr.bf16.mxu0 0
    %4220 = vmatmul.mubr.bf16.gmra.mrb[0].mxu0 %v3997
    %v4221 = vpop.f32.mrb[0].mxu0
    %v4222 = vadd.f32 %v4085, %v4221
    %v4223 = vpop.f32.mrb[0].mxu0
    %v4224 = vpop.f32.mrb[0].mxu0
    %v4225 = vadd.f32 %v4088, %v4224
    %v4226 = vpop.f32.mrb[0].mxu0
    %4227 = vmatprep.mubr.bf16.mxu0 0
    %4228 = vmatmul.mubr.bf16.gmra.mrb[0].mxu0 %v4000
    %v4229 = vpop.f32.mrb[0].mxu0
    %v4230 = vadd.f32 %v4093, %v4229
    %v4231 = vpop.f32.mrb[0].mxu0
    %v4232 = vpop.f32.mrb[0].mxu0
    %v4233 = vadd.f32 %v4096, %v4232
    %v4234 = vpop.f32.mrb[0].mxu0
    %4235 = vmatprep.mubr.bf16.mxu0 0
    %4236 = vmatmul.mubr.bf16.gmra.mrb[0].mxu0 %v4003
    %v4237 = vpop.f32.mrb[0].mxu0
    %v4238 = vadd.f32 %v4101, %v4237
    %v4239 = vpop.f32.mrb[0].mxu0
    %v4240 = vpop.f32.mrb[0].mxu0
    %v4241 = vadd.f32 %v4104, %v4240
    %v4242 = vpop.f32.mrb[0].mxu0
    %4243 = vmatprep.mubr.bf16.mxu0 0
    %4244 = vmatmul.mubr.bf16.gmra.mrb[0].mxu0 %v4006
    %v4245 = vpop.f32.mrb[0].mxu0
    %v4246 = vadd.f32 %v4109, %v4245
    %v4247 = vpop.f32.mrb[0].mxu0
    %v4248 = vpop.f32.mrb[0].mxu0
    %v4249 = vadd.f32 %v4112, %v4248
    %v4250 = vpop.f32.mrb[0].mxu0
    %4251 = vmatprep.mubr.bf16.mxu0 0
    %4252 = vmatmul.mubr.bf16.gmra.mrb[0].mxu0 %v4009
    %v4253 = vpop.f32.mrb[0].mxu0
    %v4254 = vadd.f32 %v4117, %v4253
    %v4255 = vpop.f32.mrb[0].mxu0
    %v4256 = vpop.f32.mrb[0].mxu0
    %v4257 = vadd.f32 %v4120, %v4256
    %v4258 = vpop.f32.mrb[0].mxu0
    %4259 = vmatprep.mubr.bf16.mxu0 0
    %4260 = vmatmul.mubr.bf16.gmra.mrb[0].mxu0 %v4012
    %v4261 = vpop.f32.mrb[0].mxu0
    %v4262 = vadd.f32 %v4125, %v4261
    %v4263 = vpop.f32.mrb[0].mxu0
    %v4264 = vpop.f32.mrb[0].mxu0
    %v4265 = vadd.f32 %v4128, %v4264
    %v4266 = vpop.f32.mrb[0].mxu0
    %4267 = vmatprep.mubr.bf16.mxu0 0
    %4268 = vmatmul.mubr.bf16.gmra.mrb[0].mxu0 %v4015
    %v4269 = vpop.f32.mrb[0].mxu0
    %v4270 = vadd.f32 %v4133, %v4269
    %v4271 = vpop.f32.mrb[0].mxu0
    %v4272 = vpop.f32.mrb[0].mxu0
    %v4273 = vadd.f32 %v4136, %v4272
    %v4274 = vpop.f32.mrb[0].mxu0
    %4275 = vmatprep.mubr.bf16.mxu0 0
    %4276 = vmatmul.mubr.bf16.gmra.mrb[0].mxu0 %v4018
    %v4277 = vpop.f32.mrb[0].mxu0
    %v4278 = vadd.f32 %v4141, %v4277
    %v4279 = vpop.f32.mrb[0].mxu0
    %v4280 = vpop.f32.mrb[0].mxu0
    %v4281 = vadd.f32 %v4144, %v4280
    %v4282 = vpop.f32.mrb[0].mxu0
    %4283 = vmatprep.mubr.bf16.mxu0 0
    %4284 = vmatmul.mubr.bf16.gmra.mrb[0].mxu0 %v4021
    %v4285 = vpop.f32.mrb[0].mxu0
    %v4286 = vadd.f32 %v4149, %v4285
    %v4287 = vpop.f32.mrb[0].mxu0
    %v4288 = vpop.f32.mrb[0].mxu0
    %v4289 = vadd.f32 %v4152, %v4288
    %v4290 = vpop.f32.mrb[0].mxu0
    %4291 = vmatprep.mubr.bf16.mxu0 0
    %4292 = vmatmul.mubr.bf16.gmra.mrb[0].mxu0 %v4024
    %v4293 = vpop.f32.mrb[0].mxu0
    %v4294 = vadd.f32 %v4157, %v4293
    %v4295 = vpop.f32.mrb[0].mxu0
    %v4296 = vpop.f32.mrb[0].mxu0
    %v4297 = vadd.f32 %v4160, %v4296
    %v4298 = vpop.f32.mrb[0].mxu0
    %4299 = vdwg.mxu0
    %v4300 = vmax.f32 %v4198, 0.0
    %v4301 = vmax.f32 %v4201, 0.0
    %v4302 = vmax.f32 %v4206, 0.0
    %v4303 = vmax.f32 %v4209, 0.0
    %v4304 = vmax.f32 %v4214, 0.0
    %v4305 = vmax.f32 %v4217, 0.0
    %v4306 = vmax.f32 %v4222, 0.0
    %v4307 = vmax.f32 %v4225, 0.0
    %v4308 = vmax.f32 %v4230, 0.0
    %v4309 = vmax.f32 %v4233, 0.0
    %v4310 = vmax.f32 %v4238, 0.0
    %v4311 = vmax.f32 %v4241, 0.0
    %v4312 = vmax.f32 %v4246, 0.0
    %v4313 = vmax.f32 %v4249, 0.0
    %v4314 = vmax.f32 %v4254, 0.0
    %v4315 = vmax.f32 %v4257, 0.0
    %v4316 = vmax.f32 %v4262, 0.0
    %v4317 = vmax.f32 %v4265, 0.0
    %v4318 = vmax.f32 %v4270, 0.0
    %v4319 = vmax.f32 %v4273, 0.0
    %v4320 = vmax.f32 %v4278, 0.0
    %v4321 = vmax.f32 %v4281, 0.0
    %v4322 = vmax.f32 %v4286, 0.0
    %v4323 = vmax.f32 %v4289, 0.0
    %v4324 = vmax.f32 %v4294, 0.0
    %v4325 = vmax.f32 %v4297, 0.0
    %v4326 = vmul.f32 %v4300, %v1517
    %v4327 = vmul.f32 %v4301, %v1522
    %v4328 = vmul.f32 %v4302, %v1527
    %v4329 = vmul.f32 %v4303, %v1532
    %v4330 = vmul.f32 %v4304, %v1537
    %v4331 = vmul.f32 %v4305, %v1542
    %v4332 = vmul.f32 %v4306, %v1547
    %v4333 = vmul.f32 %v4307, %v1552
    %v4334 = vmul.f32 %v4308, %v1557
    %v4335 = vmul.f32 %v4309, %v1562
    %v4336 = vmul.f32 %v4310, %v1567
    %v4337 = vmul.f32 %v4311, %v1572
    %v4338 = vmul.f32 %v4312, %v1577
    %v4339 = vmul.f32 %v4313, %v1582
    %v4340 = vmul.f32 %v4314, %v1587
    %v4341 = vmul.f32 %v4315, %v1592
    %v4342 = vmul.f32 %v4316, %v1597
    %v4343 = vmul.f32 %v4317, %v1602
    %v4344 = vmul.f32 %v4318, %v1607
    %v4345 = vmul.f32 %v4319, %v1612
    %v4346 = vmul.f32 %v4320, %v1617
    %v4347 = vmul.f32 %v4321, %v1622
    %v4348 = vmul.f32 %v4322, %v1627
    %v4349 = vmul.f32 %v4323, %v1632
    %v4350 = vmul.f32 %v4324, %v1637
    %v4351 = vmul.f32 %v4325, %v1642
    %v4352 = vpack.c.bf16 %v4327, %v4326
    %v4353 = vpack.c.bf16 %v4329, %v4328
    %v4354 = vpack.c.bf16 %v4331, %v4330
    %v4355 = vpack.c.bf16 %v4333, %v4332
    %v4356 = vpack.c.bf16 %v4335, %v4334
    %v4357 = vpack.c.bf16 %v4337, %v4336
    %v4358 = vpack.c.bf16 %v4339, %v4338
    %v4359 = vpack.c.bf16 %v4341, %v4340
    %v4360 = vpack.c.bf16 %v4343, %v4342
    %v4361 = vpack.c.bf16 %v4345, %v4344
    %v4362 = vpack.c.bf16 %v4347, %v4346
    %v4363 = vpack.c.bf16 %v4349, %v4348
    %v4364 = vpack.c.bf16 %v4351, %v4350
    %v4366 = vshrl.u32 %v4352, 16
    %v4368 = vrot.slane %v4366, 3
    %v4369 = vshll.u32 %v4352, 16
    %v4371 = vrot.slane %v4369, 4
    %v4372 = vor.u32 %v4368, %v4371
    %v4374 = vshrl.u32 %v4353, 16
    %v4376 = vrot.slane %v4374, 3
    %v4377 = vshll.u32 %v4353, 16
    %v4379 = vrot.slane %v4377, 4
    %v4380 = vor.u32 %v4376, %v4379
    %v4381 = vsel %vm103, %v4372, %v4380
    %v4383 = vshrl.u32 %v4354, 16
    %v4385 = vrot.slane %v4383, 3
    %v4386 = vshll.u32 %v4354, 16
    %v4388 = vrot.slane %v4386, 4
    %v4389 = vor.u32 %v4385, %v4388
    %v4390 = vsel %vm103, %v4380, %v4389
    %v4392 = vshrl.u32 %v4355, 16
    %v4394 = vrot.slane %v4392, 3
    %v4395 = vshll.u32 %v4355, 16
    %v4397 = vrot.slane %v4395, 4
    %v4398 = vor.u32 %v4394, %v4397
    %v4399 = vsel %vm103, %v4389, %v4398
    %v4401 = vshrl.u32 %v4356, 16
    %v4403 = vrot.slane %v4401, 3
    %v4404 = vshll.u32 %v4356, 16
    %v4406 = vrot.slane %v4404, 4
    %v4407 = vor.u32 %v4403, %v4406
    %v4408 = vsel %vm103, %v4398, %v4407
    %v4410 = vshrl.u32 %v4357, 16
    %v4412 = vrot.slane %v4410, 3
    %v4413 = vshll.u32 %v4357, 16
    %v4415 = vrot.slane %v4413, 4
    %v4416 = vor.u32 %v4412, %v4415
    %v4417 = vsel %vm103, %v4407, %v4416
    %v4419 = vshrl.u32 %v4358, 16
    %v4421 = vrot.slane %v4419, 3
    %v4422 = vshll.u32 %v4358, 16
    %v4424 = vrot.slane %v4422, 4
    %v4425 = vor.u32 %v4421, %v4424
    %v4426 = vsel %vm103, %v4416, %v4425
    %v4428 = vshrl.u32 %v4359, 16
    %v4430 = vrot.slane %v4428, 3
    %v4431 = vshll.u32 %v4359, 16
    %v4433 = vrot.slane %v4431, 4
    %v4434 = vor.u32 %v4430, %v4433
    %v4435 = vsel %vm103, %v4425, %v4434
    %v4437 = vshrl.u32 %v4360, 16
    %v4439 = vrot.slane %v4437, 3
    %v4440 = vshll.u32 %v4360, 16
    %v4442 = vrot.slane %v4440, 4
    %v4443 = vor.u32 %v4439, %v4442
    %v4444 = vsel %vm103, %v4434, %v4443
    %v4446 = vshrl.u32 %v4361, 16
    %v4448 = vrot.slane %v4446, 3
    %v4449 = vshll.u32 %v4361, 16
    %v4451 = vrot.slane %v4449, 4
    %v4452 = vor.u32 %v4448, %v4451
    %v4453 = vsel %vm103, %v4443, %v4452
    %v4455 = vshrl.u32 %v4362, 16
    %v4457 = vrot.slane %v4455, 3
    %v4458 = vshll.u32 %v4362, 16
    %v4460 = vrot.slane %v4458, 4
    %v4461 = vor.u32 %v4457, %v4460
    %v4462 = vsel %vm103, %v4452, %v4461
    %v4464 = vshrl.u32 %v4363, 16
    %v4466 = vrot.slane %v4464, 3
    %v4467 = vshll.u32 %v4363, 16
    %v4469 = vrot.slane %v4467, 4
    %v4470 = vor.u32 %v4466, %v4469
    %v4471 = vsel %vm103, %v4461, %v4470
    %v4473 = vshrl.u32 %v4364, 16
    %v4475 = vrot.slane %v4473, 3
    %v4476 = vshll.u32 %v4364, 16
    %v4478 = vrot.slane %v4476, 4
    %v4479 = vor.u32 %v4475, %v4478
    %v4480 = vsel %vm103, %v4470, %v4479
    %v4495 = vld [vmem:[#allocation4] sm:$0xf0]
    %v4496 = vsel %vm1815, %v4372, %v4495
    %4497 = vst [vmem:[#allocation4] sm:$0xf0] %v4496
    %4498 = vst.msk [vmem:[#allocation4 + $0x8] sm:$0xff] %vm1819, %v4381
    %4499 = vst.msk [vmem:[#allocation4 + $0x10] sm:$0xff] %vm1819, %v4390
    %4500 = vst.msk [vmem:[#allocation4 + $0x18] sm:$0xff] %vm1819, %v4399
    %4501 = vst.msk [vmem:[#allocation4 + $0x20] sm:$0xff] %vm1819, %v4408
    %4502 = vst.msk [vmem:[#allocation4 + $0x28] sm:$0xff] %vm1819, %v4417
    %4503 = vst.msk [vmem:[#allocation4 + $0x30] sm:$0xff] %vm1819, %v4426
    %4504 = vst.msk [vmem:[#allocation4 + $0x38] sm:$0xff] %vm1819, %v4435
    %4505 = vst.msk [vmem:[#allocation4 + $0x40] sm:$0xff] %vm1819, %v4444
    %4506 = vst.msk [vmem:[#allocation4 + $0x48] sm:$0xff] %vm1819, %v4453
    %4507 = vst.msk [vmem:[#allocation4 + $0x50] sm:$0xff] %vm1819, %v4462
    %4508 = vst.msk [vmem:[#allocation4 + $0x58] sm:$0xff] %vm1819, %v4471
    %4509 = vst.msk [vmem:[#allocation4 + $0x60] sm:$0xff] %vm1819, %v4480
    %v4510 = vld [vmem:[#allocation4 + $0x68] sm:$0xf]
    %v4511 = vsel %vm1834, %v4479, %v4510
    %4512 = vst [vmem:[#allocation4 + $0x68] sm:$0xf] %v4511
    %v4513 = vld [vmem:[#allocation5] sm:$0x1f]
    %v4514 = vsel %vm104, 0, %v4513
    %4515 = vst [vmem:[#allocation5] sm:$0x1f] %v4514
    %v4516 = vld [vmem:[#allocation5 + $0x30] sm:$0xf8]
    %v4517 = vsel %vm110, 0, %v4516
    %4518 = vst [vmem:[#allocation5 + $0x30] sm:$0xf8] %v4517
    %v4519 = vld [vmem:[#allocation4] sm:$0xff]
    %v4520 = vld [vmem:[#allocation4 + $0x8] sm:$0xff]
    %v4521 = vld [vmem:[#allocation4 + $0x10] sm:$0xff]
    %v4522 = vld [vmem:[#allocation4 + $0x18] sm:$0xff]
    %v4523 = vld [vmem:[#allocation4 + $0x20] sm:$0xff]
    %v4524 = vld [vmem:[#allocation4 + $0x28] sm:$0x7f]
    %v4525 = vld [vmem:[#allocation4 + $0x38] sm:$0xff]
    %v4526 = vld [vmem:[#allocation4 + $0x40] sm:$0xff]
    %v4527 = vld [vmem:[#allocation4 + $0x48] sm:$0xff]
    %v4528 = vld [vmem:[#allocation4 + $0x50] sm:$0xff]
    %v4529 = vld [vmem:[#allocation4 + $0x58] sm:$0xff]
    %v4530 = vld [vmem:[#allocation4 + $0x60] sm:$0x7f]
    %v4531 = vld [vmem:[#allocation4 + $0x28] sm:$0xff]
    %v4532 = vld [vmem:[#allocation4 + $0x60] sm:$0xff]
    %v4533 = vld [vmem:[#allocation4] sm:$0xfe]
    %v4534 = vld [vmem:[#allocation4 + $0x38] sm:$0xfe]
    %v4535 = vld [vmem:[#allocation4] sm:$0xf0]
    %v4536 = vld [vmem:[#allocation4 + $0x30] sm:$0x7]
    %v4537 = vld [vmem:[#allocation4 + $0x38] sm:$0xf0]
    %v4538 = vld [vmem:[#allocation4 + $0x68] sm:$0x7]
    %v4539 = vld [vmem:[#allocation4 + $0x30] sm:$0xf]
    %v4540 = vld [vmem:[#allocation4 + $0x68] sm:$0xf]
    %v4541 = vld [vmem:[#allocation4] sm:$0xe0]
    %v4542 = vld [vmem:[#allocation4 + $0x38] sm:$0xe0]
    %v4543 = vld [vmem:[#allocation4 + $0x30] sm:$0x7f]
    %v4544 = vld [vmem:[#allocation4 + $0x68] sm:$0x7f]
    %v4545 = vld [vmem:[#allocation4 + $0x30] sm:$0xff]
    %v4546 = vld [vmem:[#allocation4 + $0x68] sm:$0xff]
    %v4547 = vld [vmem:[#allocation4 + $0x8] sm:$0xfe]
    %v4548 = vld [vmem:[#allocation4 + $0x40] sm:$0xfe]
    %4555 = vrot.lane.b32.xlu0 %v4525, 32
    %v4556 = vpop.permute.xlu0 %4555
    %4557 = vrot.lane.b32.xlu0 %v4526, 32
    %v4558 = vpop.permute.xlu0 %4557
    %4559 = vrot.lane.b32.xlu0 %v4527, 32
    %v4560 = vpop.permute.xlu0 %4559
    %4561 = vrot.lane.b32.xlu0 %v4528, 32
    %v4562 = vpop.permute.xlu0 %4561
    %4563 = vrot.lane.b32.xlu0 %v4529, 32
    %v4564 = vpop.permute.xlu0 %4563
    %4565 = vrot.lane.b32.xlu0 %v4530, 32
    %v4566 = vpop.permute.xlu0 %4565
    %v4568 = vshrl.u32 %v4519, 16
    %v4570 = vshll.u32 %v4519, 16
    %v4572 = vrot.slane %v4570, 1
    %v4573 = vor.u32 %v4568, %v4572
    %v4575 = vshll.u32 %v4520, 16
    %v4577 = vrot.slane %v4575, 1
    %v4578 = vsel %vm216, %v4573, %v4577
    %v4579 = vshrl.u32 %v4520, 16
    %v4581 = vor.u32 %v4579, %v4577
    %v4583 = vshll.u32 %v4521, 16
    %v4585 = vrot.slane %v4583, 1
    %v4586 = vsel %vm216, %v4581, %v4585
    %v4587 = vshrl.u32 %v4521, 16
    %v4589 = vor.u32 %v4587, %v4585
    %v4591 = vshll.u32 %v4522, 16
    %v4593 = vrot.slane %v4591, 1
    %v4594 = vsel %vm216, %v4589, %v4593
    %v4595 = vshrl.u32 %v4522, 16
    %v4597 = vor.u32 %v4595, %v4593
    %v4599 = vshll.u32 %v4523, 16
    %v4601 = vrot.slane %v4599, 1
    %v4602 = vsel %vm216, %v4597, %v4601
    %v4603 = vshrl.u32 %v4523, 16
    %v4605 = vor.u32 %v4603, %v4601
    %v4607 = vshll.u32 %v4531, 16
    %v4609 = vrot.slane %v4607, 1
    %v4610 = vsel %vm216, %v4605, %v4609
    %v4611 = vshrl.u32 %v4531, 16
    %v4613 = vor.u32 %v4611, %v4609
    %4614 = vrot.lane.b32.xlu0 %v4578, 64
    %v4615 = vpop.permute.xlu0 %4614
    %4616 = vrot.lane.b32.xlu0 %v4586, 64
    %v4617 = vpop.permute.xlu0 %4616
    %4618 = vrot.lane.b32.xlu0 %v4594, 64
    %v4619 = vpop.permute.xlu0 %4618
    %4620 = vrot.lane.b32.xlu0 %v4602, 64
    %v4621 = vpop.permute.xlu0 %4620
    %4622 = vrot.lane.b32.xlu0 %v4610, 64
    %v4623 = vpop.permute.xlu0 %4622
    %4624 = vrot.lane.b32.xlu0 %v4613, 64
    %v4625 = vpop.permute.xlu0 %4624
    %v4627 = vshrl.u32 %v4525, 16
    %v4629 = vshll.u32 %v4525, 16
    %v4631 = vrot.slane %v4629, 1
    %v4632 = vor.u32 %v4627, %v4631
    %v4634 = vshll.u32 %v4526, 16
    %v4636 = vrot.slane %v4634, 1
    %v4637 = vsel %vm216, %v4632, %v4636
    %v4638 = vshrl.u32 %v4526, 16
    %v4640 = vor.u32 %v4638, %v4636
    %v4642 = vshll.u32 %v4527, 16
    %v4644 = vrot.slane %v4642, 1
    %v4645 = vsel %vm216, %v4640, %v4644
    %v4646 = vshrl.u32 %v4527, 16
    %v4648 = vor.u32 %v4646, %v4644
    %v4650 = vshll.u32 %v4528, 16
    %v4652 = vrot.slane %v4650, 1
    %v4653 = vsel %vm216, %v4648, %v4652
    %v4654 = vshrl.u32 %v4528, 16
    %v4656 = vor.u32 %v4654, %v4652
    %v4658 = vshll.u32 %v4529, 16
    %v4660 = vrot.slane %v4658, 1
    %v4661 = vsel %vm216, %v4656, %v4660
    %v4662 = vshrl.u32 %v4529, 16
    %v4664 = vor.u32 %v4662, %v4660
    %v4666 = vshll.u32 %v4532, 16
    %v4668 = vrot.slane %v4666, 1
    %v4669 = vsel %vm216, %v4664, %v4668
    %v4670 = vshrl.u32 %v4532, 16
    %v4672 = vor.u32 %v4670, %v4668
    %4673 = vrot.lane.b32.xlu0 %v4637, 96
    %v4674 = vpop.permute.xlu0 %4673
    %4675 = vrot.lane.b32.xlu0 %v4645, 96
    %v4676 = vpop.permute.xlu0 %4675
    %4677 = vrot.lane.b32.xlu0 %v4653, 96
    %v4678 = vpop.permute.xlu0 %4677
    %4679 = vrot.lane.b32.xlu0 %v4661, 96
    %v4680 = vpop.permute.xlu0 %4679
    %4681 = vrot.lane.b32.xlu0 %v4669, 96
    %v4682 = vpop.permute.xlu0 %4681
    %4683 = vrot.lane.b32.xlu0 %v4672, 96
    %v4684 = vpop.permute.xlu0 %4683
    %v4691 = vrot.slane %v4533, 1
    %v4692 = vrot.slane %v4520, 1
    %v4693 = vsel %vm349, %v4691, %v4692
    %v4694 = vrot.slane %v4521, 1
    %v4695 = vsel %vm349, %v4692, %v4694
    %v4696 = vrot.slane %v4522, 1
    %v4697 = vsel %vm349, %v4694, %v4696
    %v4698 = vrot.slane %v4523, 1
    %v4699 = vsel %vm349, %v4696, %v4698
    %v4700 = vrot.slane %v4531, 1
    %v4701 = vsel %vm349, %v4698, %v4700
    %v4704 = vrot.slane %v4534, 1
    %v4705 = vrot.slane %v4526, 1
    %v4706 = vsel %vm349, %v4704, %v4705
    %v4707 = vrot.slane %v4527, 1
    %v4708 = vsel %vm349, %v4705, %v4707
    %v4709 = vrot.slane %v4528, 1
    %v4710 = vsel %vm349, %v4707, %v4709
    %v4711 = vrot.slane %v4529, 1
    %v4712 = vsel %vm349, %v4709, %v4711
    %v4713 = vrot.slane %v4532, 1
    %v4714 = vsel %vm349, %v4711, %v4713
    %4715 = vrot.lane.b32.xlu0 %v4706, 32
    %v4716 = vpop.permute.xlu0 %4715
    %4717 = vrot.lane.b32.xlu0 %v4708, 32
    %v4718 = vpop.permute.xlu0 %4717
    %4719 = vrot.lane.b32.xlu0 %v4710, 32
    %v4720 = vpop.permute.xlu0 %4719
    %4721 = vrot.lane.b32.xlu0 %v4712, 32
    %v4722 = vpop.permute.xlu0 %4721
    %4723 = vrot.lane.b32.xlu0 %v4714, 32
    %v4724 = vpop.permute.xlu0 %4723
    %4725 = vrot.lane.b32.xlu0 %v4713, 32
    %v4726 = vpop.permute.xlu0 %4725
    %v4729 = vrot.slane %v4535, 4
    %v4730 = vrot.slane %v4520, 4
    %v4731 = vsel %vm2061, %v4729, %v4730
    %v4732 = vrot.slane %v4521, 4
    %v4733 = vsel %vm2061, %v4730, %v4732
    %v4734 = vrot.slane %v4522, 4
    %v4735 = vsel %vm2061, %v4732, %v4734
    %v4736 = vrot.slane %v4523, 4
    %v4737 = vsel %vm2061, %v4734, %v4736
    %v4738 = vrot.slane %v4531, 4
    %v4739 = vsel %vm2061, %v4736, %v4738
    %v4740 = vrot.slane %v4536, 4
    %v4741 = vsel %vm2061, %v4738, %v4740
    %4742 = vrot.lane.b32.xlu0 %v4731, 64
    %v4743 = vpop.permute.xlu0 %4742
    %4744 = vrot.lane.b32.xlu0 %v4733, 64
    %v4745 = vpop.permute.xlu0 %4744
    %4746 = vrot.lane.b32.xlu0 %v4735, 64
    %v4747 = vpop.permute.xlu0 %4746
    %4748 = vrot.lane.b32.xlu0 %v4737, 64
    %v4749 = vpop.permute.xlu0 %4748
    %4750 = vrot.lane.b32.xlu0 %v4739, 64
    %v4751 = vpop.permute.xlu0 %4750
    %4752 = vrot.lane.b32.xlu0 %v4741, 64
    %v4753 = vpop.permute.xlu0 %4752
    %v4756 = vrot.slane %v4537, 4
    %v4757 = vrot.slane %v4526, 4
    %v4758 = vsel %vm2061, %v4756, %v4757
    %v4759 = vrot.slane %v4527, 4
    %v4760 = vsel %vm2061, %v4757, %v4759
    %v4761 = vrot.slane %v4528, 4
    %v4762 = vsel %vm2061, %v4759, %v4761
    %v4763 = vrot.slane %v4529, 4
    %v4764 = vsel %vm2061, %v4761, %v4763
    %v4765 = vrot.slane %v4532, 4
    %v4766 = vsel %vm2061, %v4763, %v4765
    %v4767 = vrot.slane %v4538, 4
    %v4768 = vsel %vm2061, %v4765, %v4767
    %4769 = vrot.lane.b32.xlu0 %v4758, 96
    %v4770 = vpop.permute.xlu0 %4769
    %4771 = vrot.lane.b32.xlu0 %v4760, 96
    %v4772 = vpop.permute.xlu0 %4771
    %4773 = vrot.lane.b32.xlu0 %v4762, 96
    %v4774 = vpop.permute.xlu0 %4773
    %4775 = vrot.lane.b32.xlu0 %v4764, 96
    %v4776 = vpop.permute.xlu0 %4775
    %4777 = vrot.lane.b32.xlu0 %v4766, 96
    %v4778 = vpop.permute.xlu0 %4777
    %4779 = vrot.lane.b32.xlu0 %v4768, 96
    %v4780 = vpop.permute.xlu0 %4779
    %v4782 = vshrl.u32 %v4535, 16
    %v4784 = vrot.slane %v4782, 4
    %v4785 = vshll.u32 %v4535, 16
    %v4787 = vrot.slane %v4785, 5
    %v4788 = vor.u32 %v4784, %v4787
    %v4789 = vrot.slane %v4579, 4
    %v4790 = vrot.slane %v4575, 5
    %v4791 = vor.u32 %v4789, %v4790
    %v4792 = vsel %vm1833, %v4788, %v4791
    %v4793 = vrot.slane %v4587, 4
    %v4794 = vrot.slane %v4583, 5
    %v4795 = vor.u32 %v4793, %v4794
    %v4796 = vsel %vm1833, %v4791, %v4795
    %v4797 = vrot.slane %v4595, 4
    %v4798 = vrot.slane %v4591, 5
    %v4799 = vor.u32 %v4797, %v4798
    %v4800 = vsel %vm1833, %v4795, %v4799
    %v4801 = vrot.slane %v4603, 4
    %v4802 = vrot.slane %v4599, 5
    %v4803 = vor.u32 %v4801, %v4802
    %v4804 = vsel %vm1833, %v4799, %v4803
    %v4805 = vrot.slane %v4611, 4
    %v4806 = vrot.slane %v4607, 5
    %v4807 = vor.u32 %v4805, %v4806
    %v4808 = vsel %vm1833, %v4803, %v4807
    %v4810 = vshrl.u32 %v4539, 16
    %v4812 = vrot.slane %v4810, 4
    %v4813 = vshll.u32 %v4539, 16
    %v4815 = vrot.slane %v4813, 5
    %v4816 = vor.u32 %v4812, %v4815
    %v4817 = vsel %vm1833, %v4807, %v4816
    %v4819 = vshrl.u32 %v4537, 16
    %v4821 = vrot.slane %v4819, 4
    %v4822 = vshll.u32 %v4537, 16
    %v4824 = vrot.slane %v4822, 5
    %v4825 = vor.u32 %v4821, %v4824
    %v4826 = vrot.slane %v4638, 4
    %v4827 = vrot.slane %v4634, 5
    %v4828 = vor.u32 %v4826, %v4827
    %v4829 = vsel %vm1833, %v4825, %v4828
    %v4830 = vrot.slane %v4646, 4
    %v4831 = vrot.slane %v4642, 5
    %v4832 = vor.u32 %v4830, %v4831
    %v4833 = vsel %vm1833, %v4828, %v4832
    %v4834 = vrot.slane %v4654, 4
    %v4835 = vrot.slane %v4650, 5
    %v4836 = vor.u32 %v4834, %v4835
    %v4837 = vsel %vm1833, %v4832, %v4836
    %v4838 = vrot.slane %v4662, 4
    %v4839 = vrot.slane %v4658, 5
    %v4840 = vor.u32 %v4838, %v4839
    %v4841 = vsel %vm1833, %v4836, %v4840
    %v4842 = vrot.slane %v4670, 4
    %v4843 = vrot.slane %v4666, 5
    %v4844 = vor.u32 %v4842, %v4843
    %v4845 = vsel %vm1833, %v4840, %v4844
    %v4847 = vshrl.u32 %v4540, 16
    %v4849 = vrot.slane %v4847, 4
    %v4850 = vshll.u32 %v4540, 16
    %v4852 = vrot.slane %v4850, 5
    %v4853 = vor.u32 %v4849, %v4852
    %v4854 = vsel %vm1833, %v4844, %v4853
    %4855 = vrot.lane.b32.xlu0 %v4829, 32
    %v4856 = vpop.permute.xlu0 %4855
    %4857 = vrot.lane.b32.xlu0 %v4833, 32
    %v4858 = vpop.permute.xlu0 %4857
    %4859 = vrot.lane.b32.xlu0 %v4837, 32
    %v4860 = vpop.permute.xlu0 %4859
    %4861 = vrot.lane.b32.xlu0 %v4841, 32
    %v4862 = vpop.permute.xlu0 %4861
    %4863 = vrot.lane.b32.xlu0 %v4845, 32
    %v4864 = vpop.permute.xlu0 %4863
    %4865 = vrot.lane.b32.xlu0 %v4854, 32
    %v4866 = vpop.permute.xlu0 %4865
    %v4869 = vrot.slane %v4541, 5
    %v4870 = vrot.slane %v4520, 5
    %v4871 = vsel %vm2182, %v4869, %v4870
    %v4872 = vrot.slane %v4521, 5
    %v4873 = vsel %vm2182, %v4870, %v4872
    %v4874 = vrot.slane %v4522, 5
    %v4875 = vsel %vm2182, %v4872, %v4874
    %v4876 = vrot.slane %v4523, 5
    %v4877 = vsel %vm2182, %v4874, %v4876
    %v4878 = vrot.slane %v4531, 5
    %v4879 = vsel %vm2182, %v4876, %v4878
    %v4880 = vrot.slane %v4539, 5
    %v4881 = vsel %vm2182, %v4878, %v4880
    %4882 = vrot.lane.b32.xlu0 %v4871, 64
    %v4883 = vpop.permute.xlu0 %4882
    %4884 = vrot.lane.b32.xlu0 %v4873, 64
    %v4885 = vpop.permute.xlu0 %4884
    %4886 = vrot.lane.b32.xlu0 %v4875, 64
    %v4887 = vpop.permute.xlu0 %4886
    %4888 = vrot.lane.b32.xlu0 %v4877, 64
    %v4889 = vpop.permute.xlu0 %4888
    %4890 = vrot.lane.b32.xlu0 %v4879, 64
    %v4891 = vpop.permute.xlu0 %4890
    %4892 = vrot.lane.b32.xlu0 %v4881, 64
    %v4893 = vpop.permute.xlu0 %4892
    %v4896 = vrot.slane %v4542, 5
    %v4897 = vrot.slane %v4526, 5
    %v4898 = vsel %vm2182, %v4896, %v4897
    %v4899 = vrot.slane %v4527, 5
    %v4900 = vsel %vm2182, %v4897, %v4899
    %v4901 = vrot.slane %v4528, 5
    %v4902 = vsel %vm2182, %v4899, %v4901
    %v4903 = vrot.slane %v4529, 5
    %v4904 = vsel %vm2182, %v4901, %v4903
    %v4905 = vrot.slane %v4532, 5
    %v4906 = vsel %vm2182, %v4903, %v4905
    %v4907 = vrot.slane %v4540, 5
    %v4908 = vsel %vm2182, %v4905, %v4907
    %4909 = vrot.lane.b32.xlu0 %v4898, 96
    %v4910 = vpop.permute.xlu0 %4909
    %4911 = vrot.lane.b32.xlu0 %v4900, 96
    %v4912 = vpop.permute.xlu0 %4911
    %4913 = vrot.lane.b32.xlu0 %v4902, 96
    %v4914 = vpop.permute.xlu0 %4913
    %4915 = vrot.lane.b32.xlu0 %v4904, 96
    %v4916 = vpop.permute.xlu0 %4915
    %4917 = vrot.lane.b32.xlu0 %v4906, 96
    %v4918 = vpop.permute.xlu0 %4917
    %4919 = vrot.lane.b32.xlu0 %v4908, 96
    %v4920 = vpop.permute.xlu0 %4919
    %4922 = vrot.lane.b32.xlu0 %v4532, 32
    %v4923 = vpop.permute.xlu0 %4922
    %4924 = vrot.lane.b32.xlu0 %v4544, 32
    %v4925 = vpop.permute.xlu0 %4924
    %v4927 = vshll.u32 %v4545, 16
    %v4929 = vrot.slane %v4927, 1
    %v4930 = vsel %vm216, %v4613, %v4929
    %v4931 = vshrl.u32 %v4545, 16
    %v4933 = vor.u32 %v4931, %v4929
    %4934 = vrot.lane.b32.xlu0 %v4930, 64
    %v4935 = vpop.permute.xlu0 %4934
    %4936 = vrot.lane.b32.xlu0 %v4933, 64
    %v4937 = vpop.permute.xlu0 %4936
    %v4939 = vshll.u32 %v4546, 16
    %v4941 = vrot.slane %v4939, 1
    %v4942 = vsel %vm216, %v4672, %v4941
    %v4943 = vshrl.u32 %v4546, 16
    %v4945 = vor.u32 %v4943, %v4941
    %4946 = vrot.lane.b32.xlu0 %v4942, 96
    %v4947 = vpop.permute.xlu0 %4946
    %4948 = vrot.lane.b32.xlu0 %v4945, 96
    %v4949 = vpop.permute.xlu0 %4948
    %v4951 = vsel %vm1819, %v4519, %v4556
    %v4953 = vsel %vm1819, %v4520, %v4558
    %v4955 = vsel %vm1819, %v4521, %v4560
    %v4957 = vsel %vm1819, %v4522, %v4562
    %v4959 = vsel %vm1819, %v4523, %v4564
    %v4962 = vsel %vm1819, %v4524, %v4566
    %v4964 = vsel %vm601, %v4951, %v4615
    %v4966 = vsel %vm601, %v4953, %v4617
    %v4968 = vsel %vm601, %v4955, %v4619
    %v4970 = vsel %vm601, %v4957, %v4621
    %v4972 = vsel %vm601, %v4959, %v4623
    %v4974 = vsel %vm601, %v4962, %v4625
    %v4976 = vsel %vm2356, %v4964, %v4674
    %v4979 = vsel %vm2356, %v4966, %v4676
    %v4982 = vsel %vm2356, %v4968, %v4678
    %v4985 = vsel %vm2356, %v4970, %v4680
    %v4988 = vsel %vm2356, %v4972, %v4682
    %v4991 = vsel %vm2356, %v4974, %v4684
    %v4995 = vsel %vm1819, %v4693, %v4716
    %v4998 = vsel %vm1819, %v4695, %v4718
    %v5001 = vsel %vm1819, %v4697, %v4720
    %v5004 = vsel %vm1819, %v4699, %v4722
    %v5007 = vsel %vm1819, %v4701, %v4724
    %v5010 = vsel %vm1819, %v4700, %v4726
    %v5012 = vsel %vm601, %v4995, %v4743
    %v5014 = vsel %vm601, %v4998, %v4745
    %v5016 = vsel %vm601, %v5001, %v4747
    %v5018 = vsel %vm601, %v5004, %v4749
    %v5020 = vsel %vm601, %v5007, %v4751
    %v5022 = vsel %vm601, %v5010, %v4753
    %v5024 = vsel %vm2356, %v5012, %v4770
    %v5027 = vsel %vm2356, %v5014, %v4772
    %v5030 = vsel %vm2356, %v5016, %v4774
    %v5033 = vsel %vm2356, %v5018, %v4776
    %v5036 = vsel %vm2356, %v5020, %v4778
    %v5039 = vsel %vm2356, %v5022, %v4780
    %v5043 = vsel %vm1819, %v4792, %v4856
    %v5046 = vsel %vm1819, %v4796, %v4858
    %v5049 = vsel %vm1819, %v4800, %v4860
    %v5052 = vsel %vm1819, %v4804, %v4862
    %v5055 = vsel %vm1819, %v4808, %v4864
    %v5058 = vsel %vm1819, %v4817, %v4866
    %v5060 = vsel %vm601, %v5043, %v4883
    %v5062 = vsel %vm601, %v5046, %v4885
    %v5064 = vsel %vm601, %v5049, %v4887
    %v5066 = vsel %vm601, %v5052, %v4889
    %v5068 = vsel %vm601, %v5055, %v4891
    %v5070 = vsel %vm601, %v5058, %v4893
    %v5072 = vsel %vm2356, %v5060, %v4910
    %v5075 = vsel %vm2356, %v5062, %v4912
    %v5078 = vsel %vm2356, %v5064, %v4914
    %v5081 = vsel %vm2356, %v5066, %v4916
    %v5084 = vsel %vm2356, %v5068, %v4918
    %v5087 = vsel %vm2356, %v5070, %v4920
    %v5090 = vsel %vm1819, %v4531, %v4923
    %v5093 = vsel %vm1819, %v4543, %v4925
    %v5095 = vsel %vm601, %v5090, %v4935
    %v5097 = vsel %vm601, %v5093, %v4937
    %v5099 = vsel %vm2356, %v5095, %v4947
    %v5102 = vsel %vm2356, %v5097, %v4949
    %5106 = vrot.lane.b32.xlu0 %v4548, 32
    %v5107 = vpop.permute.xlu0 %5106
    %5108 = vrot.lane.b32.xlu0 %v4546, 32
    %v5109 = vpop.permute.xlu0 %5108
    %v5112 = vsel %vm1819, %v4547, %v5107
    %v5114 = vsel %vm1819, %v4545, %v5109
    %v5121 = vrot.slane %v5112, 1
    %v5122 = vrot.slane %v4955, 1
    %v5123 = vsel %vm349, %v5121, %v5122
    %v5124 = vrot.slane %v4957, 1
    %v5125 = vsel %vm349, %v5122, %v5124
    %v5126 = vrot.slane %v4959, 1
    %v5127 = vsel %vm349, %v5124, %v5126
    %v5128 = vrot.slane %v5090, 1
    %v5129 = vsel %vm349, %v5126, %v5128
    %v5130 = vrot.slane %v5114, 1
    %v5131 = vsel %vm349, %v5128, %v5130
    %v5132 = vld [vmem:[%s7] sm:$0xf]
    %v5133 = vld [vmem:[%s7 + $0x4] sm:$0xf]
    %v5134 = vld [vmem:[%s7 + $0x8] sm:$0xf]
    %v5135 = vld [vmem:[%s7 + $0xc] sm:$0xf]
    %v5136 = vld [vmem:[%s7 + $0x10] sm:$0xf]
    %v5137 = vld [vmem:[%s7 + $0x14] sm:$0xf]
    %v5138 = vld [vmem:[%s7 + $0x18] sm:$0xf]
    %v5139 = vld [vmem:[%s7 + $0x1c] sm:$0xf]
    %v5140 = vld [vmem:[%s7 + $0x20] sm:$0xf]
    %v5141 = vld [vmem:[%s7 + $0x24] sm:$0xf]
    %v5142 = vld [vmem:[%s7 + $0x28] sm:$0xf]
    %v5143 = vld [vmem:[%s7 + $0x2c] sm:$0xf]
    %v5144 = vld [vmem:[%s7 + $0x30] sm:$0xf]
    %v5145 = vld [vmem:[%s7 + $0x34] sm:$0xf]
    %v5146 = vld [vmem:[%s7 + $0x38] sm:$0xf]
    %v5147 = vld [vmem:[%s7 + $0x3c] sm:$0xf]
    %v5148 = vld [vmem:[%s7 + $0x40] sm:$0xf]
    %v5149 = vld [vmem:[%s7 + $0x44] sm:$0xf]
    %v5150 = vld [vmem:[%s7 + $0x48] sm:$0xf]
    %v5151 = vld [vmem:[%s7 + $0x4c] sm:$0xf]
    %v5152 = vld [vmem:[%s7 + $0x50] sm:$0xf]
    %v5153 = vld [vmem:[%s7 + $0x54] sm:$0xf]
    %v5154 = vld [vmem:[%s7 + $0x58] sm:$0xf]
    %v5155 = vld [vmem:[%s7 + $0x5c] sm:$0xf]
    %v5156 = vld [vmem:[%s7 + $0x60] sm:$0xf]
    %v5157 = vld [vmem:[%s7 + $0x64] sm:$0xf]
    %v5158 = vld [vmem:[%s7 + $0x68] sm:$0xf]
    %v5159 = vld [vmem:[%s7 + $0x6c] sm:$0xf]
    %v5160 = vld [vmem:[%s7 + $0x70] sm:$0xf]
    %v5161 = vld [vmem:[%s7 + $0x74] sm:$0xf]
    %v5162 = vld [vmem:[%s7 + $0x78] sm:$0xf]
    %v5163 = vld [vmem:[%s7 + $0x7c] sm:$0xf]
    %v5164 = vld [vmem:[%s7 + $0x80] sm:$0xf]
    %v5165 = vld [vmem:[%s7 + $0x84] sm:$0xf]
    %v5166 = vld [vmem:[%s7 + $0x88] sm:$0xf]
    %v5167 = vld [vmem:[%s7 + $0x8c] sm:$0xf]
    %v5168 = vld [vmem:[%s7 + $0x90] sm:$0xf]
    %v5169 = vld [vmem:[%s7 + $0x94] sm:$0xf]
    %v5170 = vld [vmem:[%s7 + $0x98] sm:$0xf]
    %v5171 = vld [vmem:[%s7 + $0x9c] sm:$0xf]
    %v5172 = vld [vmem:[%s7 + $0xa0] sm:$0xf]
    %v5173 = vld [vmem:[%s7 + $0xa4] sm:$0xf]
    %v5174 = vld [vmem:[%s7 + $0xa8] sm:$0xf]
    %v5175 = vld [vmem:[%s7 + $0xac] sm:$0xf]
    %v5176 = vld [vmem:[%s7 + $0xb0] sm:$0xf]
    %v5177 = vld [vmem:[%s7 + $0xb4] sm:$0xf]
    %v5178 = vld [vmem:[%s7 + $0xb8] sm:$0xf]
    %v5179 = vld [vmem:[%s7 + $0xbc] sm:$0xf]
    %v5180 = vld [vmem:[%s7 + $0xc0] sm:$0xf]
    %v5181 = vld [vmem:[%s7 + $0xc4] sm:$0xf]
    %v5182 = vld [vmem:[%s7 + $0xc8] sm:$0xf]
    %v5183 = vld [vmem:[%s7 + $0xcc] sm:$0xf]
    %v5184 = vld [vmem:[%s7 + $0xd0] sm:$0xf]
    %v5185 = vld [vmem:[%s7 + $0xd4] sm:$0xf]
    %v5186 = vld [vmem:[%s7 + $0xd8] sm:$0xf]
    %v5187 = vld [vmem:[%s7 + $0xdc] sm:$0xf]
    %v5188 = vld [vmem:[%s7 + $0xe0] sm:$0xf]
    %v5189 = vld [vmem:[%s7 + $0xe4] sm:$0xf]
    %v5190 = vld [vmem:[%s7 + $0xe8] sm:$0xf]
    %v5191 = vld [vmem:[%s7 + $0xec] sm:$0xf]
    %v5192 = vld [vmem:[%s7 + $0xf0] sm:$0xf]
    %v5193 = vld [vmem:[%s7 + $0xf4] sm:$0xf]
    %v5194 = vld [vmem:[%s7 + $0xf8] sm:$0xf]
    %v5195 = vld [vmem:[%s7 + $0xfc] sm:$0xf]
    %v5196 = vld [vmem:[%s7 + $0x100] sm:$0xf]
    %v5197 = vld [vmem:[%s7 + $0x104] sm:$0xf]
    %v5198 = vld [vmem:[%s7 + $0x108] sm:$0xf]
    %v5199 = vld [vmem:[%s7 + $0x10c] sm:$0xf]
    %v5200 = vld [vmem:[%s7 + $0x110] sm:$0xf]
    %v5201 = vld [vmem:[%s7 + $0x114] sm:$0xf]
    %v5202 = vld [vmem:[%s7 + $0x118] sm:$0xf]
    %v5203 = vld [vmem:[%s7 + $0x11c] sm:$0xf]
    %v5204 = vld [vmem:[%s8] sm:$0x1]
    %v5206 = vlaneseq
    %v5207 = vshrl.u32 %v5206, 7
    %v5208 = vsub.s32 0, %v5207
    %v5209 = vrot.slane %v5204, %v5208
    %v5283 = vunpack.c.l.b16 %v5132
    %v5284 = vunpack.c.l.b16 %v5133
    %v5285 = vunpack.c.l.b16 %v5134
    %v5286 = vunpack.c.l.b16 %v5135
    %v5287 = vunpack.c.l.b16 %v5136
    %v5288 = vunpack.c.l.b16 %v5137
    %v5289 = vunpack.c.l.b16 %v5138
    %v5290 = vunpack.c.l.b16 %v5139
    %v5291 = vunpack.c.l.b16 %v5140
    %v5292 = vunpack.c.l.b16 %v5141
    %v5293 = vunpack.c.l.b16 %v5142
    %v5294 = vunpack.c.l.b16 %v5143
    %v5295 = vunpack.c.l.b16 %v5144
    %v5296 = vunpack.c.l.b16 %v5145
    %v5297 = vunpack.c.l.b16 %v5146
    %v5298 = vunpack.c.l.b16 %v5147
    %v5299 = vunpack.c.l.b16 %v5148
    %v5300 = vunpack.c.l.b16 %v5149
    %v5301 = vunpack.c.l.b16 %v5150
    %v5302 = vunpack.c.l.b16 %v5151
    %v5303 = vunpack.c.l.b16 %v5152
    %v5304 = vunpack.c.l.b16 %v5153
    %v5305 = vunpack.c.l.b16 %v5154
    %v5306 = vunpack.c.l.b16 %v5155
    %v5307 = vunpack.c.l.b16 %v5156
    %v5308 = vunpack.c.l.b16 %v5157
    %v5309 = vunpack.c.l.b16 %v5158
    %v5310 = vunpack.c.l.b16 %v5159
    %v5311 = vunpack.c.l.b16 %v5160
    %v5312 = vunpack.c.l.b16 %v5161
    %v5313 = vunpack.c.l.b16 %v5162
    %v5314 = vunpack.c.l.b16 %v5163
    %v5315 = vunpack.c.l.b16 %v5164
    %v5316 = vunpack.c.l.b16 %v5165
    %v5317 = vunpack.c.l.b16 %v5166
    %v5318 = vunpack.c.l.b16 %v5167
    %v5319 = vunpack.c.l.b16 %v5168
    %v5320 = vunpack.c.l.b16 %v5169
    %v5321 = vunpack.c.l.b16 %v5170
    %v5322 = vunpack.c.l.b16 %v5171
    %v5323 = vunpack.c.l.b16 %v5172
    %v5324 = vunpack.c.l.b16 %v5173
    %v5325 = vunpack.c.l.b16 %v5174
    %v5326 = vunpack.c.l.b16 %v5175
    %v5327 = vunpack.c.l.b16 %v5176
    %v5328 = vunpack.c.l.b16 %v5177
    %v5329 = vunpack.c.l.b16 %v5178
    %v5330 = vunpack.c.l.b16 %v5179
    %v5331 = vunpack.c.l.b16 %v5180
    %v5332 = vunpack.c.l.b16 %v5181
    %v5333 = vunpack.c.l.b16 %v5182
    %v5334 = vunpack.c.l.b16 %v5183
    %v5335 = vunpack.c.l.b16 %v5184
    %v5336 = vunpack.c.l.b16 %v5185
    %v5337 = vunpack.c.l.b16 %v5186
    %v5338 = vunpack.c.l.b16 %v5187
    %v5339 = vunpack.c.l.b16 %v5188
    %v5340 = vunpack.c.l.b16 %v5189
    %v5341 = vunpack.c.l.b16 %v5190
    %v5342 = vunpack.c.l.b16 %v5191
    %v5343 = vunpack.c.l.b16 %v5192
    %v5344 = vunpack.c.l.b16 %v5193
    %v5345 = vunpack.c.l.b16 %v5194
    %v5346 = vunpack.c.l.b16 %v5195
    %v5347 = vunpack.c.l.b16 %v5196
    %v5348 = vunpack.c.l.b16 %v5197
    %v5349 = vunpack.c.l.b16 %v5198
    %v5350 = vunpack.c.l.b16 %v5199
    %v5351 = vunpack.c.l.b16 %v5200
    %v5352 = vunpack.c.l.b16 %v5201
    %v5353 = vunpack.c.l.b16 %v5202
    %v5354 = vunpack.c.l.b16 %v5203
    %v5355 = vpack.c.b16 %v5284, %v5283
    %v5356 = vpack.c.b16 %v5286, %v5285
    %v5357 = vpack.c.b16 %v5288, %v5287
    %v5358 = vpack.c.b16 %v5290, %v5289
    %v5359 = vpack.c.b16 %v5292, %v5291
    %v5360 = vpack.c.b16 %v5294, %v5293
    %v5361 = vpack.c.b16 %v5296, %v5295
    %v5362 = vpack.c.b16 %v5298, %v5297
    %v5363 = vpack.c.b16 %v5300, %v5299
    %v5364 = vpack.c.b16 %v5302, %v5301
    %v5365 = vpack.c.b16 %v5304, %v5303
    %v5366 = vpack.c.b16 %v5306, %v5305
    %v5367 = vpack.c.b16 %v5308, %v5307
    %v5368 = vpack.c.b16 %v5310, %v5309
    %v5369 = vpack.c.b16 %v5312, %v5311
    %v5370 = vpack.c.b16 %v5314, %v5313
    %v5371 = vpack.c.b16 %v5316, %v5315
    %v5372 = vpack.c.b16 %v5318, %v5317
    %v5373 = vpack.c.b16 %v5320, %v5319
    %v5374 = vpack.c.b16 %v5322, %v5321
    %v5375 = vpack.c.b16 %v5324, %v5323
    %v5376 = vpack.c.b16 %v5326, %v5325
    %v5377 = vpack.c.b16 %v5328, %v5327
    %v5378 = vpack.c.b16 %v5330, %v5329
    %v5379 = vpack.c.b16 %v5332, %v5331
    %v5380 = vpack.c.b16 %v5334, %v5333
    %v5381 = vpack.c.b16 %v5336, %v5335
    %v5382 = vpack.c.b16 %v5338, %v5337
    %v5383 = vpack.c.b16 %v5340, %v5339
    %v5384 = vpack.c.b16 %v5342, %v5341
    %v5385 = vpack.c.b16 %v5344, %v5343
    %v5386 = vpack.c.b16 %v5346, %v5345
    %v5387 = vpack.c.b16 %v5348, %v5347
    %v5388 = vpack.c.b16 %v5350, %v5349
    %v5389 = vpack.c.b16 %v5352, %v5351
    %v5390 = vpack.c.b16 %v5354, %v5353
    %v5428 = vsel %vm601, %v5123, 0
    %v5431 = vsel %vm601, %v5125, 0
    %v5434 = vsel %vm601, %v5127, 0
    %v5437 = vsel %vm601, %v5129, 0
    %v5440 = vsel %vm601, %v5131, 0
    %v5443 = vsel %vm601, %v5130, 0
    %5445 = vmatprep.subr.bf16.mxu0 0
    %5446 = vmatpush1.bf16.msra.mxu0 %v5355
    %5447 = vmatprep.subr.bf16.mxu0 0
    %5448 = vmatpush1.bf16.msra.mxu0 %v5356
    %5449 = vmatprep.subr.bf16.mxu0 0
    %5450 = vmatpush1.bf16.msra.mxu0 %v5357
    %5451 = vmatprep.subr.bf16.mxu0 0
    %5452 = vmatpush1.bf16.msra.mxu0 %v5358
    %5453 = vmatprep.subr.bf16.mxu0 0
    %5454 = vmatpush1.bf16.msra.mxu0 %v5359
    %5455 = vmatprep.subr.bf16.mxu0 0
    %5456 = vmatpush1.bf16.msra.mxu0 %v5360
    %5457 = vmatprep.subr.bf16.mxu0 0
    %5458 = vmatpush1.bf16.msra.mxu0 %v5361
    %5459 = vmatprep.subr.bf16.mxu0 0
    %5460 = vmatpush1.bf16.msra.mxu0 %v5362
    %5461 = vmatprep.subr.bf16.mxu0 0
    %5462 = vmatpush1.bf16.msra.mxu0 %v5363
    %5463 = vmatprep.subr.bf16.mxu0 0
    %5464 = vmatpush1.bf16.msra.mxu0 %v5364
    %5465 = vmatprep.subr.bf16.mxu0 0
    %5466 = vmatpush1.bf16.msra.mxu0 %v5365
    %5467 = vmatprep.subr.bf16.mxu0 0
    %5468 = vmatpush1.bf16.msra.mxu0 %v5366
    %5469 = vmatprep.subr.bf16.mxu0 0
    %5470 = vmatpush1.bf16.msra.mxu0 %v5367
    %5471 = vmatprep.subr.bf16.mxu0 0
    %5472 = vmatpush1.bf16.msra.mxu0 %v5368
    %5473 = vmatprep.subr.bf16.mxu0 0
    %5474 = vmatpush1.bf16.msra.mxu0 %v5369
    %5475 = vmatprep.subr.bf16.mxu0 0
    %5476 = vmatpush1.bf16.msra.mxu0 %v5370
    %5477 = vmatprep.mubr.bf16.mxu0 %v5024
    %5478 = vmatmul.mubr.bf16.gmra.mrb[0].mxu0 %v4976
    %v5479 = vpop.f32.mrb[0].mxu0
    %v5480 = vadd.f32 %v5209, %v5479
    %v5481 = vpop.f32.mrb[0].mxu0
    %v5482 = vpop.f32.mrb[0].mxu0
    %v5483 = vadd.f32 %v5209, %v5482
    %v5484 = vpop.f32.mrb[0].mxu0
    %5485 = vmatprep.mubr.bf16.mxu0 %v5027
    %5486 = vmatmul.mubr.bf16.gmra.mrb[0].mxu0 %v4979
    %v5487 = vpop.f32.mrb[0].mxu0
    %v5488 = vadd.f32 %v5209, %v5487
    %v5489 = vpop.f32.mrb[0].mxu0
    %v5490 = vpop.f32.mrb[0].mxu0
    %v5491 = vadd.f32 %v5209, %v5490
    %v5492 = vpop.f32.mrb[0].mxu0
    %5493 = vmatprep.mubr.bf16.mxu0 %v5030
    %5494 = vmatmul.mubr.bf16.gmra.mrb[0].mxu0 %v4982
    %v5495 = vpop.f32.mrb[0].mxu0
    %v5496 = vadd.f32 %v5209, %v5495
    %v5497 = vpop.f32.mrb[0].mxu0
    %v5498 = vpop.f32.mrb[0].mxu0
    %v5499 = vadd.f32 %v5209, %v5498
    %v5500 = vpop.f32.mrb[0].mxu0
    %5501 = vmatprep.mubr.bf16.mxu0 %v5033
    %5502 = vmatmul.mubr.bf16.gmra.mrb[0].mxu0 %v4985
    %v5503 = vpop.f32.mrb[0].mxu0
    %v5504 = vadd.f32 %v5209, %v5503
    %v5505 = vpop.f32.mrb[0].mxu0
    %v5506 = vpop.f32.mrb[0].mxu0
    %v5507 = vadd.f32 %v5209, %v5506
    %v5508 = vpop.f32.mrb[0].mxu0
    %5509 = vmatprep.mubr.bf16.mxu0 %v5036
    %5510 = vmatmul.mubr.bf16.gmra.mrb[0].mxu0 %v4988
    %v5511 = vpop.f32.mrb[0].mxu0
    %v5512 = vadd.f32 %v5209, %v5511
    %v5513 = vpop.f32.mrb[0].mxu0
    %v5514 = vpop.f32.mrb[0].mxu0
    %v5515 = vadd.f32 %v5209, %v5514
    %v5516 = vpop.f32.mrb[0].mxu0
    %5517 = vmatprep.mubr.bf16.mxu0 %v5039
    %5518 = vmatmul.mubr.bf16.gmra.mrb[0].mxu0 %v4991
    %v5519 = vpop.f32.mrb[0].mxu0
    %v5520 = vadd.f32 %v5209, %v5519
    %v5521 = vpop.f32.mrb[0].mxu0
    %v5522 = vpop.f32.mrb[0].mxu0
    %v5523 = vadd.f32 %v5209, %v5522
    %v5524 = vpop.f32.mrb[0].mxu0
    %5525 = vdwg.mxu0
    %5526 = vmatprep.subr.bf16.mxu0 0
    %5527 = vmatpush1.bf16.msra.mxu0 %v5371
    %5528 = vmatprep.subr.bf16.mxu0 0
    %5529 = vmatpush1.bf16.msra.mxu0 %v5372
    %5530 = vmatprep.subr.bf16.mxu0 0
    %5531 = vmatpush1.bf16.msra.mxu0 %v5373
    %5532 = vmatprep.subr.bf16.mxu0 0
    %5533 = vmatpush1.bf16.msra.mxu0 %v5374
    %5534 = vmatprep.subr.bf16.mxu0 0
    %5535 = vmatpush1.bf16.msra.mxu0 %v5375
    %5536 = vmatprep.subr.bf16.mxu0 0
    %5537 = vmatpush1.bf16.msra.mxu0 %v5376
    %5538 = vmatprep.subr.bf16.mxu0 0
    %5539 = vmatpush1.bf16.msra.mxu0 %v5377
    %5540 = vmatprep.subr.bf16.mxu0 0
    %5541 = vmatpush1.bf16.msra.mxu0 %v5378
    %5542 = vmatprep.subr.bf16.mxu0 0
    %5543 = vmatpush1.bf16.msra.mxu0 %v5379
    %5544 = vmatprep.subr.bf16.mxu0 0
    %5545 = vmatpush1.bf16.msra.mxu0 %v5380
    %5546 = vmatprep.subr.bf16.mxu0 0
    %5547 = vmatpush1.bf16.msra.mxu0 %v5381
    %5548 = vmatprep.subr.bf16.mxu0 0
    %5549 = vmatpush1.bf16.msra.mxu0 %v5382
    %5550 = vmatprep.subr.bf16.mxu0 0
    %5551 = vmatpush1.bf16.msra.mxu0 %v5383
    %5552 = vmatprep.subr.bf16.mxu0 0
    %5553 = vmatpush1.bf16.msra.mxu0 %v5384
    %5554 = vmatprep.subr.bf16.mxu0 0
    %5555 = vmatpush1.bf16.msra.mxu0 %v5385
    %5556 = vmatprep.subr.bf16.mxu0 0
    %5557 = vmatpush1.bf16.msra.mxu0 %v5386
    %5558 = vmatprep.mubr.bf16.mxu0 %v4979
    %5559 = vmatmul.mubr.bf16.gmra.mrb[0].mxu0 %v5072
    %v5560 = vpop.f32.mrb[0].mxu0
    %v5561 = vadd.f32 %v5480, %v5560
    %v5562 = vpop.f32.mrb[0].mxu0
    %v5563 = vpop.f32.mrb[0].mxu0
    %v5564 = vadd.f32 %v5483, %v5563
    %v5565 = vpop.f32.mrb[0].mxu0
    %5566 = vmatprep.mubr.bf16.mxu0 %v4982
    %5567 = vmatmul.mubr.bf16.gmra.mrb[0].mxu0 %v5075
    %v5568 = vpop.f32.mrb[0].mxu0
    %v5569 = vadd.f32 %v5488, %v5568
    %v5570 = vpop.f32.mrb[0].mxu0
    %v5571 = vpop.f32.mrb[0].mxu0
    %v5572 = vadd.f32 %v5491, %v5571
    %v5573 = vpop.f32.mrb[0].mxu0
    %5574 = vmatprep.mubr.bf16.mxu0 %v4985
    %5575 = vmatmul.mubr.bf16.gmra.mrb[0].mxu0 %v5078
    %v5576 = vpop.f32.mrb[0].mxu0
    %v5577 = vadd.f32 %v5496, %v5576
    %v5578 = vpop.f32.mrb[0].mxu0
    %v5579 = vpop.f32.mrb[0].mxu0
    %v5580 = vadd.f32 %v5499, %v5579
    %v5581 = vpop.f32.mrb[0].mxu0
    %5582 = vmatprep.mubr.bf16.mxu0 %v4988
    %5583 = vmatmul.mubr.bf16.gmra.mrb[0].mxu0 %v5081
    %v5584 = vpop.f32.mrb[0].mxu0
    %v5585 = vadd.f32 %v5504, %v5584
    %v5586 = vpop.f32.mrb[0].mxu0
    %v5587 = vpop.f32.mrb[0].mxu0
    %v5588 = vadd.f32 %v5507, %v5587
    %v5589 = vpop.f32.mrb[0].mxu0
    %5590 = vmatprep.mubr.bf16.mxu0 %v5099
    %5591 = vmatmul.mubr.bf16.gmra.mrb[0].mxu0 %v5084
    %v5592 = vpop.f32.mrb[0].mxu0
    %v5593 = vadd.f32 %v5512, %v5592
    %v5594 = vpop.f32.mrb[0].mxu0
    %v5595 = vpop.f32.mrb[0].mxu0
    %v5596 = vadd.f32 %v5515, %v5595
    %v5597 = vpop.f32.mrb[0].mxu0
    %5598 = vmatprep.mubr.bf16.mxu0 %v5102
    %5599 = vmatmul.mubr.bf16.gmra.mrb[0].mxu0 %v5087
    %v5600 = vpop.f32.mrb[0].mxu0
    %v5601 = vadd.f32 %v5520, %v5600
    %v5602 = vpop.f32.mrb[0].mxu0
    %v5603 = vpop.f32.mrb[0].mxu0
    %v5604 = vadd.f32 %v5523, %v5603
    %v5605 = vpop.f32.mrb[0].mxu0
    %5606 = vdwg.mxu0
    %5607 = vmatprep.subr.bf16.mxu0 0
    %5608 = vmatpush1.bf16.msra.mxu0 %v5387
    %5609 = vmatprep.subr.bf16.mxu0 0
    %5610 = vmatpush1.bf16.msra.mxu0 %v5388
    %5611 = vmatprep.subr.bf16.mxu0 0
    %5612 = vmatpush1.bf16.msra.mxu0 %v5389
    %5613 = vmatprep.subr.bf16.mxu0 0
    %5614 = vmatpush1.bf16.msra.mxu0 %v5390
    %5615 = vmatprep.subr.bf16.mxu0 0
    %5616 = vmatpush1.bf16.msra.mxu0 0
    %5617 = vmatprep.subr.bf16.mxu0 0
    %5618 = vmatpush1.bf16.msra.mxu0 0
    %5619 = vmatprep.subr.bf16.mxu0 0
    %5620 = vmatpush1.bf16.msra.mxu0 0
    %5621 = vmatprep.subr.bf16.mxu0 0
    %5622 = vmatpush1.bf16.msra.mxu0 0
    %5623 = vmatprep.subr.bf16.mxu0 0
    %5624 = vmatpush1.bf16.msra.mxu0 0
    %5625 = vmatprep.subr.bf16.mxu0 0
    %5626 = vmatpush1.bf16.msra.mxu0 0
    %5627 = vmatprep.subr.bf16.mxu0 0
    %5628 = vmatpush1.bf16.msra.mxu0 0
    %5629 = vmatprep.subr.bf16.mxu0 0
    %5630 = vmatpush1.bf16.msra.mxu0 0
    %5631 = vmatprep.subr.bf16.mxu0 0
    %5632 = vmatpush1.bf16.msra.mxu0 0
    %5633 = vmatprep.subr.bf16.mxu0 0
    %5634 = vmatpush1.bf16.msra.mxu0 0
    %5635 = vmatprep.subr.bf16.mxu0 0
    %5636 = vmatpush1.bf16.msra.mxu0 0
    %5637 = vmatprep.subr.bf16.mxu0 0
    %5638 = vmatpush1.bf16.msra.mxu0 0
    %5639 = vmatprep.mubr.bf16.mxu0 0
    %5640 = vmatmul.mubr.bf16.gmra.mrb[0].mxu0 %v5428
    %v5641 = vpop.f32.mrb[0].mxu0
    %v5642 = vadd.f32 %v5561, %v5641
    %v5643 = vpop.f32.mrb[0].mxu0
    %v5644 = vpop.f32.mrb[0].mxu0
    %v5645 = vadd.f32 %v5564, %v5644
    %v5646 = vpop.f32.mrb[0].mxu0
    %5647 = vmatprep.mubr.bf16.mxu0 0
    %5648 = vmatmul.mubr.bf16.gmra.mrb[0].mxu0 %v5431
    %v5649 = vpop.f32.mrb[0].mxu0
    %v5650 = vadd.f32 %v5569, %v5649
    %v5651 = vpop.f32.mrb[0].mxu0
    %v5652 = vpop.f32.mrb[0].mxu0
    %v5653 = vadd.f32 %v5572, %v5652
    %v5654 = vpop.f32.mrb[0].mxu0
    %5655 = vmatprep.mubr.bf16.mxu0 0
    %5656 = vmatmul.mubr.bf16.gmra.mrb[0].mxu0 %v5434
    %v5657 = vpop.f32.mrb[0].mxu0
    %v5658 = vadd.f32 %v5577, %v5657
    %v5659 = vpop.f32.mrb[0].mxu0
    %v5660 = vpop.f32.mrb[0].mxu0
    %v5661 = vadd.f32 %v5580, %v5660
    %v5662 = vpop.f32.mrb[0].mxu0
    %5663 = vmatprep.mubr.bf16.mxu0 0
    %5664 = vmatmul.mubr.bf16.gmra.mrb[0].mxu0 %v5437
    %v5665 = vpop.f32.mrb[0].mxu0
    %v5666 = vadd.f32 %v5585, %v5665
    %v5667 = vpop.f32.mrb[0].mxu0
    %v5668 = vpop.f32.mrb[0].mxu0
    %v5669 = vadd.f32 %v5588, %v5668
    %v5670 = vpop.f32.mrb[0].mxu0
    %5671 = vmatprep.mubr.bf16.mxu0 0
    %5672 = vmatmul.mubr.bf16.gmra.mrb[0].mxu0 %v5440
    %v5673 = vpop.f32.mrb[0].mxu0
    %v5674 = vadd.f32 %v5593, %v5673
    %v5675 = vpop.f32.mrb[0].mxu0
    %v5676 = vpop.f32.mrb[0].mxu0
    %v5677 = vadd.f32 %v5596, %v5676
    %v5678 = vpop.f32.mrb[0].mxu0
    %5679 = vmatprep.mubr.bf16.mxu0 0
    %5680 = vmatmul.mubr.bf16.gmra.mrb[0].mxu0 %v5443
    %v5681 = vpop.f32.mrb[0].mxu0
    %v5682 = vadd.f32 %v5601, %v5681
    %v5683 = vpop.f32.mrb[0].mxu0
    %v5684 = vpop.f32.mrb[0].mxu0
    %v5685 = vadd.f32 %v5604, %v5684
    %v5686 = vpop.f32.mrb[0].mxu0
    %5687 = vdwg.mxu0
    %v5688 = vmax.f32 %v5642, 0.0
    %v5689 = vmax.f32 %v5645, 0.0
    %v5690 = vmax.f32 %v5650, 0.0
    %v5691 = vmax.f32 %v5653, 0.0
    %v5692 = vmax.f32 %v5658, 0.0
    %v5693 = vmax.f32 %v5661, 0.0
    %v5694 = vmax.f32 %v5666, 0.0
    %v5695 = vmax.f32 %v5669, 0.0
    %v5696 = vmax.f32 %v5674, 0.0
    %v5697 = vmax.f32 %v5677, 0.0
    %v5698 = vmax.f32 %v5682, 0.0
    %v5699 = vmax.f32 %v5685, 0.0
    %5701 = vset.pattern.permute.xlu0 0
    %5702 = vperm.xlu0 %5701, %v90
    %v5703 = vpop.permute.xlu0 %5702
    %5706 = vset.pattern.permute.xlu0 0
    %5707 = vperm.xlu0 %5706, %v91
    %v5708 = vpop.permute.xlu0 %5707
    %5711 = vset.pattern.permute.xlu0 0
    %5712 = vperm.xlu0 %5711, %v92
    %v5713 = vpop.permute.xlu0 %5712
    %5716 = vset.pattern.permute.xlu0 0
    %5717 = vperm.xlu0 %5716, %v93
    %v5718 = vpop.permute.xlu0 %5717
    %5721 = vset.pattern.permute.xlu0 0
    %5722 = vperm.xlu0 %5721, %v94
    %v5723 = vpop.permute.xlu0 %5722
    %5726 = vset.pattern.permute.xlu0 0
    %5727 = vperm.xlu0 %5726, %v95
    %v5728 = vpop.permute.xlu0 %5727
    %5731 = vset.pattern.permute.xlu0 0
    %5732 = vperm.xlu0 %5731, %v96
    %v5733 = vpop.permute.xlu0 %5732
    %5736 = vset.pattern.permute.xlu0 0
    %5737 = vperm.xlu0 %5736, %v97
    %v5738 = vpop.permute.xlu0 %5737
    %5741 = vset.pattern.permute.xlu0 0
    %5742 = vperm.xlu0 %5741, %v98
    %v5743 = vpop.permute.xlu0 %5742
    %5746 = vset.pattern.permute.xlu0 0
    %5747 = vperm.xlu0 %5746, %v99
    %v5748 = vpop.permute.xlu0 %5747
    %5751 = vset.pattern.permute.xlu0 0
    %5752 = vperm.xlu0 %5751, %v100
    %v5753 = vpop.permute.xlu0 %5752
    %5756 = vset.pattern.permute.xlu0 0
    %5757 = vperm.xlu0 %5756, %v101
    %v5758 = vpop.permute.xlu0 %5757
    %v5760 = vmul.f32 %v5688, %v5703
    %v5761 = vmul.f32 %v5689, %v5708
    %v5762 = vmul.f32 %v5690, %v5713
    %v5763 = vmul.f32 %v5691, %v5718
    %v5764 = vmul.f32 %v5692, %v5723
    %v5765 = vmul.f32 %v5693, %v5728
    %v5766 = vmul.f32 %v5694, %v5733
    %v5767 = vmul.f32 %v5695, %v5738
    %v5768 = vmul.f32 %v5696, %v5743
    %v5769 = vmul.f32 %v5697, %v5748
    %v5770 = vmul.f32 %v5698, %v5753
    %v5771 = vmul.f32 %v5699, %v5758
    %v5772 = vpack.c.bf16 %v5761, %v5760
    %v5773 = vpack.c.bf16 %v5763, %v5762
    %v5774 = vpack.c.bf16 %v5765, %v5764
    %v5775 = vpack.c.bf16 %v5767, %v5766
    %v5776 = vpack.c.bf16 %v5769, %v5768
    %v5777 = vpack.c.bf16 %v5771, %v5770
    %v5779 = vshrl.u32 %v5772, 16
    %v5781 = vrot.slane %v5779, 3
    %v5782 = vshll.u32 %v5772, 16
    %v5784 = vrot.slane %v5782, 4
    %v5785 = vor.u32 %v5781, %v5784
    %v5787 = vshrl.u32 %v5773, 16
    %v5789 = vrot.slane %v5787, 3
    %v5790 = vshll.u32 %v5773, 16
    %v5792 = vrot.slane %v5790, 4
    %v5793 = vor.u32 %v5789, %v5792
    %v5794 = vsel %vm103, %v5785, %v5793
    %v5796 = vshrl.u32 %v5774, 16
    %v5798 = vrot.slane %v5796, 3
    %v5799 = vshll.u32 %v5774, 16
    %v5801 = vrot.slane %v5799, 4
    %v5802 = vor.u32 %v5798, %v5801
    %v5803 = vsel %vm103, %v5793, %v5802
    %v5805 = vshrl.u32 %v5775, 16
    %v5807 = vrot.slane %v5805, 3
    %v5808 = vshll.u32 %v5775, 16
    %v5810 = vrot.slane %v5808, 4
    %v5811 = vor.u32 %v5807, %v5810
    %v5812 = vsel %vm103, %v5802, %v5811
    %v5814 = vshrl.u32 %v5776, 16
    %v5816 = vrot.slane %v5814, 3
    %v5817 = vshll.u32 %v5776, 16
    %v5819 = vrot.slane %v5817, 4
    %v5820 = vor.u32 %v5816, %v5819
    %v5821 = vsel %vm103, %v5811, %v5820
    %v5823 = vshrl.u32 %v5777, 16
    %v5825 = vrot.slane %v5823, 3
    %v5826 = vshll.u32 %v5777, 16
    %v5828 = vrot.slane %v5826, 4
    %v5829 = vor.u32 %v5825, %v5828
    %v5830 = vsel %vm103, %v5820, %v5829
    %v5838 = vld [vmem:[#allocation5] sm:$0xf0]
    %v5839 = vsel %vm1815, %v5785, %v5838
    %5840 = vst [vmem:[#allocation5] sm:$0xf0] %v5839
    %5841 = vst.msk [vmem:[#allocation5 + $0x8] sm:$0xff] %vm1819, %v5794
    %5842 = vst.msk [vmem:[#allocation5 + $0x10] sm:$0xff] %vm1819, %v5803
    %5843 = vst.msk [vmem:[#allocation5 + $0x18] sm:$0xff] %vm1819, %v5812
    %5844 = vst.msk [vmem:[#allocation5 + $0x20] sm:$0xff] %vm1819, %v5821
    %5845 = vst.msk [vmem:[#allocation5 + $0x28] sm:$0xff] %vm1819, %v5830
    %v5846 = vld [vmem:[#allocation5 + $0x30] sm:$0xf]
    %v5847 = vsel %vm1834, %v5829, %v5846
    %5848 = vst [vmem:[#allocation5 + $0x30] sm:$0xf] %v5847
    %v5849 = vld [vmem:[#allocation6] sm:$0x1f]
    %v5850 = vsel %vm104, 0, %v5849
    %5851 = vst [vmem:[#allocation6] sm:$0x1f] %v5850
    %v5852 = vld [vmem:[#allocation6 + $0x30] sm:$0xf8]
    %v5853 = vsel %vm110, 0, %v5852
    %5854 = vst [vmem:[#allocation6 + $0x30] sm:$0xf8] %v5853
    %v5855 = vld [vmem:[#allocation5] sm:$0xff]
    %v5856 = vld [vmem:[#allocation5 + $0x8] sm:$0xff]
    %v5857 = vld [vmem:[#allocation5 + $0x10] sm:$0xff]
    %v5858 = vld [vmem:[#allocation5 + $0x18] sm:$0xff]
    %v5859 = vld [vmem:[#allocation5 + $0x20] sm:$0xff]
    %v5860 = vld [vmem:[#allocation5 + $0x28] sm:$0x7f]
    %v5861 = vld [vmem:[#allocation5 + $0x28] sm:$0xff]
    %v5862 = vld [vmem:[#allocation5] sm:$0xfe]
    %v5863 = vld [vmem:[#allocation5] sm:$0xf0]
    %v5864 = vld [vmem:[#allocation5 + $0x30] sm:$0x7]
    %v5865 = vld [vmem:[#allocation5 + $0x30] sm:$0xf]
    %v5866 = vld [vmem:[#allocation5] sm:$0xe0]
    %v5867 = vld [vmem:[#allocation5 + $0x30] sm:$0x7f]
    %v5868 = vld [vmem:[#allocation5 + $0x30] sm:$0xff]
    %v5869 = vld [vmem:[#allocation5 + $0x8] sm:$0xfe]
    %v5871 = vshrl.u32 %v5855, 16
    %v5873 = vshll.u32 %v5855, 16
    %v5875 = vrot.slane %v5873, 1
    %v5876 = vor.u32 %v5871, %v5875
    %v5878 = vshll.u32 %v5856, 16
    %v5880 = vrot.slane %v5878, 1
    %v5881 = vsel %vm216, %v5876, %v5880
    %v5882 = vshrl.u32 %v5856, 16
    %v5884 = vor.u32 %v5882, %v5880
    %v5886 = vshll.u32 %v5857, 16
    %v5888 = vrot.slane %v5886, 1
    %v5889 = vsel %vm216, %v5884, %v5888
    %v5890 = vshrl.u32 %v5857, 16
    %v5892 = vor.u32 %v5890, %v5888
    %v5894 = vshll.u32 %v5858, 16
    %v5896 = vrot.slane %v5894, 1
    %v5897 = vsel %vm216, %v5892, %v5896
    %v5898 = vshrl.u32 %v5858, 16
    %v5900 = vor.u32 %v5898, %v5896
    %v5902 = vshll.u32 %v5859, 16
    %v5904 = vrot.slane %v5902, 1
    %v5905 = vsel %vm216, %v5900, %v5904
    %v5906 = vshrl.u32 %v5859, 16
    %v5908 = vor.u32 %v5906, %v5904
    %v5910 = vshll.u32 %v5861, 16
    %v5912 = vrot.slane %v5910, 1
    %v5913 = vsel %vm216, %v5908, %v5912
    %v5914 = vshrl.u32 %v5861, 16
    %v5916 = vor.u32 %v5914, %v5912
    %5917 = vrot.lane.b32.xlu0 %v5881, 32
    %v5918 = vpop.permute.xlu0 %5917
    %5919 = vrot.lane.b32.xlu0 %v5889, 32
    %v5920 = vpop.permute.xlu0 %5919
    %5921 = vrot.lane.b32.xlu0 %v5897, 32
    %v5922 = vpop.permute.xlu0 %5921
    %5923 = vrot.lane.b32.xlu0 %v5905, 32
    %v5924 = vpop.permute.xlu0 %5923
    %5925 = vrot.lane.b32.xlu0 %v5913, 32
    %v5926 = vpop.permute.xlu0 %5925
    %5927 = vrot.lane.b32.xlu0 %v5916, 32
    %v5928 = vpop.permute.xlu0 %5927
    %v5935 = vrot.slane %v5862, 1
    %v5936 = vrot.slane %v5856, 1
    %v5937 = vsel %vm349, %v5935, %v5936
    %v5938 = vrot.slane %v5857, 1
    %v5939 = vsel %vm349, %v5936, %v5938
    %v5940 = vrot.slane %v5858, 1
    %v5941 = vsel %vm349, %v5938, %v5940
    %v5942 = vrot.slane %v5859, 1
    %v5943 = vsel %vm349, %v5940, %v5942
    %v5944 = vrot.slane %v5861, 1
    %v5945 = vsel %vm349, %v5942, %v5944
    %5946 = vrot.lane.b32.xlu0 %v5937, 64
    %v5947 = vpop.permute.xlu0 %5946
    %5948 = vrot.lane.b32.xlu0 %v5939, 64
    %v5949 = vpop.permute.xlu0 %5948
    %5950 = vrot.lane.b32.xlu0 %v5941, 64
    %v5951 = vpop.permute.xlu0 %5950
    %5952 = vrot.lane.b32.xlu0 %v5943, 64
    %v5953 = vpop.permute.xlu0 %5952
    %5954 = vrot.lane.b32.xlu0 %v5945, 64
    %v5955 = vpop.permute.xlu0 %5954
    %5956 = vrot.lane.b32.xlu0 %v5944, 64
    %v5957 = vpop.permute.xlu0 %5956
    %v5960 = vrot.slane %v5863, 4
    %v5961 = vrot.slane %v5856, 4
    %v5962 = vsel %vm2061, %v5960, %v5961
    %v5963 = vrot.slane %v5857, 4
    %v5964 = vsel %vm2061, %v5961, %v5963
    %v5965 = vrot.slane %v5858, 4
    %v5966 = vsel %vm2061, %v5963, %v5965
    %v5967 = vrot.slane %v5859, 4
    %v5968 = vsel %vm2061, %v5965, %v5967
    %v5969 = vrot.slane %v5861, 4
    %v5970 = vsel %vm2061, %v5967, %v5969
    %v5971 = vrot.slane %v5864, 4
    %v5972 = vsel %vm2061, %v5969, %v5971
    %5973 = vrot.lane.b32.xlu0 %v5962, 96
    %v5974 = vpop.permute.xlu0 %5973
    %5975 = vrot.lane.b32.xlu0 %v5964, 96
    %v5976 = vpop.permute.xlu0 %5975
    %5977 = vrot.lane.b32.xlu0 %v5966, 96
    %v5978 = vpop.permute.xlu0 %5977
    %5979 = vrot.lane.b32.xlu0 %v5968, 96
    %v5980 = vpop.permute.xlu0 %5979
    %5981 = vrot.lane.b32.xlu0 %v5970, 96
    %v5982 = vpop.permute.xlu0 %5981
    %5983 = vrot.lane.b32.xlu0 %v5972, 96
    %v5984 = vpop.permute.xlu0 %5983
    %v5986 = vshrl.u32 %v5863, 16
    %v5988 = vrot.slane %v5986, 4
    %v5989 = vshll.u32 %v5863, 16
    %v5991 = vrot.slane %v5989, 5
    %v5992 = vor.u32 %v5988, %v5991
    %v5993 = vrot.slane %v5882, 4
    %v5994 = vrot.slane %v5878, 5
    %v5995 = vor.u32 %v5993, %v5994
    %v5996 = vsel %vm1833, %v5992, %v5995
    %v5997 = vrot.slane %v5890, 4
    %v5998 = vrot.slane %v5886, 5
    %v5999 = vor.u32 %v5997, %v5998
    %v6000 = vsel %vm1833, %v5995, %v5999
    %v6001 = vrot.slane %v5898, 4
    %v6002 = vrot.slane %v5894, 5
    %v6003 = vor.u32 %v6001, %v6002
    %v6004 = vsel %vm1833, %v5999, %v6003
    %v6005 = vrot.slane %v5906, 4
    %v6006 = vrot.slane %v5902, 5
    %v6007 = vor.u32 %v6005, %v6006
    %v6008 = vsel %vm1833, %v6003, %v6007
    %v6009 = vrot.slane %v5914, 4
    %v6010 = vrot.slane %v5910, 5
    %v6011 = vor.u32 %v6009, %v6010
    %v6012 = vsel %vm1833, %v6007, %v6011
    %v6014 = vshrl.u32 %v5865, 16
    %v6016 = vrot.slane %v6014, 4
    %v6017 = vshll.u32 %v5865, 16
    %v6019 = vrot.slane %v6017, 5
    %v6020 = vor.u32 %v6016, %v6019
    %v6021 = vsel %vm1833, %v6011, %v6020
    %v6024 = vrot.slane %v5866, 5
    %v6025 = vrot.slane %v5856, 5
    %v6026 = vsel %vm2182, %v6024, %v6025
    %v6027 = vrot.slane %v5857, 5
    %v6028 = vsel %vm2182, %v6025, %v6027
    %v6029 = vrot.slane %v5858, 5
    %v6030 = vsel %vm2182, %v6027, %v6029
    %v6031 = vrot.slane %v5859, 5
    %v6032 = vsel %vm2182, %v6029, %v6031
    %v6033 = vrot.slane %v5861, 5
    %v6034 = vsel %vm2182, %v6031, %v6033
    %v6035 = vrot.slane %v5865, 5
    %v6036 = vsel %vm2182, %v6033, %v6035
    %6037 = vrot.lane.b32.xlu0 %v6026, 32
    %v6038 = vpop.permute.xlu0 %6037
    %6039 = vrot.lane.b32.xlu0 %v6028, 32
    %v6040 = vpop.permute.xlu0 %6039
    %6041 = vrot.lane.b32.xlu0 %v6030, 32
    %v6042 = vpop.permute.xlu0 %6041
    %6043 = vrot.lane.b32.xlu0 %v6032, 32
    %v6044 = vpop.permute.xlu0 %6043
    %6045 = vrot.lane.b32.xlu0 %v6034, 32
    %v6046 = vpop.permute.xlu0 %6045
    %6047 = vrot.lane.b32.xlu0 %v6036, 32
    %v6048 = vpop.permute.xlu0 %6047
    %6050 = vrot.lane.b32.xlu0 %v5856, 64
    %v6051 = vpop.permute.xlu0 %6050
    %6052 = vrot.lane.b32.xlu0 %v5857, 64
    %v6053 = vpop.permute.xlu0 %6052
    %6054 = vrot.lane.b32.xlu0 %v5858, 64
    %v6055 = vpop.permute.xlu0 %6054
    %6056 = vrot.lane.b32.xlu0 %v5859, 64
    %v6057 = vpop.permute.xlu0 %6056
    %6058 = vrot.lane.b32.xlu0 %v5861, 64
    %v6059 = vpop.permute.xlu0 %6058
    %6060 = vrot.lane.b32.xlu0 %v5867, 64
    %v6061 = vpop.permute.xlu0 %6060
    %v6063 = vshll.u32 %v5868, 16
    %v6065 = vrot.slane %v6063, 1
    %v6066 = vsel %vm216, %v5916, %v6065
    %v6067 = vshrl.u32 %v5868, 16
    %v6069 = vor.u32 %v6067, %v6065
    %6070 = vrot.lane.b32.xlu0 %v5889, 96
    %v6071 = vpop.permute.xlu0 %6070
    %6072 = vrot.lane.b32.xlu0 %v5897, 96
    %v6073 = vpop.permute.xlu0 %6072
    %6074 = vrot.lane.b32.xlu0 %v5905, 96
    %v6075 = vpop.permute.xlu0 %6074
    %6076 = vrot.lane.b32.xlu0 %v5913, 96
    %v6077 = vpop.permute.xlu0 %6076
    %6078 = vrot.lane.b32.xlu0 %v6066, 96
    %v6079 = vpop.permute.xlu0 %6078
    %6080 = vrot.lane.b32.xlu0 %v6069, 96
    %v6081 = vpop.permute.xlu0 %6080
    %v6084 = vrot.slane %v5869, 1
    %v6085 = vsel %vm349, %v6084, %v5938
    %v6086 = vrot.slane %v5868, 1
    %v6087 = vsel %vm349, %v5944, %v6086
    %v6089 = vsel %vm1819, %v5855, %v5918
    %v6091 = vsel %vm1819, %v5856, %v5920
    %v6093 = vsel %vm1819, %v5857, %v5922
    %v6095 = vsel %vm1819, %v5858, %v5924
    %v6097 = vsel %vm1819, %v5859, %v5926
    %v6100 = vsel %vm1819, %v5860, %v5928
    %v6102 = vsel %vm601, %v6089, %v5947
    %v6104 = vsel %vm601, %v6091, %v5949
    %v6106 = vsel %vm601, %v6093, %v5951
    %v6108 = vsel %vm601, %v6095, %v5953
    %v6110 = vsel %vm601, %v6097, %v5955
    %v6112 = vsel %vm601, %v6100, %v5957
    %v6114 = vsel %vm2356, %v6102, %v5974
    %v6117 = vsel %vm2356, %v6104, %v5976
    %v6120 = vsel %vm2356, %v6106, %v5978
    %v6123 = vsel %vm2356, %v6108, %v5980
    %v6126 = vsel %vm2356, %v6110, %v5982
    %v6129 = vsel %vm2356, %v6112, %v5984
    %v6133 = vsel %vm1819, %v5996, %v6038
    %v6136 = vsel %vm1819, %v6000, %v6040
    %v6139 = vsel %vm1819, %v6004, %v6042
    %v6142 = vsel %vm1819, %v6008, %v6044
    %v6145 = vsel %vm1819, %v6012, %v6046
    %v6148 = vsel %vm1819, %v6021, %v6048
    %v6150 = vsel %vm601, %v6133, %v6051
    %v6152 = vsel %vm601, %v6136, %v6053
    %v6154 = vsel %vm601, %v6139, %v6055
    %v6156 = vsel %vm601, %v6142, %v6057
    %v6158 = vsel %vm601, %v6145, %v6059
    %v6160 = vsel %vm601, %v6148, %v6061
    %v6162 = vsel %vm2356, %v6150, %v6071
    %v6165 = vsel %vm2356, %v6152, %v6073
    %v6168 = vsel %vm2356, %v6154, %v6075
    %v6171 = vsel %vm2356, %v6156, %v6077
    %v6174 = vsel %vm2356, %v6158, %v6079
    %v6177 = vsel %vm2356, %v6160, %v6081
    %v6179 = vld [vmem:[%s9] sm:$0xf]
    %v6180 = vld [vmem:[%s9 + $0x4] sm:$0xf]
    %v6181 = vld [vmem:[%s9 + $0x8] sm:$0xf]
    %v6182 = vld [vmem:[%s9 + $0xc] sm:$0xf]
    %v6183 = vld [vmem:[%s9 + $0x10] sm:$0xf]
    %v6184 = vld [vmem:[%s9 + $0x14] sm:$0xf]
    %v6185 = vld [vmem:[%s9 + $0x18] sm:$0xf]
    %v6186 = vld [vmem:[%s9 + $0x1c] sm:$0xf]
    %v6187 = vld [vmem:[%s9 + $0x20] sm:$0xf]
    %v6188 = vld [vmem:[%s9 + $0x24] sm:$0xf]
    %v6189 = vld [vmem:[%s9 + $0x28] sm:$0xf]
    %v6190 = vld [vmem:[%s9 + $0x2c] sm:$0xf]
    %v6191 = vld [vmem:[%s9 + $0x30] sm:$0xf]
    %v6192 = vld [vmem:[%s9 + $0x34] sm:$0xf]
    %v6193 = vld [vmem:[%s9 + $0x38] sm:$0xf]
    %v6194 = vld [vmem:[%s9 + $0x3c] sm:$0xf]
    %v6195 = vld [vmem:[%s9 + $0x40] sm:$0xf]
    %v6196 = vld [vmem:[%s9 + $0x44] sm:$0xf]
    %v6197 = vld [vmem:[%s9 + $0x48] sm:$0xf]
    %v6198 = vld [vmem:[%s9 + $0x4c] sm:$0xf]
    %v6199 = vld [vmem:[%s9 + $0x50] sm:$0xf]
    %v6200 = vld [vmem:[%s9 + $0x54] sm:$0xf]
    %v6201 = vld [vmem:[%s9 + $0x58] sm:$0xf]
    %v6202 = vld [vmem:[%s9 + $0x5c] sm:$0xf]
    %v6203 = vld [vmem:[%s9 + $0x60] sm:$0xf]
    %v6204 = vld [vmem:[%s9 + $0x64] sm:$0xf]
    %v6205 = vld [vmem:[%s9 + $0x68] sm:$0xf]
    %v6206 = vld [vmem:[%s9 + $0x6c] sm:$0xf]
    %v6207 = vld [vmem:[%s9 + $0x70] sm:$0xf]
    %v6208 = vld [vmem:[%s9 + $0x74] sm:$0xf]
    %v6209 = vld [vmem:[%s9 + $0x78] sm:$0xf]
    %v6210 = vld [vmem:[%s9 + $0x7c] sm:$0xf]
    %v6211 = vld [vmem:[%s9 + $0x80] sm:$0xf]
    %v6212 = vld [vmem:[%s9 + $0x84] sm:$0xf]
    %v6213 = vld [vmem:[%s9 + $0x88] sm:$0xf]
    %v6214 = vld [vmem:[%s9 + $0x8c] sm:$0xf]
    %v6215 = vld [vmem:[%s10] sm:$0x1]
    %v6217 = vlaneseq
    %v6218 = vshrl.u32 %v6217, 7
    %v6219 = vsub.s32 0, %v6218
    %v6220 = vrot.slane %v6215, %v6219
    %v6258 = vunpack.c.l.b16 %v6179
    %v6259 = vunpack.c.l.b16 %v6180
    %v6260 = vunpack.c.l.b16 %v6181
    %v6261 = vunpack.c.l.b16 %v6182
    %v6262 = vunpack.c.l.b16 %v6183
    %v6263 = vunpack.c.l.b16 %v6184
    %v6264 = vunpack.c.l.b16 %v6185
    %v6265 = vunpack.c.l.b16 %v6186
    %v6266 = vunpack.c.l.b16 %v6187
    %v6267 = vunpack.c.l.b16 %v6188
    %v6268 = vunpack.c.l.b16 %v6189
    %v6269 = vunpack.c.l.b16 %v6190
    %v6270 = vunpack.c.l.b16 %v6191
    %v6271 = vunpack.c.l.b16 %v6192
    %v6272 = vunpack.c.l.b16 %v6193
    %v6273 = vunpack.c.l.b16 %v6194
    %v6274 = vunpack.c.l.b16 %v6195
    %v6275 = vunpack.c.l.b16 %v6196
    %v6276 = vunpack.c.l.b16 %v6197
    %v6277 = vunpack.c.l.b16 %v6198
    %v6278 = vunpack.c.l.b16 %v6199
    %v6279 = vunpack.c.l.b16 %v6200
    %v6280 = vunpack.c.l.b16 %v6201
    %v6281 = vunpack.c.l.b16 %v6202
    %v6282 = vunpack.c.l.b16 %v6203
    %v6283 = vunpack.c.l.b16 %v6204
    %v6284 = vunpack.c.l.b16 %v6205
    %v6285 = vunpack.c.l.b16 %v6206
    %v6286 = vunpack.c.l.b16 %v6207
    %v6287 = vunpack.c.l.b16 %v6208
    %v6288 = vunpack.c.l.b16 %v6209
    %v6289 = vunpack.c.l.b16 %v6210
    %v6290 = vunpack.c.l.b16 %v6211
    %v6291 = vunpack.c.l.b16 %v6212
    %v6292 = vunpack.c.l.b16 %v6213
    %v6293 = vunpack.c.l.b16 %v6214
    %v6294 = vpack.c.b16 %v6259, %v6258
    %v6295 = vpack.c.b16 %v6261, %v6260
    %v6296 = vpack.c.b16 %v6263, %v6262
    %v6297 = vpack.c.b16 %v6265, %v6264
    %v6298 = vpack.c.b16 %v6267, %v6266
    %v6299 = vpack.c.b16 %v6269, %v6268
    %v6300 = vpack.c.b16 %v6271, %v6270
    %v6301 = vpack.c.b16 %v6273, %v6272
    %v6302 = vpack.c.b16 %v6275, %v6274
    %v6303 = vpack.c.b16 %v6277, %v6276
    %v6304 = vpack.c.b16 %v6279, %v6278
    %v6305 = vpack.c.b16 %v6281, %v6280
    %v6306 = vpack.c.b16 %v6283, %v6282
    %v6307 = vpack.c.b16 %v6285, %v6284
    %v6308 = vpack.c.b16 %v6287, %v6286
    %v6309 = vpack.c.b16 %v6289, %v6288
    %v6310 = vpack.c.b16 %v6291, %v6290
    %v6311 = vpack.c.b16 %v6293, %v6292
    %v6331 = vsel %vm1819, %v6085, 0
    %v6334 = vsel %vm1819, %v5941, 0
    %v6337 = vsel %vm1819, %v5943, 0
    %v6340 = vsel %vm1819, %v5945, 0
    %v6343 = vsel %vm1819, %v6087, 0
    %v6346 = vsel %vm1819, %v6086, 0
    %6348 = vmatprep.subr.bf16.mxu0 0
    %6349 = vmatpush1.bf16.msra.mxu0 %v6294
    %6350 = vmatprep.subr.bf16.mxu0 0
    %6351 = vmatpush1.bf16.msra.mxu0 %v6295
    %6352 = vmatprep.subr.bf16.mxu0 0
    %6353 = vmatpush1.bf16.msra.mxu0 %v6296
    %6354 = vmatprep.subr.bf16.mxu0 0
    %6355 = vmatpush1.bf16.msra.mxu0 %v6297
    %6356 = vmatprep.subr.bf16.mxu0 0
    %6357 = vmatpush1.bf16.msra.mxu0 %v6298
    %6358 = vmatprep.subr.bf16.mxu0 0
    %6359 = vmatpush1.bf16.msra.mxu0 %v6299
    %6360 = vmatprep.subr.bf16.mxu0 0
    %6361 = vmatpush1.bf16.msra.mxu0 %v6300
    %6362 = vmatprep.subr.bf16.mxu0 0
    %6363 = vmatpush1.bf16.msra.mxu0 %v6301
    %6364 = vmatprep.subr.bf16.mxu0 0
    %6365 = vmatpush1.bf16.msra.mxu0 %v6302
    %6366 = vmatprep.subr.bf16.mxu0 0
    %6367 = vmatpush1.bf16.msra.mxu0 %v6303
    %6368 = vmatprep.subr.bf16.mxu0 0
    %6369 = vmatpush1.bf16.msra.mxu0 %v6304
    %6370 = vmatprep.subr.bf16.mxu0 0
    %6371 = vmatpush1.bf16.msra.mxu0 %v6305
    %6372 = vmatprep.subr.bf16.mxu0 0
    %6373 = vmatpush1.bf16.msra.mxu0 %v6306
    %6374 = vmatprep.subr.bf16.mxu0 0
    %6375 = vmatpush1.bf16.msra.mxu0 %v6307
    %6376 = vmatprep.subr.bf16.mxu0 0
    %6377 = vmatpush1.bf16.msra.mxu0 %v6308
    %6378 = vmatprep.subr.bf16.mxu0 0
    %6379 = vmatpush1.bf16.msra.mxu0 %v6309
    %6380 = vmatprep.mubr.bf16.mxu0 %v6162
    %6381 = vmatmul.mubr.bf16.gmra.mrb[0].mxu0 %v6114
    %v6382 = vpop.f32.mrb[0].mxu0
    %v6383 = vadd.f32 %v6220, %v6382
    %v6384 = vpop.f32.mrb[0].mxu0
    %v6385 = vpop.f32.mrb[0].mxu0
    %v6386 = vadd.f32 %v6220, %v6385
    %v6387 = vpop.f32.mrb[0].mxu0
    %6388 = vmatprep.mubr.bf16.mxu0 %v6165
    %6389 = vmatmul.mubr.bf16.gmra.mrb[0].mxu0 %v6117
    %v6390 = vpop.f32.mrb[0].mxu0
    %v6391 = vadd.f32 %v6220, %v6390
    %v6392 = vpop.f32.mrb[0].mxu0
    %v6393 = vpop.f32.mrb[0].mxu0
    %v6394 = vadd.f32 %v6220, %v6393
    %v6395 = vpop.f32.mrb[0].mxu0
    %6396 = vmatprep.mubr.bf16.mxu0 %v6168
    %6397 = vmatmul.mubr.bf16.gmra.mrb[0].mxu0 %v6120
    %v6398 = vpop.f32.mrb[0].mxu0
    %v6399 = vadd.f32 %v6220, %v6398
    %v6400 = vpop.f32.mrb[0].mxu0
    %v6401 = vpop.f32.mrb[0].mxu0
    %v6402 = vadd.f32 %v6220, %v6401
    %v6403 = vpop.f32.mrb[0].mxu0
    %6404 = vmatprep.mubr.bf16.mxu0 %v6171
    %6405 = vmatmul.mubr.bf16.gmra.mrb[0].mxu0 %v6123
    %v6406 = vpop.f32.mrb[0].mxu0
    %v6407 = vadd.f32 %v6220, %v6406
    %v6408 = vpop.f32.mrb[0].mxu0
    %v6409 = vpop.f32.mrb[0].mxu0
    %v6410 = vadd.f32 %v6220, %v6409
    %v6411 = vpop.f32.mrb[0].mxu0
    %6412 = vmatprep.mubr.bf16.mxu0 %v6174
    %6413 = vmatmul.mubr.bf16.gmra.mrb[0].mxu0 %v6126
    %v6414 = vpop.f32.mrb[0].mxu0
    %v6415 = vadd.f32 %v6220, %v6414
    %v6416 = vpop.f32.mrb[0].mxu0
    %v6417 = vpop.f32.mrb[0].mxu0
    %v6418 = vadd.f32 %v6220, %v6417
    %v6419 = vpop.f32.mrb[0].mxu0
    %6420 = vmatprep.mubr.bf16.mxu0 %v6177
    %6421 = vmatmul.mubr.bf16.gmra.mrb[0].mxu0 %v6129
    %v6422 = vpop.f32.mrb[0].mxu0
    %v6423 = vadd.f32 %v6220, %v6422
    %v6424 = vpop.f32.mrb[0].mxu0
    %v6425 = vpop.f32.mrb[0].mxu0
    %v6426 = vadd.f32 %v6220, %v6425
    %v6427 = vpop.f32.mrb[0].mxu0
    %6428 = vdwg.mxu0
    %6429 = vmatprep.subr.bf16.mxu0 0
    %6430 = vmatpush1.bf16.msra.mxu0 %v6310
    %6431 = vmatprep.subr.bf16.mxu0 0
    %6432 = vmatpush1.bf16.msra.mxu0 %v6311
    %6433 = vmatprep.subr.bf16.mxu0 0
    %6434 = vmatpush1.bf16.msra.mxu0 0
    %6435 = vmatprep.subr.bf16.mxu0 0
    %6436 = vmatpush1.bf16.msra.mxu0 0
    %6437 = vmatprep.subr.bf16.mxu0 0
    %6438 = vmatpush1.bf16.msra.mxu0 0
    %6439 = vmatprep.subr.bf16.mxu0 0
    %6440 = vmatpush1.bf16.msra.mxu0 0
    %6441 = vmatprep.subr.bf16.mxu0 0
    %6442 = vmatpush1.bf16.msra.mxu0 0
    %6443 = vmatprep.subr.bf16.mxu0 0
    %6444 = vmatpush1.bf16.msra.mxu0 0
    %6445 = vmatprep.subr.bf16.mxu0 0
    %6446 = vmatpush1.bf16.msra.mxu0 0
    %6447 = vmatprep.subr.bf16.mxu0 0
    %6448 = vmatpush1.bf16.msra.mxu0 0
    %6449 = vmatprep.subr.bf16.mxu0 0
    %6450 = vmatpush1.bf16.msra.mxu0 0
    %6451 = vmatprep.subr.bf16.mxu0 0
    %6452 = vmatpush1.bf16.msra.mxu0 0
    %6453 = vmatprep.subr.bf16.mxu0 0
    %6454 = vmatpush1.bf16.msra.mxu0 0
    %6455 = vmatprep.subr.bf16.mxu0 0
    %6456 = vmatpush1.bf16.msra.mxu0 0
    %6457 = vmatprep.subr.bf16.mxu0 0
    %6458 = vmatpush1.bf16.msra.mxu0 0
    %6459 = vmatprep.subr.bf16.mxu0 0
    %6460 = vmatpush1.bf16.msra.mxu0 0
    %6461 = vmatprep.mubr.bf16.mxu0 0
    %6462 = vmatmul.mubr.bf16.gmra.mrb[0].mxu0 %v6331
    %v6463 = vpop.f32.mrb[0].mxu0
    %v6464 = vadd.f32 %v6383, %v6463
    %v6465 = vpop.f32.mrb[0].mxu0
    %v6466 = vpop.f32.mrb[0].mxu0
    %v6467 = vadd.f32 %v6386, %v6466
    %v6468 = vpop.f32.mrb[0].mxu0
    %6469 = vmatprep.mubr.bf16.mxu0 0
    %6470 = vmatmul.mubr.bf16.gmra.mrb[0].mxu0 %v6334
    %v6471 = vpop.f32.mrb[0].mxu0
    %v6472 = vadd.f32 %v6391, %v6471
    %v6473 = vpop.f32.mrb[0].mxu0
    %v6474 = vpop.f32.mrb[0].mxu0
    %v6475 = vadd.f32 %v6394, %v6474
    %v6476 = vpop.f32.mrb[0].mxu0
    %6477 = vmatprep.mubr.bf16.mxu0 0
    %6478 = vmatmul.mubr.bf16.gmra.mrb[0].mxu0 %v6337
    %v6479 = vpop.f32.mrb[0].mxu0
    %v6480 = vadd.f32 %v6399, %v6479
    %v6481 = vpop.f32.mrb[0].mxu0
    %v6482 = vpop.f32.mrb[0].mxu0
    %v6483 = vadd.f32 %v6402, %v6482
    %v6484 = vpop.f32.mrb[0].mxu0
    %6485 = vmatprep.mubr.bf16.mxu0 0
    %6486 = vmatmul.mubr.bf16.gmra.mrb[0].mxu0 %v6340
    %v6487 = vpop.f32.mrb[0].mxu0
    %v6488 = vadd.f32 %v6407, %v6487
    %v6489 = vpop.f32.mrb[0].mxu0
    %v6490 = vpop.f32.mrb[0].mxu0
    %v6491 = vadd.f32 %v6410, %v6490
    %v6492 = vpop.f32.mrb[0].mxu0
    %6493 = vmatprep.mubr.bf16.mxu0 0
    %6494 = vmatmul.mubr.bf16.gmra.mrb[0].mxu0 %v6343
    %v6495 = vpop.f32.mrb[0].mxu0
    %v6496 = vadd.f32 %v6415, %v6495
    %v6497 = vpop.f32.mrb[0].mxu0
    %v6498 = vpop.f32.mrb[0].mxu0
    %v6499 = vadd.f32 %v6418, %v6498
    %v6500 = vpop.f32.mrb[0].mxu0
    %6501 = vmatprep.mubr.bf16.mxu0 0
    %6502 = vmatmul.mubr.bf16.gmra.mrb[0].mxu0 %v6346
    %v6503 = vpop.f32.mrb[0].mxu0
    %v6504 = vadd.f32 %v6423, %v6503
    %v6505 = vpop.f32.mrb[0].mxu0
    %v6506 = vpop.f32.mrb[0].mxu0
    %v6507 = vadd.f32 %v6426, %v6506
    %v6508 = vpop.f32.mrb[0].mxu0
    %6509 = vdwg.mxu0
    %v6510 = vmax.f32 %v6464, 0.0
    %v6511 = vmax.f32 %v6467, 0.0
    %v6512 = vmax.f32 %v6472, 0.0
    %v6513 = vmax.f32 %v6475, 0.0
    %v6514 = vmax.f32 %v6480, 0.0
    %v6515 = vmax.f32 %v6483, 0.0
    %v6516 = vmax.f32 %v6488, 0.0
    %v6517 = vmax.f32 %v6491, 0.0
    %v6518 = vmax.f32 %v6496, 0.0
    %v6519 = vmax.f32 %v6499, 0.0
    %v6520 = vmax.f32 %v6504, 0.0
    %v6521 = vmax.f32 %v6507, 0.0
    %v6522 = vmul.f32 %v6510, %v5703
    %v6523 = vmul.f32 %v6511, %v5708
    %v6524 = vmul.f32 %v6512, %v5713
    %v6525 = vmul.f32 %v6513, %v5718
    %v6526 = vmul.f32 %v6514, %v5723
    %v6527 = vmul.f32 %v6515, %v5728
    %v6528 = vmul.f32 %v6516, %v5733
    %v6529 = vmul.f32 %v6517, %v5738
    %v6530 = vmul.f32 %v6518, %v5743
    %v6531 = vmul.f32 %v6519, %v5748
    %v6532 = vmul.f32 %v6520, %v5753
    %v6533 = vmul.f32 %v6521, %v5758
    %v6534 = vpack.c.bf16 %v6523, %v6522
    %v6535 = vpack.c.bf16 %v6525, %v6524
    %v6536 = vpack.c.bf16 %v6527, %v6526
    %v6537 = vpack.c.bf16 %v6529, %v6528
    %v6538 = vpack.c.bf16 %v6531, %v6530
    %v6539 = vpack.c.bf16 %v6533, %v6532
    %v6541 = vshrl.u32 %v6534, 16
    %v6543 = vrot.slane %v6541, 3
    %v6544 = vshll.u32 %v6534, 16
    %v6546 = vrot.slane %v6544, 4
    %v6547 = vor.u32 %v6543, %v6546
    %v6549 = vshrl.u32 %v6535, 16
    %v6551 = vrot.slane %v6549, 3
    %v6552 = vshll.u32 %v6535, 16
    %v6554 = vrot.slane %v6552, 4
    %v6555 = vor.u32 %v6551, %v6554
    %v6556 = vsel %vm103, %v6547, %v6555
    %v6558 = vshrl.u32 %v6536, 16
    %v6560 = vrot.slane %v6558, 3
    %v6561 = vshll.u32 %v6536, 16
    %v6563 = vrot.slane %v6561, 4
    %v6564 = vor.u32 %v6560, %v6563
    %v6565 = vsel %vm103, %v6555, %v6564
    %v6567 = vshrl.u32 %v6537, 16
    %v6569 = vrot.slane %v6567, 3
    %v6570 = vshll.u32 %v6537, 16
    %v6572 = vrot.slane %v6570, 4
    %v6573 = vor.u32 %v6569, %v6572
    %v6574 = vsel %vm103, %v6564, %v6573
    %v6576 = vshrl.u32 %v6538, 16
    %v6578 = vrot.slane %v6576, 3
    %v6579 = vshll.u32 %v6538, 16
    %v6581 = vrot.slane %v6579, 4
    %v6582 = vor.u32 %v6578, %v6581
    %v6583 = vsel %vm103, %v6573, %v6582
    %v6585 = vshrl.u32 %v6539, 16
    %v6587 = vrot.slane %v6585, 3
    %v6588 = vshll.u32 %v6539, 16
    %v6590 = vrot.slane %v6588, 4
    %v6591 = vor.u32 %v6587, %v6590
    %v6592 = vsel %vm103, %v6582, %v6591
    %v6600 = vld [vmem:[#allocation6] sm:$0xf0]
    %v6601 = vsel %vm1815, %v6547, %v6600
    %6602 = vst [vmem:[#allocation6] sm:$0xf0] %v6601
    %6603 = vst.msk [vmem:[#allocation6 + $0x8] sm:$0xff] %vm1819, %v6556
    %6604 = vst.msk [vmem:[#allocation6 + $0x10] sm:$0xff] %vm1819, %v6565
    %6605 = vst.msk [vmem:[#allocation6 + $0x18] sm:$0xff] %vm1819, %v6574
    %6606 = vst.msk [vmem:[#allocation6 + $0x20] sm:$0xff] %vm1819, %v6583
    %6607 = vst.msk [vmem:[#allocation6 + $0x28] sm:$0xff] %vm1819, %v6592
    %v6608 = vld [vmem:[#allocation6 + $0x30] sm:$0xf]
    %v6609 = vsel %vm1834, %v6591, %v6608
    %6610 = vst [vmem:[#allocation6 + $0x30] sm:$0xf] %v6609
    %6611 = vst.msk [vmem:[#allocation7] sm:$0xff] %vm1819, 0.0
    %vm6612 = vcmask 253952
    %6613 = vst.msk [vmem:[#allocation7 + $0x8] sm:$0x1] %vm6612, 0.0
    %6614 = vst.msk [vmem:[#allocation7 + $0x67] sm:$0xff] %vm1819, 0.0
    %6615 = vst.msk [vmem:[#allocation7 + $0x6f] sm:$0x1] %vm6612, 0.0
    %v6616 = vld [vmem:[#allocation6] sm:$0xff]
    %v6617 = vld [vmem:[#allocation6 + $0x8] sm:$0xff]
    %v6618 = vld [vmem:[#allocation6 + $0x10] sm:$0xff]
    %v6619 = vld [vmem:[#allocation6 + $0x18] sm:$0xff]
    %v6620 = vld [vmem:[#allocation6 + $0x20] sm:$0xff]
    %v6621 = vld [vmem:[#allocation6 + $0x28] sm:$0x7f]
    %v6622 = vld [vmem:[#allocation6 + $0x28] sm:$0xff]
    %v6623 = vld [vmem:[#allocation6] sm:$0xfe]
    %v6624 = vld [vmem:[#allocation6] sm:$0xf0]
    %v6625 = vld [vmem:[#allocation6 + $0x30] sm:$0x7]
    %v6626 = vld [vmem:[#allocation6 + $0x30] sm:$0xf]
    %v6627 = vld [vmem:[#allocation6] sm:$0xe0]
    %v6628 = vld [vmem:[#allocation6 + $0x30] sm:$0x7f]
    %v6629 = vld [vmem:[#allocation6 + $0x30] sm:$0xff]
    %v6630 = vld [vmem:[#allocation6 + $0x8] sm:$0xfe]
    %v6632 = vshrl.u32 %v6616, 16
    %v6634 = vshll.u32 %v6616, 16
    %v6636 = vrot.slane %v6634, 1
    %v6637 = vor.u32 %v6632, %v6636
    %v6639 = vshll.u32 %v6617, 16
    %v6641 = vrot.slane %v6639, 1
    %v6642 = vsel %vm216, %v6637, %v6641
    %v6643 = vshrl.u32 %v6617, 16
    %v6645 = vor.u32 %v6643, %v6641
    %v6647 = vshll.u32 %v6618, 16
    %v6649 = vrot.slane %v6647, 1
    %v6650 = vsel %vm216, %v6645, %v6649
    %v6651 = vshrl.u32 %v6618, 16
    %v6653 = vor.u32 %v6651, %v6649
    %v6655 = vshll.u32 %v6619, 16
    %v6657 = vrot.slane %v6655, 1
    %v6658 = vsel %vm216, %v6653, %v6657
    %v6659 = vshrl.u32 %v6619, 16
    %v6661 = vor.u32 %v6659, %v6657
    %v6663 = vshll.u32 %v6620, 16
    %v6665 = vrot.slane %v6663, 1
    %v6666 = vsel %vm216, %v6661, %v6665
    %v6667 = vshrl.u32 %v6620, 16
    %v6669 = vor.u32 %v6667, %v6665
    %v6671 = vshll.u32 %v6622, 16
    %v6673 = vrot.slane %v6671, 1
    %v6674 = vsel %vm216, %v6669, %v6673
    %v6675 = vshrl.u32 %v6622, 16
    %v6677 = vor.u32 %v6675, %v6673
    %6678 = vrot.lane.b32.xlu0 %v6642, 32
    %v6679 = vpop.permute.xlu0 %6678
    %6680 = vrot.lane.b32.xlu0 %v6650, 32
    %v6681 = vpop.permute.xlu0 %6680
    %6682 = vrot.lane.b32.xlu0 %v6658, 32
    %v6683 = vpop.permute.xlu0 %6682
    %6684 = vrot.lane.b32.xlu0 %v6666, 32
    %v6685 = vpop.permute.xlu0 %6684
    %6686 = vrot.lane.b32.xlu0 %v6674, 32
    %v6687 = vpop.permute.xlu0 %6686
    %6688 = vrot.lane.b32.xlu0 %v6677, 32
    %v6689 = vpop.permute.xlu0 %6688
    %v6696 = vrot.slane %v6623, 1
    %v6697 = vrot.slane %v6617, 1
    %v6698 = vsel %vm349, %v6696, %v6697
    %v6699 = vrot.slane %v6618, 1
    %v6700 = vsel %vm349, %v6697, %v6699
    %v6701 = vrot.slane %v6619, 1
    %v6702 = vsel %vm349, %v6699, %v6701
    %v6703 = vrot.slane %v6620, 1
    %v6704 = vsel %vm349, %v6701, %v6703
    %v6705 = vrot.slane %v6622, 1
    %v6706 = vsel %vm349, %v6703, %v6705
    %6707 = vrot.lane.b32.xlu0 %v6698, 64
    %v6708 = vpop.permute.xlu0 %6707
    %6709 = vrot.lane.b32.xlu0 %v6700, 64
    %v6710 = vpop.permute.xlu0 %6709
    %6711 = vrot.lane.b32.xlu0 %v6702, 64
    %v6712 = vpop.permute.xlu0 %6711
    %6713 = vrot.lane.b32.xlu0 %v6704, 64
    %v6714 = vpop.permute.xlu0 %6713
    %6715 = vrot.lane.b32.xlu0 %v6706, 64
    %v6716 = vpop.permute.xlu0 %6715
    %6717 = vrot.lane.b32.xlu0 %v6705, 64
    %v6718 = vpop.permute.xlu0 %6717
    %v6721 = vrot.slane %v6624, 4
    %v6722 = vrot.slane %v6617, 4
    %v6723 = vsel %vm2061, %v6721, %v6722
    %v6724 = vrot.slane %v6618, 4
    %v6725 = vsel %vm2061, %v6722, %v6724
    %v6726 = vrot.slane %v6619, 4
    %v6727 = vsel %vm2061, %v6724, %v6726
    %v6728 = vrot.slane %v6620, 4
    %v6729 = vsel %vm2061, %v6726, %v6728
    %v6730 = vrot.slane %v6622, 4
    %v6731 = vsel %vm2061, %v6728, %v6730
    %v6732 = vrot.slane %v6625, 4
    %v6733 = vsel %vm2061, %v6730, %v6732
    %6734 = vrot.lane.b32.xlu0 %v6723, 96
    %v6735 = vpop.permute.xlu0 %6734
    %6736 = vrot.lane.b32.xlu0 %v6725, 96
    %v6737 = vpop.permute.xlu0 %6736
    %6738 = vrot.lane.b32.xlu0 %v6727, 96
    %v6739 = vpop.permute.xlu0 %6738
    %6740 = vrot.lane.b32.xlu0 %v6729, 96
    %v6741 = vpop.permute.xlu0 %6740
    %6742 = vrot.lane.b32.xlu0 %v6731, 96
    %v6743 = vpop.permute.xlu0 %6742
    %6744 = vrot.lane.b32.xlu0 %v6733, 96
    %v6745 = vpop.permute.xlu0 %6744
    %v6747 = vshrl.u32 %v6624, 16
    %v6749 = vrot.slane %v6747, 4
    %v6750 = vshll.u32 %v6624, 16
    %v6752 = vrot.slane %v6750, 5
    %v6753 = vor.u32 %v6749, %v6752
    %v6754 = vrot.slane %v6643, 4
    %v6755 = vrot.slane %v6639, 5
    %v6756 = vor.u32 %v6754, %v6755
    %v6757 = vsel %vm1833, %v6753, %v6756
    %v6758 = vrot.slane %v6651, 4
    %v6759 = vrot.slane %v6647, 5
    %v6760 = vor.u32 %v6758, %v6759
    %v6761 = vsel %vm1833, %v6756, %v6760
    %v6762 = vrot.slane %v6659, 4
    %v6763 = vrot.slane %v6655, 5
    %v6764 = vor.u32 %v6762, %v6763
    %v6765 = vsel %vm1833, %v6760, %v6764
    %v6766 = vrot.slane %v6667, 4
    %v6767 = vrot.slane %v6663, 5
    %v6768 = vor.u32 %v6766, %v6767
    %v6769 = vsel %vm1833, %v6764, %v6768
    %v6770 = vrot.slane %v6675, 4
    %v6771 = vrot.slane %v6671, 5
    %v6772 = vor.u32 %v6770, %v6771
    %v6773 = vsel %vm1833, %v6768, %v6772
    %v6775 = vshrl.u32 %v6626, 16
    %v6777 = vrot.slane %v6775, 4
    %v6778 = vshll.u32 %v6626, 16
    %v6780 = vrot.slane %v6778, 5
    %v6781 = vor.u32 %v6777, %v6780
    %v6782 = vsel %vm1833, %v6772, %v6781
    %v6785 = vrot.slane %v6627, 5
    %v6786 = vrot.slane %v6617, 5
    %v6787 = vsel %vm2182, %v6785, %v6786
    %v6788 = vrot.slane %v6618, 5
    %v6789 = vsel %vm2182, %v6786, %v6788
    %v6790 = vrot.slane %v6619, 5
    %v6791 = vsel %vm2182, %v6788, %v6790
    %v6792 = vrot.slane %v6620, 5
    %v6793 = vsel %vm2182, %v6790, %v6792
    %v6794 = vrot.slane %v6622, 5
    %v6795 = vsel %vm2182, %v6792, %v6794
    %v6796 = vrot.slane %v6626, 5
    %v6797 = vsel %vm2182, %v6794, %v6796
    %6798 = vrot.lane.b32.xlu0 %v6787, 32
    %v6799 = vpop.permute.xlu0 %6798
    %6800 = vrot.lane.b32.xlu0 %v6789, 32
    %v6801 = vpop.permute.xlu0 %6800
    %6802 = vrot.lane.b32.xlu0 %v6791, 32
    %v6803 = vpop.permute.xlu0 %6802
    %6804 = vrot.lane.b32.xlu0 %v6793, 32
    %v6805 = vpop.permute.xlu0 %6804
    %6806 = vrot.lane.b32.xlu0 %v6795, 32
    %v6807 = vpop.permute.xlu0 %6806
    %6808 = vrot.lane.b32.xlu0 %v6797, 32
    %v6809 = vpop.permute.xlu0 %6808
    %6811 = vrot.lane.b32.xlu0 %v6617, 64
    %v6812 = vpop.permute.xlu0 %6811
    %6813 = vrot.lane.b32.xlu0 %v6618, 64
    %v6814 = vpop.permute.xlu0 %6813
    %6815 = vrot.lane.b32.xlu0 %v6619, 64
    %v6816 = vpop.permute.xlu0 %6815
    %6817 = vrot.lane.b32.xlu0 %v6620, 64
    %v6818 = vpop.permute.xlu0 %6817
    %6819 = vrot.lane.b32.xlu0 %v6622, 64
    %v6820 = vpop.permute.xlu0 %6819
    %6821 = vrot.lane.b32.xlu0 %v6628, 64
    %v6822 = vpop.permute.xlu0 %6821
    %v6824 = vshll.u32 %v6629, 16
    %v6826 = vrot.slane %v6824, 1
    %v6827 = vsel %vm216, %v6677, %v6826
    %v6828 = vshrl.u32 %v6629, 16
    %v6830 = vor.u32 %v6828, %v6826
    %6831 = vrot.lane.b32.xlu0 %v6650, 96
    %v6832 = vpop.permute.xlu0 %6831
    %6833 = vrot.lane.b32.xlu0 %v6658, 96
    %v6834 = vpop.permute.xlu0 %6833
    %6835 = vrot.lane.b32.xlu0 %v6666, 96
    %v6836 = vpop.permute.xlu0 %6835
    %6837 = vrot.lane.b32.xlu0 %v6674, 96
    %v6838 = vpop.permute.xlu0 %6837
    %6839 = vrot.lane.b32.xlu0 %v6827, 96
    %v6840 = vpop.permute.xlu0 %6839
    %6841 = vrot.lane.b32.xlu0 %v6830, 96
    %v6842 = vpop.permute.xlu0 %6841
    %v6845 = vrot.slane %v6630, 1
    %v6846 = vsel %vm349, %v6845, %v6699
    %v6847 = vrot.slane %v6629, 1
    %v6848 = vsel %vm349, %v6705, %v6847
    %v6850 = vsel %vm1819, %v6616, %v6679
    %v6852 = vsel %vm1819, %v6617, %v6681
    %v6854 = vsel %vm1819, %v6618, %v6683
    %v6856 = vsel %vm1819, %v6619, %v6685
    %v6858 = vsel %vm1819, %v6620, %v6687
    %v6861 = vsel %vm1819, %v6621, %v6689
    %v6863 = vsel %vm601, %v6850, %v6708
    %v6865 = vsel %vm601, %v6852, %v6710
    %v6867 = vsel %vm601, %v6854, %v6712
    %v6869 = vsel %vm601, %v6856, %v6714
    %v6871 = vsel %vm601, %v6858, %v6716
    %v6873 = vsel %vm601, %v6861, %v6718
    %v6875 = vsel %vm2356, %v6863, %v6735
    %v6878 = vsel %vm2356, %v6865, %v6737
    %v6881 = vsel %vm2356, %v6867, %v6739
    %v6884 = vsel %vm2356, %v6869, %v6741
    %v6887 = vsel %vm2356, %v6871, %v6743
    %v6890 = vsel %vm2356, %v6873, %v6745
    %v6894 = vsel %vm1819, %v6757, %v6799
    %v6897 = vsel %vm1819, %v6761, %v6801
    %v6900 = vsel %vm1819, %v6765, %v6803
    %v6903 = vsel %vm1819, %v6769, %v6805
    %v6906 = vsel %vm1819, %v6773, %v6807
    %v6909 = vsel %vm1819, %v6782, %v6809
    %v6911 = vsel %vm601, %v6894, %v6812
    %v6913 = vsel %vm601, %v6897, %v6814
    %v6915 = vsel %vm601, %v6900, %v6816
    %v6917 = vsel %vm601, %v6903, %v6818
    %v6919 = vsel %vm601, %v6906, %v6820
    %v6921 = vsel %vm601, %v6909, %v6822
    %v6923 = vsel %vm2356, %v6911, %v6832
    %v6926 = vsel %vm2356, %v6913, %v6834
    %v6929 = vsel %vm2356, %v6915, %v6836
    %v6932 = vsel %vm2356, %v6917, %v6838
    %v6935 = vsel %vm2356, %v6919, %v6840
    %v6938 = vsel %vm2356, %v6921, %v6842
    %v6940 = vld [vmem:[%s11] sm:$0xf]
    %v6941 = vld [vmem:[%s11 + $0x4] sm:$0xf]
    %v6942 = vld [vmem:[%s11 + $0x8] sm:$0xf]
    %v6943 = vld [vmem:[%s11 + $0xc] sm:$0xf]
    %v6944 = vld [vmem:[%s11 + $0x10] sm:$0xf]
    %v6945 = vld [vmem:[%s11 + $0x14] sm:$0xf]
    %v6946 = vld [vmem:[%s11 + $0x18] sm:$0xf]
    %v6947 = vld [vmem:[%s11 + $0x1c] sm:$0xf]
    %v6948 = vld [vmem:[%s11 + $0x20] sm:$0xf]
    %v6949 = vld [vmem:[%s11 + $0x24] sm:$0xf]
    %v6950 = vld [vmem:[%s11 + $0x28] sm:$0xf]
    %v6951 = vld [vmem:[%s11 + $0x2c] sm:$0xf]
    %v6952 = vld [vmem:[%s11 + $0x30] sm:$0xf]
    %v6953 = vld [vmem:[%s11 + $0x34] sm:$0xf]
    %v6954 = vld [vmem:[%s11 + $0x38] sm:$0xf]
    %v6955 = vld [vmem:[%s11 + $0x3c] sm:$0xf]
    %v6956 = vld [vmem:[%s11 + $0x40] sm:$0xf]
    %v6957 = vld [vmem:[%s11 + $0x44] sm:$0xf]
    %v6958 = vld [vmem:[%s11 + $0x48] sm:$0xf]
    %v6959 = vld [vmem:[%s11 + $0x4c] sm:$0xf]
    %v6960 = vld [vmem:[%s11 + $0x50] sm:$0xf]
    %v6961 = vld [vmem:[%s11 + $0x54] sm:$0xf]
    %v6962 = vld [vmem:[%s11 + $0x58] sm:$0xf]
    %v6963 = vld [vmem:[%s11 + $0x5c] sm:$0xf]
    %v6964 = vld [vmem:[%s11 + $0x60] sm:$0xf]
    %v6965 = vld [vmem:[%s11 + $0x64] sm:$0xf]
    %v6966 = vld [vmem:[%s11 + $0x68] sm:$0xf]
    %v6967 = vld [vmem:[%s11 + $0x6c] sm:$0xf]
    %v6968 = vld [vmem:[%s11 + $0x70] sm:$0xf]
    %v6969 = vld [vmem:[%s11 + $0x74] sm:$0xf]
    %v6970 = vld [vmem:[%s11 + $0x78] sm:$0xf]
    %v6971 = vld [vmem:[%s11 + $0x7c] sm:$0xf]
    %v6972 = vld [vmem:[%s11 + $0x80] sm:$0xf]
    %v6973 = vld [vmem:[%s11 + $0x84] sm:$0xf]
    %v6974 = vld [vmem:[%s11 + $0x88] sm:$0xf]
    %v6975 = vld [vmem:[%s11 + $0x8c] sm:$0xf]
    %v6976 = vld [vmem:[%s12] sm:$0x1]
    %v6978 = vlaneseq
    %v6979 = vshrl.u32 %v6978, 7
    %v6980 = vsub.s32 0, %v6979
    %v6981 = vrot.slane %v6976, %v6980
    %v7019 = vunpack.c.l.b16 %v6940
    %v7020 = vunpack.c.l.b16 %v6941
    %v7021 = vunpack.c.l.b16 %v6942
    %v7022 = vunpack.c.l.b16 %v6943
    %v7023 = vunpack.c.l.b16 %v6944
    %v7024 = vunpack.c.l.b16 %v6945
    %v7025 = vunpack.c.l.b16 %v6946
    %v7026 = vunpack.c.l.b16 %v6947
    %v7027 = vunpack.c.l.b16 %v6948
    %v7028 = vunpack.c.l.b16 %v6949
    %v7029 = vunpack.c.l.b16 %v6950
    %v7030 = vunpack.c.l.b16 %v6951
    %v7031 = vunpack.c.l.b16 %v6952
    %v7032 = vunpack.c.l.b16 %v6953
    %v7033 = vunpack.c.l.b16 %v6954
    %v7034 = vunpack.c.l.b16 %v6955
    %v7035 = vunpack.c.l.b16 %v6956
    %v7036 = vunpack.c.l.b16 %v6957
    %v7037 = vunpack.c.l.b16 %v6958
    %v7038 = vunpack.c.l.b16 %v6959
    %v7039 = vunpack.c.l.b16 %v6960
    %v7040 = vunpack.c.l.b16 %v6961
    %v7041 = vunpack.c.l.b16 %v6962
    %v7042 = vunpack.c.l.b16 %v6963
    %v7043 = vunpack.c.l.b16 %v6964
    %v7044 = vunpack.c.l.b16 %v6965
    %v7045 = vunpack.c.l.b16 %v6966
    %v7046 = vunpack.c.l.b16 %v6967
    %v7047 = vunpack.c.l.b16 %v6968
    %v7048 = vunpack.c.l.b16 %v6969
    %v7049 = vunpack.c.l.b16 %v6970
    %v7050 = vunpack.c.l.b16 %v6971
    %v7051 = vunpack.c.l.b16 %v6972
    %v7052 = vunpack.c.l.b16 %v6973
    %v7053 = vunpack.c.l.b16 %v6974
    %v7054 = vunpack.c.l.b16 %v6975
    %v7055 = vpack.c.b16 %v7020, %v7019
    %v7056 = vpack.c.b16 %v7022, %v7021
    %v7057 = vpack.c.b16 %v7024, %v7023
    %v7058 = vpack.c.b16 %v7026, %v7025
    %v7059 = vpack.c.b16 %v7028, %v7027
    %v7060 = vpack.c.b16 %v7030, %v7029
    %v7061 = vpack.c.b16 %v7032, %v7031
    %v7062 = vpack.c.b16 %v7034, %v7033
    %v7063 = vpack.c.b16 %v7036, %v7035
    %v7064 = vpack.c.b16 %v7038, %v7037
    %v7065 = vpack.c.b16 %v7040, %v7039
    %v7066 = vpack.c.b16 %v7042, %v7041
    %v7067 = vpack.c.b16 %v7044, %v7043
    %v7068 = vpack.c.b16 %v7046, %v7045
    %v7069 = vpack.c.b16 %v7048, %v7047
    %v7070 = vpack.c.b16 %v7050, %v7049
    %v7071 = vpack.c.b16 %v7052, %v7051
    %v7072 = vpack.c.b16 %v7054, %v7053
    %v7092 = vsel %vm1819, %v6846, 0
    %v7095 = vsel %vm1819, %v6702, 0
    %v7098 = vsel %vm1819, %v6704, 0
    %v7101 = vsel %vm1819, %v6706, 0
    %v7104 = vsel %vm1819, %v6848, 0
    %v7107 = vsel %vm1819, %v6847, 0
    %7109 = vmatprep.subr.bf16.mxu0 0
    %7110 = vmatpush1.bf16.msra.mxu0 %v7055
    %7111 = vmatprep.subr.bf16.mxu0 0
    %7112 = vmatpush1.bf16.msra.mxu0 %v7056
    %7113 = vmatprep.subr.bf16.mxu0 0
    %7114 = vmatpush1.bf16.msra.mxu0 %v7057
    %7115 = vmatprep.subr.bf16.mxu0 0
    %7116 = vmatpush1.bf16.msra.mxu0 %v7058
    %7117 = vmatprep.subr.bf16.mxu0 0
    %7118 = vmatpush1.bf16.msra.mxu0 %v7059
    %7119 = vmatprep.subr.bf16.mxu0 0
    %7120 = vmatpush1.bf16.msra.mxu0 %v7060
    %7121 = vmatprep.subr.bf16.mxu0 0
    %7122 = vmatpush1.bf16.msra.mxu0 %v7061
    %7123 = vmatprep.subr.bf16.mxu0 0
    %7124 = vmatpush1.bf16.msra.mxu0 %v7062
    %7125 = vmatprep.subr.bf16.mxu0 0
    %7126 = vmatpush1.bf16.msra.mxu0 %v7063
    %7127 = vmatprep.subr.bf16.mxu0 0
    %7128 = vmatpush1.bf16.msra.mxu0 %v7064
    %7129 = vmatprep.subr.bf16.mxu0 0
    %7130 = vmatpush1.bf16.msra.mxu0 %v7065
    %7131 = vmatprep.subr.bf16.mxu0 0
    %7132 = vmatpush1.bf16.msra.mxu0 %v7066
    %7133 = vmatprep.subr.bf16.mxu0 0
    %7134 = vmatpush1.bf16.msra.mxu0 %v7067
    %7135 = vmatprep.subr.bf16.mxu0 0
    %7136 = vmatpush1.bf16.msra.mxu0 %v7068
    %7137 = vmatprep.subr.bf16.mxu0 0
    %7138 = vmatpush1.bf16.msra.mxu0 %v7069
    %7139 = vmatprep.subr.bf16.mxu0 0
    %7140 = vmatpush1.bf16.msra.mxu0 %v7070
    %7141 = vmatprep.mubr.bf16.mxu0 %v6923
    %7142 = vmatmul.mubr.bf16.gmra.mrb[0].mxu0 %v6875
    %v7143 = vpop.f32.mrb[0].mxu0
    %v7144 = vadd.f32 %v6981, %v7143
    %v7145 = vpop.f32.mrb[0].mxu0
    %v7146 = vpop.f32.mrb[0].mxu0
    %v7147 = vadd.f32 %v6981, %v7146
    %v7148 = vpop.f32.mrb[0].mxu0
    %7149 = vmatprep.mubr.bf16.mxu0 %v6926
    %7150 = vmatmul.mubr.bf16.gmra.mrb[0].mxu0 %v6878
    %v7151 = vpop.f32.mrb[0].mxu0
    %v7152 = vadd.f32 %v6981, %v7151
    %v7153 = vpop.f32.mrb[0].mxu0
    %v7154 = vpop.f32.mrb[0].mxu0
    %v7155 = vadd.f32 %v6981, %v7154
    %v7156 = vpop.f32.mrb[0].mxu0
    %7157 = vmatprep.mubr.bf16.mxu0 %v6929
    %7158 = vmatmul.mubr.bf16.gmra.mrb[0].mxu0 %v6881
    %v7159 = vpop.f32.mrb[0].mxu0
    %v7160 = vadd.f32 %v6981, %v7159
    %v7161 = vpop.f32.mrb[0].mxu0
    %v7162 = vpop.f32.mrb[0].mxu0
    %v7163 = vadd.f32 %v6981, %v7162
    %v7164 = vpop.f32.mrb[0].mxu0
    %7165 = vmatprep.mubr.bf16.mxu0 %v6932
    %7166 = vmatmul.mubr.bf16.gmra.mrb[0].mxu0 %v6884
    %v7167 = vpop.f32.mrb[0].mxu0
    %v7168 = vadd.f32 %v6981, %v7167
    %v7169 = vpop.f32.mrb[0].mxu0
    %v7170 = vpop.f32.mrb[0].mxu0
    %v7171 = vadd.f32 %v6981, %v7170
    %v7172 = vpop.f32.mrb[0].mxu0
    %7173 = vmatprep.mubr.bf16.mxu0 %v6935
    %7174 = vmatmul.mubr.bf16.gmra.mrb[0].mxu0 %v6887
    %v7175 = vpop.f32.mrb[0].mxu0
    %v7176 = vadd.f32 %v6981, %v7175
    %v7177 = vpop.f32.mrb[0].mxu0
    %v7178 = vpop.f32.mrb[0].mxu0
    %v7179 = vadd.f32 %v6981, %v7178
    %v7180 = vpop.f32.mrb[0].mxu0
    %7181 = vmatprep.mubr.bf16.mxu0 %v6938
    %7182 = vmatmul.mubr.bf16.gmra.mrb[0].mxu0 %v6890
    %v7183 = vpop.f32.mrb[0].mxu0
    %v7184 = vadd.f32 %v6981, %v7183
    %v7185 = vpop.f32.mrb[0].mxu0
    %v7186 = vpop.f32.mrb[0].mxu0
    %v7187 = vadd.f32 %v6981, %v7186
    %v7188 = vpop.f32.mrb[0].mxu0
    %7189 = vdwg.mxu0
    %7190 = vmatprep.subr.bf16.mxu0 0
    %7191 = vmatpush1.bf16.msra.mxu0 %v7071
    %7192 = vmatprep.subr.bf16.mxu0 0
    %7193 = vmatpush1.bf16.msra.mxu0 %v7072
    %7194 = vmatprep.subr.bf16.mxu0 0
    %7195 = vmatpush1.bf16.msra.mxu0 0
    %7196 = vmatprep.subr.bf16.mxu0 0
    %7197 = vmatpush1.bf16.msra.mxu0 0
    %7198 = vmatprep.subr.bf16.mxu0 0
    %7199 = vmatpush1.bf16.msra.mxu0 0
    %7200 = vmatprep.subr.bf16.mxu0 0
    %7201 = vmatpush1.bf16.msra.mxu0 0
    %7202 = vmatprep.subr.bf16.mxu0 0
    %7203 = vmatpush1.bf16.msra.mxu0 0
    %7204 = vmatprep.subr.bf16.mxu0 0
    %7205 = vmatpush1.bf16.msra.mxu0 0
    %7206 = vmatprep.subr.bf16.mxu0 0
    %7207 = vmatpush1.bf16.msra.mxu0 0
    %7208 = vmatprep.subr.bf16.mxu0 0
    %7209 = vmatpush1.bf16.msra.mxu0 0
    %7210 = vmatprep.subr.bf16.mxu0 0
    %7211 = vmatpush1.bf16.msra.mxu0 0
    %7212 = vmatprep.subr.bf16.mxu0 0
    %7213 = vmatpush1.bf16.msra.mxu0 0
    %7214 = vmatprep.subr.bf16.mxu0 0
    %7215 = vmatpush1.bf16.msra.mxu0 0
    %7216 = vmatprep.subr.bf16.mxu0 0
    %7217 = vmatpush1.bf16.msra.mxu0 0
    %7218 = vmatprep.subr.bf16.mxu0 0
    %7219 = vmatpush1.bf16.msra.mxu0 0
    %7220 = vmatprep.subr.bf16.mxu0 0
    %7221 = vmatpush1.bf16.msra.mxu0 0
    %7222 = vmatprep.mubr.bf16.mxu0 0
    %7223 = vmatmul.mubr.bf16.gmra.mrb[0].mxu0 %v7092
    %v7224 = vpop.f32.mrb[0].mxu0
    %v7225 = vadd.f32 %v7144, %v7224
    %v7226 = vpop.f32.mrb[0].mxu0
    %v7227 = vpop.f32.mrb[0].mxu0
    %v7228 = vadd.f32 %v7147, %v7227
    %v7229 = vpop.f32.mrb[0].mxu0
    %7230 = vmatprep.mubr.bf16.mxu0 0
    %7231 = vmatmul.mubr.bf16.gmra.mrb[0].mxu0 %v7095
    %v7232 = vpop.f32.mrb[0].mxu0
    %v7233 = vadd.f32 %v7152, %v7232
    %v7234 = vpop.f32.mrb[0].mxu0
    %v7235 = vpop.f32.mrb[0].mxu0
    %v7236 = vadd.f32 %v7155, %v7235
    %v7237 = vpop.f32.mrb[0].mxu0
    %7238 = vmatprep.mubr.bf16.mxu0 0
    %7239 = vmatmul.mubr.bf16.gmra.mrb[0].mxu0 %v7098
    %v7240 = vpop.f32.mrb[0].mxu0
    %v7241 = vadd.f32 %v7160, %v7240
    %v7242 = vpop.f32.mrb[0].mxu0
    %v7243 = vpop.f32.mrb[0].mxu0
    %v7244 = vadd.f32 %v7163, %v7243
    %v7245 = vpop.f32.mrb[0].mxu0
    %7246 = vmatprep.mubr.bf16.mxu0 0
    %7247 = vmatmul.mubr.bf16.gmra.mrb[0].mxu0 %v7101
    %v7248 = vpop.f32.mrb[0].mxu0
    %v7249 = vadd.f32 %v7168, %v7248
    %v7250 = vpop.f32.mrb[0].mxu0
    %v7251 = vpop.f32.mrb[0].mxu0
    %v7252 = vadd.f32 %v7171, %v7251
    %v7253 = vpop.f32.mrb[0].mxu0
    %7254 = vmatprep.mubr.bf16.mxu0 0
    %7255 = vmatmul.mubr.bf16.gmra.mrb[0].mxu0 %v7104
    %v7256 = vpop.f32.mrb[0].mxu0
    %v7257 = vadd.f32 %v7176, %v7256
    %v7258 = vpop.f32.mrb[0].mxu0
    %v7259 = vpop.f32.mrb[0].mxu0
    %v7260 = vadd.f32 %v7179, %v7259
    %v7261 = vpop.f32.mrb[0].mxu0
    %7262 = vmatprep.mubr.bf16.mxu0 0
    %7263 = vmatmul.mubr.bf16.gmra.mrb[0].mxu0 %v7107
    %v7264 = vpop.f32.mrb[0].mxu0
    %v7265 = vadd.f32 %v7184, %v7264
    %v7266 = vpop.f32.mrb[0].mxu0
    %v7267 = vpop.f32.mrb[0].mxu0
    %v7268 = vadd.f32 %v7187, %v7267
    %v7269 = vpop.f32.mrb[0].mxu0
    %7270 = vdwg.mxu0
    %v7271 = vmax.f32 %v7225, 0.0
    %v7272 = vmax.f32 %v7228, 0.0
    %v7273 = vmax.f32 %v7233, 0.0
    %v7274 = vmax.f32 %v7236, 0.0
    %v7275 = vmax.f32 %v7241, 0.0
    %v7276 = vmax.f32 %v7244, 0.0
    %v7277 = vmax.f32 %v7249, 0.0
    %v7278 = vmax.f32 %v7252, 0.0
    %v7279 = vmax.f32 %v7257, 0.0
    %v7280 = vmax.f32 %v7260, 0.0
    %v7281 = vmax.f32 %v7265, 0.0
    %v7282 = vmax.f32 %v7268, 0.0
    %v7283 = vmul.f32 %v7271, %v5703
    %v7284 = vmul.f32 %v7272, %v5708
    %v7285 = vmul.f32 %v7273, %v5713
    %v7286 = vmul.f32 %v7274, %v5718
    %v7287 = vmul.f32 %v7275, %v5723
    %v7288 = vmul.f32 %v7276, %v5728
    %v7289 = vmul.f32 %v7277, %v5733
    %v7290 = vmul.f32 %v7278, %v5738
    %v7291 = vmul.f32 %v7279, %v5743
    %v7292 = vmul.f32 %v7280, %v5748
    %v7293 = vmul.f32 %v7281, %v5753
    %v7294 = vmul.f32 %v7282, %v5758
    %7295 = vst.msk [vmem:[#allocation7 + $0x9] sm:$0xff] %vm1819, %v7283
    %7296 = vst.msk [vmem:[#allocation7 + $0x11] sm:$0xff] %vm1819, %v7284
    %7297 = vst.msk [vmem:[#allocation7 + $0x19] sm:$0xff] %vm1819, %v7285
    %7298 = vst.msk [vmem:[#allocation7 + $0x21] sm:$0xff] %vm1819, %v7286
    %7299 = vst.msk [vmem:[#allocation7 + $0x29] sm:$0xff] %vm1819, %v7287
    %7300 = vst.msk [vmem:[#allocation7 + $0x31] sm:$0xff] %vm1819, %v7288
    %7301 = vst.msk [vmem:[#allocation7 + $0x39] sm:$0xff] %vm1819, %v7289
    %7302 = vst.msk [vmem:[#allocation7 + $0x41] sm:$0xff] %vm1819, %v7290
    %7303 = vst.msk [vmem:[#allocation7 + $0x49] sm:$0xff] %vm1819, %v7291
    %7304 = vst.msk [vmem:[#allocation7 + $0x51] sm:$0xff] %vm1819, %v7292
    %7305 = vst.msk [vmem:[#allocation7 + $0x59] sm:$0xff] %vm1819, %v7293
    %vm7306 = vcmask 259072
    %7307 = vst.msk [vmem:[#allocation7 + $0x61] sm:$0x3f] %vm7306, %v7294
    %v7308 = vld [vmem:[#allocation7] sm:$0xff]
    %v7309 = vld [vmem:[#allocation7 + $0x8] sm:$0xff]
    %v7310 = vld [vmem:[#allocation7 + $0x10] sm:$0xff]
    %v7311 = vld [vmem:[#allocation7 + $0x18] sm:$0xff]
    %v7312 = vld [vmem:[#allocation7 + $0x20] sm:$0xff]
    %v7313 = vld [vmem:[#allocation7 + $0x28] sm:$0xff]
    %v7314 = vld [vmem:[#allocation7 + $0x30] sm:$0xff]
    %v7315 = vsel %vm1819, %v7308, 0.0
    %v7316 = vsel %vm1819, %v7309, 0.0
    %v7317 = vadd.f32 %v7315, %v7316
    %v7318 = vsel %vm1819, %v7310, 0.0
    %v7319 = vadd.f32 %v7317, %v7318
    %v7320 = vsel %vm1819, %v7311, 0.0
    %v7321 = vadd.f32 %v7319, %v7320
    %v7322 = vsel %vm1819, %v7312, 0.0
    %v7323 = vadd.f32 %v7321, %v7322
    %v7324 = vsel %vm1819, %v7313, 0.0
    %v7325 = vadd.f32 %v7323, %v7324
    %v7326 = vsel %vm1819, %v7314, 0.0
    %v7327 = vadd.f32 %v7325, %v7326
    %v7328 = vrot.slane %v7327, 4
    %v7329 = vadd.f32 %v7327, %v7328
    %v7330 = vrot.slane %v7329, 2
    %v7331 = vadd.f32 %v7329, %v7330
    %v7332 = vrot.slane %v7331, 1
    %v7333 = vadd.f32 %v7331, %v7332
    %v7334 = vld [vmem:[#allocation7 + $0x38] sm:$0xff]
    %v7335 = vld [vmem:[#allocation7 + $0x40] sm:$0xff]
    %v7336 = vld [vmem:[#allocation7 + $0x48] sm:$0xff]
    %v7337 = vld [vmem:[#allocation7 + $0x50] sm:$0xff]
    %v7338 = vld [vmem:[#allocation7 + $0x58] sm:$0xff]
    %v7339 = vld [vmem:[#allocation7 + $0x60] sm:$0xff]
    %v7340 = vld [vmem:[#allocation7 + $0x68] sm:$0xff]
    %v7341 = vsel %vm1819, %v7334, 0.0
    %v7342 = vsel %vm1819, %v7335, 0.0
    %v7343 = vadd.f32 %v7341, %v7342
    %v7344 = vsel %vm1819, %v7336, 0.0
    %v7345 = vadd.f32 %v7343, %v7344
    %v7346 = vsel %vm1819, %v7337, 0.0
    %v7347 = vadd.f32 %v7345, %v7346
    %v7348 = vsel %vm1819, %v7338, 0.0
    %v7349 = vadd.f32 %v7347, %v7348
    %v7350 = vsel %vm1819, %v7339, 0.0
    %v7351 = vadd.f32 %v7349, %v7350
    %v7352 = vsel %vm1819, %v7340, 0.0
    %v7353 = vadd.f32 %v7351, %v7352
    %v7354 = vrot.slane %v7353, 4
    %v7355 = vadd.f32 %v7353, %v7354
    %v7356 = vrot.slane %v7355, 2
    %v7357 = vadd.f32 %v7355, %v7356
    %v7358 = vrot.slane %v7357, 1
    %v7359 = vadd.f32 %v7357, %v7358
    %vm7360 = vcmask 1040384
    %v7361 = vsel %vm7360, %v7333, %v7359
    %v7362 = vmul.f32 %v7361, 0.04
    %v7363 = vpack.c.bf16 %v7362, %v7362
    %v7364 = vld [vmem:[%s15] sm:$0xf]
    %v7365 = vld [vmem:[%s15 + $0x4] sm:$0xf]
    %v7366 = vld [vmem:[%s15 + $0x8] sm:$0xf]
    %v7367 = vld [vmem:[%s15 + $0xc] sm:$0xf]
    %v7368 = vld [vmem:[%s16] sm:$0x1]
    %v7370 = vlaneseq
    %v7371 = vshrl.u32 %v7370, 7
    %v7372 = vsub.s32 0, %v7371
    %v7373 = vrot.slane %v7368, %v7372
    %v7379 = vunpack.c.l.b16 %v7364
    %v7380 = vunpack.c.l.b16 %v7365
    %v7381 = vunpack.c.l.b16 %v7366
    %v7382 = vunpack.c.l.b16 %v7367
    %v7383 = vpack.c.b16 %v7380, %v7379
    %v7384 = vpack.c.b16 %v7382, %v7381
    %v7388 = vsel %vm1819, %v7363, 0
    %7390 = vmatprep.subr.bf16.mxu0 0
    %7391 = vmatpush1.bf16.msra.mxu0 %v7383
    %7392 = vmatprep.subr.bf16.mxu0 0
    %7393 = vmatpush1.bf16.msra.mxu0 %v7384
    %7394 = vmatprep.subr.bf16.mxu0 0
    %7395 = vmatpush1.bf16.msra.mxu0 0
    %7396 = vmatprep.subr.bf16.mxu0 0
    %7397 = vmatpush1.bf16.msra.mxu0 0
    %7398 = vmatprep.subr.bf16.mxu0 0
    %7399 = vmatpush1.bf16.msra.mxu0 0
    %7400 = vmatprep.subr.bf16.mxu0 0
    %7401 = vmatpush1.bf16.msra.mxu0 0
    %7402 = vmatprep.subr.bf16.mxu0 0
    %7403 = vmatpush1.bf16.msra.mxu0 0
    %7404 = vmatprep.subr.bf16.mxu0 0
    %7405 = vmatpush1.bf16.msra.mxu0 0
    %7406 = vmatprep.subr.bf16.mxu0 0
    %7407 = vmatpush1.bf16.msra.mxu0 0
    %7408 = vmatprep.subr.bf16.mxu0 0
    %7409 = vmatpush1.bf16.msra.mxu0 0
    %7410 = vmatprep.subr.bf16.mxu0 0
    %7411 = vmatpush1.bf16.msra.mxu0 0
    %7412 = vmatprep.subr.bf16.mxu0 0
    %7413 = vmatpush1.bf16.msra.mxu0 0
    %7414 = vmatprep.subr.bf16.mxu0 0
    %7415 = vmatpush1.bf16.msra.mxu0 0
    %7416 = vmatprep.subr.bf16.mxu0 0
    %7417 = vmatpush1.bf16.msra.mxu0 0
    %7418 = vmatprep.subr.bf16.mxu0 0
    %7419 = vmatpush1.bf16.msra.mxu0 0
    %7420 = vmatprep.subr.bf16.mxu0 0
    %7421 = vmatpush1.bf16.msra.mxu0 0
    %7422 = vmatprep.mubr.bf16.mxu0 0
    %7423 = vmatmul.mubr.bf16.gmra.mrb[0].mxu0 %v7388
    %v7424 = vpop.f32.mrb[0].mxu0
    %v7425 = vadd.f32 %v7373, %v7424
    %v7426 = vpop.f32.mrb[0].mxu0
    %v7427 = vpop.f32.mrb[0].mxu0
    %v7428 = vpop.f32.mrb[0].mxu0
    %7429 = vdwg.mxu0
    %v7430 = vmax.f32 %v7425, 0.0
    %v7431 = vpack.c.bf16 %v7430, %v7430
    %v7432 = vld [vmem:[%s17] sm:$0xf]
    %v7433 = vld [vmem:[%s17 + $0x4] sm:$0xf]
    %v7434 = vld [vmem:[%s17 + $0x8] sm:$0xf]
    %v7435 = vld [vmem:[%s17 + $0xc] sm:$0xf]
    %v7436 = vld [vmem:[%s18] sm:$0x1]
    %v7438 = vlaneseq
    %v7439 = vshrl.u32 %v7438, 7
    %v7440 = vsub.s32 0, %v7439
    %v7441 = vrot.slane %v7436, %v7440
    %v7447 = vunpack.c.l.b16 %v7432
    %v7448 = vunpack.c.l.b16 %v7433
    %v7449 = vunpack.c.l.b16 %v7434
    %v7450 = vunpack.c.l.b16 %v7435
    %v7451 = vpack.c.b16 %v7448, %v7447
    %v7452 = vpack.c.b16 %v7450, %v7449
    %v7456 = vsel %vm1819, %v7431, 0
    %7458 = vmatprep.subr.bf16.mxu0 0
    %7459 = vmatpush1.bf16.msra.mxu0 %v7451
    %7460 = vmatprep.subr.bf16.mxu0 0
    %7461 = vmatpush1.bf16.msra.mxu0 %v7452
    %7462 = vmatprep.subr.bf16.mxu0 0
    %7463 = vmatpush1.bf16.msra.mxu0 0
    %7464 = vmatprep.subr.bf16.mxu0 0
    %7465 = vmatpush1.bf16.msra.mxu0 0
    %7466 = vmatprep.subr.bf16.mxu0 0
    %7467 = vmatpush1.bf16.msra.mxu0 0
    %7468 = vmatprep.subr.bf16.mxu0 0
    %7469 = vmatpush1.bf16.msra.mxu0 0
    %7470 = vmatprep.subr.bf16.mxu0 0
    %7471 = vmatpush1.bf16.msra.mxu0 0
    %7472 = vmatprep.subr.bf16.mxu0 0
    %7473 = vmatpush1.bf16.msra.mxu0 0
    %7474 = vmatprep.subr.bf16.mxu0 0
    %7475 = vmatpush1.bf16.msra.mxu0 0
    %7476 = vmatprep.subr.bf16.mxu0 0
    %7477 = vmatpush1.bf16.msra.mxu0 0
    %7478 = vmatprep.subr.bf16.mxu0 0
    %7479 = vmatpush1.bf16.msra.mxu0 0
    %7480 = vmatprep.subr.bf16.mxu0 0
    %7481 = vmatpush1.bf16.msra.mxu0 0
    %7482 = vmatprep.subr.bf16.mxu0 0
    %7483 = vmatpush1.bf16.msra.mxu0 0
    %7484 = vmatprep.subr.bf16.mxu0 0
    %7485 = vmatpush1.bf16.msra.mxu0 0
    %7486 = vmatprep.subr.bf16.mxu0 0
    %7487 = vmatpush1.bf16.msra.mxu0 0
    %7488 = vmatprep.subr.bf16.mxu0 0
    %7489 = vmatpush1.bf16.msra.mxu0 0
    %7490 = vmatprep.mubr.bf16.mxu0 0
    %7491 = vmatmul.mubr.bf16.gmra.mrb[0].mxu0 %v7456
    %v7492 = vpop.f32.mrb[0].mxu0
    %v7493 = vadd.f32 %v7441, %v7492
    %v7494 = vpop.f32.mrb[0].mxu0
    %v7495 = vpop.f32.mrb[0].mxu0
    %v7496 = vpop.f32.mrb[0].mxu0
    %7497 = vdwg.mxu0
    %v7498 = vmax.f32 %v7493, 0.0
    %vm7499 = vcmask 25600
    %7500 = vst.msk [vmem:[#allocation8] sm:$0x3] %vm7499, %v7498
    // Predicated region
    $region78: #{goturn_forward.3} parent=1 // pred_check
      _
    $region79: #{goturn_forward.3} parent=1 // pred_check_branch
      %7502 = sbr.rel (0) target = $region81
    $region80: #{goturn_forward.3} parent=1 // pred_region
      %s7504 = ssub.s32 32, 32
      %7505 = vsyncadd [#allocation9], %s7504
      %s7507 = sshll.u32 [#allocation8], 4
      %s7508 = int_to_ptr.vmem [resolvable:$true] %s7507
      %7510 = dma.vmem_to_hbm [thread:$0]  %s7508, 32, %s19, [#allocation9]
    $region81: #{goturn_forward.3} parent=1 // pred_fallthru
      _
    // Predicated region
    $region82: #{goturn_forward.3} parent=1 // pred_check
      _
    $region83: #{goturn_forward.3} parent=1 // pred_check_branch
      %7512 = sbr.rel (0) target = $region85
    $region84: #{goturn_forward.3} parent=1 // pred_region
      %7513 = dma.done [#allocation9], 32
    $region85: #{goturn_forward.3} parent=1 // pred_fallthru
      _
    %7514 = vsyncpa [#allocation9], 1

</llo_original>
